<compile_context>
chip_gen: v6e
topology: v6e:2x2x1
jax: 0.10.0
libtpu: 0.0.40
codegen_flags: <defaults>
</compile_context>

<pallas_src>
import numpy as np
import jax
import jax.numpy as jnp
from jax.experimental import pallas as pl
from jax.experimental.pallas import tpu as pltpu

EPS = 1e-5   # nn.BatchNorm2d default eps
K = 4        # kernel size of every ConvTranspose2d in this module
MARG = 128   # lane-aligned halo margin on both sides of every activation buffer

# spatial geometry of the three upsampling stages (per-image strides lane-padded)
HP1, M1P = 6, 128    # layer-2 input : 4x4 interior, 6x6 padded (36)  -> 128
HP2, M2P = 10, 128   # layer-3 input : 8x8 interior, 10x10 padded(100)-> 128
HP3, M3P = 18, 384   # layer-4 input : 16x16 interior, 18x18 padded(324)->384
MOUT = 32 * 32       # final image, unpadded (already a multiple of 128)


# --------------------------------------------------------------------------
# Host-side (prepare-time) parameter repacking -- hoisted out of the forward
# --------------------------------------------------------------------------
def _merged_phase_weight(w):
    """ConvTranspose2d weight (Cin, Cout, 4, 4) -> merged (4*Cout, 9*Cin) bf16.

    Row block p = 2*py+px (output stride phase); column block t = 3*(dy+1)+(dx+1)
    (input tap offset).  Phase p only uses dy in {py-1,py}, dx in {px-1,px};
    unused taps are zero so all 4 phases become ONE GEMM.
      weight(p, dy, dx) = w[:, :, 1-2*dy+py, 1-2*dx+px]^T
    """
    w = np.asarray(w, np.float32)
    cin, cout = w.shape[0], w.shape[1]
    wm = np.zeros((4 * cout, 9 * cin), np.float32)
    for py in range(2):
        for px in range(2):
            p = 2 * py + px
            for dy in (-1, 0, 1):
                for dx in (-1, 0, 1):
                    if dy in (py - 1, py) and dx in (px - 1, px):
                        t = 3 * (dy + 1) + (dx + 1)
                        ky, kx = 1 - 2 * dy + py, 1 - 2 * dx + px
                        wm[p * cout:(p + 1) * cout, t * cin:(t + 1) * cin] = w[:, :, ky, kx].T
    return jnp.asarray(wm, jnp.bfloat16)


def prepare_params(params, latent_dim, f_base):
    """One-time weight repack (conv biases b1..b3 dropped: they cancel exactly
    inside training-mode BatchNorm)."""
    c1 = f_base * 4
    w1m = jnp.transpose(params['w1'], (2, 3, 1, 0)).reshape(16 * c1, latent_dim)
    return {
        'w1m': w1m.astype(jnp.bfloat16),
        'g1': params['g1'].reshape(-1, 1).astype(jnp.float32),
        'be1': params['be1'].reshape(-1, 1).astype(jnp.float32),
        'w2m': _merged_phase_weight(params['w2']),
        'g2': params['g2'].reshape(-1, 1).astype(jnp.float32),
        'be2': params['be2'].reshape(-1, 1).astype(jnp.float32),
        'w3m': _merged_phase_weight(params['w3']),
        'g3': params['g3'].reshape(-1, 1).astype(jnp.float32),
        'be3': params['be3'].reshape(-1, 1).astype(jnp.float32),
        'w4m': _merged_phase_weight(params['w4']),
        'b4': params['b4'].reshape(-1, 1).astype(jnp.float32),
    }


def _reloc_matrix(h_in, mp_in, mp_out, wpitch_out, pad_out):
    """Batch-independent (4*mp_in, mp_out) bf16 0/1 pixel-shuffle relocation.
    Row p*mp_in + (y*hp_in+x) -> column of output pixel (2(y-1)+py, 2(x-1)+px)
    (shifted by +1 halo when the destination buffer is padded)."""
    hp_in = h_in + 2
    off = 1 if pad_out else 0
    r = np.zeros((4 * mp_in, mp_out), np.float32)
    for py in range(2):
        for px in range(2):
            p = 2 * py + px
            for y in range(1, h_in + 1):
                for x in range(1, h_in + 1):
                    src = y * hp_in + x
                    dst = (off + 2 * (y - 1) + py) * wpitch_out + (off + 2 * (x - 1) + px)
                    r[p * mp_in + src, dst] = 1.0
    return jnp.asarray(r, jnp.bfloat16)


def _layer1_reloc(batch):
    """(16*B, B*M1P) bf16: place the 4x4 layer-1 output into the padded 6x6 grid."""
    r = np.zeros((16 * batch, batch * M1P), np.float32)
    for q in range(16):
        qy, qx = q // 4, q % 4
        for b in range(batch):
            r[q * batch + b, b * M1P + (1 + qy) * HP1 + (1 + qx)] = 1.0
    return jnp.asarray(r, jnp.bfloat16)


def _interior_mask(h_in, mp, batch):
    """(1, B*mp) f32 mask of valid (interior) conv-output columns for BN stats."""
    hp = h_in + 2
    m = np.zeros((mp,), np.float32)
    for y in range(1, h_in + 1):
        m[y * hp + 1: y * hp + 1 + h_in] = 1.0
    return jnp.asarray(np.tile(m, batch)[None, :], jnp.float32)


# --------------------------------------------------------------------------
# Fused decoder kernel
# --------------------------------------------------------------------------
def _build_decoder(latent_dim, img_chans, f_base, batch):
    L, B = latent_dim, batch
    C1, C2, C3, C4 = f_base * 4, f_base * 2, f_base, img_chans

    BUF1 = (C1, 2 * MARG + B * M1P)
    BUF2 = (C2, 2 * MARG + B * M2P)
    BUF3 = (C3, 2 * MARG + B * M3P)

    r1 = _layer1_reloc(B)
    r2 = _reloc_matrix(4, M1P, M2P, HP2, True)
    r3 = _reloc_matrix(8, M2P, M3P, HP3, True)
    r4 = _reloc_matrix(16, M3P, MOUT, 32, False)
    m2 = _interior_mask(4, M1P, B)
    m3 = _interior_mask(8, M2P, B)

    def kernel(zt_ref, w1m_ref, g1_ref, be1_ref, r1_ref,
               w2m_ref, g2_ref, be2_ref, m2_ref, r2_ref,
               w3m_ref, g3_ref, be3_ref, m3_ref, r3_ref,
               w4m_ref, b4_ref, r4_ref,
               out_ref, buf1, buf2, buf3):
        f32, bf16 = jnp.float32, jnp.bfloat16

        # halo margins / lane-pad columns must be finite zeros (they are read by
        # the masked-out halo outputs); the interiors are fully overwritten.
        buf1[...] = jnp.zeros(BUF1, bf16)
        buf2[...] = jnp.zeros(BUF2, bf16)
        buf3[...] = jnp.zeros(BUF3, bf16)

        # ---- layer 1: ConvTranspose2d(L, C1, 4, 1, 0) on 1x1 input + BN + ReLU
        y1 = jnp.dot(w1m_ref[...], zt_ref[...].astype(bf16),
                     preferred_element_type=f32)                    # (16*C1, B)
        y13 = y1.reshape(16, C1, B)
        cnt1 = 16.0 * B
        cs1 = jnp.sum(jnp.sum(y13, axis=2, keepdims=True), axis=0, keepdims=True)
        cs2 = jnp.sum(jnp.sum(y13 * y13, axis=2, keepdims=True), axis=0, keepdims=True)
        mean = cs1 / cnt1                                           # (1, C1, 1)
        var = jnp.maximum(cs2 / cnt1 - mean * mean, 0.0)
        scale = g1_ref[...].reshape(1, C1, 1) * jax.lax.rsqrt(var + EPS)
        shift = be1_ref[...].reshape(1, C1, 1) - mean * scale
        yn13 = jnp.maximum(y13 * scale + shift, 0.0)                # (16, C1, B)
        # one relocation GEMM + one lane-aligned store (replaces 16*B width-1 stores)
        lhs1 = jnp.concatenate([yn13[q] for q in range(16)], axis=1).astype(bf16)  # (C1, 16*B)
        placed1 = jnp.dot(lhs1, r1_ref[...], preferred_element_type=f32)           # (C1, B*M1P)
        buf1[:, MARG:MARG + B * M1P] = placed1.astype(bf16)

        # ---- stride-2 ConvTranspose2d as ONE GEMM per layer (9-tap patches)
        def conv_gemm(src, wm_ref, hp_in, mp_in):
            taps = []
            for dy in (-1, 0, 1):
                for dx in (-1, 0, 1):
                    s = MARG + dy * hp_in + dx
                    taps.append(src[:, s:s + B * mp_in])
            patches = jnp.concatenate(taps, axis=0)                 # (9*Cin, B*mp_in) bf16
            return jnp.dot(wm_ref[...], patches, preferred_element_type=f32)  # (4*Cout, B*mp_in)

        # ---- BN (batch stats) + ReLU + fused pixel-shuffle relocation GEMM
        def bn_relu_shuffle(y_all, g_ref, be_ref, m_ref, r_ref,
                            cout, mp_in, h_true, mp_out, dst):
            mrow = m_ref[...]                                       # (1, B*mp_in)
            ym = y_all * mrow                                       # zero halo/pad cols
            s1r = jnp.sum(ym, axis=1, keepdims=True)                # (4*cout, 1)
            s2r = jnp.sum(ym * y_all, axis=1, keepdims=True)
            cs1_ = s1r[0:cout] + s1r[cout:2 * cout] + s1r[2 * cout:3 * cout] + s1r[3 * cout:4 * cout]
            cs2_ = s2r[0:cout] + s2r[cout:2 * cout] + s2r[2 * cout:3 * cout] + s2r[3 * cout:4 * cout]
            cnt = float(B * (2 * h_true) * (2 * h_true))
            mean_l = cs1_ / cnt
            var_l = jnp.maximum(cs2_ / cnt - mean_l * mean_l, 0.0)
            scale_l = g_ref[...] * jax.lax.rsqrt(var_l + EPS)       # (cout, 1)
            shift_l = be_ref[...] - mean_l * scale_l
            parts = []
            for p in range(4):
                yp = jnp.maximum(y_all[p * cout:(p + 1) * cout, :] * scale_l + shift_l, 0.0)
                parts.append(yp.reshape(cout * B, mp_in).astype(bf16))
            lhs = jnp.concatenate(parts, axis=1)                    # (cout*B, 4*mp_in)
            placed = jnp.dot(lhs, r_ref[...], preferred_element_type=f32)  # (cout*B, mp_out)
            dst[:, MARG:MARG + B * mp_out] = placed.reshape(cout, B * mp_out).astype(bf16)

        y2 = conv_gemm(buf1, w2m_ref, HP1, M1P)
        bn_relu_shuffle(y2, g2_ref, be2_ref, m2_ref, r2_ref, C2, M1P, 4, M2P, buf2)

        y3 = conv_gemm(buf2, w3m_ref, HP2, M2P)
        bn_relu_shuffle(y3, g3_ref, be3_ref, m3_ref, r3_ref, C3, M2P, 8, M3P, buf3)

        # ---- layer 4: ConvTranspose2d(C3, img_chans, 4, 2, 1) + bias + Sigmoid
        y4 = conv_gemm(buf3, w4m_ref, HP3, M3P)                     # (4*C4, B*M3P)
        parts4 = []
        for p in range(4):
            yp = y4[p * C4:(p + 1) * C4, :] + b4_ref[...]
            parts4.append(yp.reshape(C4 * B, M3P).astype(bf16))
        lhs4 = jnp.concatenate(parts4, axis=1)                      # (C4*B, 4*M3P)
        placed4 = jnp.dot(lhs4, r4_ref[...], preferred_element_type=f32)  # (C4*B, 1024)
        out_ref[...] = jax.nn.sigmoid(placed4.reshape(C4, B * MOUT))      # lane-dense store

    def fspec(shape):
        nd = len(shape)
        return pl.BlockSpec(shape, lambda i, _n=nd: (0,) * _n)

    in_shapes = [
        (L, B), (16 * C1, L), (C1, 1), (C1, 1), (16 * B, B * M1P),
        (4 * C2, 9 * C1), (C2, 1), (C2, 1), (1, B * M1P), (4 * M1P, M2P),
        (4 * C3, 9 * C2), (C3, 1), (C3, 1), (1, B * M2P), (4 * M2P, M3P),
        (4 * C4, 9 * C3), (C4, 1), (4 * M3P, MOUT),
    ]

    # Total resident VMEM (weights + reloc constants + scratch) is ~4 MiB, far
    # below even v7x's 64 MiB, so default vmem limit and grid=(1,) are kept.
    # TODO(synk): for large batch on v7x the batch could be split across the 2
    # TensorCores, exchanging only the (C,1) BN partial sums; at B~2 the
    # barrier latency would dominate, so it stays single-core.
    call = pl.pallas_call(
        kernel,
        grid=(1,),
        in_specs=[fspec(s) for s in in_shapes],
        out_specs=fspec((C4, B * MOUT)),
        out_shape=jax.ShapeDtypeStruct((C4, B * MOUT), jnp.float32),
        scratch_shapes=[pltpu.VMEM(BUF1, jnp.bfloat16),
                        pltpu.VMEM(BUF2, jnp.bfloat16),
                        pltpu.VMEM(BUF3, jnp.bfloat16)],
        compiler_params=pltpu.CompilerParams(
            dimension_semantics=("arbitrary",)),
    )
    return call, (r1, r2, r3, r4, m2, m3)


# --------------------------------------------------------------------------
# DecCNNAdd_OSCN forward
# --------------------------------------------------------------------------
def dec_cnn_add_oscn_forward(z, prep):
    """z: (..., latent_dim) -> (out (..., img_chans, 32, 32), 0.75)"""
    lead = z.shape[:-1]
    L = z.shape[-1]
    zf = z.reshape(-1, L)
    B = zf.shape[0]
    c1 = prep['w1m'].shape[0] // 16
    f_base = c1 // 4
    img_chans = prep['w4m'].shape[0] // 4

    call, (r1, r2, r3, r4, m2, m3) = _build_decoder(L, img_chans, f_base, B)
    out2d = call(zf.T, prep['w1m'], prep['g1'], prep['be1'], r1,
                 prep['w2m'], prep['g2'], prep['be2'], m2, r2,
                 prep['w3m'], prep['g3'], prep['be3'], m3, r3,
                 prep['w4m'], prep['b4'], r4)
    # wrapper-side layout plumbing only (tiny): (C, B*32*32) -> (..., C, 32, 32)
    out = out2d.reshape(img_chans, B, 32, 32).transpose(1, 0, 2, 3)
    out = out.reshape(*lead, img_chans, 32, 32)
    return out, jnp.asarray(0.75, jnp.float32)


def init_params(key, latent_dim, img_chans=3, f_base=8):
    # Deterministic synthetic init (shapes match nn.ConvTranspose2d / nn.BatchNorm2d).
    dims = [(latent_dim, f_base * 4), (f_base * 4, f_base * 2),
            (f_base * 2, f_base), (f_base, img_chans)]
    params = {}
    for i, (cin, cout) in enumerate(dims, start=1):
        key, k1, k2, k3, k4 = jax.random.split(key, 5)
        scale = 1.0 / np.sqrt(cin * K * K)
        params[f'w{i}'] = jax.random.uniform(k1, (cin, cout, K, K), jnp.float32, -scale, scale)
        params[f'b{i}'] = jax.random.uniform(k2, (cout,), jnp.float32, -scale, scale)
        if i < 4:
            params[f'g{i}'] = 1.0 + 0.1 * jax.random.normal(k3, (cout,), jnp.float32)
            params[f'be{i}'] = 0.1 * jax.random.normal(k4, (cout,), jnp.float32)
    return params


# --------------------------------------------------------------------------
# Pure-JAX reference (for correctness check)
# --------------------------------------------------------------------------
def _ref_conv_t(x, w, b, stride, pad):
    cout = w.shape[1]
    wf = jnp.transpose(w[:, :, ::-1, ::-1], (1, 0, 2, 3))   # (Cout, Cin, K, K)
    y = jax.lax.conv_general_dilated(
        x, wf, window_strides=(1, 1),
        padding=[(K - 1 - pad, K - 1 - pad)] * 2,
        lhs_dilation=(stride, stride),
        dimension_numbers=('NCHW', 'OIHW', 'NCHW'))
    return y + b.reshape(1, cout, 1, 1)


def reference_forward(z, params):
    x = z.reshape(-1, z.shape[-1], 1, 1)
    for i in (1, 2, 3):
        stride, pad = (1, 0) if i == 1 else (2, 1)
        x = _ref_conv_t(x, params[f'w{i}'], params[f'b{i}'], stride, pad)
        mean = jnp.mean(x, axis=(0, 2, 3), keepdims=True)
        var = jnp.mean((x - mean) ** 2, axis=(0, 2, 3), keepdims=True)
        x = (x - mean) * jax.lax.rsqrt(var + EPS)
        x = x * params[f'g{i}'].reshape(1, -1, 1, 1) + params[f'be{i}'].reshape(1, -1, 1, 1)
        x = jnp.maximum(x, 0.0)
    x = _ref_conv_t(x, params['w4'], params['b4'], 2, 1)
    return jax.nn.sigmoid(x)


if __name__ == "__main__":
    latent_dim, img_chans, f_base, Bsz = 16, 3, 8, 2
    key = jax.random.PRNGKey(0)
    kp, kz = jax.random.split(key)
    params = init_params(kp, latent_dim, img_chans, f_base)
    z = jax.random.normal(kz, (Bsz, latent_dim), jnp.float32)

    prep = prepare_params(params, latent_dim, f_base)   # hoisted weight repack
    fwd = jax.jit(dec_cnn_add_oscn_forward)
    out, const = fwd(z, prep)
    out = jax.block_until_ready(out)

    assert out.shape == (Bsz, img_chans, 32, 32), out.shape
    assert float(const) == 0.75

    ref = jax.block_until_ready(reference_forward(z, params))
    # bf16 GEMM operands (f32 accumulation) => slightly looser tolerance.
    np.testing.assert_allclose(np.asarray(out), np.asarray(ref), atol=2e-2, rtol=2e-2)

    print("KERNEL_OK")
</pallas_src>

<mosaic_0001>
module attributes {stable_mosaic.version = 11 : i64} {
  func.func @kernel(%arg0: i32, %arg1: memref<16x2xf32, #tpu.memory_space<vmem>>, %arg2: memref<512x16xbf16, #tpu.memory_space<vmem>>, %arg3: memref<32x1xf32, #tpu.memory_space<vmem>>, %arg4: memref<32x1xf32, #tpu.memory_space<vmem>>, %arg5: memref<32x256xbf16, #tpu.memory_space<vmem>>, %arg6: memref<64x288xbf16, #tpu.memory_space<vmem>>, %arg7: memref<16x1xf32, #tpu.memory_space<vmem>>, %arg8: memref<16x1xf32, #tpu.memory_space<vmem>>, %arg9: memref<1x256xf32, #tpu.memory_space<vmem>>, %arg10: memref<512x128xbf16, #tpu.memory_space<vmem>>, %arg11: memref<32x144xbf16, #tpu.memory_space<vmem>>, %arg12: memref<8x1xf32, #tpu.memory_space<vmem>>, %arg13: memref<8x1xf32, #tpu.memory_space<vmem>>, %arg14: memref<1x256xf32, #tpu.memory_space<vmem>>, %arg15: memref<512x384xbf16, #tpu.memory_space<vmem>>, %arg16: memref<12x72xbf16, #tpu.memory_space<vmem>>, %arg17: memref<3x1xf32, #tpu.memory_space<vmem>>, %arg18: memref<1536x1024xbf16, #tpu.memory_space<vmem>>, %arg19: memref<3x2048xf32, #tpu.memory_space<vmem>>, %arg20: memref<32x512xbf16, #tpu.memory_space<vmem>>, %arg21: memref<16x512xbf16, #tpu.memory_space<vmem>>, %arg22: memref<8x1024xbf16, #tpu.memory_space<vmem>>) attributes {dimension_semantics = [#tpu.dimension_semantics<arbitrary>], iteration_bounds = array<i64: 1>, scalar_prefetch = 0 : i64, scratch_operands = 3 : i64, tpu.core_type = #tpu.core_type<tc>, window_params = [{pipeline_mode = #tpu.pipeline_mode<synchronous>, transform_indices = @transform_0, window_bounds = array<i64: 16, 2>}, {pipeline_mode = #tpu.pipeline_mode<synchronous>, transform_indices = @transform_1, window_bounds = array<i64: 512, 16>}, {pipeline_mode = #tpu.pipeline_mode<synchronous>, transform_indices = @transform_2, window_bounds = array<i64: 32, 1>}, {pipeline_mode = #tpu.pipeline_mode<synchronous>, transform_indices = @transform_3, window_bounds = array<i64: 32, 1>}, {pipeline_mode = #tpu.pipeline_mode<synchronous>, transform_indices = @transform_4, window_bounds = array<i64: 32, 256>}, {pipeline_mode = #tpu.pipeline_mode<synchronous>, transform_indices = @transform_5, window_bounds = array<i64: 64, 288>}, {pipeline_mode = #tpu.pipeline_mode<synchronous>, transform_indices = @transform_6, window_bounds = array<i64: 16, 1>}, {pipeline_mode = #tpu.pipeline_mode<synchronous>, transform_indices = @transform_7, window_bounds = array<i64: 16, 1>}, {pipeline_mode = #tpu.pipeline_mode<synchronous>, transform_indices = @transform_8, window_bounds = array<i64: 1, 256>}, {pipeline_mode = #tpu.pipeline_mode<synchronous>, transform_indices = @transform_9, window_bounds = array<i64: 512, 128>}, {pipeline_mode = #tpu.pipeline_mode<synchronous>, transform_indices = @transform_10, window_bounds = array<i64: 32, 144>}, {pipeline_mode = #tpu.pipeline_mode<synchronous>, transform_indices = @transform_11, window_bounds = array<i64: 8, 1>}, {pipeline_mode = #tpu.pipeline_mode<synchronous>, transform_indices = @transform_12, window_bounds = array<i64: 8, 1>}, {pipeline_mode = #tpu.pipeline_mode<synchronous>, transform_indices = @transform_13, window_bounds = array<i64: 1, 256>}, {pipeline_mode = #tpu.pipeline_mode<synchronous>, transform_indices = @transform_14, window_bounds = array<i64: 512, 384>}, {pipeline_mode = #tpu.pipeline_mode<synchronous>, transform_indices = @transform_15, window_bounds = array<i64: 12, 72>}, {pipeline_mode = #tpu.pipeline_mode<synchronous>, transform_indices = @transform_16, window_bounds = array<i64: 3, 1>}, {pipeline_mode = #tpu.pipeline_mode<synchronous>, transform_indices = @transform_17, window_bounds = array<i64: 1536, 1024>}, {pipeline_mode = #tpu.pipeline_mode<synchronous>, transform_indices = @transform_18, window_bounds = array<i64: 3, 2048>}]} {
    %cst = arith.constant 0.000000e+00 : bf16
    %0 = vector.broadcast %cst : bf16 to vector<32x512xbf16>
    %c0 = arith.constant 0 : index
    %c0_0 = arith.constant 0 : index
    %1 = vector.load %arg20[%c0, %c0_0] : memref<32x512xbf16, #tpu.memory_space<vmem>>, vector<32x512xbf16>
    tpu.vector_store %arg20[%c0, %c0_0], %0 {strides = array<i32>} : memref<32x512xbf16, #tpu.memory_space<vmem>>, vector<32x512xbf16>,
    %cst_1 = arith.constant 0.000000e+00 : bf16
    %2 = vector.broadcast %cst_1 : bf16 to vector<16x512xbf16>
    %c0_2 = arith.constant 0 : index
    %c0_3 = arith.constant 0 : index
    %3 = vector.load %arg21[%c0_2, %c0_3] : memref<16x512xbf16, #tpu.memory_space<vmem>>, vector<16x512xbf16>
    tpu.vector_store %arg21[%c0_2, %c0_3], %2 {strides = array<i32>} : memref<16x512xbf16, #tpu.memory_space<vmem>>, vector<16x512xbf16>,
    %cst_4 = arith.constant 0.000000e+00 : bf16
    %4 = vector.broadcast %cst_4 : bf16 to vector<8x1024xbf16>
    %c0_5 = arith.constant 0 : index
    %c0_6 = arith.constant 0 : index
    %5 = vector.load %arg22[%c0_5, %c0_6] : memref<8x1024xbf16, #tpu.memory_space<vmem>>, vector<8x1024xbf16>
    tpu.vector_store %arg22[%c0_5, %c0_6], %4 {strides = array<i32>} : memref<8x1024xbf16, #tpu.memory_space<vmem>>, vector<8x1024xbf16>,
    %c0_7 = arith.constant 0 : index
    %c0_8 = arith.constant 0 : index
    %6 = vector.load %arg2[%c0_7, %c0_8] : memref<512x16xbf16, #tpu.memory_space<vmem>>, vector<512x16xbf16>
    %c0_9 = arith.constant 0 : index
    %c0_10 = arith.constant 0 : index
    %7 = vector.load %arg1[%c0_9, %c0_10] : memref<16x2xf32, #tpu.memory_space<vmem>>, vector<16x2xf32>
    %8 = arith.truncf %7 : vector<16x2xf32> to vector<16x2xbf16>
    %cst_11 = arith.constant dense<0.000000e+00> : vector<512x2xf32>
    %9 = tpu.matmul %6, %8, %cst_11 {dimension_numbers = #tpu.dot_dimension_numbers<[1], [0], [0], [1], [0, 0, 1, 1], [], []>} : vector<512x16xbf16>, vector<16x2xbf16>, vector<512x2xf32> -> vector<512x2xf32>
    %10 = vector.shape_cast %9 : vector<512x2xf32> to vector<16x32x2xf32>
    %cst_12 = arith.constant dense<0.000000e+00> : vector<16x32xf32>
    %11 = vector.multi_reduction <add>, %10, %cst_12 [2] : vector<16x32x2xf32> to vector<16x32xf32>
    %12 = vector.shape_cast %11 : vector<16x32xf32> to vector<16x32x1xf32>
    %cst_13 = arith.constant dense<0.000000e+00> : vector<32x1xf32>
    %13 = vector.multi_reduction <add>, %12, %cst_13 [0] : vector<16x32x1xf32> to vector<32x1xf32>
    %14 = vector.shape_cast %13 : vector<32x1xf32> to vector<1x32x1xf32>
    %15 = arith.mulf %10, %10 : vector<16x32x2xf32>
    %cst_14 = arith.constant dense<0.000000e+00> : vector<16x32xf32>
    %16 = vector.multi_reduction <add>, %15, %cst_14 [2] : vector<16x32x2xf32> to vector<16x32xf32>
    %17 = vector.shape_cast %16 : vector<16x32xf32> to vector<16x32x1xf32>
    %cst_15 = arith.constant dense<0.000000e+00> : vector<32x1xf32>
    %18 = vector.multi_reduction <add>, %17, %cst_15 [0] : vector<16x32x1xf32> to vector<32x1xf32>
    %19 = vector.shape_cast %18 : vector<32x1xf32> to vector<1x32x1xf32>
    %cst_16 = arith.constant 3.200000e+01 : f32
    %20 = vector.broadcast %cst_16 : f32 to vector<1x32x1xf32>
    %21 = arith.divf %14, %20 : vector<1x32x1xf32>
    %cst_17 = arith.constant 3.200000e+01 : f32
    %22 = vector.broadcast %cst_17 : f32 to vector<1x32x1xf32>
    %23 = arith.divf %19, %22 : vector<1x32x1xf32>
    %24 = arith.mulf %21, %21 : vector<1x32x1xf32>
    %25 = arith.subf %23, %24 : vector<1x32x1xf32>
    %cst_18 = arith.constant 0.000000e+00 : f32
    %26 = vector.broadcast %cst_18 : f32 to vector<1x32x1xf32>
    %27 = arith.maximumf %25, %26 : vector<1x32x1xf32>
    %c0_19 = arith.constant 0 : index
    %c0_20 = arith.constant 0 : index
    %28 = vector.load %arg3[%c0_19, %c0_20] : memref<32x1xf32, #tpu.memory_space<vmem>>, vector<32x1xf32>
    %29 = vector.shape_cast %28 : vector<32x1xf32> to vector<1x32x1xf32>
    %cst_21 = arith.constant 9.99999974E-6 : f32
    %30 = vector.broadcast %cst_21 : f32 to vector<1x32x1xf32>
    %31 = arith.addf %27, %30 : vector<1x32x1xf32>
    %32 = math.rsqrt %31 : vector<1x32x1xf32>
    %33 = arith.mulf %29, %32 : vector<1x32x1xf32>
    %c0_22 = arith.constant 0 : index
    %c0_23 = arith.constant 0 : index
    %34 = vector.load %arg4[%c0_22, %c0_23] : memref<32x1xf32, #tpu.memory_space<vmem>>, vector<32x1xf32>
    %35 = vector.shape_cast %34 : vector<32x1xf32> to vector<1x32x1xf32>
    %36 = arith.mulf %21, %33 : vector<1x32x1xf32>
    %37 = arith.subf %35, %36 : vector<1x32x1xf32>
    %38 = vector.broadcast %33 : vector<1x32x1xf32> to vector<16x32x2xf32>
    %39 = arith.mulf %10, %38 : vector<16x32x2xf32>
    %40 = vector.broadcast %37 : vector<1x32x1xf32> to vector<16x32x2xf32>
    %41 = arith.addf %39, %40 : vector<16x32x2xf32>
    %cst_24 = arith.constant 0.000000e+00 : f32
    %42 = vector.broadcast %cst_24 : f32 to vector<16x32x2xf32>
    %43 = arith.maximumf %41, %42 : vector<16x32x2xf32>
    %44 = vector.extract_strided_slice %43 {offsets = [0, 0, 0], sizes = [1, 32, 2], strides = [1, 1, 1]} : vector<16x32x2xf32> to vector<1x32x2xf32>
    %45 = vector.shape_cast %44 : vector<1x32x2xf32> to vector<32x2xf32>
    %46 = vector.extract_strided_slice %43 {offsets = [1, 0, 0], sizes = [1, 32, 2], strides = [1, 1, 1]} : vector<16x32x2xf32> to vector<1x32x2xf32>
    %47 = vector.shape_cast %46 : vector<1x32x2xf32> to vector<32x2xf32>
    %48 = vector.extract_strided_slice %43 {offsets = [2, 0, 0], sizes = [1, 32, 2], strides = [1, 1, 1]} : vector<16x32x2xf32> to vector<1x32x2xf32>
    %49 = vector.shape_cast %48 : vector<1x32x2xf32> to vector<32x2xf32>
    %50 = vector.extract_strided_slice %43 {offsets = [3, 0, 0], sizes = [1, 32, 2], strides = [1, 1, 1]} : vector<16x32x2xf32> to vector<1x32x2xf32>
    %51 = vector.shape_cast %50 : vector<1x32x2xf32> to vector<32x2xf32>
    %52 = vector.extract_strided_slice %43 {offsets = [4, 0, 0], sizes = [1, 32, 2], strides = [1, 1, 1]} : vector<16x32x2xf32> to vector<1x32x2xf32>
    %53 = vector.shape_cast %52 : vector<1x32x2xf32> to vector<32x2xf32>
    %54 = vector.extract_strided_slice %43 {offsets = [5, 0, 0], sizes = [1, 32, 2], strides = [1, 1, 1]} : vector<16x32x2xf32> to vector<1x32x2xf32>
    %55 = vector.shape_cast %54 : vector<1x32x2xf32> to vector<32x2xf32>
    %56 = vector.extract_strided_slice %43 {offsets = [6, 0, 0], sizes = [1, 32, 2], strides = [1, 1, 1]} : vector<16x32x2xf32> to vector<1x32x2xf32>
    %57 = vector.shape_cast %56 : vector<1x32x2xf32> to vector<32x2xf32>
    %58 = vector.extract_strided_slice %43 {offsets = [7, 0, 0], sizes = [1, 32, 2], strides = [1, 1, 1]} : vector<16x32x2xf32> to vector<1x32x2xf32>
    %59 = vector.shape_cast %58 : vector<1x32x2xf32> to vector<32x2xf32>
    %60 = vector.extract_strided_slice %43 {offsets = [8, 0, 0], sizes = [1, 32, 2], strides = [1, 1, 1]} : vector<16x32x2xf32> to vector<1x32x2xf32>
    %61 = vector.shape_cast %60 : vector<1x32x2xf32> to vector<32x2xf32>
    %62 = vector.extract_strided_slice %43 {offsets = [9, 0, 0], sizes = [1, 32, 2], strides = [1, 1, 1]} : vector<16x32x2xf32> to vector<1x32x2xf32>
    %63 = vector.shape_cast %62 : vector<1x32x2xf32> to vector<32x2xf32>
    %64 = vector.extract_strided_slice %43 {offsets = [10, 0, 0], sizes = [1, 32, 2], strides = [1, 1, 1]} : vector<16x32x2xf32> to vector<1x32x2xf32>
    %65 = vector.shape_cast %64 : vector<1x32x2xf32> to vector<32x2xf32>
    %66 = vector.extract_strided_slice %43 {offsets = [11, 0, 0], sizes = [1, 32, 2], strides = [1, 1, 1]} : vector<16x32x2xf32> to vector<1x32x2xf32>
    %67 = vector.shape_cast %66 : vector<1x32x2xf32> to vector<32x2xf32>
    %68 = vector.extract_strided_slice %43 {offsets = [12, 0, 0], sizes = [1, 32, 2], strides = [1, 1, 1]} : vector<16x32x2xf32> to vector<1x32x2xf32>
    %69 = vector.shape_cast %68 : vector<1x32x2xf32> to vector<32x2xf32>
    %70 = vector.extract_strided_slice %43 {offsets = [13, 0, 0], sizes = [1, 32, 2], strides = [1, 1, 1]} : vector<16x32x2xf32> to vector<1x32x2xf32>
    %71 = vector.shape_cast %70 : vector<1x32x2xf32> to vector<32x2xf32>
    %72 = vector.extract_strided_slice %43 {offsets = [14, 0, 0], sizes = [1, 32, 2], strides = [1, 1, 1]} : vector<16x32x2xf32> to vector<1x32x2xf32>
    %73 = vector.shape_cast %72 : vector<1x32x2xf32> to vector<32x2xf32>
    %74 = vector.extract_strided_slice %43 {offsets = [15, 0, 0], sizes = [1, 32, 2], strides = [1, 1, 1]} : vector<16x32x2xf32> to vector<1x32x2xf32>
    %75 = vector.shape_cast %74 : vector<1x32x2xf32> to vector<32x2xf32>
    %76 = tpu.concatenate %45, %47, %49, %51, %53, %55, %57, %59, %61, %63, %65, %67, %69, %71, %73, %75 in 1 : vector<32x2xf32>, vector<32x2xf32>, vector<32x2xf32>, vector<32x2xf32>, vector<32x2xf32>, vector<32x2xf32>, vector<32x2xf32>, vector<32x2xf32>, vector<32x2xf32>, vector<32x2xf32>, vector<32x2xf32>, vector<32x2xf32>, vector<32x2xf32>, vector<32x2xf32>, vector<32x2xf32>, vector<32x2xf32> -> vector<32x32xf32>
    %77 = arith.truncf %76 : vector<32x32xf32> to vector<32x32xbf16>
    %c0_25 = arith.constant 0 : index
    %c0_26 = arith.constant 0 : index
    %78 = vector.load %arg5[%c0_25, %c0_26] : memref<32x256xbf16, #tpu.memory_space<vmem>>, vector<32x256xbf16>
    %cst_27 = arith.constant dense<0.000000e+00> : vector<32x256xf32>
    %79 = tpu.matmul %77, %78, %cst_27 {dimension_numbers = #tpu.dot_dimension_numbers<[1], [0], [0], [1], [0, 0, 1, 1], [], []>} : vector<32x32xbf16>, vector<32x256xbf16>, vector<32x256xf32> -> vector<32x256xf32>
    %80 = arith.truncf %79 : vector<32x256xf32> to vector<32x256xbf16>
    %c0_28 = arith.constant 0 : index
    %c128 = arith.constant 128 : index
    %81 = vector.load %arg20[%c0_28, %c128] : memref<32x512xbf16, #tpu.memory_space<vmem>>, vector<32x256xbf16>
    tpu.vector_store %arg20[%c0_28, %c128], %80 {strides = array<i32>} : memref<32x512xbf16, #tpu.memory_space<vmem>>, vector<32x256xbf16>,
    %c0_29 = arith.constant 0 : index
    %c121 = arith.constant 121 : index
    %82 = vector.load %arg20[%c0_29, %c121] : memref<32x512xbf16, #tpu.memory_space<vmem>>, vector<32x256xbf16>
    %c0_30 = arith.constant 0 : index
    %c122 = arith.constant 122 : index
    %83 = vector.load %arg20[%c0_30, %c122] : memref<32x512xbf16, #tpu.memory_space<vmem>>, vector<32x256xbf16>
    %c0_31 = arith.constant 0 : index
    %c123 = arith.constant 123 : index
    %84 = vector.load %arg20[%c0_31, %c123] : memref<32x512xbf16, #tpu.memory_space<vmem>>, vector<32x256xbf16>
    %c0_32 = arith.constant 0 : index
    %c127 = arith.constant 127 : index
    %85 = vector.load %arg20[%c0_32, %c127] : memref<32x512xbf16, #tpu.memory_space<vmem>>, vector<32x256xbf16>
    %c0_33 = arith.constant 0 : index
    %c128_34 = arith.constant 128 : index
    %86 = vector.load %arg20[%c0_33, %c128_34] : memref<32x512xbf16, #tpu.memory_space<vmem>>, vector<32x256xbf16>
    %c0_35 = arith.constant 0 : index
    %c129 = arith.constant 129 : index
    %87 = vector.load %arg20[%c0_35, %c129] : memref<32x512xbf16, #tpu.memory_space<vmem>>, vector<32x256xbf16>
    %c0_36 = arith.constant 0 : index
    %c133 = arith.constant 133 : index
    %88 = vector.load %arg20[%c0_36, %c133] : memref<32x512xbf16, #tpu.memory_space<vmem>>, vector<32x256xbf16>
    %c0_37 = arith.constant 0 : index
    %c134 = arith.constant 134 : index
    %89 = vector.load %arg20[%c0_37, %c134] : memref<32x512xbf16, #tpu.memory_space<vmem>>, vector<32x256xbf16>
    %c0_38 = arith.constant 0 : index
    %c135 = arith.constant 135 : index
    %90 = vector.load %arg20[%c0_38, %c135] : memref<32x512xbf16, #tpu.memory_space<vmem>>, vector<32x256xbf16>
    %91 = tpu.concatenate %82, %83, %84, %85, %86, %87, %88, %89, %90 in 0 : vector<32x256xbf16>, vector<32x256xbf16>, vector<32x256xbf16>, vector<32x256xbf16>, vector<32x256xbf16>, vector<32x256xbf16>, vector<32x256xbf16>, vector<32x256xbf16>, vector<32x256xbf16> -> vector<288x256xbf16>
    %c0_39 = arith.constant 0 : index
    %c0_40 = arith.constant 0 : index
    %92 = vector.load %arg6[%c0_39, %c0_40] : memref<64x288xbf16, #tpu.memory_space<vmem>>, vector<64x288xbf16>
    %cst_41 = arith.constant dense<0.000000e+00> : vector<64x256xf32>
    %93 = tpu.matmul %92, %91, %cst_41 {dimension_numbers = #tpu.dot_dimension_numbers<[1], [0], [0], [1], [0, 0, 1, 1], [], []>} : vector<64x288xbf16>, vector<288x256xbf16>, vector<64x256xf32> -> vector<64x256xf32>
    %c0_42 = arith.constant 0 : index
    %c0_43 = arith.constant 0 : index
    %94 = vector.load %arg9[%c0_42, %c0_43] : memref<1x256xf32, #tpu.memory_space<vmem>>, vector<1x256xf32>
    %95 = vector.broadcast %94 : vector<1x256xf32> to vector<64x256xf32>
    %96 = arith.mulf %93, %95 : vector<64x256xf32>
    %cst_44 = arith.constant dense<0.000000e+00> : vector<64xf32>
    %97 = vector.multi_reduction <add>, %96, %cst_44 [1] : vector<64x256xf32> to vector<64xf32>
    %98 = vector.shape_cast %97 : vector<64xf32> to vector<64x1xf32>
    %99 = arith.mulf %96, %93 : vector<64x256xf32>
    %cst_45 = arith.constant dense<0.000000e+00> : vector<64xf32>
    %100 = vector.multi_reduction <add>, %99, %cst_45 [1] : vector<64x256xf32> to vector<64xf32>
    %101 = vector.shape_cast %100 : vector<64xf32> to vector<64x1xf32>
    %102 = vector.extract_strided_slice %98 {offsets = [0, 0], sizes = [16, 1], strides = [1, 1]} : vector<64x1xf32> to vector<16x1xf32>
    %103 = vector.extract_strided_slice %98 {offsets = [16, 0], sizes = [16, 1], strides = [1, 1]} : vector<64x1xf32> to vector<16x1xf32>
    %104 = arith.addf %102, %103 : vector<16x1xf32>
    %105 = vector.extract_strided_slice %98 {offsets = [32, 0], sizes = [16, 1], strides = [1, 1]} : vector<64x1xf32> to vector<16x1xf32>
    %106 = arith.addf %104, %105 : vector<16x1xf32>
    %107 = vector.extract_strided_slice %98 {offsets = [48, 0], sizes = [16, 1], strides = [1, 1]} : vector<64x1xf32> to vector<16x1xf32>
    %108 = arith.addf %106, %107 : vector<16x1xf32>
    %109 = vector.extract_strided_slice %101 {offsets = [0, 0], sizes = [16, 1], strides = [1, 1]} : vector<64x1xf32> to vector<16x1xf32>
    %110 = vector.extract_strided_slice %101 {offsets = [16, 0], sizes = [16, 1], strides = [1, 1]} : vector<64x1xf32> to vector<16x1xf32>
    %111 = arith.addf %109, %110 : vector<16x1xf32>
    %112 = vector.extract_strided_slice %101 {offsets = [32, 0], sizes = [16, 1], strides = [1, 1]} : vector<64x1xf32> to vector<16x1xf32>
    %113 = arith.addf %111, %112 : vector<16x1xf32>
    %114 = vector.extract_strided_slice %101 {offsets = [48, 0], sizes = [16, 1], strides = [1, 1]} : vector<64x1xf32> to vector<16x1xf32>
    %115 = arith.addf %113, %114 : vector<16x1xf32>
    %cst_46 = arith.constant 1.280000e+02 : f32
    %116 = vector.broadcast %cst_46 : f32 to vector<16x1xf32>
    %117 = arith.divf %108, %116 : vector<16x1xf32>
    %cst_47 = arith.constant 1.280000e+02 : f32
    %118 = vector.broadcast %cst_47 : f32 to vector<16x1xf32>
    %119 = arith.divf %115, %118 : vector<16x1xf32>
    %120 = arith.mulf %117, %117 : vector<16x1xf32>
    %121 = arith.subf %119, %120 : vector<16x1xf32>
    %cst_48 = arith.constant 0.000000e+00 : f32
    %122 = vector.broadcast %cst_48 : f32 to vector<16x1xf32>
    %123 = arith.maximumf %121, %122 : vector<16x1xf32>
    %c0_49 = arith.constant 0 : index
    %c0_50 = arith.constant 0 : index
    %124 = vector.load %arg7[%c0_49, %c0_50] : memref<16x1xf32, #tpu.memory_space<vmem>>, vector<16x1xf32>
    %cst_51 = arith.constant 9.99999974E-6 : f32
    %125 = vector.broadcast %cst_51 : f32 to vector<16x1xf32>
    %126 = arith.addf %123, %125 : vector<16x1xf32>
    %127 = math.rsqrt %126 : vector<16x1xf32>
    %128 = arith.mulf %124, %127 : vector<16x1xf32>
    %c0_52 = arith.constant 0 : index
    %c0_53 = arith.constant 0 : index
    %129 = vector.load %arg8[%c0_52, %c0_53] : memref<16x1xf32, #tpu.memory_space<vmem>>, vector<16x1xf32>
    %130 = arith.mulf %117, %128 : vector<16x1xf32>
    %131 = arith.subf %129, %130 : vector<16x1xf32>
    %132 = vector.extract_strided_slice %93 {offsets = [0, 0], sizes = [16, 256], strides = [1, 1]} : vector<64x256xf32> to vector<16x256xf32>
    %133 = vector.broadcast %128 : vector<16x1xf32> to vector<16x256xf32>
    %134 = arith.mulf %132, %133 : vector<16x256xf32>
    %135 = vector.broadcast %131 : vector<16x1xf32> to vector<16x256xf32>
    %136 = arith.addf %134, %135 : vector<16x256xf32>
    %cst_54 = arith.constant 0.000000e+00 : f32
    %137 = vector.broadcast %cst_54 : f32 to vector<16x256xf32>
    %138 = arith.maximumf %136, %137 : vector<16x256xf32>
    %139 = vector.shape_cast %138 : vector<16x256xf32> to vector<32x128xf32>
    %140 = arith.truncf %139 : vector<32x128xf32> to vector<32x128xbf16>
    %141 = vector.extract_strided_slice %93 {offsets = [16, 0], sizes = [16, 256], strides = [1, 1]} : vector<64x256xf32> to vector<16x256xf32>
    %142 = vector.broadcast %128 : vector<16x1xf32> to vector<16x256xf32>
    %143 = arith.mulf %141, %142 : vector<16x256xf32>
    %144 = vector.broadcast %131 : vector<16x1xf32> to vector<16x256xf32>
    %145 = arith.addf %143, %144 : vector<16x256xf32>
    %cst_55 = arith.constant 0.000000e+00 : f32
    %146 = vector.broadcast %cst_55 : f32 to vector<16x256xf32>
    %147 = arith.maximumf %145, %146 : vector<16x256xf32>
    %148 = vector.shape_cast %147 : vector<16x256xf32> to vector<32x128xf32>
    %149 = arith.truncf %148 : vector<32x128xf32> to vector<32x128xbf16>
    %150 = vector.extract_strided_slice %93 {offsets = [32, 0], sizes = [16, 256], strides = [1, 1]} : vector<64x256xf32> to vector<16x256xf32>
    %151 = vector.broadcast %128 : vector<16x1xf32> to vector<16x256xf32>
    %152 = arith.mulf %150, %151 : vector<16x256xf32>
    %153 = vector.broadcast %131 : vector<16x1xf32> to vector<16x256xf32>
    %154 = arith.addf %152, %153 : vector<16x256xf32>
    %cst_56 = arith.constant 0.000000e+00 : f32
    %155 = vector.broadcast %cst_56 : f32 to vector<16x256xf32>
    %156 = arith.maximumf %154, %155 : vector<16x256xf32>
    %157 = vector.shape_cast %156 : vector<16x256xf32> to vector<32x128xf32>
    %158 = arith.truncf %157 : vector<32x128xf32> to vector<32x128xbf16>
    %159 = vector.extract_strided_slice %93 {offsets = [48, 0], sizes = [16, 256], strides = [1, 1]} : vector<64x256xf32> to vector<16x256xf32>
    %160 = vector.broadcast %128 : vector<16x1xf32> to vector<16x256xf32>
    %161 = arith.mulf %159, %160 : vector<16x256xf32>
    %162 = vector.broadcast %131 : vector<16x1xf32> to vector<16x256xf32>
    %163 = arith.addf %161, %162 : vector<16x256xf32>
    %cst_57 = arith.constant 0.000000e+00 : f32
    %164 = vector.broadcast %cst_57 : f32 to vector<16x256xf32>
    %165 = arith.maximumf %163, %164 : vector<16x256xf32>
    %166 = vector.shape_cast %165 : vector<16x256xf32> to vector<32x128xf32>
    %167 = arith.truncf %166 : vector<32x128xf32> to vector<32x128xbf16>
    %168 = tpu.concatenate %140, %149, %158, %167 in 1 : vector<32x128xbf16>, vector<32x128xbf16>, vector<32x128xbf16>, vector<32x128xbf16> -> vector<32x512xbf16>
    %c0_58 = arith.constant 0 : index
    %c0_59 = arith.constant 0 : index
    %169 = vector.load %arg10[%c0_58, %c0_59] : memref<512x128xbf16, #tpu.memory_space<vmem>>, vector<512x128xbf16>
    %cst_60 = arith.constant dense<0.000000e+00> : vector<32x128xf32>
    %170 = tpu.matmul %168, %169, %cst_60 {dimension_numbers = #tpu.dot_dimension_numbers<[1], [0], [0], [1], [0, 0, 1, 1], [], []>} : vector<32x512xbf16>, vector<512x128xbf16>, vector<32x128xf32> -> vector<32x128xf32>
    %171 = vector.shape_cast %170 : vector<32x128xf32> to vector<16x256xf32>
    %172 = arith.truncf %171 : vector<16x256xf32> to vector<16x256xbf16>
    %c0_61 = arith.constant 0 : index
    %c128_62 = arith.constant 128 : index
    %173 = vector.load %arg21[%c0_61, %c128_62] : memref<16x512xbf16, #tpu.memory_space<vmem>>, vector<16x256xbf16>
    tpu.vector_store %arg21[%c0_61, %c128_62], %172 {strides = array<i32>} : memref<16x512xbf16, #tpu.memory_space<vmem>>, vector<16x256xbf16>,
    %c0_63 = arith.constant 0 : index
    %c117 = arith.constant 117 : index
    %174 = vector.load %arg21[%c0_63, %c117] : memref<16x512xbf16, #tpu.memory_space<vmem>>, vector<16x256xbf16>
    %c0_64 = arith.constant 0 : index
    %c118 = arith.constant 118 : index
    %175 = vector.load %arg21[%c0_64, %c118] : memref<16x512xbf16, #tpu.memory_space<vmem>>, vector<16x256xbf16>
    %c0_65 = arith.constant 0 : index
    %c119 = arith.constant 119 : index
    %176 = vector.load %arg21[%c0_65, %c119] : memref<16x512xbf16, #tpu.memory_space<vmem>>, vector<16x256xbf16>
    %c0_66 = arith.constant 0 : index
    %c127_67 = arith.constant 127 : index
    %177 = vector.load %arg21[%c0_66, %c127_67] : memref<16x512xbf16, #tpu.memory_space<vmem>>, vector<16x256xbf16>
    %c0_68 = arith.constant 0 : index
    %c128_69 = arith.constant 128 : index
    %178 = vector.load %arg21[%c0_68, %c128_69] : memref<16x512xbf16, #tpu.memory_space<vmem>>, vector<16x256xbf16>
    %c0_70 = arith.constant 0 : index
    %c129_71 = arith.constant 129 : index
    %179 = vector.load %arg21[%c0_70, %c129_71] : memref<16x512xbf16, #tpu.memory_space<vmem>>, vector<16x256xbf16>
    %c0_72 = arith.constant 0 : index
    %c137 = arith.constant 137 : index
    %180 = vector.load %arg21[%c0_72, %c137] : memref<16x512xbf16, #tpu.memory_space<vmem>>, vector<16x256xbf16>
    %c0_73 = arith.constant 0 : index
    %c138 = arith.constant 138 : index
    %181 = vector.load %arg21[%c0_73, %c138] : memref<16x512xbf16, #tpu.memory_space<vmem>>, vector<16x256xbf16>
    %c0_74 = arith.constant 0 : index
    %c139 = arith.constant 139 : index
    %182 = vector.load %arg21[%c0_74, %c139] : memref<16x512xbf16, #tpu.memory_space<vmem>>, vector<16x256xbf16>
    %183 = tpu.concatenate %174, %175, %176, %177, %178, %179, %180, %181, %182 in 0 : vector<16x256xbf16>, vector<16x256xbf16>, vector<16x256xbf16>, vector<16x256xbf16>, vector<16x256xbf16>, vector<16x256xbf16>, vector<16x256xbf16>, vector<16x256xbf16>, vector<16x256xbf16> -> vector<144x256xbf16>
    %c0_75 = arith.constant 0 : index
    %c0_76 = arith.constant 0 : index
    %184 = vector.load %arg11[%c0_75, %c0_76] : memref<32x144xbf16, #tpu.memory_space<vmem>>, vector<32x144xbf16>
    %cst_77 = arith.constant dense<0.000000e+00> : vector<32x256xf32>
    %185 = tpu.matmul %184, %183, %cst_77 {dimension_numbers = #tpu.dot_dimension_numbers<[1], [0], [0], [1], [0, 0, 1, 1], [], []>} : vector<32x144xbf16>, vector<144x256xbf16>, vector<32x256xf32> -> vector<32x256xf32>
    %c0_78 = arith.constant 0 : index
    %c0_79 = arith.constant 0 : index
    %186 = vector.load %arg14[%c0_78, %c0_79] : memref<1x256xf32, #tpu.memory_space<vmem>>, vector<1x256xf32>
    %187 = vector.broadcast %186 : vector<1x256xf32> to vector<32x256xf32>
    %188 = arith.mulf %185, %187 : vector<32x256xf32>
    %cst_80 = arith.constant dense<0.000000e+00> : vector<32xf32>
    %189 = vector.multi_reduction <add>, %188, %cst_80 [1] : vector<32x256xf32> to vector<32xf32>
    %190 = vector.shape_cast %189 : vector<32xf32> to vector<32x1xf32>
    %191 = arith.mulf %188, %185 : vector<32x256xf32>
    %cst_81 = arith.constant dense<0.000000e+00> : vector<32xf32>
    %192 = vector.multi_reduction <add>, %191, %cst_81 [1] : vector<32x256xf32> to vector<32xf32>
    %193 = vector.shape_cast %192 : vector<32xf32> to vector<32x1xf32>
    %194 = vector.extract_strided_slice %190 {offsets = [0, 0], sizes = [8, 1], strides = [1, 1]} : vector<32x1xf32> to vector<8x1xf32>
    %195 = vector.extract_strided_slice %190 {offsets = [8, 0], sizes = [8, 1], strides = [1, 1]} : vector<32x1xf32> to vector<8x1xf32>
    %196 = arith.addf %194, %195 : vector<8x1xf32>
    %197 = vector.extract_strided_slice %190 {offsets = [16, 0], sizes = [8, 1], strides = [1, 1]} : vector<32x1xf32> to vector<8x1xf32>
    %198 = arith.addf %196, %197 : vector<8x1xf32>
    %199 = vector.extract_strided_slice %190 {offsets = [24, 0], sizes = [8, 1], strides = [1, 1]} : vector<32x1xf32> to vector<8x1xf32>
    %200 = arith.addf %198, %199 : vector<8x1xf32>
    %201 = vector.extract_strided_slice %193 {offsets = [0, 0], sizes = [8, 1], strides = [1, 1]} : vector<32x1xf32> to vector<8x1xf32>
    %202 = vector.extract_strided_slice %193 {offsets = [8, 0], sizes = [8, 1], strides = [1, 1]} : vector<32x1xf32> to vector<8x1xf32>
    %203 = arith.addf %201, %202 : vector<8x1xf32>
    %204 = vector.extract_strided_slice %193 {offsets = [16, 0], sizes = [8, 1], strides = [1, 1]} : vector<32x1xf32> to vector<8x1xf32>
    %205 = arith.addf %203, %204 : vector<8x1xf32>
    %206 = vector.extract_strided_slice %193 {offsets = [24, 0], sizes = [8, 1], strides = [1, 1]} : vector<32x1xf32> to vector<8x1xf32>
    %207 = arith.addf %205, %206 : vector<8x1xf32>
    %cst_82 = arith.constant 5.120000e+02 : f32
    %208 = vector.broadcast %cst_82 : f32 to vector<8x1xf32>
    %209 = arith.divf %200, %208 : vector<8x1xf32>
    %cst_83 = arith.constant 5.120000e+02 : f32
    %210 = vector.broadcast %cst_83 : f32 to vector<8x1xf32>
    %211 = arith.divf %207, %210 : vector<8x1xf32>
    %212 = arith.mulf %209, %209 : vector<8x1xf32>
    %213 = arith.subf %211, %212 : vector<8x1xf32>
    %cst_84 = arith.constant 0.000000e+00 : f32
    %214 = vector.broadcast %cst_84 : f32 to vector<8x1xf32>
    %215 = arith.maximumf %213, %214 : vector<8x1xf32>
    %c0_85 = arith.constant 0 : index
    %c0_86 = arith.constant 0 : index
    %216 = vector.load %arg12[%c0_85, %c0_86] : memref<8x1xf32, #tpu.memory_space<vmem>>, vector<8x1xf32>
    %cst_87 = arith.constant 9.99999974E-6 : f32
    %217 = vector.broadcast %cst_87 : f32 to vector<8x1xf32>
    %218 = arith.addf %215, %217 : vector<8x1xf32>
    %219 = math.rsqrt %218 : vector<8x1xf32>
    %220 = arith.mulf %216, %219 : vector<8x1xf32>
    %c0_88 = arith.constant 0 : index
    %c0_89 = arith.constant 0 : index
    %221 = vector.load %arg13[%c0_88, %c0_89] : memref<8x1xf32, #tpu.memory_space<vmem>>, vector<8x1xf32>
    %222 = arith.mulf %209, %220 : vector<8x1xf32>
    %223 = arith.subf %221, %222 : vector<8x1xf32>
    %224 = vector.extract_strided_slice %185 {offsets = [0, 0], sizes = [8, 256], strides = [1, 1]} : vector<32x256xf32> to vector<8x256xf32>
    %225 = vector.broadcast %220 : vector<8x1xf32> to vector<8x256xf32>
    %226 = arith.mulf %224, %225 : vector<8x256xf32>
    %227 = vector.broadcast %223 : vector<8x1xf32> to vector<8x256xf32>
    %228 = arith.addf %226, %227 : vector<8x256xf32>
    %cst_90 = arith.constant 0.000000e+00 : f32
    %229 = vector.broadcast %cst_90 : f32 to vector<8x256xf32>
    %230 = arith.maximumf %228, %229 : vector<8x256xf32>
    %231 = vector.shape_cast %230 : vector<8x256xf32> to vector<16x128xf32>
    %232 = arith.truncf %231 : vector<16x128xf32> to vector<16x128xbf16>
    %233 = vector.extract_strided_slice %185 {offsets = [8, 0], sizes = [8, 256], strides = [1, 1]} : vector<32x256xf32> to vector<8x256xf32>
    %234 = vector.broadcast %220 : vector<8x1xf32> to vector<8x256xf32>
    %235 = arith.mulf %233, %234 : vector<8x256xf32>
    %236 = vector.broadcast %223 : vector<8x1xf32> to vector<8x256xf32>
    %237 = arith.addf %235, %236 : vector<8x256xf32>
    %cst_91 = arith.constant 0.000000e+00 : f32
    %238 = vector.broadcast %cst_91 : f32 to vector<8x256xf32>
    %239 = arith.maximumf %237, %238 : vector<8x256xf32>
    %240 = vector.shape_cast %239 : vector<8x256xf32> to vector<16x128xf32>
    %241 = arith.truncf %240 : vector<16x128xf32> to vector<16x128xbf16>
    %242 = vector.extract_strided_slice %185 {offsets = [16, 0], sizes = [8, 256], strides = [1, 1]} : vector<32x256xf32> to vector<8x256xf32>
    %243 = vector.broadcast %220 : vector<8x1xf32> to vector<8x256xf32>
    %244 = arith.mulf %242, %243 : vector<8x256xf32>
    %245 = vector.broadcast %223 : vector<8x1xf32> to vector<8x256xf32>
    %246 = arith.addf %244, %245 : vector<8x256xf32>
    %cst_92 = arith.constant 0.000000e+00 : f32
    %247 = vector.broadcast %cst_92 : f32 to vector<8x256xf32>
    %248 = arith.maximumf %246, %247 : vector<8x256xf32>
    %249 = vector.shape_cast %248 : vector<8x256xf32> to vector<16x128xf32>
    %250 = arith.truncf %249 : vector<16x128xf32> to vector<16x128xbf16>
    %251 = vector.extract_strided_slice %185 {offsets = [24, 0], sizes = [8, 256], strides = [1, 1]} : vector<32x256xf32> to vector<8x256xf32>
    %252 = vector.broadcast %220 : vector<8x1xf32> to vector<8x256xf32>
    %253 = arith.mulf %251, %252 : vector<8x256xf32>
    %254 = vector.broadcast %223 : vector<8x1xf32> to vector<8x256xf32>
    %255 = arith.addf %253, %254 : vector<8x256xf32>
    %cst_93 = arith.constant 0.000000e+00 : f32
    %256 = vector.broadcast %cst_93 : f32 to vector<8x256xf32>
    %257 = arith.maximumf %255, %256 : vector<8x256xf32>
    %258 = vector.shape_cast %257 : vector<8x256xf32> to vector<16x128xf32>
    %259 = arith.truncf %258 : vector<16x128xf32> to vector<16x128xbf16>
    %260 = tpu.concatenate %232, %241, %250, %259 in 1 : vector<16x128xbf16>, vector<16x128xbf16>, vector<16x128xbf16>, vector<16x128xbf16> -> vector<16x512xbf16>
    %c0_94 = arith.constant 0 : index
    %c0_95 = arith.constant 0 : index
    %261 = vector.load %arg15[%c0_94, %c0_95] : memref<512x384xbf16, #tpu.memory_space<vmem>>, vector<512x384xbf16>
    %cst_96 = arith.constant dense<0.000000e+00> : vector<16x384xf32>
    %262 = tpu.matmul %260, %261, %cst_96 {dimension_numbers = #tpu.dot_dimension_numbers<[1], [0], [0], [1], [0, 0, 1, 1], [], []>} : vector<16x512xbf16>, vector<512x384xbf16>, vector<16x384xf32> -> vector<16x384xf32>
    %263 = vector.shape_cast %262 : vector<16x384xf32> to vector<8x768xf32>
    %264 = arith.truncf %263 : vector<8x768xf32> to vector<8x768xbf16>
    %c0_97 = arith.constant 0 : index
    %c128_98 = arith.constant 128 : index
    %265 = vector.load %arg22[%c0_97, %c128_98] : memref<8x1024xbf16, #tpu.memory_space<vmem>>, vector<8x768xbf16>
    tpu.vector_store %arg22[%c0_97, %c128_98], %264 {strides = array<i32>} : memref<8x1024xbf16, #tpu.memory_space<vmem>>, vector<8x768xbf16>,
    %c0_99 = arith.constant 0 : index
    %c109 = arith.constant 109 : index
    %266 = vector.load %arg22[%c0_99, %c109] : memref<8x1024xbf16, #tpu.memory_space<vmem>>, vector<8x768xbf16>
    %c0_100 = arith.constant 0 : index
    %c110 = arith.constant 110 : index
    %267 = vector.load %arg22[%c0_100, %c110] : memref<8x1024xbf16, #tpu.memory_space<vmem>>, vector<8x768xbf16>
    %c0_101 = arith.constant 0 : index
    %c111 = arith.constant 111 : index
    %268 = vector.load %arg22[%c0_101, %c111] : memref<8x1024xbf16, #tpu.memory_space<vmem>>, vector<8x768xbf16>
    %c0_102 = arith.constant 0 : index
    %c127_103 = arith.constant 127 : index
    %269 = vector.load %arg22[%c0_102, %c127_103] : memref<8x1024xbf16, #tpu.memory_space<vmem>>, vector<8x768xbf16>
    %c0_104 = arith.constant 0 : index
    %c128_105 = arith.constant 128 : index
    %270 = vector.load %arg22[%c0_104, %c128_105] : memref<8x1024xbf16, #tpu.memory_space<vmem>>, vector<8x768xbf16>
    %c0_106 = arith.constant 0 : index
    %c129_107 = arith.constant 129 : index
    %271 = vector.load %arg22[%c0_106, %c129_107] : memref<8x1024xbf16, #tpu.memory_space<vmem>>, vector<8x768xbf16>
    %c0_108 = arith.constant 0 : index
    %c145 = arith.constant 145 : index
    %272 = vector.load %arg22[%c0_108, %c145] : memref<8x1024xbf16, #tpu.memory_space<vmem>>, vector<8x768xbf16>
    %c0_109 = arith.constant 0 : index
    %c146 = arith.constant 146 : index
    %273 = vector.load %arg22[%c0_109, %c146] : memref<8x1024xbf16, #tpu.memory_space<vmem>>, vector<8x768xbf16>
    %c0_110 = arith.constant 0 : index
    %c147 = arith.constant 147 : index
    %274 = vector.load %arg22[%c0_110, %c147] : memref<8x1024xbf16, #tpu.memory_space<vmem>>, vector<8x768xbf16>
    %275 = tpu.concatenate %266, %267, %268, %269, %270, %271, %272, %273, %274 in 0 : vector<8x768xbf16>, vector<8x768xbf16>, vector<8x768xbf16>, vector<8x768xbf16>, vector<8x768xbf16>, vector<8x768xbf16>, vector<8x768xbf16>, vector<8x768xbf16>, vector<8x768xbf16> -> vector<72x768xbf16>
    %c0_111 = arith.constant 0 : index
    %c0_112 = arith.constant 0 : index
    %276 = vector.load %arg16[%c0_111, %c0_112] : memref<12x72xbf16, #tpu.memory_space<vmem>>, vector<12x72xbf16>
    %cst_113 = arith.constant dense<0.000000e+00> : vector<12x768xf32>
    %277 = tpu.matmul %276, %275, %cst_113 {dimension_numbers = #tpu.dot_dimension_numbers<[1], [0], [0], [1], [0, 0, 1, 1], [], []>} : vector<12x72xbf16>, vector<72x768xbf16>, vector<12x768xf32> -> vector<12x768xf32>
    %278 = vector.extract_strided_slice %277 {offsets = [0, 0], sizes = [3, 768], strides = [1, 1]} : vector<12x768xf32> to vector<3x768xf32>
    %c0_114 = arith.constant 0 : index
    %c0_115 = arith.constant 0 : index
    %279 = vector.load %arg17[%c0_114, %c0_115] : memref<3x1xf32, #tpu.memory_space<vmem>>, vector<3x1xf32>
    %280 = vector.broadcast %279 : vector<3x1xf32> to vector<3x768xf32>
    %281 = arith.addf %278, %280 : vector<3x768xf32>
    %282 = vector.shape_cast %281 : vector<3x768xf32> to vector<6x384xf32>
    %283 = arith.truncf %282 : vector<6x384xf32> to vector<6x384xbf16>
    %284 = vector.extract_strided_slice %277 {offsets = [3, 0], sizes = [3, 768], strides = [1, 1]} : vector<12x768xf32> to vector<3x768xf32>
    %c0_116 = arith.constant 0 : index
    %c0_117 = arith.constant 0 : index
    %285 = vector.load %arg17[%c0_116, %c0_117] : memref<3x1xf32, #tpu.memory_space<vmem>>, vector<3x1xf32>
    %286 = vector.broadcast %285 : vector<3x1xf32> to vector<3x768xf32>
    %287 = arith.addf %284, %286 : vector<3x768xf32>
    %288 = vector.shape_cast %287 : vector<3x768xf32> to vector<6x384xf32>
    %289 = arith.truncf %288 : vector<6x384xf32> to vector<6x384xbf16>
    %290 = vector.extract_strided_slice %277 {offsets = [6, 0], sizes = [3, 768], strides = [1, 1]} : vector<12x768xf32> to vector<3x768xf32>
    %c0_118 = arith.constant 0 : index
    %c0_119 = arith.constant 0 : index
    %291 = vector.load %arg17[%c0_118, %c0_119] : memref<3x1xf32, #tpu.memory_space<vmem>>, vector<3x1xf32>
    %292 = vector.broadcast %291 : vector<3x1xf32> to vector<3x768xf32>
    %293 = arith.addf %290, %292 : vector<3x768xf32>
    %294 = vector.shape_cast %293 : vector<3x768xf32> to vector<6x384xf32>
    %295 = arith.truncf %294 : vector<6x384xf32> to vector<6x384xbf16>
    %296 = vector.extract_strided_slice %277 {offsets = [9, 0], sizes = [3, 768], strides = [1, 1]} : vector<12x768xf32> to vector<3x768xf32>
    %c0_120 = arith.constant 0 : index
    %c0_121 = arith.constant 0 : index
    %297 = vector.load %arg17[%c0_120, %c0_121] : memref<3x1xf32, #tpu.memory_space<vmem>>, vector<3x1xf32>
    %298 = vector.broadcast %297 : vector<3x1xf32> to vector<3x768xf32>
    %299 = arith.addf %296, %298 : vector<3x768xf32>
    %300 = vector.shape_cast %299 : vector<3x768xf32> to vector<6x384xf32>
    %301 = arith.truncf %300 : vector<6x384xf32> to vector<6x384xbf16>
    %302 = tpu.concatenate %283, %289, %295, %301 in 1 : vector<6x384xbf16>, vector<6x384xbf16>, vector<6x384xbf16>, vector<6x384xbf16> -> vector<6x1536xbf16>
    %c0_122 = arith.constant 0 : index
    %c0_123 = arith.constant 0 : index
    %303 = vector.load %arg18[%c0_122, %c0_123] : memref<1536x1024xbf16, #tpu.memory_space<vmem>>, vector<1536x1024xbf16>
    %cst_124 = arith.constant dense<0.000000e+00> : vector<6x1024xf32>
    %304 = tpu.matmul %302, %303, %cst_124 {dimension_numbers = #tpu.dot_dimension_numbers<[1], [0], [0], [1], [0, 0, 1, 1], [], []>} : vector<6x1536xbf16>, vector<1536x1024xbf16>, vector<6x1024xf32> -> vector<6x1024xf32>
    %305 = vector.shape_cast %304 : vector<6x1024xf32> to vector<3x2048xf32>
    %306 = arith.negf %305 : vector<3x2048xf32>
    %307 = math.exp %306 : vector<3x2048xf32>
    %cst_125 = arith.constant 1.000000e+00 : f32
    %308 = vector.broadcast %cst_125 : f32 to vector<3x2048xf32>
    %309 = arith.addf %308, %307 : vector<3x2048xf32>
    %310 = arith.divf %308, %309 : vector<3x2048xf32>
    %c0_126 = arith.constant 0 : index
    %c0_127 = arith.constant 0 : index
    %311 = vector.load %arg19[%c0_126, %c0_127] : memref<3x2048xf32, #tpu.memory_space<vmem>>, vector<3x2048xf32>
    tpu.vector_store %arg19[%c0_126, %c0_127], %310 {strides = array<i32>} : memref<3x2048xf32, #tpu.memory_space<vmem>>, vector<3x2048xf32>,
    return
  }
  func.func @transform_0(%arg0: i32) -> (i32, i32) {
    %c0_i32 = arith.constant 0 : i32
    %c0_i32_0 = arith.constant 0 : i32
    %c0_i32_1 = arith.constant 0 : i32
    return %c0_i32, %c0_i32_0 : i32, i32
  }
  func.func @transform_1(%arg0: i32) -> (i32, i32) {
    %c0_i32 = arith.constant 0 : i32
    %c0_i32_0 = arith.constant 0 : i32
    %c0_i32_1 = arith.constant 0 : i32
    return %c0_i32, %c0_i32_0 : i32, i32
  }
  func.func @transform_2(%arg0: i32) -> (i32, i32) {
    %c0_i32 = arith.constant 0 : i32
    %c0_i32_0 = arith.constant 0 : i32
    %c0_i32_1 = arith.constant 0 : i32
    return %c0_i32, %c0_i32_0 : i32, i32
  }
  func.func @transform_3(%arg0: i32) -> (i32, i32) {
    %c0_i32 = arith.constant 0 : i32
    %c0_i32_0 = arith.constant 0 : i32
    %c0_i32_1 = arith.constant 0 : i32
    return %c0_i32, %c0_i32_0 : i32, i32
  }
  func.func @transform_4(%arg0: i32) -> (i32, i32) {
    %c0_i32 = arith.constant 0 : i32
    %c0_i32_0 = arith.constant 0 : i32
    %c0_i32_1 = arith.constant 0 : i32
    return %c0_i32, %c0_i32_0 : i32, i32
  }
  func.func @transform_5(%arg0: i32) -> (i32, i32) {
    %c0_i32 = arith.constant 0 : i32
    %c0_i32_0 = arith.constant 0 : i32
    %c0_i32_1 = arith.constant 0 : i32
    return %c0_i32, %c0_i32_0 : i32, i32
  }
  func.func @transform_6(%arg0: i32) -> (i32, i32) {
    %c0_i32 = arith.constant 0 : i32
    %c0_i32_0 = arith.constant 0 : i32
    %c0_i32_1 = arith.constant 0 : i32
    return %c0_i32, %c0_i32_0 : i32, i32
  }
  func.func @transform_7(%arg0: i32) -> (i32, i32) {
    %c0_i32 = arith.constant 0 : i32
    %c0_i32_0 = arith.constant 0 : i32
    %c0_i32_1 = arith.constant 0 : i32
    return %c0_i32, %c0_i32_0 : i32, i32
  }
  func.func @transform_8(%arg0: i32) -> (i32, i32) {
    %c0_i32 = arith.constant 0 : i32
    %c0_i32_0 = arith.constant 0 : i32
    %c0_i32_1 = arith.constant 0 : i32
    return %c0_i32, %c0_i32_0 : i32, i32
  }
  func.func @transform_9(%arg0: i32) -> (i32, i32) {
    %c0_i32 = arith.constant 0 : i32
    %c0_i32_0 = arith.constant 0 : i32
    %c0_i32_1 = arith.constant 0 : i32
    return %c0_i32, %c0_i32_0 : i32, i32
  }
  func.func @transform_10(%arg0: i32) -> (i32, i32) {
    %c0_i32 = arith.constant 0 : i32
    %c0_i32_0 = arith.constant 0 : i32
    %c0_i32_1 = arith.constant 0 : i32
    return %c0_i32, %c0_i32_0 : i32, i32
  }
  func.func @transform_11(%arg0: i32) -> (i32, i32) {
    %c0_i32 = arith.constant 0 : i32
    %c0_i32_0 = arith.constant 0 : i32
    %c0_i32_1 = arith.constant 0 : i32
    return %c0_i32, %c0_i32_0 : i32, i32
  }
  func.func @transform_12(%arg0: i32) -> (i32, i32) {
    %c0_i32 = arith.constant 0 : i32
    %c0_i32_0 = arith.constant 0 : i32
    %c0_i32_1 = arith.constant 0 : i32
    return %c0_i32, %c0_i32_0 : i32, i32
  }
  func.func @transform_13(%arg0: i32) -> (i32, i32) {
    %c0_i32 = arith.constant 0 : i32
    %c0_i32_0 = arith.constant 0 : i32
    %c0_i32_1 = arith.constant 0 : i32
    return %c0_i32, %c0_i32_0 : i32, i32
  }
  func.func @transform_14(%arg0: i32) -> (i32, i32) {
    %c0_i32 = arith.constant 0 : i32
    %c0_i32_0 = arith.constant 0 : i32
    %c0_i32_1 = arith.constant 0 : i32
    return %c0_i32, %c0_i32_0 : i32, i32
  }
  func.func @transform_15(%arg0: i32) -> (i32, i32) {
    %c0_i32 = arith.constant 0 : i32
    %c0_i32_0 = arith.constant 0 : i32
    %c0_i32_1 = arith.constant 0 : i32
    return %c0_i32, %c0_i32_0 : i32, i32
  }
  func.func @transform_16(%arg0: i32) -> (i32, i32) {
    %c0_i32 = arith.constant 0 : i32
    %c0_i32_0 = arith.constant 0 : i32
    %c0_i32_1 = arith.constant 0 : i32
    return %c0_i32, %c0_i32_0 : i32, i32
  }
  func.func @transform_17(%arg0: i32) -> (i32, i32) {
    %c0_i32 = arith.constant 0 : i32
    %c0_i32_0 = arith.constant 0 : i32
    %c0_i32_1 = arith.constant 0 : i32
    return %c0_i32, %c0_i32_0 : i32, i32
  }
  func.func @transform_18(%arg0: i32) -> (i32, i32) {
    %c0_i32 = arith.constant 0 : i32
    %c0_i32_0 = arith.constant 0 : i32
    %c0_i32_1 = arith.constant 0 : i32
    return %c0_i32, %c0_i32_0 : i32, i32
  }
}

</mosaic_0001>

<llo_original>
// kernel: dec_cnn_add_oscn_forward.1
$region0: #{dec_cnn_add_oscn_forward.1}
  #allocation0 [shape = 'u32[]', space=smem, size = 0x4, offset = 0x4, fixed_abs, tag = 'smem constant byte address 0x4 - core index']
  #allocation1 [shape = 'u32[144,128]{1,0:T(1,128)}', space=vmem, size = 0x12000, scoped, tag = 'internal scratch']
  #allocation2 [shape = 'bf16[32,512]{1,0:T(8,128)(2,1)}', space=vmem, size = 0x8000, scoped, tag = 'scratch operand']
  #allocation3 [shape = 'bf16[16,512]{1,0:T(8,128)(2,1)}', space=vmem, size = 0x4000, scoped, tag = 'scratch operand']
  #allocation4 [shape = 'bf16[8,1024]{1,0:T(8,128)(2,1)}', space=vmem, size = 0x4000, scoped, tag = 'scratch operand']
  %s0 = inlined_call_operand.vmem [shape: f32[16,2], index: 0, kind: input, shape index: {}]
  %s1 = inlined_call_operand.vmem [shape: bf16[512,16], index: 1, kind: input, shape index: {}]
  %s2 = inlined_call_operand.vmem [shape: f32[32,1], index: 2, kind: input, shape index: {}]
  %s3 = inlined_call_operand.vmem [shape: f32[32,1], index: 3, kind: input, shape index: {}]
  %s4 = inlined_call_operand.hbm [shape: bf16[32,256], index: 4, kind: input, shape index: {}]
  %s5 = inlined_call_operand.hbm [shape: bf16[64,288], index: 5, kind: input, shape index: {}]
  %s6 = inlined_call_operand.vmem [shape: f32[16,1], index: 6, kind: input, shape index: {}]
  %s7 = inlined_call_operand.vmem [shape: f32[16,1], index: 7, kind: input, shape index: {}]
  %s8 = inlined_call_operand.hbm [shape: f32[1,256], index: 8, kind: input, shape index: {}]
  %s9 = inlined_call_operand.hbm [shape: bf16[512,128], index: 9, kind: input, shape index: {}]
  %s10 = inlined_call_operand.hbm [shape: bf16[32,144], index: 10, kind: input, shape index: {}]
  %s11 = inlined_call_operand.vmem [shape: f32[8,1], index: 11, kind: input, shape index: {}]
  %s12 = inlined_call_operand.vmem [shape: f32[8,1], index: 12, kind: input, shape index: {}]
  %s13 = inlined_call_operand.hbm [shape: f32[1,256], index: 13, kind: input, shape index: {}]
  %s14 = inlined_call_operand.hbm [shape: bf16[512,384], index: 14, kind: input, shape index: {}]
  %s15 = inlined_call_operand.hbm [shape: bf16[12,72], index: 15, kind: input, shape index: {}]
  %s16 = inlined_call_operand.vmem [shape: f32[3,1], index: 16, kind: input, shape index: {}]
  %s17 = inlined_call_operand.hbm [shape: bf16[1536,1024], index: 17, kind: input, shape index: {}]
  %s18 = inlined_call_operand.vmem [shape: f32[3,2048], index: 18, kind: output, shape index: {}]
  %s19 = sld [smem:[#allocation0]]
  $region118: #{dec_cnn_add_oscn_forward.1} parent=0
    _
  %s21 = ssub.s32 1, %s19
  %s22 = scalar_select 0, %s21, %s19
  $region1: #{dec_cnn_add_oscn_forward.1} parent=0
    #allocation5 [shape = 'u8[16384]{0}', space=vmem, size = 0x4000, scoped, tag = 'input window, operand 4, single buffered']
    #allocation6 [shape = 's32[1]{0}', space=sflag, size = 0x4, scoped, tag = 'scoped memory for dec_cnn_add_oscn_forward.1']
    #allocation7 [shape = 'u8[49152]{0}', space=vmem, size = 0xc000, scoped, tag = 'input window, operand 5, single buffered']
    #allocation8 [shape = 's32[1]{0}', space=sflag, size = 0x4, scoped, tag = 'scoped memory for dec_cnn_add_oscn_forward.1']
    #allocation9 [shape = 'u8[1024]{0}', space=vmem, size = 0x400, scoped, tag = 'input window, operand 8, single buffered']
    #allocation10 [shape = 'u8[131072]{0}', space=vmem, size = 0x20000, scoped, tag = 'input window, operand 9, single buffered']
    #allocation11 [shape = 's32[1]{0}', space=sflag, size = 0x4, scoped, tag = 'scoped memory for dec_cnn_add_oscn_forward.1']
    #allocation12 [shape = 'u8[16384]{0}', space=vmem, size = 0x4000, scoped, tag = 'input window, operand 10, single buffered']
    #allocation13 [shape = 'u8[1024]{0}', space=vmem, size = 0x400, scoped, tag = 'input window, operand 13, single buffered']
    #allocation14 [shape = 's32[1]{0}', space=sflag, size = 0x4, scoped, tag = 'scoped memory for dec_cnn_add_oscn_forward.1']
    #allocation15 [shape = 'u8[393216]{0}', space=vmem, size = 0x60000, scoped, tag = 'input window, operand 14, single buffered']
    #allocation16 [shape = 'u8[4096]{0}', space=vmem, size = 0x1000, scoped, tag = 'input window, operand 15, single buffered']
    #allocation17 [shape = 's32[1]{0}', space=sflag, size = 0x4, scoped, tag = 'scoped memory for dec_cnn_add_oscn_forward.1']
    #allocation18 [shape = 'u8[3145728]{0}', space=vmem, size = 0x300000, scoped, tag = 'input window, operand 17, single buffered']
    %23 = vsyncpa [#allocation6], 0
    %24 = vsyncpa [#allocation8], 0
    %25 = vsyncpa [#allocation11], 0
    %26 = vsyncpa [#allocation14], 0
    %27 = vsyncpa [#allocation17], 0
    // Predicated region
    $region2: #{dec_cnn_add_oscn_forward.1} parent=1 // pred_check
      _
    $region3: #{dec_cnn_add_oscn_forward.1} parent=1 // pred_check_branch
      %29 = sbr.rel (0) target = $region5
    $region4: #{dec_cnn_add_oscn_forward.1} parent=1 // pred_region
      _
    $region5: #{dec_cnn_add_oscn_forward.1} parent=1 // pred_fallthru
      _
    // Predicated region
    $region6: #{dec_cnn_add_oscn_forward.1} parent=1 // pred_check
      _
    $region7: #{dec_cnn_add_oscn_forward.1} parent=1 // pred_check_branch
      %31 = sbr.rel (0) target = $region9
    $region8: #{dec_cnn_add_oscn_forward.1} parent=1 // pred_region
      _
    $region9: #{dec_cnn_add_oscn_forward.1} parent=1 // pred_fallthru
      _
    // Predicated region
    $region10: #{dec_cnn_add_oscn_forward.1} parent=1 // pred_check
      _
    $region11: #{dec_cnn_add_oscn_forward.1} parent=1 // pred_check_branch
      %33 = sbr.rel (0) target = $region13
    $region12: #{dec_cnn_add_oscn_forward.1} parent=1 // pred_region
      _
    $region13: #{dec_cnn_add_oscn_forward.1} parent=1 // pred_fallthru
      _
    // Predicated region
    $region14: #{dec_cnn_add_oscn_forward.1} parent=1 // pred_check
      _
    $region15: #{dec_cnn_add_oscn_forward.1} parent=1 // pred_check_branch
      %35 = sbr.rel (0) target = $region17
    $region16: #{dec_cnn_add_oscn_forward.1} parent=1 // pred_region
      _
    $region17: #{dec_cnn_add_oscn_forward.1} parent=1 // pred_fallthru
      _
    // Predicated region
    $region18: #{dec_cnn_add_oscn_forward.1} parent=1 // pred_check
      _
    $region19: #{dec_cnn_add_oscn_forward.1} parent=1 // pred_check_branch
      %37 = sbr.rel (0) target = $region21
    $region20: #{dec_cnn_add_oscn_forward.1} parent=1 // pred_region
      %s39 = ssub.s32 512, 512
      %40 = vsyncadd [#allocation6], %s39
      %s41 = sshll.u32 [#allocation5], 4
      %s42 = int_to_ptr.vmem [resolvable:$true] %s41
      %47 = dma.hbm_to_vmem [thread:$0]  %s4, 512, %s42, [#allocation6], 128, 128, 8
    $region21: #{dec_cnn_add_oscn_forward.1} parent=1 // pred_fallthru
      _
    // Predicated region
    $region22: #{dec_cnn_add_oscn_forward.1} parent=1 // pred_check
      _
    $region23: #{dec_cnn_add_oscn_forward.1} parent=1 // pred_check_branch
      %49 = sbr.rel (0) target = $region25
    $region24: #{dec_cnn_add_oscn_forward.1} parent=1 // pred_region
      %s51 = ssub.s32 1536, 1536
      %52 = vsyncadd [#allocation8], %s51
      %s53 = sshll.u32 [#allocation7], 4
      %s54 = int_to_ptr.vmem [resolvable:$true] %s53
      %59 = dma.hbm_to_vmem [thread:$0]  %s5, 1536, %s54, [#allocation8], 192, 192, 12
    $region25: #{dec_cnn_add_oscn_forward.1} parent=1 // pred_fallthru
      _
    // Predicated region
    $region26: #{dec_cnn_add_oscn_forward.1} parent=1 // pred_check
      _
    $region27: #{dec_cnn_add_oscn_forward.1} parent=1 // pred_check_branch
      %61 = sbr.rel (0) target = $region29
    $region28: #{dec_cnn_add_oscn_forward.1} parent=1 // pred_region
      _
    $region29: #{dec_cnn_add_oscn_forward.1} parent=1 // pred_fallthru
      _
    // Predicated region
    $region30: #{dec_cnn_add_oscn_forward.1} parent=1 // pred_check
      _
    $region31: #{dec_cnn_add_oscn_forward.1} parent=1 // pred_check_branch
      %63 = sbr.rel (0) target = $region33
    $region32: #{dec_cnn_add_oscn_forward.1} parent=1 // pred_region
      _
    $region33: #{dec_cnn_add_oscn_forward.1} parent=1 // pred_fallthru
      _
    // Predicated region
    $region34: #{dec_cnn_add_oscn_forward.1} parent=1 // pred_check
      _
    $region35: #{dec_cnn_add_oscn_forward.1} parent=1 // pred_check_branch
      %65 = sbr.rel (0) target = $region37
    $region36: #{dec_cnn_add_oscn_forward.1} parent=1 // pred_region
      %s67 = ssub.s32 32, 32
      %68 = vsyncadd [#allocation8], %s67
      %s70 = sshll.u32 [#allocation9], 4
      %s71 = int_to_ptr.vmem [resolvable:$true] %s70
      %73 = dma.hbm_to_vmem [thread:$0]  %s8, 32, %s71, [#allocation8]
    $region37: #{dec_cnn_add_oscn_forward.1} parent=1 // pred_fallthru
      _
    // Predicated region
    $region38: #{dec_cnn_add_oscn_forward.1} parent=1 // pred_check
      _
    $region39: #{dec_cnn_add_oscn_forward.1} parent=1 // pred_check_branch
      %75 = sbr.rel (0) target = $region41
    $region40: #{dec_cnn_add_oscn_forward.1} parent=1 // pred_region
      %s77 = ssub.s32 4096, 4096
      %78 = vsyncadd [#allocation11], %s77
      %s79 = sshll.u32 [#allocation10], 4
      %s80 = int_to_ptr.vmem [resolvable:$true] %s79
      %85 = dma.hbm_to_vmem [thread:$0]  %s9, 4096, %s80, [#allocation11], 64, 64, 4
    $region41: #{dec_cnn_add_oscn_forward.1} parent=1 // pred_fallthru
      _
    // Predicated region
    $region42: #{dec_cnn_add_oscn_forward.1} parent=1 // pred_check
      _
    $region43: #{dec_cnn_add_oscn_forward.1} parent=1 // pred_check_branch
      %87 = sbr.rel (0) target = $region45
    $region44: #{dec_cnn_add_oscn_forward.1} parent=1 // pred_region
      %s89 = ssub.s32 512, 512
      %90 = vsyncadd [#allocation11], %s89
      %s91 = sshll.u32 [#allocation12], 4
      %s92 = int_to_ptr.vmem [resolvable:$true] %s91
      %97 = dma.hbm_to_vmem [thread:$0]  %s10, 512, %s92, [#allocation11], 128, 128, 8
    $region45: #{dec_cnn_add_oscn_forward.1} parent=1 // pred_fallthru
      _
    // Predicated region
    $region46: #{dec_cnn_add_oscn_forward.1} parent=1 // pred_check
      _
    $region47: #{dec_cnn_add_oscn_forward.1} parent=1 // pred_check_branch
      %99 = sbr.rel (0) target = $region49
    $region48: #{dec_cnn_add_oscn_forward.1} parent=1 // pred_region
      _
    $region49: #{dec_cnn_add_oscn_forward.1} parent=1 // pred_fallthru
      _
    // Predicated region
    $region50: #{dec_cnn_add_oscn_forward.1} parent=1 // pred_check
      _
    $region51: #{dec_cnn_add_oscn_forward.1} parent=1 // pred_check_branch
      %101 = sbr.rel (0) target = $region53
    $region52: #{dec_cnn_add_oscn_forward.1} parent=1 // pred_region
      _
    $region53: #{dec_cnn_add_oscn_forward.1} parent=1 // pred_fallthru
      _
    // Predicated region
    $region54: #{dec_cnn_add_oscn_forward.1} parent=1 // pred_check
      _
    $region55: #{dec_cnn_add_oscn_forward.1} parent=1 // pred_check_branch
      %103 = sbr.rel (0) target = $region57
    $region56: #{dec_cnn_add_oscn_forward.1} parent=1 // pred_region
      %s105 = ssub.s32 32, 32
      %106 = vsyncadd [#allocation14], %s105
      %s108 = sshll.u32 [#allocation13], 4
      %s109 = int_to_ptr.vmem [resolvable:$true] %s108
      %111 = dma.hbm_to_vmem [thread:$0]  %s13, 32, %s109, [#allocation14]
    $region57: #{dec_cnn_add_oscn_forward.1} parent=1 // pred_fallthru
      _
    // Predicated region
    $region58: #{dec_cnn_add_oscn_forward.1} parent=1 // pred_check
      _
    $region59: #{dec_cnn_add_oscn_forward.1} parent=1 // pred_check_branch
      %113 = sbr.rel (0) target = $region61
    $region60: #{dec_cnn_add_oscn_forward.1} parent=1 // pred_region
      %s115 = ssub.s32 12288, 12288
      %116 = vsyncadd [#allocation14], %s115
      %s117 = sshll.u32 [#allocation15], 4
      %s118 = int_to_ptr.vmem [resolvable:$true] %s117
      %123 = dma.hbm_to_vmem [thread:$0]  %s14, 12288, %s118, [#allocation14], 192, 192, 12
    $region61: #{dec_cnn_add_oscn_forward.1} parent=1 // pred_fallthru
      _
    // Predicated region
    $region62: #{dec_cnn_add_oscn_forward.1} parent=1 // pred_check
      _
    $region63: #{dec_cnn_add_oscn_forward.1} parent=1 // pred_check_branch
      %125 = sbr.rel (0) target = $region65
    $region64: #{dec_cnn_add_oscn_forward.1} parent=1 // pred_region
      %s127 = ssub.s32 128, 128
      %128 = vsyncadd [#allocation17], %s127
      %s129 = sshll.u32 [#allocation16], 4
      %s130 = int_to_ptr.vmem [resolvable:$true] %s129
      %135 = dma.hbm_to_vmem [thread:$0]  %s15, 128, %s130, [#allocation17], 64, 64, 4
    $region65: #{dec_cnn_add_oscn_forward.1} parent=1 // pred_fallthru
      _
    // Predicated region
    $region66: #{dec_cnn_add_oscn_forward.1} parent=1 // pred_check
      _
    $region67: #{dec_cnn_add_oscn_forward.1} parent=1 // pred_check_branch
      %137 = sbr.rel (0) target = $region69
    $region68: #{dec_cnn_add_oscn_forward.1} parent=1 // pred_region
      _
    $region69: #{dec_cnn_add_oscn_forward.1} parent=1 // pred_fallthru
      _
    // Predicated region
    $region70: #{dec_cnn_add_oscn_forward.1} parent=1 // pred_check
      _
    $region71: #{dec_cnn_add_oscn_forward.1} parent=1 // pred_check_branch
      %139 = sbr.rel (0) target = $region73
    $region72: #{dec_cnn_add_oscn_forward.1} parent=1 // pred_region
      %s141 = ssub.s32 98304, 98304
      %142 = vsyncadd [#allocation17], %s141
      %s143 = sshll.u32 [#allocation18], 4
      %s144 = int_to_ptr.vmem [resolvable:$true] %s143
      %149 = dma.hbm_to_vmem [thread:$0]  %s17, 98304, %s144, [#allocation17], 512, 512, 32
    $region73: #{dec_cnn_add_oscn_forward.1} parent=1 // pred_fallthru
      _
    // Predicated region
    $region74: #{dec_cnn_add_oscn_forward.1} parent=1 // pred_check
      _
    $region75: #{dec_cnn_add_oscn_forward.1} parent=1 // pred_check_branch
      %151 = sbr.rel (0) target = $region77
    $region76: #{dec_cnn_add_oscn_forward.1} parent=1 // pred_region
      %152 = dma.done [#allocation6], 512
    $region77: #{dec_cnn_add_oscn_forward.1} parent=1 // pred_fallthru
      _
    // Predicated region
    $region78: #{dec_cnn_add_oscn_forward.1} parent=1 // pred_check
      _
    $region79: #{dec_cnn_add_oscn_forward.1} parent=1 // pred_check_branch
      %154 = sbr.rel (0) target = $region81
    $region80: #{dec_cnn_add_oscn_forward.1} parent=1 // pred_region
      %155 = dma.done [#allocation8], 1536
    $region81: #{dec_cnn_add_oscn_forward.1} parent=1 // pred_fallthru
      _
    // Predicated region
    $region82: #{dec_cnn_add_oscn_forward.1} parent=1 // pred_check
      _
    $region83: #{dec_cnn_add_oscn_forward.1} parent=1 // pred_check_branch
      %157 = sbr.rel (0) target = $region85
    $region84: #{dec_cnn_add_oscn_forward.1} parent=1 // pred_region
      %158 = dma.done [#allocation8], 32
    $region85: #{dec_cnn_add_oscn_forward.1} parent=1 // pred_fallthru
      _
    // Predicated region
    $region86: #{dec_cnn_add_oscn_forward.1} parent=1 // pred_check
      _
    $region87: #{dec_cnn_add_oscn_forward.1} parent=1 // pred_check_branch
      %160 = sbr.rel (0) target = $region89
    $region88: #{dec_cnn_add_oscn_forward.1} parent=1 // pred_region
      %161 = dma.done [#allocation11], 4096
    $region89: #{dec_cnn_add_oscn_forward.1} parent=1 // pred_fallthru
      _
    // Predicated region
    $region90: #{dec_cnn_add_oscn_forward.1} parent=1 // pred_check
      _
    $region91: #{dec_cnn_add_oscn_forward.1} parent=1 // pred_check_branch
      %163 = sbr.rel (0) target = $region93
    $region92: #{dec_cnn_add_oscn_forward.1} parent=1 // pred_region
      %164 = dma.done [#allocation11], 512
    $region93: #{dec_cnn_add_oscn_forward.1} parent=1 // pred_fallthru
      _
    // Predicated region
    $region94: #{dec_cnn_add_oscn_forward.1} parent=1 // pred_check
      _
    $region95: #{dec_cnn_add_oscn_forward.1} parent=1 // pred_check_branch
      %166 = sbr.rel (0) target = $region97
    $region96: #{dec_cnn_add_oscn_forward.1} parent=1 // pred_region
      %167 = dma.done [#allocation14], 32
    $region97: #{dec_cnn_add_oscn_forward.1} parent=1 // pred_fallthru
      _
    // Predicated region
    $region98: #{dec_cnn_add_oscn_forward.1} parent=1 // pred_check
      _
    $region99: #{dec_cnn_add_oscn_forward.1} parent=1 // pred_check_branch
      %169 = sbr.rel (0) target = $region101
    $region100: #{dec_cnn_add_oscn_forward.1} parent=1 // pred_region
      %170 = dma.done [#allocation14], 12288
    $region101: #{dec_cnn_add_oscn_forward.1} parent=1 // pred_fallthru
      _
    // Predicated region
    $region102: #{dec_cnn_add_oscn_forward.1} parent=1 // pred_check
      _
    $region103: #{dec_cnn_add_oscn_forward.1} parent=1 // pred_check_branch
      %172 = sbr.rel (0) target = $region105
    $region104: #{dec_cnn_add_oscn_forward.1} parent=1 // pred_region
      %173 = dma.done [#allocation17], 128
    $region105: #{dec_cnn_add_oscn_forward.1} parent=1 // pred_fallthru
      _
    // Predicated region
    $region106: #{dec_cnn_add_oscn_forward.1} parent=1 // pred_check
      _
    $region107: #{dec_cnn_add_oscn_forward.1} parent=1 // pred_check_branch
      %175 = sbr.rel (0) target = $region109
    $region108: #{dec_cnn_add_oscn_forward.1} parent=1 // pred_region
      %176 = dma.done [#allocation17], 98304
    $region109: #{dec_cnn_add_oscn_forward.1} parent=1 // pred_fallthru
      _
    %178 = vst [vmem:[#allocation2] sm:$0xff] 0
    %179 = vst [vmem:[#allocation2 + $0x8] sm:$0xff] 0
    %180 = vst [vmem:[#allocation2 + $0x10] sm:$0xff] 0
    %181 = vst [vmem:[#allocation2 + $0x18] sm:$0xff] 0
    %182 = vst [vmem:[#allocation2 + $0x20] sm:$0xff] 0
    %183 = vst [vmem:[#allocation2 + $0x28] sm:$0xff] 0
    %184 = vst [vmem:[#allocation2 + $0x30] sm:$0xff] 0
    %185 = vst [vmem:[#allocation2 + $0x38] sm:$0xff] 0
    %186 = vst [vmem:[#allocation3] sm:$0xff] 0
    %187 = vst [vmem:[#allocation3 + $0x8] sm:$0xff] 0
    %188 = vst [vmem:[#allocation3 + $0x10] sm:$0xff] 0
    %189 = vst [vmem:[#allocation3 + $0x18] sm:$0xff] 0
    %190 = vst [vmem:[#allocation4] sm:$0xff] 0
    %191 = vst [vmem:[#allocation4 + $0x8] sm:$0xff] 0
    %192 = vst [vmem:[#allocation4 + $0x10] sm:$0xff] 0
    %193 = vst [vmem:[#allocation4 + $0x18] sm:$0xff] 0
    %v194 = vld [vmem:[%s1] sm:$0xf]
    %v195 = vld [vmem:[%s1 + $0x4] sm:$0xf]
    %v196 = vld [vmem:[%s1 + $0x8] sm:$0xf]
    %v197 = vld [vmem:[%s1 + $0xc] sm:$0xf]
    %v198 = vld [vmem:[%s1 + $0x10] sm:$0xf]
    %v199 = vld [vmem:[%s1 + $0x14] sm:$0xf]
    %v200 = vld [vmem:[%s1 + $0x18] sm:$0xf]
    %v201 = vld [vmem:[%s1 + $0x1c] sm:$0xf]
    %v202 = vld [vmem:[%s1 + $0x20] sm:$0xf]
    %v203 = vld [vmem:[%s1 + $0x24] sm:$0xf]
    %v204 = vld [vmem:[%s1 + $0x28] sm:$0xf]
    %v205 = vld [vmem:[%s1 + $0x2c] sm:$0xf]
    %v206 = vld [vmem:[%s1 + $0x30] sm:$0xf]
    %v207 = vld [vmem:[%s1 + $0x34] sm:$0xf]
    %v208 = vld [vmem:[%s1 + $0x38] sm:$0xf]
    %v209 = vld [vmem:[%s1 + $0x3c] sm:$0xf]
    %v210 = vld [vmem:[%s1 + $0x40] sm:$0xf]
    %v211 = vld [vmem:[%s1 + $0x44] sm:$0xf]
    %v212 = vld [vmem:[%s1 + $0x48] sm:$0xf]
    %v213 = vld [vmem:[%s1 + $0x4c] sm:$0xf]
    %v214 = vld [vmem:[%s1 + $0x50] sm:$0xf]
    %v215 = vld [vmem:[%s1 + $0x54] sm:$0xf]
    %v216 = vld [vmem:[%s1 + $0x58] sm:$0xf]
    %v217 = vld [vmem:[%s1 + $0x5c] sm:$0xf]
    %v218 = vld [vmem:[%s1 + $0x60] sm:$0xf]
    %v219 = vld [vmem:[%s1 + $0x64] sm:$0xf]
    %v220 = vld [vmem:[%s1 + $0x68] sm:$0xf]
    %v221 = vld [vmem:[%s1 + $0x6c] sm:$0xf]
    %v222 = vld [vmem:[%s1 + $0x70] sm:$0xf]
    %v223 = vld [vmem:[%s1 + $0x74] sm:$0xf]
    %v224 = vld [vmem:[%s1 + $0x78] sm:$0xf]
    %v225 = vld [vmem:[%s1 + $0x7c] sm:$0xf]
    %v226 = vld [vmem:[%s1 + $0x80] sm:$0xf]
    %v227 = vld [vmem:[%s1 + $0x84] sm:$0xf]
    %v228 = vld [vmem:[%s1 + $0x88] sm:$0xf]
    %v229 = vld [vmem:[%s1 + $0x8c] sm:$0xf]
    %v230 = vld [vmem:[%s1 + $0x90] sm:$0xf]
    %v231 = vld [vmem:[%s1 + $0x94] sm:$0xf]
    %v232 = vld [vmem:[%s1 + $0x98] sm:$0xf]
    %v233 = vld [vmem:[%s1 + $0x9c] sm:$0xf]
    %v234 = vld [vmem:[%s1 + $0xa0] sm:$0xf]
    %v235 = vld [vmem:[%s1 + $0xa4] sm:$0xf]
    %v236 = vld [vmem:[%s1 + $0xa8] sm:$0xf]
    %v237 = vld [vmem:[%s1 + $0xac] sm:$0xf]
    %v238 = vld [vmem:[%s1 + $0xb0] sm:$0xf]
    %v239 = vld [vmem:[%s1 + $0xb4] sm:$0xf]
    %v240 = vld [vmem:[%s1 + $0xb8] sm:$0xf]
    %v241 = vld [vmem:[%s1 + $0xbc] sm:$0xf]
    %v242 = vld [vmem:[%s1 + $0xc0] sm:$0xf]
    %v243 = vld [vmem:[%s1 + $0xc4] sm:$0xf]
    %v244 = vld [vmem:[%s1 + $0xc8] sm:$0xf]
    %v245 = vld [vmem:[%s1 + $0xcc] sm:$0xf]
    %v246 = vld [vmem:[%s1 + $0xd0] sm:$0xf]
    %v247 = vld [vmem:[%s1 + $0xd4] sm:$0xf]
    %v248 = vld [vmem:[%s1 + $0xd8] sm:$0xf]
    %v249 = vld [vmem:[%s1 + $0xdc] sm:$0xf]
    %v250 = vld [vmem:[%s1 + $0xe0] sm:$0xf]
    %v251 = vld [vmem:[%s1 + $0xe4] sm:$0xf]
    %v252 = vld [vmem:[%s1 + $0xe8] sm:$0xf]
    %v253 = vld [vmem:[%s1 + $0xec] sm:$0xf]
    %v254 = vld [vmem:[%s1 + $0xf0] sm:$0xf]
    %v255 = vld [vmem:[%s1 + $0xf4] sm:$0xf]
    %v256 = vld [vmem:[%s1 + $0xf8] sm:$0xf]
    %v257 = vld [vmem:[%s1 + $0xfc] sm:$0xf]
    %v258 = vld [vmem:[%s0] sm:$0xff]
    %v259 = vld [vmem:[%s0 + $0x8] sm:$0xff]
    %v260 = vpack.c.bf16 %v259, %v258
    %v325 = vunpack.c.l.b16 %v194
    %v326 = vunpack.c.l.b16 %v195
    %v327 = vunpack.c.l.b16 %v196
    %v328 = vunpack.c.l.b16 %v197
    %v329 = vunpack.c.l.b16 %v198
    %v330 = vunpack.c.l.b16 %v199
    %v331 = vunpack.c.l.b16 %v200
    %v332 = vunpack.c.l.b16 %v201
    %v333 = vunpack.c.l.b16 %v202
    %v334 = vunpack.c.l.b16 %v203
    %v335 = vunpack.c.l.b16 %v204
    %v336 = vunpack.c.l.b16 %v205
    %v337 = vunpack.c.l.b16 %v206
    %v338 = vunpack.c.l.b16 %v207
    %v339 = vunpack.c.l.b16 %v208
    %v340 = vunpack.c.l.b16 %v209
    %v341 = vunpack.c.l.b16 %v210
    %v342 = vunpack.c.l.b16 %v211
    %v343 = vunpack.c.l.b16 %v212
    %v344 = vunpack.c.l.b16 %v213
    %v345 = vunpack.c.l.b16 %v214
    %v346 = vunpack.c.l.b16 %v215
    %v347 = vunpack.c.l.b16 %v216
    %v348 = vunpack.c.l.b16 %v217
    %v349 = vunpack.c.l.b16 %v218
    %v350 = vunpack.c.l.b16 %v219
    %v351 = vunpack.c.l.b16 %v220
    %v352 = vunpack.c.l.b16 %v221
    %v353 = vunpack.c.l.b16 %v222
    %v354 = vunpack.c.l.b16 %v223
    %v355 = vunpack.c.l.b16 %v224
    %v356 = vunpack.c.l.b16 %v225
    %v357 = vunpack.c.l.b16 %v226
    %v358 = vunpack.c.l.b16 %v227
    %v359 = vunpack.c.l.b16 %v228
    %v360 = vunpack.c.l.b16 %v229
    %v361 = vunpack.c.l.b16 %v230
    %v362 = vunpack.c.l.b16 %v231
    %v363 = vunpack.c.l.b16 %v232
    %v364 = vunpack.c.l.b16 %v233
    %v365 = vunpack.c.l.b16 %v234
    %v366 = vunpack.c.l.b16 %v235
    %v367 = vunpack.c.l.b16 %v236
    %v368 = vunpack.c.l.b16 %v237
    %v369 = vunpack.c.l.b16 %v238
    %v370 = vunpack.c.l.b16 %v239
    %v371 = vunpack.c.l.b16 %v240
    %v372 = vunpack.c.l.b16 %v241
    %v373 = vunpack.c.l.b16 %v242
    %v374 = vunpack.c.l.b16 %v243
    %v375 = vunpack.c.l.b16 %v244
    %v376 = vunpack.c.l.b16 %v245
    %v377 = vunpack.c.l.b16 %v246
    %v378 = vunpack.c.l.b16 %v247
    %v379 = vunpack.c.l.b16 %v248
    %v380 = vunpack.c.l.b16 %v249
    %v381 = vunpack.c.l.b16 %v250
    %v382 = vunpack.c.l.b16 %v251
    %v383 = vunpack.c.l.b16 %v252
    %v384 = vunpack.c.l.b16 %v253
    %v385 = vunpack.c.l.b16 %v254
    %v386 = vunpack.c.l.b16 %v255
    %v387 = vunpack.c.l.b16 %v256
    %v388 = vunpack.c.l.b16 %v257
    %v389 = vpack.c.b16 %v326, %v325
    %v390 = vpack.c.b16 %v328, %v327
    %v391 = vpack.c.b16 %v330, %v329
    %v392 = vpack.c.b16 %v332, %v331
    %v393 = vpack.c.b16 %v334, %v333
    %v394 = vpack.c.b16 %v336, %v335
    %v395 = vpack.c.b16 %v338, %v337
    %v396 = vpack.c.b16 %v340, %v339
    %v397 = vpack.c.b16 %v342, %v341
    %v398 = vpack.c.b16 %v344, %v343
    %v399 = vpack.c.b16 %v346, %v345
    %v400 = vpack.c.b16 %v348, %v347
    %v401 = vpack.c.b16 %v350, %v349
    %v402 = vpack.c.b16 %v352, %v351
    %v403 = vpack.c.b16 %v354, %v353
    %v404 = vpack.c.b16 %v356, %v355
    %v405 = vpack.c.b16 %v358, %v357
    %v406 = vpack.c.b16 %v360, %v359
    %v407 = vpack.c.b16 %v362, %v361
    %v408 = vpack.c.b16 %v364, %v363
    %v409 = vpack.c.b16 %v366, %v365
    %v410 = vpack.c.b16 %v368, %v367
    %v411 = vpack.c.b16 %v370, %v369
    %v412 = vpack.c.b16 %v372, %v371
    %v413 = vpack.c.b16 %v374, %v373
    %v414 = vpack.c.b16 %v376, %v375
    %v415 = vpack.c.b16 %v378, %v377
    %v416 = vpack.c.b16 %v380, %v379
    %v417 = vpack.c.b16 %v382, %v381
    %v418 = vpack.c.b16 %v384, %v383
    %v419 = vpack.c.b16 %v386, %v385
    %v420 = vpack.c.b16 %v388, %v387
    %vm421 = vcmask 130048
    %v423 = vsel %vm421, %v389, 0
    %v426 = vsel %vm421, %v390, 0
    %v429 = vsel %vm421, %v391, 0
    %v432 = vsel %vm421, %v392, 0
    %v435 = vsel %vm421, %v393, 0
    %v438 = vsel %vm421, %v394, 0
    %v441 = vsel %vm421, %v395, 0
    %v444 = vsel %vm421, %v396, 0
    %v447 = vsel %vm421, %v397, 0
    %v450 = vsel %vm421, %v398, 0
    %v453 = vsel %vm421, %v399, 0
    %v456 = vsel %vm421, %v400, 0
    %v459 = vsel %vm421, %v401, 0
    %v462 = vsel %vm421, %v402, 0
    %v465 = vsel %vm421, %v403, 0
    %v468 = vsel %vm421, %v404, 0
    %v471 = vsel %vm421, %v405, 0
    %v474 = vsel %vm421, %v406, 0
    %v477 = vsel %vm421, %v407, 0
    %v480 = vsel %vm421, %v408, 0
    %v483 = vsel %vm421, %v409, 0
    %v486 = vsel %vm421, %v410, 0
    %v489 = vsel %vm421, %v411, 0
    %v492 = vsel %vm421, %v412, 0
    %v495 = vsel %vm421, %v413, 0
    %v498 = vsel %vm421, %v414, 0
    %v501 = vsel %vm421, %v415, 0
    %v504 = vsel %vm421, %v416, 0
    %v507 = vsel %vm421, %v417, 0
    %v510 = vsel %vm421, %v418, 0
    %v513 = vsel %vm421, %v419, 0
    %v516 = vsel %vm421, %v420, 0
    %518 = vmatprep.subr.bf16.mxu0 0
    %519 = vmatpush1.bf16.msra.mxu0 0
    %520 = vmatprep.subr.bf16.mxu0 0
    %521 = vmatpush1.bf16.msra.mxu0 0
    %522 = vmatprep.subr.bf16.mxu0 0
    %523 = vmatpush1.bf16.msra.mxu0 0
    %524 = vmatprep.subr.bf16.mxu0 0
    %525 = vmatpush1.bf16.msra.mxu0 0
    %526 = vmatprep.subr.bf16.mxu0 0
    %527 = vmatpush1.bf16.msra.mxu0 0
    %528 = vmatprep.subr.bf16.mxu0 0
    %529 = vmatpush1.bf16.msra.mxu0 0
    %530 = vmatprep.subr.bf16.mxu0 0
    %531 = vmatpush1.bf16.msra.mxu0 0
    %532 = vmatprep.subr.bf16.mxu0 0
    %533 = vmatpush1.bf16.msra.mxu0 %v260
    %534 = vmatprep.subr.bf16.mxu0 0
    %535 = vmatpush2.bf16.msra.mxu0 0
    %536 = vmatprep.subr.bf16.mxu0 0
    %537 = vmatpush2.bf16.msra.mxu0 0
    %538 = vmatprep.subr.bf16.mxu0 0
    %539 = vmatpush2.bf16.msra.mxu0 0
    %540 = vmatprep.subr.bf16.mxu0 0
    %541 = vmatpush2.bf16.msra.mxu0 0
    %542 = vmatprep.subr.bf16.mxu0 0
    %543 = vmatpush2.bf16.msra.mxu0 0
    %544 = vmatprep.subr.bf16.mxu0 0
    %545 = vmatpush2.bf16.msra.mxu0 0
    %546 = vmatprep.subr.bf16.mxu0 0
    %547 = vmatpush2.bf16.msra.mxu0 0
    %548 = vmatprep.subr.bf16.mxu0 0
    %549 = vmatpush2.bf16.msra.mxu0 0
    %550 = vmatprep.mubr.bf16.mxu0 0
    %551 = vmatmul.mubr.bf16.gmra.mxu0 %v423
    %v552 = vpop.f32.mrf.mxu0
    %v553 = vadd.f32 0.0, %v552
    %v554 = vpop.f32.mrf.mxu0
    %v555 = vpop.f32.mrf.mxu0
    %v556 = vadd.f32 0.0, %v555
    %v557 = vpop.f32.mrf.mxu0
    %558 = vmatprep.mubr.bf16.mxu0 0
    %559 = vmatmul.mubr.bf16.gmra.mxu0 %v426
    %v560 = vpop.f32.mrf.mxu0
    %v561 = vadd.f32 0.0, %v560
    %v562 = vpop.f32.mrf.mxu0
    %v563 = vpop.f32.mrf.mxu0
    %v564 = vadd.f32 0.0, %v563
    %v565 = vpop.f32.mrf.mxu0
    %566 = vmatprep.mubr.bf16.mxu0 0
    %567 = vmatmul.mubr.bf16.gmra.mxu0 %v429
    %v568 = vpop.f32.mrf.mxu0
    %v569 = vadd.f32 0.0, %v568
    %v570 = vpop.f32.mrf.mxu0
    %v571 = vpop.f32.mrf.mxu0
    %v572 = vadd.f32 0.0, %v571
    %v573 = vpop.f32.mrf.mxu0
    %574 = vmatprep.mubr.bf16.mxu0 0
    %575 = vmatmul.mubr.bf16.gmra.mxu0 %v432
    %v576 = vpop.f32.mrf.mxu0
    %v577 = vadd.f32 0.0, %v576
    %v578 = vpop.f32.mrf.mxu0
    %v579 = vpop.f32.mrf.mxu0
    %v580 = vadd.f32 0.0, %v579
    %v581 = vpop.f32.mrf.mxu0
    %582 = vmatprep.mubr.bf16.mxu0 0
    %583 = vmatmul.mubr.bf16.gmra.mxu0 %v435
    %v584 = vpop.f32.mrf.mxu0
    %v585 = vadd.f32 0.0, %v584
    %v586 = vpop.f32.mrf.mxu0
    %v587 = vpop.f32.mrf.mxu0
    %v588 = vadd.f32 0.0, %v587
    %v589 = vpop.f32.mrf.mxu0
    %590 = vmatprep.mubr.bf16.mxu0 0
    %591 = vmatmul.mubr.bf16.gmra.mxu0 %v438
    %v592 = vpop.f32.mrf.mxu0
    %v593 = vadd.f32 0.0, %v592
    %v594 = vpop.f32.mrf.mxu0
    %v595 = vpop.f32.mrf.mxu0
    %v596 = vadd.f32 0.0, %v595
    %v597 = vpop.f32.mrf.mxu0
    %598 = vmatprep.mubr.bf16.mxu0 0
    %599 = vmatmul.mubr.bf16.gmra.mxu0 %v441
    %v600 = vpop.f32.mrf.mxu0
    %v601 = vadd.f32 0.0, %v600
    %v602 = vpop.f32.mrf.mxu0
    %v603 = vpop.f32.mrf.mxu0
    %v604 = vadd.f32 0.0, %v603
    %v605 = vpop.f32.mrf.mxu0
    %606 = vmatprep.mubr.bf16.mxu0 0
    %607 = vmatmul.mubr.bf16.gmra.mxu0 %v444
    %v608 = vpop.f32.mrf.mxu0
    %v609 = vadd.f32 0.0, %v608
    %v610 = vpop.f32.mrf.mxu0
    %v611 = vpop.f32.mrf.mxu0
    %v612 = vadd.f32 0.0, %v611
    %v613 = vpop.f32.mrf.mxu0
    %614 = vmatprep.mubr.bf16.mxu0 0
    %615 = vmatmul.mubr.bf16.gmra.mxu0 %v447
    %v616 = vpop.f32.mrf.mxu0
    %v617 = vadd.f32 0.0, %v616
    %v618 = vpop.f32.mrf.mxu0
    %v619 = vpop.f32.mrf.mxu0
    %v620 = vadd.f32 0.0, %v619
    %v621 = vpop.f32.mrf.mxu0
    %622 = vmatprep.mubr.bf16.mxu0 0
    %623 = vmatmul.mubr.bf16.gmra.mxu0 %v450
    %v624 = vpop.f32.mrf.mxu0
    %v625 = vadd.f32 0.0, %v624
    %v626 = vpop.f32.mrf.mxu0
    %v627 = vpop.f32.mrf.mxu0
    %v628 = vadd.f32 0.0, %v627
    %v629 = vpop.f32.mrf.mxu0
    %630 = vmatprep.mubr.bf16.mxu0 0
    %631 = vmatmul.mubr.bf16.gmra.mxu0 %v453
    %v632 = vpop.f32.mrf.mxu0
    %v633 = vadd.f32 0.0, %v632
    %v634 = vpop.f32.mrf.mxu0
    %v635 = vpop.f32.mrf.mxu0
    %v636 = vadd.f32 0.0, %v635
    %v637 = vpop.f32.mrf.mxu0
    %638 = vmatprep.mubr.bf16.mxu0 0
    %639 = vmatmul.mubr.bf16.gmra.mxu0 %v456
    %v640 = vpop.f32.mrf.mxu0
    %v641 = vadd.f32 0.0, %v640
    %v642 = vpop.f32.mrf.mxu0
    %v643 = vpop.f32.mrf.mxu0
    %v644 = vadd.f32 0.0, %v643
    %v645 = vpop.f32.mrf.mxu0
    %646 = vmatprep.mubr.bf16.mxu0 0
    %647 = vmatmul.mubr.bf16.gmra.mxu0 %v459
    %v648 = vpop.f32.mrf.mxu0
    %v649 = vadd.f32 0.0, %v648
    %v650 = vpop.f32.mrf.mxu0
    %v651 = vpop.f32.mrf.mxu0
    %v652 = vadd.f32 0.0, %v651
    %v653 = vpop.f32.mrf.mxu0
    %654 = vmatprep.mubr.bf16.mxu0 0
    %655 = vmatmul.mubr.bf16.gmra.mxu0 %v462
    %v656 = vpop.f32.mrf.mxu0
    %v657 = vadd.f32 0.0, %v656
    %v658 = vpop.f32.mrf.mxu0
    %v659 = vpop.f32.mrf.mxu0
    %v660 = vadd.f32 0.0, %v659
    %v661 = vpop.f32.mrf.mxu0
    %662 = vmatprep.mubr.bf16.mxu0 0
    %663 = vmatmul.mubr.bf16.gmra.mxu0 %v465
    %v664 = vpop.f32.mrf.mxu0
    %v665 = vadd.f32 0.0, %v664
    %v666 = vpop.f32.mrf.mxu0
    %v667 = vpop.f32.mrf.mxu0
    %v668 = vadd.f32 0.0, %v667
    %v669 = vpop.f32.mrf.mxu0
    %670 = vmatprep.mubr.bf16.mxu0 0
    %671 = vmatmul.mubr.bf16.gmra.mxu0 %v468
    %v672 = vpop.f32.mrf.mxu0
    %v673 = vadd.f32 0.0, %v672
    %v674 = vpop.f32.mrf.mxu0
    %v675 = vpop.f32.mrf.mxu0
    %v676 = vadd.f32 0.0, %v675
    %v677 = vpop.f32.mrf.mxu0
    %678 = vmatprep.mubr.bf16.mxu0 0
    %679 = vmatmul.mubr.bf16.gmra.mxu0 %v471
    %v680 = vpop.f32.mrf.mxu0
    %v681 = vadd.f32 0.0, %v680
    %v682 = vpop.f32.mrf.mxu0
    %v683 = vpop.f32.mrf.mxu0
    %v684 = vadd.f32 0.0, %v683
    %v685 = vpop.f32.mrf.mxu0
    %686 = vmatprep.mubr.bf16.mxu0 0
    %687 = vmatmul.mubr.bf16.gmra.mxu0 %v474
    %v688 = vpop.f32.mrf.mxu0
    %v689 = vadd.f32 0.0, %v688
    %v690 = vpop.f32.mrf.mxu0
    %v691 = vpop.f32.mrf.mxu0
    %v692 = vadd.f32 0.0, %v691
    %v693 = vpop.f32.mrf.mxu0
    %694 = vmatprep.mubr.bf16.mxu0 0
    %695 = vmatmul.mubr.bf16.gmra.mxu0 %v477
    %v696 = vpop.f32.mrf.mxu0
    %v697 = vadd.f32 0.0, %v696
    %v698 = vpop.f32.mrf.mxu0
    %v699 = vpop.f32.mrf.mxu0
    %v700 = vadd.f32 0.0, %v699
    %v701 = vpop.f32.mrf.mxu0
    %702 = vmatprep.mubr.bf16.mxu0 0
    %703 = vmatmul.mubr.bf16.gmra.mxu0 %v480
    %v704 = vpop.f32.mrf.mxu0
    %v705 = vadd.f32 0.0, %v704
    %v706 = vpop.f32.mrf.mxu0
    %v707 = vpop.f32.mrf.mxu0
    %v708 = vadd.f32 0.0, %v707
    %v709 = vpop.f32.mrf.mxu0
    %710 = vmatprep.mubr.bf16.mxu0 0
    %711 = vmatmul.mubr.bf16.gmra.mxu0 %v483
    %v712 = vpop.f32.mrf.mxu0
    %v713 = vadd.f32 0.0, %v712
    %v714 = vpop.f32.mrf.mxu0
    %v715 = vpop.f32.mrf.mxu0
    %v716 = vadd.f32 0.0, %v715
    %v717 = vpop.f32.mrf.mxu0
    %718 = vmatprep.mubr.bf16.mxu0 0
    %719 = vmatmul.mubr.bf16.gmra.mxu0 %v486
    %v720 = vpop.f32.mrf.mxu0
    %v721 = vadd.f32 0.0, %v720
    %v722 = vpop.f32.mrf.mxu0
    %v723 = vpop.f32.mrf.mxu0
    %v724 = vadd.f32 0.0, %v723
    %v725 = vpop.f32.mrf.mxu0
    %726 = vmatprep.mubr.bf16.mxu0 0
    %727 = vmatmul.mubr.bf16.gmra.mxu0 %v489
    %v728 = vpop.f32.mrf.mxu0
    %v729 = vadd.f32 0.0, %v728
    %v730 = vpop.f32.mrf.mxu0
    %v731 = vpop.f32.mrf.mxu0
    %v732 = vadd.f32 0.0, %v731
    %v733 = vpop.f32.mrf.mxu0
    %734 = vmatprep.mubr.bf16.mxu0 0
    %735 = vmatmul.mubr.bf16.gmra.mxu0 %v492
    %v736 = vpop.f32.mrf.mxu0
    %v737 = vadd.f32 0.0, %v736
    %v738 = vpop.f32.mrf.mxu0
    %v739 = vpop.f32.mrf.mxu0
    %v740 = vadd.f32 0.0, %v739
    %v741 = vpop.f32.mrf.mxu0
    %742 = vmatprep.mubr.bf16.mxu0 0
    %743 = vmatmul.mubr.bf16.gmra.mxu0 %v495
    %v744 = vpop.f32.mrf.mxu0
    %v745 = vadd.f32 0.0, %v744
    %v746 = vpop.f32.mrf.mxu0
    %v747 = vpop.f32.mrf.mxu0
    %v748 = vadd.f32 0.0, %v747
    %v749 = vpop.f32.mrf.mxu0
    %750 = vmatprep.mubr.bf16.mxu0 0
    %751 = vmatmul.mubr.bf16.gmra.mxu0 %v498
    %v752 = vpop.f32.mrf.mxu0
    %v753 = vadd.f32 0.0, %v752
    %v754 = vpop.f32.mrf.mxu0
    %v755 = vpop.f32.mrf.mxu0
    %v756 = vadd.f32 0.0, %v755
    %v757 = vpop.f32.mrf.mxu0
    %758 = vmatprep.mubr.bf16.mxu0 0
    %759 = vmatmul.mubr.bf16.gmra.mxu0 %v501
    %v760 = vpop.f32.mrf.mxu0
    %v761 = vadd.f32 0.0, %v760
    %v762 = vpop.f32.mrf.mxu0
    %v763 = vpop.f32.mrf.mxu0
    %v764 = vadd.f32 0.0, %v763
    %v765 = vpop.f32.mrf.mxu0
    %766 = vmatprep.mubr.bf16.mxu0 0
    %767 = vmatmul.mubr.bf16.gmra.mxu0 %v504
    %v768 = vpop.f32.mrf.mxu0
    %v769 = vadd.f32 0.0, %v768
    %v770 = vpop.f32.mrf.mxu0
    %v771 = vpop.f32.mrf.mxu0
    %v772 = vadd.f32 0.0, %v771
    %v773 = vpop.f32.mrf.mxu0
    %774 = vmatprep.mubr.bf16.mxu0 0
    %775 = vmatmul.mubr.bf16.gmra.mxu0 %v507
    %v776 = vpop.f32.mrf.mxu0
    %v777 = vadd.f32 0.0, %v776
    %v778 = vpop.f32.mrf.mxu0
    %v779 = vpop.f32.mrf.mxu0
    %v780 = vadd.f32 0.0, %v779
    %v781 = vpop.f32.mrf.mxu0
    %782 = vmatprep.mubr.bf16.mxu0 0
    %783 = vmatmul.mubr.bf16.gmra.mxu0 %v510
    %v784 = vpop.f32.mrf.mxu0
    %v785 = vadd.f32 0.0, %v784
    %v786 = vpop.f32.mrf.mxu0
    %v787 = vpop.f32.mrf.mxu0
    %v788 = vadd.f32 0.0, %v787
    %v789 = vpop.f32.mrf.mxu0
    %790 = vmatprep.mubr.bf16.mxu0 0
    %791 = vmatmul.mubr.bf16.gmra.mxu0 %v513
    %v792 = vpop.f32.mrf.mxu0
    %v793 = vadd.f32 0.0, %v792
    %v794 = vpop.f32.mrf.mxu0
    %v795 = vpop.f32.mrf.mxu0
    %v796 = vadd.f32 0.0, %v795
    %v797 = vpop.f32.mrf.mxu0
    %798 = vmatprep.mubr.bf16.mxu0 0
    %799 = vmatmul.mubr.bf16.gmra.mxu0 %v516
    %v800 = vpop.f32.mrf.mxu0
    %v801 = vadd.f32 0.0, %v800
    %v802 = vpop.f32.mrf.mxu0
    %v803 = vpop.f32.mrf.mxu0
    %v804 = vadd.f32 0.0, %v803
    %v805 = vpop.f32.mrf.mxu0
    %806 = vdwg.mxu0
    %vm807 = vcmask 15360
    %v808 = vsel %vm807, %v553, 0.0
    %809 = vadd.xlane.f32.xlu0 %v808
    %v810 = vpop.xlane.xlu0 %809
    %v811 = vsel %vm807, %v556, 0.0
    %812 = vadd.xlane.f32.xlu0 %v811
    %v813 = vpop.xlane.xlu0 %812
    %v814 = vsel %vm807, %v561, 0.0
    %815 = vadd.xlane.f32.xlu0 %v814
    %v816 = vpop.xlane.xlu0 %815
    %v817 = vsel %vm807, %v564, 0.0
    %818 = vadd.xlane.f32.xlu0 %v817
    %v819 = vpop.xlane.xlu0 %818
    %v820 = vsel %vm807, %v569, 0.0
    %821 = vadd.xlane.f32.xlu0 %v820
    %v822 = vpop.xlane.xlu0 %821
    %v823 = vsel %vm807, %v572, 0.0
    %824 = vadd.xlane.f32.xlu0 %v823
    %v825 = vpop.xlane.xlu0 %824
    %v826 = vsel %vm807, %v577, 0.0
    %827 = vadd.xlane.f32.xlu0 %v826
    %v828 = vpop.xlane.xlu0 %827
    %v829 = vsel %vm807, %v580, 0.0
    %830 = vadd.xlane.f32.xlu0 %v829
    %v831 = vpop.xlane.xlu0 %830
    %v832 = vsel %vm807, %v585, 0.0
    %833 = vadd.xlane.f32.xlu0 %v832
    %v834 = vpop.xlane.xlu0 %833
    %v835 = vsel %vm807, %v588, 0.0
    %836 = vadd.xlane.f32.xlu0 %v835
    %v837 = vpop.xlane.xlu0 %836
    %v838 = vsel %vm807, %v593, 0.0
    %839 = vadd.xlane.f32.xlu0 %v838
    %v840 = vpop.xlane.xlu0 %839
    %v841 = vsel %vm807, %v596, 0.0
    %842 = vadd.xlane.f32.xlu0 %v841
    %v843 = vpop.xlane.xlu0 %842
    %v844 = vsel %vm807, %v601, 0.0
    %845 = vadd.xlane.f32.xlu0 %v844
    %v846 = vpop.xlane.xlu0 %845
    %v847 = vsel %vm807, %v604, 0.0
    %848 = vadd.xlane.f32.xlu0 %v847
    %v849 = vpop.xlane.xlu0 %848
    %v850 = vsel %vm807, %v609, 0.0
    %851 = vadd.xlane.f32.xlu0 %v850
    %v852 = vpop.xlane.xlu0 %851
    %v853 = vsel %vm807, %v612, 0.0
    %854 = vadd.xlane.f32.xlu0 %v853
    %v855 = vpop.xlane.xlu0 %854
    %v856 = vsel %vm807, %v617, 0.0
    %857 = vadd.xlane.f32.xlu0 %v856
    %v858 = vpop.xlane.xlu0 %857
    %v859 = vsel %vm807, %v620, 0.0
    %860 = vadd.xlane.f32.xlu0 %v859
    %v861 = vpop.xlane.xlu0 %860
    %v862 = vsel %vm807, %v625, 0.0
    %863 = vadd.xlane.f32.xlu0 %v862
    %v864 = vpop.xlane.xlu0 %863
    %v865 = vsel %vm807, %v628, 0.0
    %866 = vadd.xlane.f32.xlu0 %v865
    %v867 = vpop.xlane.xlu0 %866
    %v868 = vsel %vm807, %v633, 0.0
    %869 = vadd.xlane.f32.xlu0 %v868
    %v870 = vpop.xlane.xlu0 %869
    %v871 = vsel %vm807, %v636, 0.0
    %872 = vadd.xlane.f32.xlu0 %v871
    %v873 = vpop.xlane.xlu0 %872
    %v874 = vsel %vm807, %v641, 0.0
    %875 = vadd.xlane.f32.xlu0 %v874
    %v876 = vpop.xlane.xlu0 %875
    %v877 = vsel %vm807, %v644, 0.0
    %878 = vadd.xlane.f32.xlu0 %v877
    %v879 = vpop.xlane.xlu0 %878
    %v880 = vsel %vm807, %v649, 0.0
    %881 = vadd.xlane.f32.xlu0 %v880
    %v882 = vpop.xlane.xlu0 %881
    %v883 = vsel %vm807, %v652, 0.0
    %884 = vadd.xlane.f32.xlu0 %v883
    %v885 = vpop.xlane.xlu0 %884
    %v886 = vsel %vm807, %v657, 0.0
    %887 = vadd.xlane.f32.xlu0 %v886
    %v888 = vpop.xlane.xlu0 %887
    %v889 = vsel %vm807, %v660, 0.0
    %890 = vadd.xlane.f32.xlu0 %v889
    %v891 = vpop.xlane.xlu0 %890
    %v892 = vsel %vm807, %v665, 0.0
    %893 = vadd.xlane.f32.xlu0 %v892
    %v894 = vpop.xlane.xlu0 %893
    %v895 = vsel %vm807, %v668, 0.0
    %896 = vadd.xlane.f32.xlu0 %v895
    %v897 = vpop.xlane.xlu0 %896
    %v898 = vsel %vm807, %v673, 0.0
    %899 = vadd.xlane.f32.xlu0 %v898
    %v900 = vpop.xlane.xlu0 %899
    %v901 = vsel %vm807, %v676, 0.0
    %902 = vadd.xlane.f32.xlu0 %v901
    %v903 = vpop.xlane.xlu0 %902
    %v904 = vsel %vm807, %v681, 0.0
    %905 = vadd.xlane.f32.xlu0 %v904
    %v906 = vpop.xlane.xlu0 %905
    %v907 = vsel %vm807, %v684, 0.0
    %908 = vadd.xlane.f32.xlu0 %v907
    %v909 = vpop.xlane.xlu0 %908
    %v910 = vsel %vm807, %v689, 0.0
    %911 = vadd.xlane.f32.xlu0 %v910
    %v912 = vpop.xlane.xlu0 %911
    %v913 = vsel %vm807, %v692, 0.0
    %914 = vadd.xlane.f32.xlu0 %v913
    %v915 = vpop.xlane.xlu0 %914
    %v916 = vsel %vm807, %v697, 0.0
    %917 = vadd.xlane.f32.xlu0 %v916
    %v918 = vpop.xlane.xlu0 %917
    %v919 = vsel %vm807, %v700, 0.0
    %920 = vadd.xlane.f32.xlu0 %v919
    %v921 = vpop.xlane.xlu0 %920
    %v922 = vsel %vm807, %v705, 0.0
    %923 = vadd.xlane.f32.xlu0 %v922
    %v924 = vpop.xlane.xlu0 %923
    %v925 = vsel %vm807, %v708, 0.0
    %926 = vadd.xlane.f32.xlu0 %v925
    %v927 = vpop.xlane.xlu0 %926
    %v928 = vsel %vm807, %v713, 0.0
    %929 = vadd.xlane.f32.xlu0 %v928
    %v930 = vpop.xlane.xlu0 %929
    %v931 = vsel %vm807, %v716, 0.0
    %932 = vadd.xlane.f32.xlu0 %v931
    %v933 = vpop.xlane.xlu0 %932
    %v934 = vsel %vm807, %v721, 0.0
    %935 = vadd.xlane.f32.xlu0 %v934
    %v936 = vpop.xlane.xlu0 %935
    %v937 = vsel %vm807, %v724, 0.0
    %938 = vadd.xlane.f32.xlu0 %v937
    %v939 = vpop.xlane.xlu0 %938
    %v940 = vsel %vm807, %v729, 0.0
    %941 = vadd.xlane.f32.xlu0 %v940
    %v942 = vpop.xlane.xlu0 %941
    %v943 = vsel %vm807, %v732, 0.0
    %944 = vadd.xlane.f32.xlu0 %v943
    %v945 = vpop.xlane.xlu0 %944
    %v946 = vsel %vm807, %v737, 0.0
    %947 = vadd.xlane.f32.xlu0 %v946
    %v948 = vpop.xlane.xlu0 %947
    %v949 = vsel %vm807, %v740, 0.0
    %950 = vadd.xlane.f32.xlu0 %v949
    %v951 = vpop.xlane.xlu0 %950
    %v952 = vsel %vm807, %v745, 0.0
    %953 = vadd.xlane.f32.xlu0 %v952
    %v954 = vpop.xlane.xlu0 %953
    %v955 = vsel %vm807, %v748, 0.0
    %956 = vadd.xlane.f32.xlu0 %v955
    %v957 = vpop.xlane.xlu0 %956
    %v958 = vsel %vm807, %v753, 0.0
    %959 = vadd.xlane.f32.xlu0 %v958
    %v960 = vpop.xlane.xlu0 %959
    %v961 = vsel %vm807, %v756, 0.0
    %962 = vadd.xlane.f32.xlu0 %v961
    %v963 = vpop.xlane.xlu0 %962
    %v964 = vsel %vm807, %v761, 0.0
    %965 = vadd.xlane.f32.xlu0 %v964
    %v966 = vpop.xlane.xlu0 %965
    %v967 = vsel %vm807, %v764, 0.0
    %968 = vadd.xlane.f32.xlu0 %v967
    %v969 = vpop.xlane.xlu0 %968
    %v970 = vsel %vm807, %v769, 0.0
    %971 = vadd.xlane.f32.xlu0 %v970
    %v972 = vpop.xlane.xlu0 %971
    %v973 = vsel %vm807, %v772, 0.0
    %974 = vadd.xlane.f32.xlu0 %v973
    %v975 = vpop.xlane.xlu0 %974
    %v976 = vsel %vm807, %v777, 0.0
    %977 = vadd.xlane.f32.xlu0 %v976
    %v978 = vpop.xlane.xlu0 %977
    %v979 = vsel %vm807, %v780, 0.0
    %980 = vadd.xlane.f32.xlu0 %v979
    %v981 = vpop.xlane.xlu0 %980
    %v982 = vsel %vm807, %v785, 0.0
    %983 = vadd.xlane.f32.xlu0 %v982
    %v984 = vpop.xlane.xlu0 %983
    %v985 = vsel %vm807, %v788, 0.0
    %986 = vadd.xlane.f32.xlu0 %v985
    %v987 = vpop.xlane.xlu0 %986
    %v988 = vsel %vm807, %v793, 0.0
    %989 = vadd.xlane.f32.xlu0 %v988
    %v990 = vpop.xlane.xlu0 %989
    %v991 = vsel %vm807, %v796, 0.0
    %992 = vadd.xlane.f32.xlu0 %v991
    %v993 = vpop.xlane.xlu0 %992
    %v994 = vsel %vm807, %v801, 0.0
    %995 = vadd.xlane.f32.xlu0 %v994
    %v996 = vpop.xlane.xlu0 %995
    %v997 = vsel %vm807, %v804, 0.0
    %998 = vadd.xlane.f32.xlu0 %v997
    %v999 = vpop.xlane.xlu0 %998
    %v1000 = vadd.f32 %v810, %v822
    %v1001 = vadd.f32 %v1000, %v834
    %v1002 = vadd.f32 %v1001, %v846
    %v1003 = vadd.f32 %v1002, %v858
    %v1004 = vadd.f32 %v1003, %v870
    %v1005 = vadd.f32 %v1004, %v882
    %v1006 = vadd.f32 %v1005, %v894
    %v1007 = vadd.f32 %v1006, %v906
    %v1008 = vadd.f32 %v1007, %v918
    %v1009 = vadd.f32 %v1008, %v930
    %v1010 = vadd.f32 %v1009, %v942
    %v1011 = vadd.f32 %v1010, %v954
    %v1012 = vadd.f32 %v1011, %v966
    %v1013 = vadd.f32 %v1012, %v978
    %v1014 = vadd.f32 %v1013, %v990
    %v1015 = vadd.f32 %v813, %v825
    %v1016 = vadd.f32 %v1015, %v837
    %v1017 = vadd.f32 %v1016, %v849
    %v1018 = vadd.f32 %v1017, %v861
    %v1019 = vadd.f32 %v1018, %v873
    %v1020 = vadd.f32 %v1019, %v885
    %v1021 = vadd.f32 %v1020, %v897
    %v1022 = vadd.f32 %v1021, %v909
    %v1023 = vadd.f32 %v1022, %v921
    %v1024 = vadd.f32 %v1023, %v933
    %v1025 = vadd.f32 %v1024, %v945
    %v1026 = vadd.f32 %v1025, %v957
    %v1027 = vadd.f32 %v1026, %v969
    %v1028 = vadd.f32 %v1027, %v981
    %v1029 = vadd.f32 %v1028, %v993
    %v1030 = vadd.f32 %v816, %v828
    %v1031 = vadd.f32 %v1030, %v840
    %v1032 = vadd.f32 %v1031, %v852
    %v1033 = vadd.f32 %v1032, %v864
    %v1034 = vadd.f32 %v1033, %v876
    %v1035 = vadd.f32 %v1034, %v888
    %v1036 = vadd.f32 %v1035, %v900
    %v1037 = vadd.f32 %v1036, %v912
    %v1038 = vadd.f32 %v1037, %v924
    %v1039 = vadd.f32 %v1038, %v936
    %v1040 = vadd.f32 %v1039, %v948
    %v1041 = vadd.f32 %v1040, %v960
    %v1042 = vadd.f32 %v1041, %v972
    %v1043 = vadd.f32 %v1042, %v984
    %v1044 = vadd.f32 %v1043, %v996
    %v1045 = vadd.f32 %v819, %v831
    %v1046 = vadd.f32 %v1045, %v843
    %v1047 = vadd.f32 %v1046, %v855
    %v1048 = vadd.f32 %v1047, %v867
    %v1049 = vadd.f32 %v1048, %v879
    %v1050 = vadd.f32 %v1049, %v891
    %v1051 = vadd.f32 %v1050, %v903
    %v1052 = vadd.f32 %v1051, %v915
    %v1053 = vadd.f32 %v1052, %v927
    %v1054 = vadd.f32 %v1053, %v939
    %v1055 = vadd.f32 %v1054, %v951
    %v1056 = vadd.f32 %v1055, %v963
    %v1057 = vadd.f32 %v1056, %v975
    %v1058 = vadd.f32 %v1057, %v987
    %v1059 = vadd.f32 %v1058, %v999
    %v1060 = vmul.f32 %v553, %v553
    %v1061 = vmul.f32 %v556, %v556
    %v1062 = vmul.f32 %v561, %v561
    %v1063 = vmul.f32 %v564, %v564
    %v1064 = vmul.f32 %v569, %v569
    %v1065 = vmul.f32 %v572, %v572
    %v1066 = vmul.f32 %v577, %v577
    %v1067 = vmul.f32 %v580, %v580
    %v1068 = vmul.f32 %v585, %v585
    %v1069 = vmul.f32 %v588, %v588
    %v1070 = vmul.f32 %v593, %v593
    %v1071 = vmul.f32 %v596, %v596
    %v1072 = vmul.f32 %v601, %v601
    %v1073 = vmul.f32 %v604, %v604
    %v1074 = vmul.f32 %v609, %v609
    %v1075 = vmul.f32 %v612, %v612
    %v1076 = vmul.f32 %v617, %v617
    %v1077 = vmul.f32 %v620, %v620
    %v1078 = vmul.f32 %v625, %v625
    %v1079 = vmul.f32 %v628, %v628
    %v1080 = vmul.f32 %v633, %v633
    %v1081 = vmul.f32 %v636, %v636
    %v1082 = vmul.f32 %v641, %v641
    %v1083 = vmul.f32 %v644, %v644
    %v1084 = vmul.f32 %v649, %v649
    %v1085 = vmul.f32 %v652, %v652
    %v1086 = vmul.f32 %v657, %v657
    %v1087 = vmul.f32 %v660, %v660
    %v1088 = vmul.f32 %v665, %v665
    %v1089 = vmul.f32 %v668, %v668
    %v1090 = vmul.f32 %v673, %v673
    %v1091 = vmul.f32 %v676, %v676
    %v1092 = vmul.f32 %v681, %v681
    %v1093 = vmul.f32 %v684, %v684
    %v1094 = vmul.f32 %v689, %v689
    %v1095 = vmul.f32 %v692, %v692
    %v1096 = vmul.f32 %v697, %v697
    %v1097 = vmul.f32 %v700, %v700
    %v1098 = vmul.f32 %v705, %v705
    %v1099 = vmul.f32 %v708, %v708
    %v1100 = vmul.f32 %v713, %v713
    %v1101 = vmul.f32 %v716, %v716
    %v1102 = vmul.f32 %v721, %v721
    %v1103 = vmul.f32 %v724, %v724
    %v1104 = vmul.f32 %v729, %v729
    %v1105 = vmul.f32 %v732, %v732
    %v1106 = vmul.f32 %v737, %v737
    %v1107 = vmul.f32 %v740, %v740
    %v1108 = vmul.f32 %v745, %v745
    %v1109 = vmul.f32 %v748, %v748
    %v1110 = vmul.f32 %v753, %v753
    %v1111 = vmul.f32 %v756, %v756
    %v1112 = vmul.f32 %v761, %v761
    %v1113 = vmul.f32 %v764, %v764
    %v1114 = vmul.f32 %v769, %v769
    %v1115 = vmul.f32 %v772, %v772
    %v1116 = vmul.f32 %v777, %v777
    %v1117 = vmul.f32 %v780, %v780
    %v1118 = vmul.f32 %v785, %v785
    %v1119 = vmul.f32 %v788, %v788
    %v1120 = vmul.f32 %v793, %v793
    %v1121 = vmul.f32 %v796, %v796
    %v1122 = vmul.f32 %v801, %v801
    %v1123 = vmul.f32 %v804, %v804
    %v1124 = vsel %vm807, %v1060, 0.0
    %1125 = vadd.xlane.f32.xlu0 %v1124
    %v1126 = vpop.xlane.xlu0 %1125
    %v1127 = vsel %vm807, %v1061, 0.0
    %1128 = vadd.xlane.f32.xlu0 %v1127
    %v1129 = vpop.xlane.xlu0 %1128
    %v1130 = vsel %vm807, %v1062, 0.0
    %1131 = vadd.xlane.f32.xlu0 %v1130
    %v1132 = vpop.xlane.xlu0 %1131
    %v1133 = vsel %vm807, %v1063, 0.0
    %1134 = vadd.xlane.f32.xlu0 %v1133
    %v1135 = vpop.xlane.xlu0 %1134
    %v1136 = vsel %vm807, %v1064, 0.0
    %1137 = vadd.xlane.f32.xlu0 %v1136
    %v1138 = vpop.xlane.xlu0 %1137
    %v1139 = vsel %vm807, %v1065, 0.0
    %1140 = vadd.xlane.f32.xlu0 %v1139
    %v1141 = vpop.xlane.xlu0 %1140
    %v1142 = vsel %vm807, %v1066, 0.0
    %1143 = vadd.xlane.f32.xlu0 %v1142
    %v1144 = vpop.xlane.xlu0 %1143
    %v1145 = vsel %vm807, %v1067, 0.0
    %1146 = vadd.xlane.f32.xlu0 %v1145
    %v1147 = vpop.xlane.xlu0 %1146
    %v1148 = vsel %vm807, %v1068, 0.0
    %1149 = vadd.xlane.f32.xlu0 %v1148
    %v1150 = vpop.xlane.xlu0 %1149
    %v1151 = vsel %vm807, %v1069, 0.0
    %1152 = vadd.xlane.f32.xlu0 %v1151
    %v1153 = vpop.xlane.xlu0 %1152
    %v1154 = vsel %vm807, %v1070, 0.0
    %1155 = vadd.xlane.f32.xlu0 %v1154
    %v1156 = vpop.xlane.xlu0 %1155
    %v1157 = vsel %vm807, %v1071, 0.0
    %1158 = vadd.xlane.f32.xlu0 %v1157
    %v1159 = vpop.xlane.xlu0 %1158
    %v1160 = vsel %vm807, %v1072, 0.0
    %1161 = vadd.xlane.f32.xlu0 %v1160
    %v1162 = vpop.xlane.xlu0 %1161
    %v1163 = vsel %vm807, %v1073, 0.0
    %1164 = vadd.xlane.f32.xlu0 %v1163
    %v1165 = vpop.xlane.xlu0 %1164
    %v1166 = vsel %vm807, %v1074, 0.0
    %1167 = vadd.xlane.f32.xlu0 %v1166
    %v1168 = vpop.xlane.xlu0 %1167
    %v1169 = vsel %vm807, %v1075, 0.0
    %1170 = vadd.xlane.f32.xlu0 %v1169
    %v1171 = vpop.xlane.xlu0 %1170
    %v1172 = vsel %vm807, %v1076, 0.0
    %1173 = vadd.xlane.f32.xlu0 %v1172
    %v1174 = vpop.xlane.xlu0 %1173
    %v1175 = vsel %vm807, %v1077, 0.0
    %1176 = vadd.xlane.f32.xlu0 %v1175
    %v1177 = vpop.xlane.xlu0 %1176
    %v1178 = vsel %vm807, %v1078, 0.0
    %1179 = vadd.xlane.f32.xlu0 %v1178
    %v1180 = vpop.xlane.xlu0 %1179
    %v1181 = vsel %vm807, %v1079, 0.0
    %1182 = vadd.xlane.f32.xlu0 %v1181
    %v1183 = vpop.xlane.xlu0 %1182
    %v1184 = vsel %vm807, %v1080, 0.0
    %1185 = vadd.xlane.f32.xlu0 %v1184
    %v1186 = vpop.xlane.xlu0 %1185
    %v1187 = vsel %vm807, %v1081, 0.0
    %1188 = vadd.xlane.f32.xlu0 %v1187
    %v1189 = vpop.xlane.xlu0 %1188
    %v1190 = vsel %vm807, %v1082, 0.0
    %1191 = vadd.xlane.f32.xlu0 %v1190
    %v1192 = vpop.xlane.xlu0 %1191
    %v1193 = vsel %vm807, %v1083, 0.0
    %1194 = vadd.xlane.f32.xlu0 %v1193
    %v1195 = vpop.xlane.xlu0 %1194
    %v1196 = vsel %vm807, %v1084, 0.0
    %1197 = vadd.xlane.f32.xlu0 %v1196
    %v1198 = vpop.xlane.xlu0 %1197
    %v1199 = vsel %vm807, %v1085, 0.0
    %1200 = vadd.xlane.f32.xlu0 %v1199
    %v1201 = vpop.xlane.xlu0 %1200
    %v1202 = vsel %vm807, %v1086, 0.0
    %1203 = vadd.xlane.f32.xlu0 %v1202
    %v1204 = vpop.xlane.xlu0 %1203
    %v1205 = vsel %vm807, %v1087, 0.0
    %1206 = vadd.xlane.f32.xlu0 %v1205
    %v1207 = vpop.xlane.xlu0 %1206
    %v1208 = vsel %vm807, %v1088, 0.0
    %1209 = vadd.xlane.f32.xlu0 %v1208
    %v1210 = vpop.xlane.xlu0 %1209
    %v1211 = vsel %vm807, %v1089, 0.0
    %1212 = vadd.xlane.f32.xlu0 %v1211
    %v1213 = vpop.xlane.xlu0 %1212
    %v1214 = vsel %vm807, %v1090, 0.0
    %1215 = vadd.xlane.f32.xlu0 %v1214
    %v1216 = vpop.xlane.xlu0 %1215
    %v1217 = vsel %vm807, %v1091, 0.0
    %1218 = vadd.xlane.f32.xlu0 %v1217
    %v1219 = vpop.xlane.xlu0 %1218
    %v1220 = vsel %vm807, %v1092, 0.0
    %1221 = vadd.xlane.f32.xlu0 %v1220
    %v1222 = vpop.xlane.xlu0 %1221
    %v1223 = vsel %vm807, %v1093, 0.0
    %1224 = vadd.xlane.f32.xlu0 %v1223
    %v1225 = vpop.xlane.xlu0 %1224
    %v1226 = vsel %vm807, %v1094, 0.0
    %1227 = vadd.xlane.f32.xlu0 %v1226
    %v1228 = vpop.xlane.xlu0 %1227
    %v1229 = vsel %vm807, %v1095, 0.0
    %1230 = vadd.xlane.f32.xlu0 %v1229
    %v1231 = vpop.xlane.xlu0 %1230
    %v1232 = vsel %vm807, %v1096, 0.0
    %1233 = vadd.xlane.f32.xlu0 %v1232
    %v1234 = vpop.xlane.xlu0 %1233
    %v1235 = vsel %vm807, %v1097, 0.0
    %1236 = vadd.xlane.f32.xlu0 %v1235
    %v1237 = vpop.xlane.xlu0 %1236
    %v1238 = vsel %vm807, %v1098, 0.0
    %1239 = vadd.xlane.f32.xlu0 %v1238
    %v1240 = vpop.xlane.xlu0 %1239
    %v1241 = vsel %vm807, %v1099, 0.0
    %1242 = vadd.xlane.f32.xlu0 %v1241
    %v1243 = vpop.xlane.xlu0 %1242
    %v1244 = vsel %vm807, %v1100, 0.0
    %1245 = vadd.xlane.f32.xlu0 %v1244
    %v1246 = vpop.xlane.xlu0 %1245
    %v1247 = vsel %vm807, %v1101, 0.0
    %1248 = vadd.xlane.f32.xlu0 %v1247
    %v1249 = vpop.xlane.xlu0 %1248
    %v1250 = vsel %vm807, %v1102, 0.0
    %1251 = vadd.xlane.f32.xlu0 %v1250
    %v1252 = vpop.xlane.xlu0 %1251
    %v1253 = vsel %vm807, %v1103, 0.0
    %1254 = vadd.xlane.f32.xlu0 %v1253
    %v1255 = vpop.xlane.xlu0 %1254
    %v1256 = vsel %vm807, %v1104, 0.0
    %1257 = vadd.xlane.f32.xlu0 %v1256
    %v1258 = vpop.xlane.xlu0 %1257
    %v1259 = vsel %vm807, %v1105, 0.0
    %1260 = vadd.xlane.f32.xlu0 %v1259
    %v1261 = vpop.xlane.xlu0 %1260
    %v1262 = vsel %vm807, %v1106, 0.0
    %1263 = vadd.xlane.f32.xlu0 %v1262
    %v1264 = vpop.xlane.xlu0 %1263
    %v1265 = vsel %vm807, %v1107, 0.0
    %1266 = vadd.xlane.f32.xlu0 %v1265
    %v1267 = vpop.xlane.xlu0 %1266
    %v1268 = vsel %vm807, %v1108, 0.0
    %1269 = vadd.xlane.f32.xlu0 %v1268
    %v1270 = vpop.xlane.xlu0 %1269
    %v1271 = vsel %vm807, %v1109, 0.0
    %1272 = vadd.xlane.f32.xlu0 %v1271
    %v1273 = vpop.xlane.xlu0 %1272
    %v1274 = vsel %vm807, %v1110, 0.0
    %1275 = vadd.xlane.f32.xlu0 %v1274
    %v1276 = vpop.xlane.xlu0 %1275
    %v1277 = vsel %vm807, %v1111, 0.0
    %1278 = vadd.xlane.f32.xlu0 %v1277
    %v1279 = vpop.xlane.xlu0 %1278
    %v1280 = vsel %vm807, %v1112, 0.0
    %1281 = vadd.xlane.f32.xlu0 %v1280
    %v1282 = vpop.xlane.xlu0 %1281
    %v1283 = vsel %vm807, %v1113, 0.0
    %1284 = vadd.xlane.f32.xlu0 %v1283
    %v1285 = vpop.xlane.xlu0 %1284
    %v1286 = vsel %vm807, %v1114, 0.0
    %1287 = vadd.xlane.f32.xlu0 %v1286
    %v1288 = vpop.xlane.xlu0 %1287
    %v1289 = vsel %vm807, %v1115, 0.0
    %1290 = vadd.xlane.f32.xlu0 %v1289
    %v1291 = vpop.xlane.xlu0 %1290
    %v1292 = vsel %vm807, %v1116, 0.0
    %1293 = vadd.xlane.f32.xlu0 %v1292
    %v1294 = vpop.xlane.xlu0 %1293
    %v1295 = vsel %vm807, %v1117, 0.0
    %1296 = vadd.xlane.f32.xlu0 %v1295
    %v1297 = vpop.xlane.xlu0 %1296
    %v1298 = vsel %vm807, %v1118, 0.0
    %1299 = vadd.xlane.f32.xlu0 %v1298
    %v1300 = vpop.xlane.xlu0 %1299
    %v1301 = vsel %vm807, %v1119, 0.0
    %1302 = vadd.xlane.f32.xlu0 %v1301
    %v1303 = vpop.xlane.xlu0 %1302
    %v1304 = vsel %vm807, %v1120, 0.0
    %1305 = vadd.xlane.f32.xlu0 %v1304
    %v1306 = vpop.xlane.xlu0 %1305
    %v1307 = vsel %vm807, %v1121, 0.0
    %1308 = vadd.xlane.f32.xlu0 %v1307
    %v1309 = vpop.xlane.xlu0 %1308
    %v1310 = vsel %vm807, %v1122, 0.0
    %1311 = vadd.xlane.f32.xlu0 %v1310
    %v1312 = vpop.xlane.xlu0 %1311
    %v1313 = vsel %vm807, %v1123, 0.0
    %1314 = vadd.xlane.f32.xlu0 %v1313
    %v1315 = vpop.xlane.xlu0 %1314
    %v1316 = vadd.f32 %v1126, %v1138
    %v1317 = vadd.f32 %v1316, %v1150
    %v1318 = vadd.f32 %v1317, %v1162
    %v1319 = vadd.f32 %v1318, %v1174
    %v1320 = vadd.f32 %v1319, %v1186
    %v1321 = vadd.f32 %v1320, %v1198
    %v1322 = vadd.f32 %v1321, %v1210
    %v1323 = vadd.f32 %v1322, %v1222
    %v1324 = vadd.f32 %v1323, %v1234
    %v1325 = vadd.f32 %v1324, %v1246
    %v1326 = vadd.f32 %v1325, %v1258
    %v1327 = vadd.f32 %v1326, %v1270
    %v1328 = vadd.f32 %v1327, %v1282
    %v1329 = vadd.f32 %v1328, %v1294
    %v1330 = vadd.f32 %v1329, %v1306
    %v1331 = vadd.f32 %v1129, %v1141
    %v1332 = vadd.f32 %v1331, %v1153
    %v1333 = vadd.f32 %v1332, %v1165
    %v1334 = vadd.f32 %v1333, %v1177
    %v1335 = vadd.f32 %v1334, %v1189
    %v1336 = vadd.f32 %v1335, %v1201
    %v1337 = vadd.f32 %v1336, %v1213
    %v1338 = vadd.f32 %v1337, %v1225
    %v1339 = vadd.f32 %v1338, %v1237
    %v1340 = vadd.f32 %v1339, %v1249
    %v1341 = vadd.f32 %v1340, %v1261
    %v1342 = vadd.f32 %v1341, %v1273
    %v1343 = vadd.f32 %v1342, %v1285
    %v1344 = vadd.f32 %v1343, %v1297
    %v1345 = vadd.f32 %v1344, %v1309
    %v1346 = vadd.f32 %v1132, %v1144
    %v1347 = vadd.f32 %v1346, %v1156
    %v1348 = vadd.f32 %v1347, %v1168
    %v1349 = vadd.f32 %v1348, %v1180
    %v1350 = vadd.f32 %v1349, %v1192
    %v1351 = vadd.f32 %v1350, %v1204
    %v1352 = vadd.f32 %v1351, %v1216
    %v1353 = vadd.f32 %v1352, %v1228
    %v1354 = vadd.f32 %v1353, %v1240
    %v1355 = vadd.f32 %v1354, %v1252
    %v1356 = vadd.f32 %v1355, %v1264
    %v1357 = vadd.f32 %v1356, %v1276
    %v1358 = vadd.f32 %v1357, %v1288
    %v1359 = vadd.f32 %v1358, %v1300
    %v1360 = vadd.f32 %v1359, %v1312
    %v1361 = vadd.f32 %v1135, %v1147
    %v1362 = vadd.f32 %v1361, %v1159
    %v1363 = vadd.f32 %v1362, %v1171
    %v1364 = vadd.f32 %v1363, %v1183
    %v1365 = vadd.f32 %v1364, %v1195
    %v1366 = vadd.f32 %v1365, %v1207
    %v1367 = vadd.f32 %v1366, %v1219
    %v1368 = vadd.f32 %v1367, %v1231
    %v1369 = vadd.f32 %v1368, %v1243
    %v1370 = vadd.f32 %v1369, %v1255
    %v1371 = vadd.f32 %v1370, %v1267
    %v1372 = vadd.f32 %v1371, %v1279
    %v1373 = vadd.f32 %v1372, %v1291
    %v1374 = vadd.f32 %v1373, %v1303
    %v1375 = vadd.f32 %v1374, %v1315
    %v1376 = vrcp.pop 32.0
    %v1377 = vmul.f32 %v1014, %v1376
    %v1378 = vmul.f32 %v1029, %v1376
    %v1379 = vmul.f32 %v1044, %v1376
    %v1380 = vmul.f32 %v1059, %v1376
    %v1381 = vmul.f32 %v1330, %v1376
    %v1382 = vmul.f32 %v1345, %v1376
    %v1383 = vmul.f32 %v1360, %v1376
    %v1384 = vmul.f32 %v1375, %v1376
    %v1385 = vmul.f32 %v1377, %v1377
    %v1386 = vmul.f32 %v1378, %v1378
    %v1387 = vmul.f32 %v1379, %v1379
    %v1388 = vmul.f32 %v1380, %v1380
    %v1389 = vsub.f32 %v1381, %v1385
    %v1390 = vsub.f32 %v1382, %v1386
    %v1391 = vsub.f32 %v1383, %v1387
    %v1392 = vsub.f32 %v1384, %v1388
    %v1393 = vmax.f32 %v1389, 0.0
    %v1394 = vmax.f32 %v1390, 0.0
    %v1395 = vmax.f32 %v1391, 0.0
    %v1396 = vmax.f32 %v1392, 0.0
    %v1397 = vld [vmem:[%s2] sm:$0xff]
    %v1398 = vld [vmem:[%s2 + $0x8] sm:$0xff]
    %v1399 = vld [vmem:[%s2 + $0x10] sm:$0xff]
    %v1400 = vld [vmem:[%s2 + $0x18] sm:$0xff]
    %v1401 = vadd.f32 %v1393, 1e-05
    %v1402 = vadd.f32 %v1394, 1e-05
    %v1403 = vadd.f32 %v1395, 1e-05
    %v1404 = vadd.f32 %v1396, 1e-05
    %v1405 = vrsqrt.pop %v1401
    %v1406 = vrsqrt.pop %v1402
    %v1407 = vrsqrt.pop %v1403
    %v1408 = vrsqrt.pop %v1404
    %v1409 = vmul.f32 %v1397, %v1405
    %v1410 = vmul.f32 %v1398, %v1406
    %v1411 = vmul.f32 %v1399, %v1407
    %v1412 = vmul.f32 %v1400, %v1408
    %v1413 = vld [vmem:[%s3] sm:$0xff]
    %v1414 = vld [vmem:[%s3 + $0x8] sm:$0xff]
    %v1415 = vld [vmem:[%s3 + $0x10] sm:$0xff]
    %v1416 = vld [vmem:[%s3 + $0x18] sm:$0xff]
    %v1417 = vmul.f32 %v1377, %v1409
    %v1418 = vmul.f32 %v1378, %v1410
    %v1419 = vmul.f32 %v1379, %v1411
    %v1420 = vmul.f32 %v1380, %v1412
    %v1421 = vsub.f32 %v1413, %v1417
    %v1422 = vsub.f32 %v1414, %v1418
    %v1423 = vsub.f32 %v1415, %v1419
    %v1424 = vsub.f32 %v1416, %v1420
    %1426 = vset.pattern.permute.xlu0 0
    %1427 = vperm.xlu0 %1426, %v1409
    %v1428 = vpop.permute.xlu0 %1427
    %1431 = vset.pattern.permute.xlu0 0
    %1432 = vperm.xlu0 %1431, %v1410
    %v1433 = vpop.permute.xlu0 %1432
    %1436 = vset.pattern.permute.xlu0 0
    %1437 = vperm.xlu0 %1436, %v1411
    %v1438 = vpop.permute.xlu0 %1437
    %1441 = vset.pattern.permute.xlu0 0
    %1442 = vperm.xlu0 %1441, %v1412
    %v1443 = vpop.permute.xlu0 %1442
    %v1445 = vmul.f32 %v553, %v1428
    %v1446 = vmul.f32 %v556, %v1433
    %v1447 = vmul.f32 %v561, %v1438
    %v1448 = vmul.f32 %v564, %v1443
    %v1449 = vmul.f32 %v569, %v1428
    %v1450 = vmul.f32 %v572, %v1433
    %v1451 = vmul.f32 %v577, %v1438
    %v1452 = vmul.f32 %v580, %v1443
    %v1453 = vmul.f32 %v585, %v1428
    %v1454 = vmul.f32 %v588, %v1433
    %v1455 = vmul.f32 %v593, %v1438
    %v1456 = vmul.f32 %v596, %v1443
    %v1457 = vmul.f32 %v601, %v1428
    %v1458 = vmul.f32 %v604, %v1433
    %v1459 = vmul.f32 %v609, %v1438
    %v1460 = vmul.f32 %v612, %v1443
    %v1461 = vmul.f32 %v617, %v1428
    %v1462 = vmul.f32 %v620, %v1433
    %v1463 = vmul.f32 %v625, %v1438
    %v1464 = vmul.f32 %v628, %v1443
    %v1465 = vmul.f32 %v633, %v1428
    %v1466 = vmul.f32 %v636, %v1433
    %v1467 = vmul.f32 %v641, %v1438
    %v1468 = vmul.f32 %v644, %v1443
    %v1469 = vmul.f32 %v649, %v1428
    %v1470 = vmul.f32 %v652, %v1433
    %v1471 = vmul.f32 %v657, %v1438
    %v1472 = vmul.f32 %v660, %v1443
    %v1473 = vmul.f32 %v665, %v1428
    %v1474 = vmul.f32 %v668, %v1433
    %v1475 = vmul.f32 %v673, %v1438
    %v1476 = vmul.f32 %v676, %v1443
    %v1477 = vmul.f32 %v681, %v1428
    %v1478 = vmul.f32 %v684, %v1433
    %v1479 = vmul.f32 %v689, %v1438
    %v1480 = vmul.f32 %v692, %v1443
    %v1481 = vmul.f32 %v697, %v1428
    %v1482 = vmul.f32 %v700, %v1433
    %v1483 = vmul.f32 %v705, %v1438
    %v1484 = vmul.f32 %v708, %v1443
    %v1485 = vmul.f32 %v713, %v1428
    %v1486 = vmul.f32 %v716, %v1433
    %v1487 = vmul.f32 %v721, %v1438
    %v1488 = vmul.f32 %v724, %v1443
    %v1489 = vmul.f32 %v729, %v1428
    %v1490 = vmul.f32 %v732, %v1433
    %v1491 = vmul.f32 %v737, %v1438
    %v1492 = vmul.f32 %v740, %v1443
    %v1493 = vmul.f32 %v745, %v1428
    %v1494 = vmul.f32 %v748, %v1433
    %v1495 = vmul.f32 %v753, %v1438
    %v1496 = vmul.f32 %v756, %v1443
    %v1497 = vmul.f32 %v761, %v1428
    %v1498 = vmul.f32 %v764, %v1433
    %v1499 = vmul.f32 %v769, %v1438
    %v1500 = vmul.f32 %v772, %v1443
    %v1501 = vmul.f32 %v777, %v1428
    %v1502 = vmul.f32 %v780, %v1433
    %v1503 = vmul.f32 %v785, %v1438
    %v1504 = vmul.f32 %v788, %v1443
    %v1505 = vmul.f32 %v793, %v1428
    %v1506 = vmul.f32 %v796, %v1433
    %v1507 = vmul.f32 %v801, %v1438
    %v1508 = vmul.f32 %v804, %v1443
    %1510 = vset.pattern.permute.xlu0 0
    %1511 = vperm.xlu0 %1510, %v1421
    %v1512 = vpop.permute.xlu0 %1511
    %1515 = vset.pattern.permute.xlu0 0
    %1516 = vperm.xlu0 %1515, %v1422
    %v1517 = vpop.permute.xlu0 %1516
    %1520 = vset.pattern.permute.xlu0 0
    %1521 = vperm.xlu0 %1520, %v1423
    %v1522 = vpop.permute.xlu0 %1521
    %1525 = vset.pattern.permute.xlu0 0
    %1526 = vperm.xlu0 %1525, %v1424
    %v1527 = vpop.permute.xlu0 %1526
    %v1529 = vadd.f32 %v1445, %v1512
    %v1530 = vadd.f32 %v1446, %v1517
    %v1531 = vadd.f32 %v1447, %v1522
    %v1532 = vadd.f32 %v1448, %v1527
    %v1533 = vadd.f32 %v1449, %v1512
    %v1534 = vadd.f32 %v1450, %v1517
    %v1535 = vadd.f32 %v1451, %v1522
    %v1536 = vadd.f32 %v1452, %v1527
    %v1537 = vadd.f32 %v1453, %v1512
    %v1538 = vadd.f32 %v1454, %v1517
    %v1539 = vadd.f32 %v1455, %v1522
    %v1540 = vadd.f32 %v1456, %v1527
    %v1541 = vadd.f32 %v1457, %v1512
    %v1542 = vadd.f32 %v1458, %v1517
    %v1543 = vadd.f32 %v1459, %v1522
    %v1544 = vadd.f32 %v1460, %v1527
    %v1545 = vadd.f32 %v1461, %v1512
    %v1546 = vadd.f32 %v1462, %v1517
    %v1547 = vadd.f32 %v1463, %v1522
    %v1548 = vadd.f32 %v1464, %v1527
    %v1549 = vadd.f32 %v1465, %v1512
    %v1550 = vadd.f32 %v1466, %v1517
    %v1551 = vadd.f32 %v1467, %v1522
    %v1552 = vadd.f32 %v1468, %v1527
    %v1553 = vadd.f32 %v1469, %v1512
    %v1554 = vadd.f32 %v1470, %v1517
    %v1555 = vadd.f32 %v1471, %v1522
    %v1556 = vadd.f32 %v1472, %v1527
    %v1557 = vadd.f32 %v1473, %v1512
    %v1558 = vadd.f32 %v1474, %v1517
    %v1559 = vadd.f32 %v1475, %v1522
    %v1560 = vadd.f32 %v1476, %v1527
    %v1561 = vadd.f32 %v1477, %v1512
    %v1562 = vadd.f32 %v1478, %v1517
    %v1563 = vadd.f32 %v1479, %v1522
    %v1564 = vadd.f32 %v1480, %v1527
    %v1565 = vadd.f32 %v1481, %v1512
    %v1566 = vadd.f32 %v1482, %v1517
    %v1567 = vadd.f32 %v1483, %v1522
    %v1568 = vadd.f32 %v1484, %v1527
    %v1569 = vadd.f32 %v1485, %v1512
    %v1570 = vadd.f32 %v1486, %v1517
    %v1571 = vadd.f32 %v1487, %v1522
    %v1572 = vadd.f32 %v1488, %v1527
    %v1573 = vadd.f32 %v1489, %v1512
    %v1574 = vadd.f32 %v1490, %v1517
    %v1575 = vadd.f32 %v1491, %v1522
    %v1576 = vadd.f32 %v1492, %v1527
    %v1577 = vadd.f32 %v1493, %v1512
    %v1578 = vadd.f32 %v1494, %v1517
    %v1579 = vadd.f32 %v1495, %v1522
    %v1580 = vadd.f32 %v1496, %v1527
    %v1581 = vadd.f32 %v1497, %v1512
    %v1582 = vadd.f32 %v1498, %v1517
    %v1583 = vadd.f32 %v1499, %v1522
    %v1584 = vadd.f32 %v1500, %v1527
    %v1585 = vadd.f32 %v1501, %v1512
    %v1586 = vadd.f32 %v1502, %v1517
    %v1587 = vadd.f32 %v1503, %v1522
    %v1588 = vadd.f32 %v1504, %v1527
    %v1589 = vadd.f32 %v1505, %v1512
    %v1590 = vadd.f32 %v1506, %v1517
    %v1591 = vadd.f32 %v1507, %v1522
    %v1592 = vadd.f32 %v1508, %v1527
    %v1593 = vmax.f32 %v1529, 0.0
    %v1594 = vmax.f32 %v1530, 0.0
    %v1595 = vmax.f32 %v1531, 0.0
    %v1596 = vmax.f32 %v1532, 0.0
    %v1597 = vmax.f32 %v1533, 0.0
    %v1598 = vmax.f32 %v1534, 0.0
    %v1599 = vmax.f32 %v1535, 0.0
    %v1600 = vmax.f32 %v1536, 0.0
    %v1601 = vmax.f32 %v1537, 0.0
    %v1602 = vmax.f32 %v1538, 0.0
    %v1603 = vmax.f32 %v1539, 0.0
    %v1604 = vmax.f32 %v1540, 0.0
    %v1605 = vmax.f32 %v1541, 0.0
    %v1606 = vmax.f32 %v1542, 0.0
    %v1607 = vmax.f32 %v1543, 0.0
    %v1608 = vmax.f32 %v1544, 0.0
    %v1609 = vmax.f32 %v1545, 0.0
    %v1610 = vmax.f32 %v1546, 0.0
    %v1611 = vmax.f32 %v1547, 0.0
    %v1612 = vmax.f32 %v1548, 0.0
    %v1613 = vmax.f32 %v1549, 0.0
    %v1614 = vmax.f32 %v1550, 0.0
    %v1615 = vmax.f32 %v1551, 0.0
    %v1616 = vmax.f32 %v1552, 0.0
    %v1617 = vmax.f32 %v1553, 0.0
    %v1618 = vmax.f32 %v1554, 0.0
    %v1619 = vmax.f32 %v1555, 0.0
    %v1620 = vmax.f32 %v1556, 0.0
    %v1621 = vmax.f32 %v1557, 0.0
    %v1622 = vmax.f32 %v1558, 0.0
    %v1623 = vmax.f32 %v1559, 0.0
    %v1624 = vmax.f32 %v1560, 0.0
    %v1625 = vmax.f32 %v1561, 0.0
    %v1626 = vmax.f32 %v1562, 0.0
    %v1627 = vmax.f32 %v1563, 0.0
    %v1628 = vmax.f32 %v1564, 0.0
    %v1629 = vmax.f32 %v1565, 0.0
    %v1630 = vmax.f32 %v1566, 0.0
    %v1631 = vmax.f32 %v1567, 0.0
    %v1632 = vmax.f32 %v1568, 0.0
    %v1633 = vmax.f32 %v1569, 0.0
    %v1634 = vmax.f32 %v1570, 0.0
    %v1635 = vmax.f32 %v1571, 0.0
    %v1636 = vmax.f32 %v1572, 0.0
    %v1637 = vmax.f32 %v1573, 0.0
    %v1638 = vmax.f32 %v1574, 0.0
    %v1639 = vmax.f32 %v1575, 0.0
    %v1640 = vmax.f32 %v1576, 0.0
    %v1641 = vmax.f32 %v1577, 0.0
    %v1642 = vmax.f32 %v1578, 0.0
    %v1643 = vmax.f32 %v1579, 0.0
    %v1644 = vmax.f32 %v1580, 0.0
    %v1645 = vmax.f32 %v1581, 0.0
    %v1646 = vmax.f32 %v1582, 0.0
    %v1647 = vmax.f32 %v1583, 0.0
    %v1648 = vmax.f32 %v1584, 0.0
    %v1649 = vmax.f32 %v1585, 0.0
    %v1650 = vmax.f32 %v1586, 0.0
    %v1651 = vmax.f32 %v1587, 0.0
    %v1652 = vmax.f32 %v1588, 0.0
    %v1653 = vmax.f32 %v1589, 0.0
    %v1654 = vmax.f32 %v1590, 0.0
    %v1655 = vmax.f32 %v1591, 0.0
    %v1656 = vmax.f32 %v1592, 0.0
    %1661 = vrot.lane.b32.xlu0 %v1597, 2
    %v1662 = vpop.permute.xlu0 %1661
    %1663 = vrot.lane.b32.xlu0 %v1598, 2
    %v1664 = vpop.permute.xlu0 %1663
    %1665 = vrot.lane.b32.xlu0 %v1599, 2
    %v1666 = vpop.permute.xlu0 %1665
    %1667 = vrot.lane.b32.xlu0 %v1600, 2
    %v1668 = vpop.permute.xlu0 %1667
    %1677 = vrot.lane.b32.xlu0 %v1601, 4
    %v1678 = vpop.permute.xlu0 %1677
    %1679 = vrot.lane.b32.xlu0 %v1602, 4
    %v1680 = vpop.permute.xlu0 %1679
    %1681 = vrot.lane.b32.xlu0 %v1603, 4
    %v1682 = vpop.permute.xlu0 %1681
    %1683 = vrot.lane.b32.xlu0 %v1604, 4
    %v1684 = vpop.permute.xlu0 %1683
    %1693 = vrot.lane.b32.xlu0 %v1605, 6
    %v1694 = vpop.permute.xlu0 %1693
    %1695 = vrot.lane.b32.xlu0 %v1606, 6
    %v1696 = vpop.permute.xlu0 %1695
    %1697 = vrot.lane.b32.xlu0 %v1607, 6
    %v1698 = vpop.permute.xlu0 %1697
    %1699 = vrot.lane.b32.xlu0 %v1608, 6
    %v1700 = vpop.permute.xlu0 %1699
    %1709 = vrot.lane.b32.xlu0 %v1609, 8
    %v1710 = vpop.permute.xlu0 %1709
    %1711 = vrot.lane.b32.xlu0 %v1610, 8
    %v1712 = vpop.permute.xlu0 %1711
    %1713 = vrot.lane.b32.xlu0 %v1611, 8
    %v1714 = vpop.permute.xlu0 %1713
    %1715 = vrot.lane.b32.xlu0 %v1612, 8
    %v1716 = vpop.permute.xlu0 %1715
    %1725 = vrot.lane.b32.xlu0 %v1613, 10
    %v1726 = vpop.permute.xlu0 %1725
    %1727 = vrot.lane.b32.xlu0 %v1614, 10
    %v1728 = vpop.permute.xlu0 %1727
    %1729 = vrot.lane.b32.xlu0 %v1615, 10
    %v1730 = vpop.permute.xlu0 %1729
    %1731 = vrot.lane.b32.xlu0 %v1616, 10
    %v1732 = vpop.permute.xlu0 %1731
    %1741 = vrot.lane.b32.xlu0 %v1617, 12
    %v1742 = vpop.permute.xlu0 %1741
    %1743 = vrot.lane.b32.xlu0 %v1618, 12
    %v1744 = vpop.permute.xlu0 %1743
    %1745 = vrot.lane.b32.xlu0 %v1619, 12
    %v1746 = vpop.permute.xlu0 %1745
    %1747 = vrot.lane.b32.xlu0 %v1620, 12
    %v1748 = vpop.permute.xlu0 %1747
    %1757 = vrot.lane.b32.xlu0 %v1621, 14
    %v1758 = vpop.permute.xlu0 %1757
    %1759 = vrot.lane.b32.xlu0 %v1622, 14
    %v1760 = vpop.permute.xlu0 %1759
    %1761 = vrot.lane.b32.xlu0 %v1623, 14
    %v1762 = vpop.permute.xlu0 %1761
    %1763 = vrot.lane.b32.xlu0 %v1624, 14
    %v1764 = vpop.permute.xlu0 %1763
    %1773 = vrot.lane.b32.xlu0 %v1625, 16
    %v1774 = vpop.permute.xlu0 %1773
    %1775 = vrot.lane.b32.xlu0 %v1626, 16
    %v1776 = vpop.permute.xlu0 %1775
    %1777 = vrot.lane.b32.xlu0 %v1627, 16
    %v1778 = vpop.permute.xlu0 %1777
    %1779 = vrot.lane.b32.xlu0 %v1628, 16
    %v1780 = vpop.permute.xlu0 %1779
    %1789 = vrot.lane.b32.xlu0 %v1629, 18
    %v1790 = vpop.permute.xlu0 %1789
    %1791 = vrot.lane.b32.xlu0 %v1630, 18
    %v1792 = vpop.permute.xlu0 %1791
    %1793 = vrot.lane.b32.xlu0 %v1631, 18
    %v1794 = vpop.permute.xlu0 %1793
    %1795 = vrot.lane.b32.xlu0 %v1632, 18
    %v1796 = vpop.permute.xlu0 %1795
    %1805 = vrot.lane.b32.xlu0 %v1633, 20
    %v1806 = vpop.permute.xlu0 %1805
    %1807 = vrot.lane.b32.xlu0 %v1634, 20
    %v1808 = vpop.permute.xlu0 %1807
    %1809 = vrot.lane.b32.xlu0 %v1635, 20
    %v1810 = vpop.permute.xlu0 %1809
    %1811 = vrot.lane.b32.xlu0 %v1636, 20
    %v1812 = vpop.permute.xlu0 %1811
    %1821 = vrot.lane.b32.xlu0 %v1637, 22
    %v1822 = vpop.permute.xlu0 %1821
    %1823 = vrot.lane.b32.xlu0 %v1638, 22
    %v1824 = vpop.permute.xlu0 %1823
    %1825 = vrot.lane.b32.xlu0 %v1639, 22
    %v1826 = vpop.permute.xlu0 %1825
    %1827 = vrot.lane.b32.xlu0 %v1640, 22
    %v1828 = vpop.permute.xlu0 %1827
    %1837 = vrot.lane.b32.xlu0 %v1641, 24
    %v1838 = vpop.permute.xlu0 %1837
    %1839 = vrot.lane.b32.xlu0 %v1642, 24
    %v1840 = vpop.permute.xlu0 %1839
    %1841 = vrot.lane.b32.xlu0 %v1643, 24
    %v1842 = vpop.permute.xlu0 %1841
    %1843 = vrot.lane.b32.xlu0 %v1644, 24
    %v1844 = vpop.permute.xlu0 %1843
    %1853 = vrot.lane.b32.xlu0 %v1645, 26
    %v1854 = vpop.permute.xlu0 %1853
    %1855 = vrot.lane.b32.xlu0 %v1646, 26
    %v1856 = vpop.permute.xlu0 %1855
    %1857 = vrot.lane.b32.xlu0 %v1647, 26
    %v1858 = vpop.permute.xlu0 %1857
    %1859 = vrot.lane.b32.xlu0 %v1648, 26
    %v1860 = vpop.permute.xlu0 %1859
    %1869 = vrot.lane.b32.xlu0 %v1649, 28
    %v1870 = vpop.permute.xlu0 %1869
    %1871 = vrot.lane.b32.xlu0 %v1650, 28
    %v1872 = vpop.permute.xlu0 %1871
    %1873 = vrot.lane.b32.xlu0 %v1651, 28
    %v1874 = vpop.permute.xlu0 %1873
    %1875 = vrot.lane.b32.xlu0 %v1652, 28
    %v1876 = vpop.permute.xlu0 %1875
    %1885 = vrot.lane.b32.xlu0 %v1653, 30
    %v1886 = vpop.permute.xlu0 %1885
    %1887 = vrot.lane.b32.xlu0 %v1654, 30
    %v1888 = vpop.permute.xlu0 %1887
    %1889 = vrot.lane.b32.xlu0 %v1655, 30
    %v1890 = vpop.permute.xlu0 %1889
    %1891 = vrot.lane.b32.xlu0 %v1656, 30
    %v1892 = vpop.permute.xlu0 %1891
    %v1897 = vsel %vm807, %v1593, %v1662
    %v1898 = vsel %vm807, %v1594, %v1664
    %v1899 = vsel %vm807, %v1595, %v1666
    %v1900 = vsel %vm807, %v1596, %v1668
    %vm1901 = vcmask 31744
    %v1902 = vsel %vm1901, %v1897, %v1678
    %v1903 = vsel %vm1901, %v1898, %v1680
    %v1904 = vsel %vm1901, %v1899, %v1682
    %v1905 = vsel %vm1901, %v1900, %v1684
    %vm1906 = vcmask 48128
    %v1907 = vsel %vm1906, %v1902, %v1694
    %v1908 = vsel %vm1906, %v1903, %v1696
    %v1909 = vsel %vm1906, %v1904, %v1698
    %v1910 = vsel %vm1906, %v1905, %v1700
    %vm1911 = vcmask 64512
    %v1912 = vsel %vm1911, %v1907, %v1710
    %v1913 = vsel %vm1911, %v1908, %v1712
    %v1914 = vsel %vm1911, %v1909, %v1714
    %v1915 = vsel %vm1911, %v1910, %v1716
    %vm1916 = vcmask 80896
    %v1917 = vsel %vm1916, %v1912, %v1726
    %v1918 = vsel %vm1916, %v1913, %v1728
    %v1919 = vsel %vm1916, %v1914, %v1730
    %v1920 = vsel %vm1916, %v1915, %v1732
    %vm1921 = vcmask 97280
    %v1922 = vsel %vm1921, %v1917, %v1742
    %v1923 = vsel %vm1921, %v1918, %v1744
    %v1924 = vsel %vm1921, %v1919, %v1746
    %v1925 = vsel %vm1921, %v1920, %v1748
    %vm1926 = vcmask 113664
    %v1927 = vsel %vm1926, %v1922, %v1758
    %v1928 = vsel %vm1926, %v1923, %v1760
    %v1929 = vsel %vm1926, %v1924, %v1762
    %v1930 = vsel %vm1926, %v1925, %v1764
    %v1931 = vsel %vm421, %v1927, %v1774
    %v1932 = vsel %vm421, %v1928, %v1776
    %v1933 = vsel %vm421, %v1929, %v1778
    %v1934 = vsel %vm421, %v1930, %v1780
    %vm1935 = vcmask 146432
    %v1936 = vsel %vm1935, %v1931, %v1790
    %v1937 = vsel %vm1935, %v1932, %v1792
    %v1938 = vsel %vm1935, %v1933, %v1794
    %v1939 = vsel %vm1935, %v1934, %v1796
    %vm1940 = vcmask 162816
    %v1941 = vsel %vm1940, %v1936, %v1806
    %v1942 = vsel %vm1940, %v1937, %v1808
    %v1943 = vsel %vm1940, %v1938, %v1810
    %v1944 = vsel %vm1940, %v1939, %v1812
    %vm1945 = vcmask 179200
    %v1946 = vsel %vm1945, %v1941, %v1822
    %v1947 = vsel %vm1945, %v1942, %v1824
    %v1948 = vsel %vm1945, %v1943, %v1826
    %v1949 = vsel %vm1945, %v1944, %v1828
    %vm1950 = vcmask 195584
    %v1951 = vsel %vm1950, %v1946, %v1838
    %v1952 = vsel %vm1950, %v1947, %v1840
    %v1953 = vsel %vm1950, %v1948, %v1842
    %v1954 = vsel %vm1950, %v1949, %v1844
    %vm1955 = vcmask 211968
    %v1956 = vsel %vm1955, %v1951, %v1854
    %v1957 = vsel %vm1955, %v1952, %v1856
    %v1958 = vsel %vm1955, %v1953, %v1858
    %v1959 = vsel %vm1955, %v1954, %v1860
    %vm1960 = vcmask 228352
    %v1961 = vsel %vm1960, %v1956, %v1870
    %v1962 = vsel %vm1960, %v1957, %v1872
    %v1963 = vsel %vm1960, %v1958, %v1874
    %v1964 = vsel %vm1960, %v1959, %v1876
    %vm1965 = vcmask 244736
    %v1966 = vsel %vm1965, %v1961, %v1886
    %v1967 = vsel %vm1965, %v1962, %v1888
    %v1968 = vsel %vm1965, %v1963, %v1890
    %v1969 = vsel %vm1965, %v1964, %v1892
    %v1970 = vpack.c.bf16 %v1967, %v1966
    %v1971 = vpack.c.bf16 %v1969, %v1968
    %v1972 = vld [vmem:[#allocation5] sm:$0xff]
    %v1973 = vld [vmem:[#allocation5 + $0x8] sm:$0xff]
    %v1974 = vld [vmem:[#allocation5 + $0x10] sm:$0xff]
    %v1975 = vld [vmem:[#allocation5 + $0x18] sm:$0xff]
    %v1980 = vunpack.c.l.b16 %v1972
    %v1981 = vunpack.c.h.b16 %v1972
    %v1982 = vunpack.c.l.b16 %v1973
    %v1983 = vunpack.c.h.b16 %v1973
    %v1984 = vunpack.c.l.b16 %v1974
    %v1985 = vunpack.c.h.b16 %v1974
    %v1986 = vunpack.c.l.b16 %v1975
    %v1987 = vunpack.c.h.b16 %v1975
    %v1988 = vpack.c.b16 %v1982, %v1980
    %v1989 = vpack.c.b16 %v1983, %v1981
    %v1990 = vpack.c.b16 %v1986, %v1984
    %v1991 = vpack.c.b16 %v1987, %v1985
    %vm1996 = vcmask 261120
    %v1998 = vsel %vm1996, %v1970, 0
    %v2001 = vsel %vm1996, %v1971, 0
    %2003 = vmatprep.subr.bf16.mxu0 0
    %2004 = vmatpush1.bf16.msra.mxu0 0
    %2005 = vmatprep.subr.bf16.mxu0 0
    %2006 = vmatpush1.bf16.msra.mxu0 0
    %2007 = vmatprep.subr.bf16.mxu0 0
    %2008 = vmatpush1.bf16.msra.mxu0 0
    %2009 = vmatprep.subr.bf16.mxu0 0
    %2010 = vmatpush1.bf16.msra.mxu0 0
    %2011 = vmatprep.subr.bf16.mxu0 0
    %2012 = vmatpush1.bf16.msra.mxu0 0
    %2013 = vmatprep.subr.bf16.mxu0 0
    %2014 = vmatpush1.bf16.msra.mxu0 0
    %2015 = vmatprep.subr.bf16.mxu0 %v1991
    %2016 = vmatpush1.bf16.msra.mxu0 %v1990
    %2017 = vmatprep.subr.bf16.mxu0 %v1989
    %2018 = vmatpush1.bf16.msra.mxu0 %v1988
    %2019 = vmatprep.subr.bf16.mxu0 0
    %2020 = vmatpush2.bf16.msra.mxu0 0
    %2021 = vmatprep.subr.bf16.mxu0 0
    %2022 = vmatpush2.bf16.msra.mxu0 0
    %2023 = vmatprep.subr.bf16.mxu0 0
    %2024 = vmatpush2.bf16.msra.mxu0 0
    %2025 = vmatprep.subr.bf16.mxu0 0
    %2026 = vmatpush2.bf16.msra.mxu0 0
    %2027 = vmatprep.subr.bf16.mxu0 0
    %2028 = vmatpush2.bf16.msra.mxu0 0
    %2029 = vmatprep.subr.bf16.mxu0 0
    %2030 = vmatpush2.bf16.msra.mxu0 0
    %2031 = vmatprep.subr.bf16.mxu0 0
    %2032 = vmatpush2.bf16.msra.mxu0 0
    %2033 = vmatprep.subr.bf16.mxu0 0
    %2034 = vmatpush2.bf16.msra.mxu0 0
    %2035 = vmatprep.mubr.bf16.mxu0 0
    %2036 = vmatmul.mubr.bf16.gmra.mxu0 %v1998
    %v2037 = vpop.f32.mrf.mxu0
    %v2038 = vadd.f32 0.0, %v2037
    %v2039 = vpop.f32.mrf.mxu0
    %v2040 = vadd.f32 0.0, %v2039
    %v2041 = vpop.f32.mrf.mxu0
    %v2042 = vadd.f32 0.0, %v2041
    %v2043 = vpop.f32.mrf.mxu0
    %v2044 = vadd.f32 0.0, %v2043
    %2045 = vmatprep.mubr.bf16.mxu0 0
    %2046 = vmatmul.mubr.bf16.gmra.mxu0 %v2001
    %v2047 = vpop.f32.mrf.mxu0
    %v2048 = vadd.f32 0.0, %v2047
    %v2049 = vpop.f32.mrf.mxu0
    %v2050 = vadd.f32 0.0, %v2049
    %v2051 = vpop.f32.mrf.mxu0
    %v2052 = vadd.f32 0.0, %v2051
    %v2053 = vpop.f32.mrf.mxu0
    %v2054 = vadd.f32 0.0, %v2053
    %2055 = vdwg.mxu0
    %v2056 = vpack.c.bf16 %v2042, %v2038
    %v2057 = vpack.c.bf16 %v2044, %v2040
    %v2058 = vpack.c.bf16 %v2052, %v2048
    %v2059 = vpack.c.bf16 %v2054, %v2050
    %v2064 = vunpack.c.l.b16 %v2056
    %v2065 = vunpack.c.l.b16 %v2057
    %v2066 = vunpack.c.h.b16 %v2056
    %v2067 = vunpack.c.h.b16 %v2057
    %v2068 = vunpack.c.l.b16 %v2058
    %v2069 = vunpack.c.l.b16 %v2059
    %v2070 = vunpack.c.h.b16 %v2058
    %v2071 = vunpack.c.h.b16 %v2059
    %v2072 = vpack.c.b16 %v2065, %v2064
    %v2073 = vpack.c.b16 %v2067, %v2066
    %v2074 = vpack.c.b16 %v2069, %v2068
    %v2075 = vpack.c.b16 %v2071, %v2070
    %2080 = vst [vmem:[#allocation2 + $0x4] sm:$0xff] %v2072
    %2081 = vst [vmem:[#allocation2 + $0x14] sm:$0xff] %v2073
    %2082 = vst [vmem:[#allocation2 + $0x24] sm:$0xff] %v2074
    %2083 = vst [vmem:[#allocation2 + $0x34] sm:$0xff] %v2075
    %v2084 = vld [vmem:[#allocation2] sm:$0xff]
    %v2085 = vld [vmem:[#allocation2 + $0x8] sm:$0xf]
    %v2086 = vld [vmem:[#allocation2 + $0x10] sm:$0xff]
    %v2087 = vld [vmem:[#allocation2 + $0x18] sm:$0xf]
    %v2088 = vld [vmem:[#allocation2 + $0x20] sm:$0xff]
    %v2089 = vld [vmem:[#allocation2 + $0x28] sm:$0xf]
    %v2090 = vld [vmem:[#allocation2 + $0x30] sm:$0xff]
    %v2091 = vld [vmem:[#allocation2 + $0x38] sm:$0xf]
    %v2092 = vld [vmem:[#allocation2 + $0x4] sm:$0xff]
    %v2093 = vld [vmem:[#allocation2 + $0x14] sm:$0xff]
    %v2094 = vld [vmem:[#allocation2 + $0x24] sm:$0xff]
    %v2095 = vld [vmem:[#allocation2 + $0x34] sm:$0xff]
    %v2096 = vld [vmem:[#allocation2 + $0x4] sm:$0xff]
    %v2097 = vld [vmem:[#allocation2 + $0xc] sm:$0xf]
    %v2098 = vld [vmem:[#allocation2 + $0x14] sm:$0xff]
    %v2099 = vld [vmem:[#allocation2 + $0x1c] sm:$0xf]
    %v2100 = vld [vmem:[#allocation2 + $0x24] sm:$0xff]
    %v2101 = vld [vmem:[#allocation2 + $0x2c] sm:$0xf]
    %v2102 = vld [vmem:[#allocation2 + $0x34] sm:$0xff]
    %v2103 = vld [vmem:[#allocation2 + $0x3c] sm:$0xf]
    %v2112 = vunpack.c.l.b16 %v2084
    %v2113 = vunpack.c.h.b16 %v2084
    %v2114 = vunpack.c.l.b16 %v2085
    %v2115 = vunpack.c.l.b16 %v2086
    %v2116 = vunpack.c.h.b16 %v2086
    %v2117 = vunpack.c.l.b16 %v2087
    %v2118 = vunpack.c.l.b16 %v2088
    %v2119 = vunpack.c.h.b16 %v2088
    %v2120 = vunpack.c.l.b16 %v2089
    %v2121 = vunpack.c.l.b16 %v2090
    %v2122 = vunpack.c.h.b16 %v2090
    %v2123 = vunpack.c.l.b16 %v2091
    %v2124 = vpack.c.b16 %v2115, %v2112
    %v2125 = vpack.c.b16 %v2116, %v2113
    %v2126 = vpack.c.b16 %v2117, %v2114
    %v2127 = vpack.c.b16 %v2121, %v2118
    %v2128 = vpack.c.b16 %v2122, %v2119
    %v2129 = vpack.c.b16 %v2123, %v2120
    %2130 = vrot.lane.b32.xlu0 %v2124, 127
    %v2131 = vpop.permute.xlu0 %2130
    %2132 = vrot.lane.b32.xlu0 %v2125, 127
    %v2133 = vpop.permute.xlu0 %2132
    %2134 = vrot.lane.b32.xlu0 %v2126, 127
    %v2135 = vpop.permute.xlu0 %2134
    %2136 = vrot.lane.b32.xlu0 %v2127, 127
    %v2137 = vpop.permute.xlu0 %2136
    %2138 = vrot.lane.b32.xlu0 %v2128, 127
    %v2139 = vpop.permute.xlu0 %2138
    %2140 = vrot.lane.b32.xlu0 %v2129, 127
    %v2141 = vpop.permute.xlu0 %2140
    %vm2142 = vcmask 1039360
    %v2143 = vsel %vm2142, %v2131, %v2133
    %v2144 = vsel %vm2142, %v2133, %v2135
    %v2145 = vsel %vm2142, %v2137, %v2139
    %v2146 = vsel %vm2142, %v2139, %v2141
    %2147 = vrot.lane.b32.xlu0 %v2124, 126
    %v2148 = vpop.permute.xlu0 %2147
    %2149 = vrot.lane.b32.xlu0 %v2125, 126
    %v2150 = vpop.permute.xlu0 %2149
    %2151 = vrot.lane.b32.xlu0 %v2126, 126
    %v2152 = vpop.permute.xlu0 %2151
    %2153 = vrot.lane.b32.xlu0 %v2127, 126
    %v2154 = vpop.permute.xlu0 %2153
    %2155 = vrot.lane.b32.xlu0 %v2128, 126
    %v2156 = vpop.permute.xlu0 %2155
    %2157 = vrot.lane.b32.xlu0 %v2129, 126
    %v2158 = vpop.permute.xlu0 %2157
    %vm2159 = vcmask 1031168
    %v2160 = vsel %vm2159, %v2148, %v2150
    %v2161 = vsel %vm2159, %v2150, %v2152
    %v2162 = vsel %vm2159, %v2154, %v2156
    %v2163 = vsel %vm2159, %v2156, %v2158
    %2164 = vrot.lane.b32.xlu0 %v2124, 122
    %v2165 = vpop.permute.xlu0 %2164
    %2166 = vrot.lane.b32.xlu0 %v2125, 122
    %v2167 = vpop.permute.xlu0 %2166
    %2168 = vrot.lane.b32.xlu0 %v2126, 122
    %v2169 = vpop.permute.xlu0 %2168
    %2170 = vrot.lane.b32.xlu0 %v2127, 122
    %v2171 = vpop.permute.xlu0 %2170
    %2172 = vrot.lane.b32.xlu0 %v2128, 122
    %v2173 = vpop.permute.xlu0 %2172
    %2174 = vrot.lane.b32.xlu0 %v2129, 122
    %v2175 = vpop.permute.xlu0 %2174
    %vm2176 = vcmask 998400
    %v2177 = vsel %vm2176, %v2165, %v2167
    %v2178 = vsel %vm2176, %v2167, %v2169
    %v2179 = vsel %vm2176, %v2171, %v2173
    %v2180 = vsel %vm2176, %v2173, %v2175
    %v2185 = vunpack.c.l.b16 %v2092
    %v2186 = vunpack.c.h.b16 %v2092
    %v2187 = vunpack.c.l.b16 %v2093
    %v2188 = vunpack.c.h.b16 %v2093
    %v2189 = vunpack.c.l.b16 %v2094
    %v2190 = vunpack.c.h.b16 %v2094
    %v2191 = vunpack.c.l.b16 %v2095
    %v2192 = vunpack.c.h.b16 %v2095
    %v2193 = vpack.c.b16 %v2187, %v2185
    %v2194 = vpack.c.b16 %v2188, %v2186
    %v2195 = vpack.c.b16 %v2191, %v2189
    %v2196 = vpack.c.b16 %v2192, %v2190
    %2197 = vrot.lane.b32.xlu0 %v2193, 121
    %v2198 = vpop.permute.xlu0 %2197
    %2199 = vrot.lane.b32.xlu0 %v2194, 121
    %v2200 = vpop.permute.xlu0 %2199
    %2201 = vrot.lane.b32.xlu0 %v2195, 121
    %v2202 = vpop.permute.xlu0 %2201
    %2203 = vrot.lane.b32.xlu0 %v2196, 121
    %v2204 = vpop.permute.xlu0 %2203
    %vm2205 = vcmask 990208
    %v2206 = vsel %vm2205, %v2198, %v2200
    %v2207 = vsel %vm2205, %v2202, %v2204
    %v2216 = vunpack.c.l.b16 %v2096
    %v2217 = vunpack.c.h.b16 %v2096
    %v2218 = vunpack.c.l.b16 %v2097
    %v2219 = vunpack.c.l.b16 %v2098
    %v2220 = vunpack.c.h.b16 %v2098
    %v2221 = vunpack.c.l.b16 %v2099
    %v2222 = vunpack.c.l.b16 %v2100
    %v2223 = vunpack.c.h.b16 %v2100
    %v2224 = vunpack.c.l.b16 %v2101
    %v2225 = vunpack.c.l.b16 %v2102
    %v2226 = vunpack.c.h.b16 %v2102
    %v2227 = vunpack.c.l.b16 %v2103
    %v2228 = vpack.c.b16 %v2219, %v2216
    %v2229 = vpack.c.b16 %v2220, %v2217
    %v2230 = vpack.c.b16 %v2221, %v2218
    %v2231 = vpack.c.b16 %v2225, %v2222
    %v2232 = vpack.c.b16 %v2226, %v2223
    %v2233 = vpack.c.b16 %v2227, %v2224
    %2234 = vrot.lane.b32.xlu0 %v2228, 120
    %v2235 = vpop.permute.xlu0 %2234
    %2236 = vrot.lane.b32.xlu0 %v2229, 120
    %v2237 = vpop.permute.xlu0 %2236
    %2238 = vrot.lane.b32.xlu0 %v2230, 120
    %v2239 = vpop.permute.xlu0 %2238
    %2240 = vrot.lane.b32.xlu0 %v2231, 120
    %v2241 = vpop.permute.xlu0 %2240
    %2242 = vrot.lane.b32.xlu0 %v2232, 120
    %v2243 = vpop.permute.xlu0 %2242
    %2244 = vrot.lane.b32.xlu0 %v2233, 120
    %v2245 = vpop.permute.xlu0 %2244
    %vm2246 = vcmask 982016
    %v2247 = vsel %vm2246, %v2235, %v2237
    %v2248 = vsel %vm2246, %v2237, %v2239
    %v2249 = vsel %vm2246, %v2241, %v2243
    %v2250 = vsel %vm2246, %v2243, %v2245
    %2251 = vrot.lane.b32.xlu0 %v2228, 116
    %v2252 = vpop.permute.xlu0 %2251
    %2253 = vrot.lane.b32.xlu0 %v2229, 116
    %v2254 = vpop.permute.xlu0 %2253
    %2255 = vrot.lane.b32.xlu0 %v2230, 116
    %v2256 = vpop.permute.xlu0 %2255
    %2257 = vrot.lane.b32.xlu0 %v2231, 116
    %v2258 = vpop.permute.xlu0 %2257
    %2259 = vrot.lane.b32.xlu0 %v2232, 116
    %v2260 = vpop.permute.xlu0 %2259
    %2261 = vrot.lane.b32.xlu0 %v2233, 116
    %v2262 = vpop.permute.xlu0 %2261
    %vm2263 = vcmask 949248
    %v2264 = vsel %vm2263, %v2252, %v2254
    %v2265 = vsel %vm2263, %v2254, %v2256
    %v2266 = vsel %vm2263, %v2258, %v2260
    %v2267 = vsel %vm2263, %v2260, %v2262
    %2268 = vrot.lane.b32.xlu0 %v2228, 115
    %v2269 = vpop.permute.xlu0 %2268
    %2270 = vrot.lane.b32.xlu0 %v2229, 115
    %v2271 = vpop.permute.xlu0 %2270
    %2272 = vrot.lane.b32.xlu0 %v2230, 115
    %v2273 = vpop.permute.xlu0 %2272
    %2274 = vrot.lane.b32.xlu0 %v2231, 115
    %v2275 = vpop.permute.xlu0 %2274
    %2276 = vrot.lane.b32.xlu0 %v2232, 115
    %v2277 = vpop.permute.xlu0 %2276
    %2278 = vrot.lane.b32.xlu0 %v2233, 115
    %v2279 = vpop.permute.xlu0 %2278
    %vm2280 = vcmask 941056
    %v2281 = vsel %vm2280, %v2269, %v2271
    %v2282 = vsel %vm2280, %v2271, %v2273
    %v2283 = vsel %vm2280, %v2275, %v2277
    %v2284 = vsel %vm2280, %v2277, %v2279
    %2285 = vrot.lane.b32.xlu0 %v2228, 114
    %v2286 = vpop.permute.xlu0 %2285
    %2287 = vrot.lane.b32.xlu0 %v2229, 114
    %v2288 = vpop.permute.xlu0 %2287
    %2289 = vrot.lane.b32.xlu0 %v2230, 114
    %v2290 = vpop.permute.xlu0 %2289
    %2291 = vrot.lane.b32.xlu0 %v2231, 114
    %v2292 = vpop.permute.xlu0 %2291
    %2293 = vrot.lane.b32.xlu0 %v2232, 114
    %v2294 = vpop.permute.xlu0 %2293
    %2295 = vrot.lane.b32.xlu0 %v2233, 114
    %v2296 = vpop.permute.xlu0 %2295
    %vm2297 = vcmask 932864
    %v2298 = vsel %vm2297, %v2286, %v2288
    %v2299 = vsel %vm2297, %v2288, %v2290
    %v2300 = vsel %vm2297, %v2292, %v2294
    %v2301 = vsel %vm2297, %v2294, %v2296
    %v2302 = vld [vmem:[#allocation7] sm:$0xff]
    %v2303 = vld [vmem:[#allocation7 + $0x8] sm:$0xf]
    %v2304 = vld [vmem:[#allocation7 + $0xc] sm:$0xff]
    %v2305 = vld [vmem:[#allocation7 + $0x14] sm:$0xf]
    %v2306 = vld [vmem:[#allocation7 + $0x18] sm:$0xff]
    %v2307 = vld [vmem:[#allocation7 + $0x20] sm:$0xf]
    %v2308 = vld [vmem:[#allocation7 + $0x24] sm:$0xff]
    %v2309 = vld [vmem:[#allocation7 + $0x2c] sm:$0xf]
    %v2310 = vld [vmem:[#allocation7 + $0x30] sm:$0xff]
    %v2311 = vld [vmem:[#allocation7 + $0x38] sm:$0xf]
    %v2312 = vld [vmem:[#allocation7 + $0x3c] sm:$0xff]
    %v2313 = vld [vmem:[#allocation7 + $0x44] sm:$0xf]
    %v2314 = vld [vmem:[#allocation7 + $0x48] sm:$0xff]
    %v2315 = vld [vmem:[#allocation7 + $0x50] sm:$0xf]
    %v2316 = vld [vmem:[#allocation7 + $0x54] sm:$0xff]
    %v2317 = vld [vmem:[#allocation7 + $0x5c] sm:$0xf]
    %v2334 = vunpack.c.l.b16 %v2302
    %v2335 = vunpack.c.h.b16 %v2302
    %v2336 = vunpack.c.l.b16 %v2303
    %v2337 = vunpack.c.l.b16 %v2304
    %v2338 = vunpack.c.h.b16 %v2304
    %v2339 = vunpack.c.l.b16 %v2305
    %v2340 = vunpack.c.l.b16 %v2306
    %v2341 = vunpack.c.h.b16 %v2306
    %v2342 = vunpack.c.l.b16 %v2307
    %v2343 = vunpack.c.l.b16 %v2308
    %v2344 = vunpack.c.h.b16 %v2308
    %v2345 = vunpack.c.l.b16 %v2309
    %v2346 = vunpack.c.l.b16 %v2310
    %v2347 = vunpack.c.h.b16 %v2310
    %v2348 = vunpack.c.l.b16 %v2311
    %v2349 = vunpack.c.l.b16 %v2312
    %v2350 = vunpack.c.h.b16 %v2312
    %v2351 = vunpack.c.l.b16 %v2313
    %v2352 = vunpack.c.l.b16 %v2314
    %v2353 = vunpack.c.h.b16 %v2314
    %v2354 = vunpack.c.l.b16 %v2315
    %v2355 = vunpack.c.l.b16 %v2316
    %v2356 = vunpack.c.h.b16 %v2316
    %v2357 = vunpack.c.l.b16 %v2317
    %v2358 = vpack.c.b16 %v2337, %v2334
    %v2359 = vpack.c.b16 %v2338, %v2335
    %v2360 = vpack.c.b16 %v2339, %v2336
    %v2361 = vpack.c.b16 %v2343, %v2340
    %v2362 = vpack.c.b16 %v2344, %v2341
    %v2363 = vpack.c.b16 %v2345, %v2342
    %v2364 = vpack.c.b16 %v2349, %v2346
    %v2365 = vpack.c.b16 %v2350, %v2347
    %v2366 = vpack.c.b16 %v2351, %v2348
    %v2367 = vpack.c.b16 %v2355, %v2352
    %v2368 = vpack.c.b16 %v2356, %v2353
    %v2369 = vpack.c.b16 %v2357, %v2354
    %2378 = vrot.lane.b32.xlu0 %v2124, 7
    %v2379 = vpop.permute.xlu0 %2378
    %2380 = vrot.lane.b32.xlu0 %v2125, 7
    %v2381 = vpop.permute.xlu0 %2380
    %2382 = vrot.lane.b32.xlu0 %v2126, 7
    %v2383 = vpop.permute.xlu0 %2382
    %2384 = vrot.lane.b32.xlu0 %v2127, 7
    %v2385 = vpop.permute.xlu0 %2384
    %2386 = vrot.lane.b32.xlu0 %v2128, 7
    %v2387 = vpop.permute.xlu0 %2386
    %2388 = vrot.lane.b32.xlu0 %v2129, 7
    %v2389 = vpop.permute.xlu0 %2388
    %2390 = vrot.lane.b32.xlu0 %v2143, 7
    %v2391 = vpop.permute.xlu0 %2390
    %2392 = vrot.lane.b32.xlu0 %v2144, 7
    %v2393 = vpop.permute.xlu0 %2392
    %2394 = vrot.lane.b32.xlu0 %v2135, 7
    %v2395 = vpop.permute.xlu0 %2394
    %2396 = vrot.lane.b32.xlu0 %v2145, 7
    %v2397 = vpop.permute.xlu0 %2396
    %2398 = vrot.lane.b32.xlu0 %v2146, 7
    %v2399 = vpop.permute.xlu0 %2398
    %2400 = vrot.lane.b32.xlu0 %v2141, 7
    %v2401 = vpop.permute.xlu0 %2400
    %2402 = vrot.lane.b32.xlu0 %v2160, 7
    %v2403 = vpop.permute.xlu0 %2402
    %2404 = vrot.lane.b32.xlu0 %v2161, 7
    %v2405 = vpop.permute.xlu0 %2404
    %2406 = vrot.lane.b32.xlu0 %v2152, 7
    %v2407 = vpop.permute.xlu0 %2406
    %2408 = vrot.lane.b32.xlu0 %v2162, 7
    %v2409 = vpop.permute.xlu0 %2408
    %2410 = vrot.lane.b32.xlu0 %v2163, 7
    %v2411 = vpop.permute.xlu0 %2410
    %2412 = vrot.lane.b32.xlu0 %v2158, 7
    %v2413 = vpop.permute.xlu0 %2412
    %2414 = vrot.lane.b32.xlu0 %v2177, 7
    %v2415 = vpop.permute.xlu0 %2414
    %2416 = vrot.lane.b32.xlu0 %v2178, 7
    %v2417 = vpop.permute.xlu0 %2416
    %2418 = vrot.lane.b32.xlu0 %v2169, 7
    %v2419 = vpop.permute.xlu0 %2418
    %2420 = vrot.lane.b32.xlu0 %v2179, 7
    %v2421 = vpop.permute.xlu0 %2420
    %2422 = vrot.lane.b32.xlu0 %v2180, 7
    %v2423 = vpop.permute.xlu0 %2422
    %2424 = vrot.lane.b32.xlu0 %v2175, 7
    %v2425 = vpop.permute.xlu0 %2424
    %2426 = vrot.lane.b32.xlu0 %v2198, 7
    %v2427 = vpop.permute.xlu0 %2426
    %2428 = vrot.lane.b32.xlu0 %v2206, 7
    %v2429 = vpop.permute.xlu0 %2428
    %2430 = vrot.lane.b32.xlu0 %v2200, 7
    %v2431 = vpop.permute.xlu0 %2430
    %2432 = vrot.lane.b32.xlu0 %v2202, 7
    %v2433 = vpop.permute.xlu0 %2432
    %2434 = vrot.lane.b32.xlu0 %v2207, 7
    %v2435 = vpop.permute.xlu0 %2434
    %2436 = vrot.lane.b32.xlu0 %v2204, 7
    %v2437 = vpop.permute.xlu0 %2436
    %2438 = vrot.lane.b32.xlu0 %v2235, 7
    %v2439 = vpop.permute.xlu0 %2438
    %2440 = vrot.lane.b32.xlu0 %v2247, 7
    %v2441 = vpop.permute.xlu0 %2440
    %2442 = vrot.lane.b32.xlu0 %v2248, 7
    %v2443 = vpop.permute.xlu0 %2442
    %2444 = vrot.lane.b32.xlu0 %v2241, 7
    %v2445 = vpop.permute.xlu0 %2444
    %2446 = vrot.lane.b32.xlu0 %v2249, 7
    %v2447 = vpop.permute.xlu0 %2446
    %2448 = vrot.lane.b32.xlu0 %v2250, 7
    %v2449 = vpop.permute.xlu0 %2448
    %2450 = vrot.lane.b32.xlu0 %v2252, 7
    %v2451 = vpop.permute.xlu0 %2450
    %2452 = vrot.lane.b32.xlu0 %v2264, 7
    %v2453 = vpop.permute.xlu0 %2452
    %2454 = vrot.lane.b32.xlu0 %v2265, 7
    %v2455 = vpop.permute.xlu0 %2454
    %2456 = vrot.lane.b32.xlu0 %v2258, 7
    %v2457 = vpop.permute.xlu0 %2456
    %2458 = vrot.lane.b32.xlu0 %v2266, 7
    %v2459 = vpop.permute.xlu0 %2458
    %2460 = vrot.lane.b32.xlu0 %v2267, 7
    %v2461 = vpop.permute.xlu0 %2460
    %2462 = vrot.lane.b32.xlu0 %v2269, 7
    %v2463 = vpop.permute.xlu0 %2462
    %2464 = vrot.lane.b32.xlu0 %v2281, 7
    %v2465 = vpop.permute.xlu0 %2464
    %2466 = vrot.lane.b32.xlu0 %v2282, 7
    %v2467 = vpop.permute.xlu0 %2466
    %2468 = vrot.lane.b32.xlu0 %v2275, 7
    %v2469 = vpop.permute.xlu0 %2468
    %2470 = vrot.lane.b32.xlu0 %v2283, 7
    %v2471 = vpop.permute.xlu0 %2470
    %2472 = vrot.lane.b32.xlu0 %v2284, 7
    %v2473 = vpop.permute.xlu0 %2472
    %2474 = vrot.lane.b32.xlu0 %v2286, 7
    %v2475 = vpop.permute.xlu0 %2474
    %2476 = vrot.lane.b32.xlu0 %v2298, 7
    %v2477 = vpop.permute.xlu0 %2476
    %2478 = vrot.lane.b32.xlu0 %v2299, 7
    %v2479 = vpop.permute.xlu0 %2478
    %2480 = vrot.lane.b32.xlu0 %v2292, 7
    %v2481 = vpop.permute.xlu0 %2480
    %2482 = vrot.lane.b32.xlu0 %v2300, 7
    %v2483 = vpop.permute.xlu0 %2482
    %2484 = vrot.lane.b32.xlu0 %v2301, 7
    %v2485 = vpop.permute.xlu0 %2484
    %vm2486 = vcmask 56320
    %v2487 = vsel %vm2486, %v2379, %v2381
    %v2488 = vsel %vm2486, %v2381, %v2383
    %v2489 = vsel %vm2486, %v2385, %v2387
    %v2490 = vsel %vm2486, %v2387, %v2389
    %v2491 = vsel %vm2486, %v2391, %v2393
    %v2492 = vsel %vm2486, %v2393, %v2395
    %v2493 = vsel %vm2486, %v2397, %v2399
    %v2494 = vsel %vm2486, %v2399, %v2401
    %v2495 = vsel %vm2486, %v2403, %v2405
    %v2496 = vsel %vm2486, %v2405, %v2407
    %v2497 = vsel %vm2486, %v2409, %v2411
    %v2498 = vsel %vm2486, %v2411, %v2413
    %v2499 = vsel %vm2486, %v2415, %v2417
    %v2500 = vsel %vm2486, %v2417, %v2419
    %v2501 = vsel %vm2486, %v2421, %v2423
    %v2502 = vsel %vm2486, %v2423, %v2425
    %v2503 = vsel %vm2486, %v2427, %v2429
    %v2504 = vsel %vm2486, %v2429, %v2431
    %v2505 = vsel %vm2486, %v2433, %v2435
    %v2506 = vsel %vm2486, %v2435, %v2437
    %v2507 = vsel %vm2486, %v2439, %v2441
    %v2508 = vsel %vm2486, %v2441, %v2443
    %v2509 = vsel %vm2486, %v2445, %v2447
    %v2510 = vsel %vm2486, %v2447, %v2449
    %v2511 = vsel %vm2486, %v2451, %v2453
    %v2512 = vsel %vm2486, %v2453, %v2455
    %v2513 = vsel %vm2486, %v2457, %v2459
    %v2514 = vsel %vm2486, %v2459, %v2461
    %v2515 = vsel %vm2486, %v2463, %v2465
    %v2516 = vsel %vm2486, %v2465, %v2467
    %v2517 = vsel %vm2486, %v2469, %v2471
    %v2518 = vsel %vm2486, %v2471, %v2473
    %v2519 = vsel %vm2486, %v2475, %v2477
    %v2520 = vsel %vm2486, %v2477, %v2479
    %v2521 = vsel %vm2486, %v2481, %v2483
    %v2522 = vsel %vm2486, %v2483, %v2485
    %v2560 = vsel %vm1996, %v2360, 0
    %v2563 = vsel %vm1996, %v2363, 0
    %v2566 = vsel %vm1996, %v2366, 0
    %v2569 = vsel %vm1996, %v2369, 0
    %2571 = vmatprep.subr.bf16.mxu0 %v2502
    %2572 = vmatpush1.bf16.msra.mxu0 %v2501
    %2573 = vmatprep.subr.bf16.mxu0 %v2500
    %2574 = vmatpush1.bf16.msra.mxu0 %v2499
    %2575 = vmatprep.subr.bf16.mxu0 %v2498
    %2576 = vmatpush1.bf16.msra.mxu0 %v2497
    %2577 = vmatprep.subr.bf16.mxu0 %v2496
    %2578 = vmatpush1.bf16.msra.mxu0 %v2495
    %2579 = vmatprep.subr.bf16.mxu0 %v2494
    %2580 = vmatpush1.bf16.msra.mxu0 %v2493
    %2581 = vmatprep.subr.bf16.mxu0 %v2492
    %2582 = vmatpush1.bf16.msra.mxu0 %v2491
    %2583 = vmatprep.subr.bf16.mxu0 %v2490
    %2584 = vmatpush1.bf16.msra.mxu0 %v2489
    %2585 = vmatprep.subr.bf16.mxu0 %v2488
    %2586 = vmatpush1.bf16.msra.mxu0 %v2487
    %2587 = vmatprep.subr.bf16.mxu0 %v2518
    %2588 = vmatpush2.bf16.msra.mxu0 %v2517
    %2589 = vmatprep.subr.bf16.mxu0 %v2516
    %2590 = vmatpush2.bf16.msra.mxu0 %v2515
    %2591 = vmatprep.subr.bf16.mxu0 %v2514
    %2592 = vmatpush2.bf16.msra.mxu0 %v2513
    %2593 = vmatprep.subr.bf16.mxu0 %v2512
    %2594 = vmatpush2.bf16.msra.mxu0 %v2511
    %2595 = vmatprep.subr.bf16.mxu0 %v2510
    %2596 = vmatpush2.bf16.msra.mxu0 %v2509
    %2597 = vmatprep.subr.bf16.mxu0 %v2508
    %2598 = vmatpush2.bf16.msra.mxu0 %v2507
    %2599 = vmatprep.subr.bf16.mxu0 %v2506
    %2600 = vmatpush2.bf16.msra.mxu0 %v2505
    %2601 = vmatprep.subr.bf16.mxu0 %v2504
    %2602 = vmatpush2.bf16.msra.mxu0 %v2503
    %2603 = vmatprep.mubr.bf16.mxu0 %v2359
    %2604 = vmatmul.mubr.bf16.gmra.mxu0 %v2358
    %v2605 = vpop.f32.mrf.mxu0
    %v2606 = vadd.f32 0.0, %v2605
    %v2607 = vpop.f32.mrf.mxu0
    %v2608 = vadd.f32 0.0, %v2607
    %v2609 = vpop.f32.mrf.mxu0
    %v2610 = vadd.f32 0.0, %v2609
    %v2611 = vpop.f32.mrf.mxu0
    %v2612 = vadd.f32 0.0, %v2611
    %2613 = vmatprep.mubr.bf16.mxu0 %v2362
    %2614 = vmatmul.mubr.bf16.gmra.mxu0 %v2361
    %v2615 = vpop.f32.mrf.mxu0
    %v2616 = vadd.f32 0.0, %v2615
    %v2617 = vpop.f32.mrf.mxu0
    %v2618 = vadd.f32 0.0, %v2617
    %v2619 = vpop.f32.mrf.mxu0
    %v2620 = vadd.f32 0.0, %v2619
    %v2621 = vpop.f32.mrf.mxu0
    %v2622 = vadd.f32 0.0, %v2621
    %2623 = vmatprep.mubr.bf16.mxu0 %v2365
    %2624 = vmatmul.mubr.bf16.gmra.mxu0 %v2364
    %v2625 = vpop.f32.mrf.mxu0
    %v2626 = vadd.f32 0.0, %v2625
    %v2627 = vpop.f32.mrf.mxu0
    %v2628 = vadd.f32 0.0, %v2627
    %v2629 = vpop.f32.mrf.mxu0
    %v2630 = vadd.f32 0.0, %v2629
    %v2631 = vpop.f32.mrf.mxu0
    %v2632 = vadd.f32 0.0, %v2631
    %2633 = vmatprep.mubr.bf16.mxu0 %v2368
    %2634 = vmatmul.mubr.bf16.gmra.mxu0 %v2367
    %v2635 = vpop.f32.mrf.mxu0
    %v2636 = vadd.f32 0.0, %v2635
    %v2637 = vpop.f32.mrf.mxu0
    %v2638 = vadd.f32 0.0, %v2637
    %v2639 = vpop.f32.mrf.mxu0
    %v2640 = vadd.f32 0.0, %v2639
    %v2641 = vpop.f32.mrf.mxu0
    %v2642 = vadd.f32 0.0, %v2641
    %2643 = vdwg.mxu0
    %2644 = vmatprep.subr.bf16.mxu0 0
    %2645 = vmatpush1.bf16.msra.mxu0 0
    %2646 = vmatprep.subr.bf16.mxu0 0
    %2647 = vmatpush1.bf16.msra.mxu0 0
    %2648 = vmatprep.subr.bf16.mxu0 0
    %2649 = vmatpush1.bf16.msra.mxu0 0
    %2650 = vmatprep.subr.bf16.mxu0 0
    %2651 = vmatpush1.bf16.msra.mxu0 0
    %2652 = vmatprep.subr.bf16.mxu0 0
    %2653 = vmatpush1.bf16.msra.mxu0 0
    %2654 = vmatprep.subr.bf16.mxu0 0
    %2655 = vmatpush1.bf16.msra.mxu0 0
    %2656 = vmatprep.subr.bf16.mxu0 %v2522
    %2657 = vmatpush1.bf16.msra.mxu0 %v2521
    %2658 = vmatprep.subr.bf16.mxu0 %v2520
    %2659 = vmatpush1.bf16.msra.mxu0 %v2519
    %2660 = vmatprep.subr.bf16.mxu0 0
    %2661 = vmatpush2.bf16.msra.mxu0 0
    %2662 = vmatprep.subr.bf16.mxu0 0
    %2663 = vmatpush2.bf16.msra.mxu0 0
    %2664 = vmatprep.subr.bf16.mxu0 0
    %2665 = vmatpush2.bf16.msra.mxu0 0
    %2666 = vmatprep.subr.bf16.mxu0 0
    %2667 = vmatpush2.bf16.msra.mxu0 0
    %2668 = vmatprep.subr.bf16.mxu0 0
    %2669 = vmatpush2.bf16.msra.mxu0 0
    %2670 = vmatprep.subr.bf16.mxu0 0
    %2671 = vmatpush2.bf16.msra.mxu0 0
    %2672 = vmatprep.subr.bf16.mxu0 0
    %2673 = vmatpush2.bf16.msra.mxu0 0
    %2674 = vmatprep.subr.bf16.mxu0 0
    %2675 = vmatpush2.bf16.msra.mxu0 0
    %2676 = vmatprep.mubr.bf16.mxu0 0
    %2677 = vmatmul.mubr.bf16.gmra.mxu0 %v2560
    %v2678 = vpop.f32.mrf.mxu0
    %v2679 = vadd.f32 %v2606, %v2678
    %v2680 = vpop.f32.mrf.mxu0
    %v2681 = vadd.f32 %v2608, %v2680
    %v2682 = vpop.f32.mrf.mxu0
    %v2683 = vadd.f32 %v2610, %v2682
    %v2684 = vpop.f32.mrf.mxu0
    %v2685 = vadd.f32 %v2612, %v2684
    %2686 = vmatprep.mubr.bf16.mxu0 0
    %2687 = vmatmul.mubr.bf16.gmra.mxu0 %v2563
    %v2688 = vpop.f32.mrf.mxu0
    %v2689 = vadd.f32 %v2616, %v2688
    %v2690 = vpop.f32.mrf.mxu0
    %v2691 = vadd.f32 %v2618, %v2690
    %v2692 = vpop.f32.mrf.mxu0
    %v2693 = vadd.f32 %v2620, %v2692
    %v2694 = vpop.f32.mrf.mxu0
    %v2695 = vadd.f32 %v2622, %v2694
    %2696 = vmatprep.mubr.bf16.mxu0 0
    %2697 = vmatmul.mubr.bf16.gmra.mxu0 %v2566
    %v2698 = vpop.f32.mrf.mxu0
    %v2699 = vadd.f32 %v2626, %v2698
    %v2700 = vpop.f32.mrf.mxu0
    %v2701 = vadd.f32 %v2628, %v2700
    %v2702 = vpop.f32.mrf.mxu0
    %v2703 = vadd.f32 %v2630, %v2702
    %v2704 = vpop.f32.mrf.mxu0
    %v2705 = vadd.f32 %v2632, %v2704
    %2706 = vmatprep.mubr.bf16.mxu0 0
    %2707 = vmatmul.mubr.bf16.gmra.mxu0 %v2569
    %v2708 = vpop.f32.mrf.mxu0
    %v2709 = vadd.f32 %v2636, %v2708
    %v2710 = vpop.f32.mrf.mxu0
    %v2711 = vadd.f32 %v2638, %v2710
    %v2712 = vpop.f32.mrf.mxu0
    %v2713 = vadd.f32 %v2640, %v2712
    %v2714 = vpop.f32.mrf.mxu0
    %v2715 = vadd.f32 %v2642, %v2714
    %2716 = vdwg.mxu0
    %v2717 = vld [vmem:[#allocation9] sm:$0x3]
    %v2719 = vlaneseq
    %v2720 = vshrl.u32 %v2719, 7
    %v2721 = vsub.s32 0, %v2720
    %v2722 = vrot.slane %v2717, %v2721
    %v2723 = vlaneseq
    %v2724 = vshrl.u32 %v2723, 7
    %v2725 = vsub.s32 1, %v2724
    %v2726 = vrot.slane %v2717, %v2725
    %v2729 = vmul.f32 %v2679, %v2722
    %v2730 = vmul.f32 %v2681, %v2726
    %v2731 = vmul.f32 %v2683, %v2722
    %v2732 = vmul.f32 %v2685, %v2726
    %v2733 = vmul.f32 %v2689, %v2722
    %v2734 = vmul.f32 %v2691, %v2726
    %v2735 = vmul.f32 %v2693, %v2722
    %v2736 = vmul.f32 %v2695, %v2726
    %v2737 = vmul.f32 %v2699, %v2722
    %v2738 = vmul.f32 %v2701, %v2726
    %v2739 = vmul.f32 %v2703, %v2722
    %v2740 = vmul.f32 %v2705, %v2726
    %v2741 = vmul.f32 %v2709, %v2722
    %v2742 = vmul.f32 %v2711, %v2726
    %v2743 = vmul.f32 %v2713, %v2722
    %v2744 = vmul.f32 %v2715, %v2726
    %v2745 = vadd.f32 %v2729, %v2730
    %2746 = vadd.xlane.f32.xlu0 %v2745
    %v2747 = vpop.xlane.xlu0 %2746
    %v2748 = vadd.f32 %v2731, %v2732
    %2749 = vadd.xlane.f32.xlu0 %v2748
    %v2750 = vpop.xlane.xlu0 %2749
    %v2751 = vadd.f32 %v2733, %v2734
    %2752 = vadd.xlane.f32.xlu0 %v2751
    %v2753 = vpop.xlane.xlu0 %2752
    %v2754 = vadd.f32 %v2735, %v2736
    %2755 = vadd.xlane.f32.xlu0 %v2754
    %v2756 = vpop.xlane.xlu0 %2755
    %v2757 = vadd.f32 %v2737, %v2738
    %2758 = vadd.xlane.f32.xlu0 %v2757
    %v2759 = vpop.xlane.xlu0 %2758
    %v2760 = vadd.f32 %v2739, %v2740
    %2761 = vadd.xlane.f32.xlu0 %v2760
    %v2762 = vpop.xlane.xlu0 %2761
    %v2763 = vadd.f32 %v2741, %v2742
    %2764 = vadd.xlane.f32.xlu0 %v2763
    %v2765 = vpop.xlane.xlu0 %2764
    %v2766 = vadd.f32 %v2743, %v2744
    %2767 = vadd.xlane.f32.xlu0 %v2766
    %v2768 = vpop.xlane.xlu0 %2767
    %v2769 = vmul.f32 %v2729, %v2679
    %v2770 = vmul.f32 %v2730, %v2681
    %v2771 = vmul.f32 %v2731, %v2683
    %v2772 = vmul.f32 %v2732, %v2685
    %v2773 = vmul.f32 %v2733, %v2689
    %v2774 = vmul.f32 %v2734, %v2691
    %v2775 = vmul.f32 %v2735, %v2693
    %v2776 = vmul.f32 %v2736, %v2695
    %v2777 = vmul.f32 %v2737, %v2699
    %v2778 = vmul.f32 %v2738, %v2701
    %v2779 = vmul.f32 %v2739, %v2703
    %v2780 = vmul.f32 %v2740, %v2705
    %v2781 = vmul.f32 %v2741, %v2709
    %v2782 = vmul.f32 %v2742, %v2711
    %v2783 = vmul.f32 %v2743, %v2713
    %v2784 = vmul.f32 %v2744, %v2715
    %v2785 = vadd.f32 %v2769, %v2770
    %2786 = vadd.xlane.f32.xlu0 %v2785
    %v2787 = vpop.xlane.xlu0 %2786
    %v2788 = vadd.f32 %v2771, %v2772
    %2789 = vadd.xlane.f32.xlu0 %v2788
    %v2790 = vpop.xlane.xlu0 %2789
    %v2791 = vadd.f32 %v2773, %v2774
    %2792 = vadd.xlane.f32.xlu0 %v2791
    %v2793 = vpop.xlane.xlu0 %2792
    %v2794 = vadd.f32 %v2775, %v2776
    %2795 = vadd.xlane.f32.xlu0 %v2794
    %v2796 = vpop.xlane.xlu0 %2795
    %v2797 = vadd.f32 %v2777, %v2778
    %2798 = vadd.xlane.f32.xlu0 %v2797
    %v2799 = vpop.xlane.xlu0 %2798
    %v2800 = vadd.f32 %v2779, %v2780
    %2801 = vadd.xlane.f32.xlu0 %v2800
    %v2802 = vpop.xlane.xlu0 %2801
    %v2803 = vadd.f32 %v2781, %v2782
    %2804 = vadd.xlane.f32.xlu0 %v2803
    %v2805 = vpop.xlane.xlu0 %2804
    %v2806 = vadd.f32 %v2783, %v2784
    %2807 = vadd.xlane.f32.xlu0 %v2806
    %v2808 = vpop.xlane.xlu0 %2807
    %v2809 = vadd.f32 %v2747, %v2753
    %v2810 = vadd.f32 %v2750, %v2756
    %v2811 = vadd.f32 %v2809, %v2759
    %v2812 = vadd.f32 %v2810, %v2762
    %v2813 = vadd.f32 %v2811, %v2765
    %v2814 = vadd.f32 %v2812, %v2768
    %v2815 = vadd.f32 %v2787, %v2793
    %v2816 = vadd.f32 %v2790, %v2796
    %v2817 = vadd.f32 %v2815, %v2799
    %v2818 = vadd.f32 %v2816, %v2802
    %v2819 = vadd.f32 %v2817, %v2805
    %v2820 = vadd.f32 %v2818, %v2808
    %v2821 = vrcp.pop 128.0
    %v2822 = vmul.f32 %v2813, %v2821
    %v2823 = vmul.f32 %v2814, %v2821
    %v2824 = vmul.f32 %v2819, %v2821
    %v2825 = vmul.f32 %v2820, %v2821
    %v2826 = vmul.f32 %v2822, %v2822
    %v2827 = vmul.f32 %v2823, %v2823
    %v2828 = vsub.f32 %v2824, %v2826
    %v2829 = vsub.f32 %v2825, %v2827
    %v2830 = vmax.f32 %v2828, 0.0
    %v2831 = vmax.f32 %v2829, 0.0
    %v2832 = vld [vmem:[%s6] sm:$0xff]
    %v2833 = vld [vmem:[%s6 + $0x8] sm:$0xff]
    %v2834 = vadd.f32 %v2830, 1e-05
    %v2835 = vadd.f32 %v2831, 1e-05
    %v2836 = vrsqrt.pop %v2834
    %v2837 = vrsqrt.pop %v2835
    %v2838 = vmul.f32 %v2832, %v2836
    %v2839 = vmul.f32 %v2833, %v2837
    %v2840 = vld [vmem:[%s7] sm:$0xff]
    %v2841 = vld [vmem:[%s7 + $0x8] sm:$0xff]
    %v2842 = vmul.f32 %v2822, %v2838
    %v2843 = vmul.f32 %v2823, %v2839
    %v2844 = vsub.f32 %v2840, %v2842
    %v2845 = vsub.f32 %v2841, %v2843
    %2847 = vset.pattern.permute.xlu0 0
    %2848 = vperm.xlu0 %2847, %v2838
    %v2849 = vpop.permute.xlu0 %2848
    %2852 = vset.pattern.permute.xlu0 0
    %2853 = vperm.xlu0 %2852, %v2839
    %v2854 = vpop.permute.xlu0 %2853
    %v2856 = vmul.f32 %v2679, %v2849
    %v2857 = vmul.f32 %v2681, %v2849
    %v2858 = vmul.f32 %v2683, %v2854
    %v2859 = vmul.f32 %v2685, %v2854
    %2861 = vset.pattern.permute.xlu0 0
    %2862 = vperm.xlu0 %2861, %v2844
    %v2863 = vpop.permute.xlu0 %2862
    %2866 = vset.pattern.permute.xlu0 0
    %2867 = vperm.xlu0 %2866, %v2845
    %v2868 = vpop.permute.xlu0 %2867
    %v2870 = vadd.f32 %v2856, %v2863
    %v2871 = vadd.f32 %v2857, %v2863
    %v2872 = vadd.f32 %v2858, %v2868
    %v2873 = vadd.f32 %v2859, %v2868
    %v2874 = vmax.f32 %v2870, 0.0
    %v2875 = vmax.f32 %v2871, 0.0
    %v2876 = vmax.f32 %v2872, 0.0
    %v2877 = vmax.f32 %v2873, 0.0
    %v2882 = vcombine.low %v2874, %v2875
    %v2883 = vcombine.high %v2874, %v2875
    %v2884 = vcombine.low %v2876, %v2877
    %v2885 = vcombine.high %v2876, %v2877
    %v2891 = vunpack.c.l.s4 1935823168
    %v2892 = vunpack.c.0.s8 %v2891
    %v2893 = vlaneseq
    %v2894 = vshrl.u32 %v2893, 7
    %v2895 = vsub.s32 %v2892, %v2894
    %v2896 = vrot.slane %v2882, %v2895
    %v2898 = vunpack.c.l.s4 1935823168
    %v2899 = vunpack.c.0.s8 %v2898
    %v2900 = vlaneseq
    %v2901 = vshrl.u32 %v2900, 7
    %v2902 = vsub.s32 %v2899, %v2901
    %v2903 = vrot.slane %v2883, %v2902
    %v2905 = vunpack.c.l.s4 1935823168
    %v2906 = vunpack.c.0.s8 %v2905
    %v2907 = vlaneseq
    %v2908 = vshrl.u32 %v2907, 7
    %v2909 = vsub.s32 %v2906, %v2908
    %v2910 = vrot.slane %v2884, %v2909
    %v2912 = vunpack.c.l.s4 1935823168
    %v2913 = vunpack.c.0.s8 %v2912
    %v2914 = vlaneseq
    %v2915 = vshrl.u32 %v2914, 7
    %v2916 = vsub.s32 %v2913, %v2915
    %v2917 = vrot.slane %v2885, %v2916
    %v2918 = vpack.c.bf16 %v2903, %v2896
    %v2919 = vpack.c.bf16 %v2917, %v2910
    %v2920 = vmul.f32 %v2689, %v2849
    %v2921 = vmul.f32 %v2691, %v2849
    %v2922 = vmul.f32 %v2693, %v2854
    %v2923 = vmul.f32 %v2695, %v2854
    %v2924 = vadd.f32 %v2920, %v2863
    %v2925 = vadd.f32 %v2921, %v2863
    %v2926 = vadd.f32 %v2922, %v2868
    %v2927 = vadd.f32 %v2923, %v2868
    %v2928 = vmax.f32 %v2924, 0.0
    %v2929 = vmax.f32 %v2925, 0.0
    %v2930 = vmax.f32 %v2926, 0.0
    %v2931 = vmax.f32 %v2927, 0.0
    %v2936 = vcombine.low %v2928, %v2929
    %v2937 = vcombine.high %v2928, %v2929
    %v2938 = vcombine.low %v2930, %v2931
    %v2939 = vcombine.high %v2930, %v2931
    %v2945 = vunpack.c.l.s4 1935823168
    %v2946 = vunpack.c.0.s8 %v2945
    %v2947 = vlaneseq
    %v2948 = vshrl.u32 %v2947, 7
    %v2949 = vsub.s32 %v2946, %v2948
    %v2950 = vrot.slane %v2936, %v2949
    %v2952 = vunpack.c.l.s4 1935823168
    %v2953 = vunpack.c.0.s8 %v2952
    %v2954 = vlaneseq
    %v2955 = vshrl.u32 %v2954, 7
    %v2956 = vsub.s32 %v2953, %v2955
    %v2957 = vrot.slane %v2937, %v2956
    %v2959 = vunpack.c.l.s4 1935823168
    %v2960 = vunpack.c.0.s8 %v2959
    %v2961 = vlaneseq
    %v2962 = vshrl.u32 %v2961, 7
    %v2963 = vsub.s32 %v2960, %v2962
    %v2964 = vrot.slane %v2938, %v2963
    %v2966 = vunpack.c.l.s4 1935823168
    %v2967 = vunpack.c.0.s8 %v2966
    %v2968 = vlaneseq
    %v2969 = vshrl.u32 %v2968, 7
    %v2970 = vsub.s32 %v2967, %v2969
    %v2971 = vrot.slane %v2939, %v2970
    %v2972 = vpack.c.bf16 %v2957, %v2950
    %v2973 = vpack.c.bf16 %v2971, %v2964
    %v2974 = vmul.f32 %v2699, %v2849
    %v2975 = vmul.f32 %v2701, %v2849
    %v2976 = vmul.f32 %v2703, %v2854
    %v2977 = vmul.f32 %v2705, %v2854
    %v2978 = vadd.f32 %v2974, %v2863
    %v2979 = vadd.f32 %v2975, %v2863
    %v2980 = vadd.f32 %v2976, %v2868
    %v2981 = vadd.f32 %v2977, %v2868
    %v2982 = vmax.f32 %v2978, 0.0
    %v2983 = vmax.f32 %v2979, 0.0
    %v2984 = vmax.f32 %v2980, 0.0
    %v2985 = vmax.f32 %v2981, 0.0
    %v2990 = vcombine.low %v2982, %v2983
    %v2991 = vcombine.high %v2982, %v2983
    %v2992 = vcombine.low %v2984, %v2985
    %v2993 = vcombine.high %v2984, %v2985
    %v2999 = vunpack.c.l.s4 1935823168
    %v3000 = vunpack.c.0.s8 %v2999
    %v3001 = vlaneseq
    %v3002 = vshrl.u32 %v3001, 7
    %v3003 = vsub.s32 %v3000, %v3002
    %v3004 = vrot.slane %v2990, %v3003
    %v3006 = vunpack.c.l.s4 1935823168
    %v3007 = vunpack.c.0.s8 %v3006
    %v3008 = vlaneseq
    %v3009 = vshrl.u32 %v3008, 7
    %v3010 = vsub.s32 %v3007, %v3009
    %v3011 = vrot.slane %v2991, %v3010
    %v3013 = vunpack.c.l.s4 1935823168
    %v3014 = vunpack.c.0.s8 %v3013
    %v3015 = vlaneseq
    %v3016 = vshrl.u32 %v3015, 7
    %v3017 = vsub.s32 %v3014, %v3016
    %v3018 = vrot.slane %v2992, %v3017
    %v3020 = vunpack.c.l.s4 1935823168
    %v3021 = vunpack.c.0.s8 %v3020
    %v3022 = vlaneseq
    %v3023 = vshrl.u32 %v3022, 7
    %v3024 = vsub.s32 %v3021, %v3023
    %v3025 = vrot.slane %v2993, %v3024
    %v3026 = vpack.c.bf16 %v3011, %v3004
    %v3027 = vpack.c.bf16 %v3025, %v3018
    %v3028 = vmul.f32 %v2709, %v2849
    %v3029 = vmul.f32 %v2711, %v2849
    %v3030 = vmul.f32 %v2713, %v2854
    %v3031 = vmul.f32 %v2715, %v2854
    %v3032 = vadd.f32 %v3028, %v2863
    %v3033 = vadd.f32 %v3029, %v2863
    %v3034 = vadd.f32 %v3030, %v2868
    %v3035 = vadd.f32 %v3031, %v2868
    %v3036 = vmax.f32 %v3032, 0.0
    %v3037 = vmax.f32 %v3033, 0.0
    %v3038 = vmax.f32 %v3034, 0.0
    %v3039 = vmax.f32 %v3035, 0.0
    %v3044 = vcombine.low %v3036, %v3037
    %v3045 = vcombine.high %v3036, %v3037
    %v3046 = vcombine.low %v3038, %v3039
    %v3047 = vcombine.high %v3038, %v3039
    %v3053 = vunpack.c.l.s4 1935823168
    %v3054 = vunpack.c.0.s8 %v3053
    %v3055 = vlaneseq
    %v3056 = vshrl.u32 %v3055, 7
    %v3057 = vsub.s32 %v3054, %v3056
    %v3058 = vrot.slane %v3044, %v3057
    %v3060 = vunpack.c.l.s4 1935823168
    %v3061 = vunpack.c.0.s8 %v3060
    %v3062 = vlaneseq
    %v3063 = vshrl.u32 %v3062, 7
    %v3064 = vsub.s32 %v3061, %v3063
    %v3065 = vrot.slane %v3045, %v3064
    %v3067 = vunpack.c.l.s4 1935823168
    %v3068 = vunpack.c.0.s8 %v3067
    %v3069 = vlaneseq
    %v3070 = vshrl.u32 %v3069, 7
    %v3071 = vsub.s32 %v3068, %v3070
    %v3072 = vrot.slane %v3046, %v3071
    %v3074 = vunpack.c.l.s4 1935823168
    %v3075 = vunpack.c.0.s8 %v3074
    %v3076 = vlaneseq
    %v3077 = vshrl.u32 %v3076, 7
    %v3078 = vsub.s32 %v3075, %v3077
    %v3079 = vrot.slane %v3047, %v3078
    %v3080 = vpack.c.bf16 %v3065, %v3058
    %v3081 = vpack.c.bf16 %v3079, %v3072
    %v3082 = vld [vmem:[#allocation10] sm:$0xf]
    %v3083 = vld [vmem:[#allocation10 + $0x4] sm:$0xf]
    %v3084 = vld [vmem:[#allocation10 + $0x8] sm:$0xf]
    %v3085 = vld [vmem:[#allocation10 + $0xc] sm:$0xf]
    %v3086 = vld [vmem:[#allocation10 + $0x10] sm:$0xf]
    %v3087 = vld [vmem:[#allocation10 + $0x14] sm:$0xf]
    %v3088 = vld [vmem:[#allocation10 + $0x18] sm:$0xf]
    %v3089 = vld [vmem:[#allocation10 + $0x1c] sm:$0xf]
    %v3090 = vld [vmem:[#allocation10 + $0x20] sm:$0xf]
    %v3091 = vld [vmem:[#allocation10 + $0x24] sm:$0xf]
    %v3092 = vld [vmem:[#allocation10 + $0x28] sm:$0xf]
    %v3093 = vld [vmem:[#allocation10 + $0x2c] sm:$0xf]
    %v3094 = vld [vmem:[#allocation10 + $0x30] sm:$0xf]
    %v3095 = vld [vmem:[#allocation10 + $0x34] sm:$0xf]
    %v3096 = vld [vmem:[#allocation10 + $0x38] sm:$0xf]
    %v3097 = vld [vmem:[#allocation10 + $0x3c] sm:$0xf]
    %v3098 = vld [vmem:[#allocation10 + $0x40] sm:$0xf]
    %v3099 = vld [vmem:[#allocation10 + $0x44] sm:$0xf]
    %v3100 = vld [vmem:[#allocation10 + $0x48] sm:$0xf]
    %v3101 = vld [vmem:[#allocation10 + $0x4c] sm:$0xf]
    %v3102 = vld [vmem:[#allocation10 + $0x50] sm:$0xf]
    %v3103 = vld [vmem:[#allocation10 + $0x54] sm:$0xf]
    %v3104 = vld [vmem:[#allocation10 + $0x58] sm:$0xf]
    %v3105 = vld [vmem:[#allocation10 + $0x5c] sm:$0xf]
    %v3106 = vld [vmem:[#allocation10 + $0x60] sm:$0xf]
    %v3107 = vld [vmem:[#allocation10 + $0x64] sm:$0xf]
    %v3108 = vld [vmem:[#allocation10 + $0x68] sm:$0xf]
    %v3109 = vld [vmem:[#allocation10 + $0x6c] sm:$0xf]
    %v3110 = vld [vmem:[#allocation10 + $0x70] sm:$0xf]
    %v3111 = vld [vmem:[#allocation10 + $0x74] sm:$0xf]
    %v3112 = vld [vmem:[#allocation10 + $0x78] sm:$0xf]
    %v3113 = vld [vmem:[#allocation10 + $0x7c] sm:$0xf]
    %v3114 = vld [vmem:[#allocation10 + $0x80] sm:$0xf]
    %v3115 = vld [vmem:[#allocation10 + $0x84] sm:$0xf]
    %v3116 = vld [vmem:[#allocation10 + $0x88] sm:$0xf]
    %v3117 = vld [vmem:[#allocation10 + $0x8c] sm:$0xf]
    %v3118 = vld [vmem:[#allocation10 + $0x90] sm:$0xf]
    %v3119 = vld [vmem:[#allocation10 + $0x94] sm:$0xf]
    %v3120 = vld [vmem:[#allocation10 + $0x98] sm:$0xf]
    %v3121 = vld [vmem:[#allocation10 + $0x9c] sm:$0xf]
    %v3122 = vld [vmem:[#allocation10 + $0xa0] sm:$0xf]
    %v3123 = vld [vmem:[#allocation10 + $0xa4] sm:$0xf]
    %v3124 = vld [vmem:[#allocation10 + $0xa8] sm:$0xf]
    %v3125 = vld [vmem:[#allocation10 + $0xac] sm:$0xf]
    %v3126 = vld [vmem:[#allocation10 + $0xb0] sm:$0xf]
    %v3127 = vld [vmem:[#allocation10 + $0xb4] sm:$0xf]
    %v3128 = vld [vmem:[#allocation10 + $0xb8] sm:$0xf]
    %v3129 = vld [vmem:[#allocation10 + $0xbc] sm:$0xf]
    %v3130 = vld [vmem:[#allocation10 + $0xc0] sm:$0xf]
    %v3131 = vld [vmem:[#allocation10 + $0xc4] sm:$0xf]
    %v3132 = vld [vmem:[#allocation10 + $0xc8] sm:$0xf]
    %v3133 = vld [vmem:[#allocation10 + $0xcc] sm:$0xf]
    %v3134 = vld [vmem:[#allocation10 + $0xd0] sm:$0xf]
    %v3135 = vld [vmem:[#allocation10 + $0xd4] sm:$0xf]
    %v3136 = vld [vmem:[#allocation10 + $0xd8] sm:$0xf]
    %v3137 = vld [vmem:[#allocation10 + $0xdc] sm:$0xf]
    %v3138 = vld [vmem:[#allocation10 + $0xe0] sm:$0xf]
    %v3139 = vld [vmem:[#allocation10 + $0xe4] sm:$0xf]
    %v3140 = vld [vmem:[#allocation10 + $0xe8] sm:$0xf]
    %v3141 = vld [vmem:[#allocation10 + $0xec] sm:$0xf]
    %v3142 = vld [vmem:[#allocation10 + $0xf0] sm:$0xf]
    %v3143 = vld [vmem:[#allocation10 + $0xf4] sm:$0xf]
    %v3144 = vld [vmem:[#allocation10 + $0xf8] sm:$0xf]
    %v3145 = vld [vmem:[#allocation10 + $0xfc] sm:$0xf]
    %v3210 = vunpack.c.l.b16 %v3082
    %v3211 = vunpack.c.l.b16 %v3083
    %v3212 = vunpack.c.l.b16 %v3084
    %v3213 = vunpack.c.l.b16 %v3085
    %v3214 = vunpack.c.l.b16 %v3086
    %v3215 = vunpack.c.l.b16 %v3087
    %v3216 = vunpack.c.l.b16 %v3088
    %v3217 = vunpack.c.l.b16 %v3089
    %v3218 = vunpack.c.l.b16 %v3090
    %v3219 = vunpack.c.l.b16 %v3091
    %v3220 = vunpack.c.l.b16 %v3092
    %v3221 = vunpack.c.l.b16 %v3093
    %v3222 = vunpack.c.l.b16 %v3094
    %v3223 = vunpack.c.l.b16 %v3095
    %v3224 = vunpack.c.l.b16 %v3096
    %v3225 = vunpack.c.l.b16 %v3097
    %v3226 = vunpack.c.l.b16 %v3098
    %v3227 = vunpack.c.l.b16 %v3099
    %v3228 = vunpack.c.l.b16 %v3100
    %v3229 = vunpack.c.l.b16 %v3101
    %v3230 = vunpack.c.l.b16 %v3102
    %v3231 = vunpack.c.l.b16 %v3103
    %v3232 = vunpack.c.l.b16 %v3104
    %v3233 = vunpack.c.l.b16 %v3105
    %v3234 = vunpack.c.l.b16 %v3106
    %v3235 = vunpack.c.l.b16 %v3107
    %v3236 = vunpack.c.l.b16 %v3108
    %v3237 = vunpack.c.l.b16 %v3109
    %v3238 = vunpack.c.l.b16 %v3110
    %v3239 = vunpack.c.l.b16 %v3111
    %v3240 = vunpack.c.l.b16 %v3112
    %v3241 = vunpack.c.l.b16 %v3113
    %v3242 = vunpack.c.l.b16 %v3114
    %v3243 = vunpack.c.l.b16 %v3115
    %v3244 = vunpack.c.l.b16 %v3116
    %v3245 = vunpack.c.l.b16 %v3117
    %v3246 = vunpack.c.l.b16 %v3118
    %v3247 = vunpack.c.l.b16 %v3119
    %v3248 = vunpack.c.l.b16 %v3120
    %v3249 = vunpack.c.l.b16 %v3121
    %v3250 = vunpack.c.l.b16 %v3122
    %v3251 = vunpack.c.l.b16 %v3123
    %v3252 = vunpack.c.l.b16 %v3124
    %v3253 = vunpack.c.l.b16 %v3125
    %v3254 = vunpack.c.l.b16 %v3126
    %v3255 = vunpack.c.l.b16 %v3127
    %v3256 = vunpack.c.l.b16 %v3128
    %v3257 = vunpack.c.l.b16 %v3129
    %v3258 = vunpack.c.l.b16 %v3130
    %v3259 = vunpack.c.l.b16 %v3131
    %v3260 = vunpack.c.l.b16 %v3132
    %v3261 = vunpack.c.l.b16 %v3133
    %v3262 = vunpack.c.l.b16 %v3134
    %v3263 = vunpack.c.l.b16 %v3135
    %v3264 = vunpack.c.l.b16 %v3136
    %v3265 = vunpack.c.l.b16 %v3137
    %v3266 = vunpack.c.l.b16 %v3138
    %v3267 = vunpack.c.l.b16 %v3139
    %v3268 = vunpack.c.l.b16 %v3140
    %v3269 = vunpack.c.l.b16 %v3141
    %v3270 = vunpack.c.l.b16 %v3142
    %v3271 = vunpack.c.l.b16 %v3143
    %v3272 = vunpack.c.l.b16 %v3144
    %v3273 = vunpack.c.l.b16 %v3145
    %v3274 = vpack.c.b16 %v3211, %v3210
    %v3275 = vpack.c.b16 %v3213, %v3212
    %v3276 = vpack.c.b16 %v3215, %v3214
    %v3277 = vpack.c.b16 %v3217, %v3216
    %v3278 = vpack.c.b16 %v3219, %v3218
    %v3279 = vpack.c.b16 %v3221, %v3220
    %v3280 = vpack.c.b16 %v3223, %v3222
    %v3281 = vpack.c.b16 %v3225, %v3224
    %v3282 = vpack.c.b16 %v3227, %v3226
    %v3283 = vpack.c.b16 %v3229, %v3228
    %v3284 = vpack.c.b16 %v3231, %v3230
    %v3285 = vpack.c.b16 %v3233, %v3232
    %v3286 = vpack.c.b16 %v3235, %v3234
    %v3287 = vpack.c.b16 %v3237, %v3236
    %v3288 = vpack.c.b16 %v3239, %v3238
    %v3289 = vpack.c.b16 %v3241, %v3240
    %v3290 = vpack.c.b16 %v3243, %v3242
    %v3291 = vpack.c.b16 %v3245, %v3244
    %v3292 = vpack.c.b16 %v3247, %v3246
    %v3293 = vpack.c.b16 %v3249, %v3248
    %v3294 = vpack.c.b16 %v3251, %v3250
    %v3295 = vpack.c.b16 %v3253, %v3252
    %v3296 = vpack.c.b16 %v3255, %v3254
    %v3297 = vpack.c.b16 %v3257, %v3256
    %v3298 = vpack.c.b16 %v3259, %v3258
    %v3299 = vpack.c.b16 %v3261, %v3260
    %v3300 = vpack.c.b16 %v3263, %v3262
    %v3301 = vpack.c.b16 %v3265, %v3264
    %v3302 = vpack.c.b16 %v3267, %v3266
    %v3303 = vpack.c.b16 %v3269, %v3268
    %v3304 = vpack.c.b16 %v3271, %v3270
    %v3305 = vpack.c.b16 %v3273, %v3272
    %3338 = vmatprep.subr.bf16.mxu0 0
    %3339 = vmatpush1.bf16.msra.mxu0 %v3281
    %3340 = vmatprep.subr.bf16.mxu0 0
    %3341 = vmatpush1.bf16.msra.mxu0 %v3280
    %3342 = vmatprep.subr.bf16.mxu0 0
    %3343 = vmatpush1.bf16.msra.mxu0 %v3279
    %3344 = vmatprep.subr.bf16.mxu0 0
    %3345 = vmatpush1.bf16.msra.mxu0 %v3278
    %3346 = vmatprep.subr.bf16.mxu0 0
    %3347 = vmatpush1.bf16.msra.mxu0 %v3277
    %3348 = vmatprep.subr.bf16.mxu0 0
    %3349 = vmatpush1.bf16.msra.mxu0 %v3276
    %3350 = vmatprep.subr.bf16.mxu0 0
    %3351 = vmatpush1.bf16.msra.mxu0 %v3275
    %3352 = vmatprep.subr.bf16.mxu0 0
    %3353 = vmatpush1.bf16.msra.mxu0 %v3274
    %3354 = vmatprep.subr.bf16.mxu0 0
    %3355 = vmatpush2.bf16.msra.mxu0 %v3289
    %3356 = vmatprep.subr.bf16.mxu0 0
    %3357 = vmatpush2.bf16.msra.mxu0 %v3288
    %3358 = vmatprep.subr.bf16.mxu0 0
    %3359 = vmatpush2.bf16.msra.mxu0 %v3287
    %3360 = vmatprep.subr.bf16.mxu0 0
    %3361 = vmatpush2.bf16.msra.mxu0 %v3286
    %3362 = vmatprep.subr.bf16.mxu0 0
    %3363 = vmatpush2.bf16.msra.mxu0 %v3285
    %3364 = vmatprep.subr.bf16.mxu0 0
    %3365 = vmatpush2.bf16.msra.mxu0 %v3284
    %3366 = vmatprep.subr.bf16.mxu0 0
    %3367 = vmatpush2.bf16.msra.mxu0 %v3283
    %3368 = vmatprep.subr.bf16.mxu0 0
    %3369 = vmatpush2.bf16.msra.mxu0 %v3282
    %3370 = vmatprep.mubr.bf16.mxu0 %v2972
    %3371 = vmatmul.mubr.bf16.gmra.mxu0 %v2918
    %v3372 = vpop.f32.mrf.mxu0
    %v3373 = vadd.f32 0.0, %v3372
    %v3374 = vpop.f32.mrf.mxu0
    %v3375 = vpop.f32.mrf.mxu0
    %v3376 = vadd.f32 0.0, %v3375
    %v3377 = vpop.f32.mrf.mxu0
    %3378 = vmatprep.mubr.bf16.mxu0 %v2973
    %3379 = vmatmul.mubr.bf16.gmra.mxu0 %v2919
    %v3380 = vpop.f32.mrf.mxu0
    %v3381 = vadd.f32 0.0, %v3380
    %v3382 = vpop.f32.mrf.mxu0
    %v3383 = vpop.f32.mrf.mxu0
    %v3384 = vadd.f32 0.0, %v3383
    %v3385 = vpop.f32.mrf.mxu0
    %3386 = vdwg.mxu0
    %3387 = vmatprep.subr.bf16.mxu0 0
    %3388 = vmatpush1.bf16.msra.mxu0 %v3297
    %3389 = vmatprep.subr.bf16.mxu0 0
    %3390 = vmatpush1.bf16.msra.mxu0 %v3296
    %3391 = vmatprep.subr.bf16.mxu0 0
    %3392 = vmatpush1.bf16.msra.mxu0 %v3295
    %3393 = vmatprep.subr.bf16.mxu0 0
    %3394 = vmatpush1.bf16.msra.mxu0 %v3294
    %3395 = vmatprep.subr.bf16.mxu0 0
    %3396 = vmatpush1.bf16.msra.mxu0 %v3293
    %3397 = vmatprep.subr.bf16.mxu0 0
    %3398 = vmatpush1.bf16.msra.mxu0 %v3292
    %3399 = vmatprep.subr.bf16.mxu0 0
    %3400 = vmatpush1.bf16.msra.mxu0 %v3291
    %3401 = vmatprep.subr.bf16.mxu0 0
    %3402 = vmatpush1.bf16.msra.mxu0 %v3290
    %3403 = vmatprep.subr.bf16.mxu0 0
    %3404 = vmatpush2.bf16.msra.mxu0 %v3305
    %3405 = vmatprep.subr.bf16.mxu0 0
    %3406 = vmatpush2.bf16.msra.mxu0 %v3304
    %3407 = vmatprep.subr.bf16.mxu0 0
    %3408 = vmatpush2.bf16.msra.mxu0 %v3303
    %3409 = vmatprep.subr.bf16.mxu0 0
    %3410 = vmatpush2.bf16.msra.mxu0 %v3302
    %3411 = vmatprep.subr.bf16.mxu0 0
    %3412 = vmatpush2.bf16.msra.mxu0 %v3301
    %3413 = vmatprep.subr.bf16.mxu0 0
    %3414 = vmatpush2.bf16.msra.mxu0 %v3300
    %3415 = vmatprep.subr.bf16.mxu0 0
    %3416 = vmatpush2.bf16.msra.mxu0 %v3299
    %3417 = vmatprep.subr.bf16.mxu0 0
    %3418 = vmatpush2.bf16.msra.mxu0 %v3298
    %3419 = vmatprep.mubr.bf16.mxu0 %v3080
    %3420 = vmatmul.mubr.bf16.gmra.mxu0 %v3026
    %v3421 = vpop.f32.mrf.mxu0
    %v3422 = vadd.f32 %v3373, %v3421
    %v3423 = vpop.f32.mrf.mxu0
    %v3424 = vpop.f32.mrf.mxu0
    %v3425 = vadd.f32 %v3376, %v3424
    %v3426 = vpop.f32.mrf.mxu0
    %3427 = vmatprep.mubr.bf16.mxu0 %v3081
    %3428 = vmatmul.mubr.bf16.gmra.mxu0 %v3027
    %v3429 = vpop.f32.mrf.mxu0
    %v3430 = vadd.f32 %v3381, %v3429
    %v3431 = vpop.f32.mrf.mxu0
    %v3432 = vpop.f32.mrf.mxu0
    %v3433 = vadd.f32 %v3384, %v3432
    %v3434 = vpop.f32.mrf.mxu0
    %3435 = vdwg.mxu0
    %v3437 = vunpack.c.l.s4 1966171168
    %v3438 = vunpack.c.0.s8 %v3437
    %v3439 = vlaneseq
    %v3440 = vshrl.u32 %v3439, 7
    %v3441 = vsub.s32 %v3438, %v3440
    %v3442 = vrot.slane %v3422, %v3441
    %v3444 = vunpack.c.l.s4 1966171168
    %v3445 = vunpack.c.0.s8 %v3444
    %v3446 = vlaneseq
    %v3447 = vshrl.u32 %v3446, 7
    %v3448 = vsub.s32 %v3445, %v3447
    %v3449 = vrot.slane %v3425, %v3448
    %v3451 = vunpack.c.l.s4 1966171168
    %v3452 = vunpack.c.0.s8 %v3451
    %v3453 = vlaneseq
    %v3454 = vshrl.u32 %v3453, 7
    %v3455 = vsub.s32 %v3452, %v3454
    %v3456 = vrot.slane %v3430, %v3455
    %v3458 = vunpack.c.l.s4 1966171168
    %v3459 = vunpack.c.0.s8 %v3458
    %v3460 = vlaneseq
    %v3461 = vshrl.u32 %v3460, 7
    %v3462 = vsub.s32 %v3459, %v3461
    %v3463 = vrot.slane %v3433, %v3462
    %v3468 = vcombine.low %v3442, %v3449
    %v3469 = vcombine.high %v3442, %v3449
    %v3470 = vcombine.low %v3456, %v3463
    %v3471 = vcombine.high %v3456, %v3463
    %v3476 = vpack.c.bf16 %v3470, %v3468
    %v3477 = vpack.c.bf16 %v3471, %v3469
    %v3480 = vunpack.c.l.b16 %v3476
    %v3481 = vunpack.c.l.b16 %v3477
    %v3482 = vunpack.c.h.b16 %v3476
    %v3483 = vunpack.c.h.b16 %v3477
    %v3484 = vpack.c.b16 %v3481, %v3480
    %v3485 = vpack.c.b16 %v3483, %v3482
    %3488 = vst [vmem:[#allocation3 + $0x4] sm:$0xff] %v3484
    %3489 = vst [vmem:[#allocation3 + $0x14] sm:$0xff] %v3485
    %v3490 = vld [vmem:[#allocation3] sm:$0xff]
    %v3491 = vld [vmem:[#allocation3 + $0x8] sm:$0xf]
    %v3492 = vld [vmem:[#allocation3 + $0x10] sm:$0xff]
    %v3493 = vld [vmem:[#allocation3 + $0x18] sm:$0xf]
    %v3494 = vld [vmem:[#allocation3 + $0x4] sm:$0xff]
    %v3495 = vld [vmem:[#allocation3 + $0x14] sm:$0xff]
    %v3496 = vld [vmem:[#allocation3 + $0x4] sm:$0xff]
    %v3497 = vld [vmem:[#allocation3 + $0xc] sm:$0xf]
    %v3498 = vld [vmem:[#allocation3 + $0x14] sm:$0xff]
    %v3499 = vld [vmem:[#allocation3 + $0x1c] sm:$0xf]
    %v3504 = vunpack.c.l.b16 %v3490
    %v3505 = vunpack.c.h.b16 %v3490
    %v3506 = vunpack.c.l.b16 %v3491
    %v3507 = vunpack.c.l.b16 %v3492
    %v3508 = vunpack.c.h.b16 %v3492
    %v3509 = vunpack.c.l.b16 %v3493
    %v3510 = vpack.c.b16 %v3507, %v3504
    %v3511 = vpack.c.b16 %v3508, %v3505
    %v3512 = vpack.c.b16 %v3509, %v3506
    %3513 = vrot.lane.b32.xlu0 %v3510, 127
    %v3514 = vpop.permute.xlu0 %3513
    %3515 = vrot.lane.b32.xlu0 %v3511, 127
    %v3516 = vpop.permute.xlu0 %3515
    %3517 = vrot.lane.b32.xlu0 %v3512, 127
    %v3518 = vpop.permute.xlu0 %3517
    %v3519 = vsel %vm2142, %v3514, %v3516
    %v3520 = vsel %vm2142, %v3516, %v3518
    %3521 = vrot.lane.b32.xlu0 %v3510, 126
    %v3522 = vpop.permute.xlu0 %3521
    %3523 = vrot.lane.b32.xlu0 %v3511, 126
    %v3524 = vpop.permute.xlu0 %3523
    %3525 = vrot.lane.b32.xlu0 %v3512, 126
    %v3526 = vpop.permute.xlu0 %3525
    %v3527 = vsel %vm2159, %v3522, %v3524
    %v3528 = vsel %vm2159, %v3524, %v3526
    %3529 = vrot.lane.b32.xlu0 %v3510, 118
    %v3530 = vpop.permute.xlu0 %3529
    %3531 = vrot.lane.b32.xlu0 %v3511, 118
    %v3532 = vpop.permute.xlu0 %3531
    %3533 = vrot.lane.b32.xlu0 %v3512, 118
    %v3534 = vpop.permute.xlu0 %3533
    %vm3535 = vcmask 965632
    %v3536 = vsel %vm3535, %v3530, %v3532
    %v3537 = vsel %vm3535, %v3532, %v3534
    %v3540 = vunpack.c.l.b16 %v3494
    %v3541 = vunpack.c.h.b16 %v3494
    %v3542 = vunpack.c.l.b16 %v3495
    %v3543 = vunpack.c.h.b16 %v3495
    %v3544 = vpack.c.b16 %v3542, %v3540
    %v3545 = vpack.c.b16 %v3543, %v3541
    %3546 = vrot.lane.b32.xlu0 %v3544, 117
    %v3547 = vpop.permute.xlu0 %3546
    %3548 = vrot.lane.b32.xlu0 %v3545, 117
    %v3549 = vpop.permute.xlu0 %3548
    %vm3550 = vcmask 957440
    %v3551 = vsel %vm3550, %v3547, %v3549
    %v3556 = vunpack.c.l.b16 %v3496
    %v3557 = vunpack.c.h.b16 %v3496
    %v3558 = vunpack.c.l.b16 %v3497
    %v3559 = vunpack.c.l.b16 %v3498
    %v3560 = vunpack.c.h.b16 %v3498
    %v3561 = vunpack.c.l.b16 %v3499
    %v3562 = vpack.c.b16 %v3559, %v3556
    %v3563 = vpack.c.b16 %v3560, %v3557
    %v3564 = vpack.c.b16 %v3561, %v3558
    %3565 = vrot.lane.b32.xlu0 %v3562, 116
    %v3566 = vpop.permute.xlu0 %3565
    %3567 = vrot.lane.b32.xlu0 %v3563, 116
    %v3568 = vpop.permute.xlu0 %3567
    %3569 = vrot.lane.b32.xlu0 %v3564, 116
    %v3570 = vpop.permute.xlu0 %3569
    %v3571 = vsel %vm2263, %v3566, %v3568
    %v3572 = vsel %vm2263, %v3568, %v3570
    %3573 = vrot.lane.b32.xlu0 %v3562, 108
    %v3574 = vpop.permute.xlu0 %3573
    %3575 = vrot.lane.b32.xlu0 %v3563, 108
    %v3576 = vpop.permute.xlu0 %3575
    %3577 = vrot.lane.b32.xlu0 %v3564, 108
    %v3578 = vpop.permute.xlu0 %3577
    %vm3579 = vcmask 883712
    %v3580 = vsel %vm3579, %v3574, %v3576
    %v3581 = vsel %vm3579, %v3576, %v3578
    %3582 = vrot.lane.b32.xlu0 %v3562, 107
    %v3583 = vpop.permute.xlu0 %3582
    %3584 = vrot.lane.b32.xlu0 %v3563, 107
    %v3585 = vpop.permute.xlu0 %3584
    %3586 = vrot.lane.b32.xlu0 %v3564, 107
    %v3587 = vpop.permute.xlu0 %3586
    %vm3588 = vcmask 875520
    %v3589 = vsel %vm3588, %v3583, %v3585
    %v3590 = vsel %vm3588, %v3585, %v3587
    %3591 = vrot.lane.b32.xlu0 %v3562, 106
    %v3592 = vpop.permute.xlu0 %3591
    %3593 = vrot.lane.b32.xlu0 %v3563, 106
    %v3594 = vpop.permute.xlu0 %3593
    %3595 = vrot.lane.b32.xlu0 %v3564, 106
    %v3596 = vpop.permute.xlu0 %3595
    %vm3597 = vcmask 867328
    %v3598 = vsel %vm3597, %v3592, %v3594
    %v3599 = vsel %vm3597, %v3594, %v3596
    %v3600 = vld [vmem:[#allocation12] sm:$0xff]
    %v3601 = vld [vmem:[#allocation12 + $0x8] sm:$0xff]
    %v3602 = vld [vmem:[#allocation12 + $0x10] sm:$0xff]
    %v3603 = vld [vmem:[#allocation12 + $0x18] sm:$0xff]
    %v3608 = vunpack.c.l.b16 %v3600
    %v3609 = vunpack.c.h.b16 %v3600
    %v3610 = vunpack.c.l.b16 %v3601
    %v3611 = vunpack.c.h.b16 %v3601
    %v3612 = vunpack.c.l.b16 %v3602
    %v3613 = vunpack.c.h.b16 %v3602
    %v3614 = vunpack.c.l.b16 %v3603
    %v3615 = vunpack.c.h.b16 %v3603
    %v3616 = vpack.c.b16 %v3610, %v3608
    %v3617 = vpack.c.b16 %v3611, %v3609
    %v3618 = vpack.c.b16 %v3614, %v3612
    %v3619 = vpack.c.b16 %v3615, %v3613
    %3622 = vrot.lane.b32.xlu0 %v3510, 11
    %v3623 = vpop.permute.xlu0 %3622
    %3624 = vrot.lane.b32.xlu0 %v3511, 11
    %v3625 = vpop.permute.xlu0 %3624
    %3626 = vrot.lane.b32.xlu0 %v3512, 11
    %v3627 = vpop.permute.xlu0 %3626
    %3628 = vrot.lane.b32.xlu0 %v3519, 11
    %v3629 = vpop.permute.xlu0 %3628
    %3630 = vrot.lane.b32.xlu0 %v3520, 11
    %v3631 = vpop.permute.xlu0 %3630
    %3632 = vrot.lane.b32.xlu0 %v3518, 11
    %v3633 = vpop.permute.xlu0 %3632
    %3634 = vrot.lane.b32.xlu0 %v3527, 11
    %v3635 = vpop.permute.xlu0 %3634
    %3636 = vrot.lane.b32.xlu0 %v3528, 11
    %v3637 = vpop.permute.xlu0 %3636
    %3638 = vrot.lane.b32.xlu0 %v3526, 11
    %v3639 = vpop.permute.xlu0 %3638
    %3640 = vrot.lane.b32.xlu0 %v3536, 11
    %v3641 = vpop.permute.xlu0 %3640
    %3642 = vrot.lane.b32.xlu0 %v3537, 11
    %v3643 = vpop.permute.xlu0 %3642
    %3644 = vrot.lane.b32.xlu0 %v3534, 11
    %v3645 = vpop.permute.xlu0 %3644
    %3646 = vrot.lane.b32.xlu0 %v3547, 11
    %v3647 = vpop.permute.xlu0 %3646
    %3648 = vrot.lane.b32.xlu0 %v3551, 11
    %v3649 = vpop.permute.xlu0 %3648
    %3650 = vrot.lane.b32.xlu0 %v3549, 11
    %v3651 = vpop.permute.xlu0 %3650
    %3652 = vrot.lane.b32.xlu0 %v3566, 11
    %v3653 = vpop.permute.xlu0 %3652
    %3654 = vrot.lane.b32.xlu0 %v3571, 11
    %v3655 = vpop.permute.xlu0 %3654
    %3656 = vrot.lane.b32.xlu0 %v3572, 11
    %v3657 = vpop.permute.xlu0 %3656
    %3658 = vrot.lane.b32.xlu0 %v3574, 11
    %v3659 = vpop.permute.xlu0 %3658
    %3660 = vrot.lane.b32.xlu0 %v3580, 11
    %v3661 = vpop.permute.xlu0 %3660
    %3662 = vrot.lane.b32.xlu0 %v3581, 11
    %v3663 = vpop.permute.xlu0 %3662
    %3664 = vrot.lane.b32.xlu0 %v3583, 11
    %v3665 = vpop.permute.xlu0 %3664
    %3666 = vrot.lane.b32.xlu0 %v3589, 11
    %v3667 = vpop.permute.xlu0 %3666
    %3668 = vrot.lane.b32.xlu0 %v3590, 11
    %v3669 = vpop.permute.xlu0 %3668
    %3670 = vrot.lane.b32.xlu0 %v3592, 11
    %v3671 = vpop.permute.xlu0 %3670
    %3672 = vrot.lane.b32.xlu0 %v3598, 11
    %v3673 = vpop.permute.xlu0 %3672
    %3674 = vrot.lane.b32.xlu0 %v3599, 11
    %v3675 = vpop.permute.xlu0 %3674
    %vm3676 = vcmask 89088
    %v3677 = vsel %vm3676, %v3623, %v3625
    %v3678 = vsel %vm3676, %v3625, %v3627
    %v3679 = vsel %vm3676, %v3629, %v3631
    %v3680 = vsel %vm3676, %v3631, %v3633
    %v3681 = vsel %vm3676, %v3635, %v3637
    %v3682 = vsel %vm3676, %v3637, %v3639
    %v3683 = vsel %vm3676, %v3641, %v3643
    %v3684 = vsel %vm3676, %v3643, %v3645
    %v3685 = vsel %vm3676, %v3647, %v3649
    %v3686 = vsel %vm3676, %v3649, %v3651
    %v3687 = vsel %vm3676, %v3653, %v3655
    %v3688 = vsel %vm3676, %v3655, %v3657
    %v3689 = vsel %vm3676, %v3659, %v3661
    %v3690 = vsel %vm3676, %v3661, %v3663
    %v3691 = vsel %vm3676, %v3665, %v3667
    %v3692 = vsel %vm3676, %v3667, %v3669
    %v3693 = vsel %vm3676, %v3671, %v3673
    %v3694 = vsel %vm3676, %v3673, %v3675
    %v3714 = vsel %vm421, %v3617, 0
    %v3717 = vsel %vm421, %v3619, 0
    %3719 = vmatprep.subr.bf16.mxu0 %v3692
    %3720 = vmatpush1.bf16.msra.mxu0 %v3691
    %3721 = vmatprep.subr.bf16.mxu0 %v3690
    %3722 = vmatpush1.bf16.msra.mxu0 %v3689
    %3723 = vmatprep.subr.bf16.mxu0 %v3688
    %3724 = vmatpush1.bf16.msra.mxu0 %v3687
    %3725 = vmatprep.subr.bf16.mxu0 %v3686
    %3726 = vmatpush1.bf16.msra.mxu0 %v3685
    %3727 = vmatprep.subr.bf16.mxu0 %v3684
    %3728 = vmatpush1.bf16.msra.mxu0 %v3683
    %3729 = vmatprep.subr.bf16.mxu0 %v3682
    %3730 = vmatpush1.bf16.msra.mxu0 %v3681
    %3731 = vmatprep.subr.bf16.mxu0 %v3680
    %3732 = vmatpush1.bf16.msra.mxu0 %v3679
    %3733 = vmatprep.subr.bf16.mxu0 %v3678
    %3734 = vmatpush1.bf16.msra.mxu0 %v3677
    %3735 = vmatprep.subr.bf16.mxu0 0
    %3736 = vmatpush2.bf16.msra.mxu0 0
    %3737 = vmatprep.subr.bf16.mxu0 0
    %3738 = vmatpush2.bf16.msra.mxu0 0
    %3739 = vmatprep.subr.bf16.mxu0 0
    %3740 = vmatpush2.bf16.msra.mxu0 0
    %3741 = vmatprep.subr.bf16.mxu0 0
    %3742 = vmatpush2.bf16.msra.mxu0 0
    %3743 = vmatprep.subr.bf16.mxu0 0
    %3744 = vmatpush2.bf16.msra.mxu0 0
    %3745 = vmatprep.subr.bf16.mxu0 0
    %3746 = vmatpush2.bf16.msra.mxu0 0
    %3747 = vmatprep.subr.bf16.mxu0 0
    %3748 = vmatpush2.bf16.msra.mxu0 0
    %3749 = vmatprep.subr.bf16.mxu0 %v3694
    %3750 = vmatpush2.bf16.msra.mxu0 %v3693
    %3751 = vmatprep.mubr.bf16.mxu0 %v3714
    %3752 = vmatmul.mubr.bf16.gmra.mxu0 %v3616
    %v3753 = vpop.f32.mrf.mxu0
    %v3754 = vadd.f32 0.0, %v3753
    %v3755 = vpop.f32.mrf.mxu0
    %v3756 = vadd.f32 0.0, %v3755
    %v3757 = vpop.f32.mrf.mxu0
    %v3758 = vadd.f32 0.0, %v3757
    %v3759 = vpop.f32.mrf.mxu0
    %v3760 = vadd.f32 0.0, %v3759
    %3761 = vmatprep.mubr.bf16.mxu0 %v3717
    %3762 = vmatmul.mubr.bf16.gmra.mxu0 %v3618
    %v3763 = vpop.f32.mrf.mxu0
    %v3764 = vadd.f32 0.0, %v3763
    %v3765 = vpop.f32.mrf.mxu0
    %v3766 = vadd.f32 0.0, %v3765
    %v3767 = vpop.f32.mrf.mxu0
    %v3768 = vadd.f32 0.0, %v3767
    %v3769 = vpop.f32.mrf.mxu0
    %v3770 = vadd.f32 0.0, %v3769
    %3771 = vdwg.mxu0
    %v3772 = vld [vmem:[#allocation13] sm:$0x3]
    %v3774 = vlaneseq
    %v3775 = vshrl.u32 %v3774, 7
    %v3776 = vsub.s32 0, %v3775
    %v3777 = vrot.slane %v3772, %v3776
    %v3778 = vlaneseq
    %v3779 = vshrl.u32 %v3778, 7
    %v3780 = vsub.s32 1, %v3779
    %v3781 = vrot.slane %v3772, %v3780
    %v3784 = vmul.f32 %v3754, %v3777
    %v3785 = vmul.f32 %v3756, %v3781
    %v3786 = vmul.f32 %v3758, %v3777
    %v3787 = vmul.f32 %v3760, %v3781
    %v3788 = vmul.f32 %v3764, %v3777
    %v3789 = vmul.f32 %v3766, %v3781
    %v3790 = vmul.f32 %v3768, %v3777
    %v3791 = vmul.f32 %v3770, %v3781
    %v3792 = vadd.f32 %v3784, %v3785
    %3793 = vadd.xlane.f32.xlu0 %v3792
    %v3794 = vpop.xlane.xlu0 %3793
    %v3795 = vadd.f32 %v3786, %v3787
    %3796 = vadd.xlane.f32.xlu0 %v3795
    %v3797 = vpop.xlane.xlu0 %3796
    %v3798 = vadd.f32 %v3788, %v3789
    %3799 = vadd.xlane.f32.xlu0 %v3798
    %v3800 = vpop.xlane.xlu0 %3799
    %v3801 = vadd.f32 %v3790, %v3791
    %3802 = vadd.xlane.f32.xlu0 %v3801
    %v3803 = vpop.xlane.xlu0 %3802
    %v3804 = vmul.f32 %v3784, %v3754
    %v3805 = vmul.f32 %v3785, %v3756
    %v3806 = vmul.f32 %v3786, %v3758
    %v3807 = vmul.f32 %v3787, %v3760
    %v3808 = vmul.f32 %v3788, %v3764
    %v3809 = vmul.f32 %v3789, %v3766
    %v3810 = vmul.f32 %v3790, %v3768
    %v3811 = vmul.f32 %v3791, %v3770
    %v3812 = vadd.f32 %v3804, %v3805
    %3813 = vadd.xlane.f32.xlu0 %v3812
    %v3814 = vpop.xlane.xlu0 %3813
    %v3815 = vadd.f32 %v3806, %v3807
    %3816 = vadd.xlane.f32.xlu0 %v3815
    %v3817 = vpop.xlane.xlu0 %3816
    %v3818 = vadd.f32 %v3808, %v3809
    %3819 = vadd.xlane.f32.xlu0 %v3818
    %v3820 = vpop.xlane.xlu0 %3819
    %v3821 = vadd.f32 %v3810, %v3811
    %3822 = vadd.xlane.f32.xlu0 %v3821
    %v3823 = vpop.xlane.xlu0 %3822
    %v3824 = vadd.f32 %v3794, %v3797
    %v3825 = vadd.f32 %v3824, %v3800
    %v3826 = vadd.f32 %v3825, %v3803
    %v3827 = vadd.f32 %v3814, %v3817
    %v3828 = vadd.f32 %v3827, %v3820
    %v3829 = vadd.f32 %v3828, %v3823
    %v3830 = vrcp.pop 512.0
    %v3831 = vmul.f32 %v3826, %v3830
    %v3832 = vmul.f32 %v3829, %v3830
    %v3833 = vmul.f32 %v3831, %v3831
    %v3834 = vsub.f32 %v3832, %v3833
    %v3835 = vmax.f32 %v3834, 0.0
    %v3836 = vld [vmem:[%s11] sm:$0xff]
    %v3837 = vadd.f32 %v3835, 1e-05
    %v3838 = vrsqrt.pop %v3837
    %v3839 = vmul.f32 %v3836, %v3838
    %v3840 = vld [vmem:[%s12] sm:$0xff]
    %v3841 = vmul.f32 %v3831, %v3839
    %v3842 = vsub.f32 %v3840, %v3841
    %3844 = vset.pattern.permute.xlu0 0
    %3845 = vperm.xlu0 %3844, %v3839
    %v3846 = vpop.permute.xlu0 %3845
    %v3848 = vmul.f32 %v3754, %v3846
    %v3849 = vmul.f32 %v3756, %v3846
    %3851 = vset.pattern.permute.xlu0 0
    %3852 = vperm.xlu0 %3851, %v3842
    %v3853 = vpop.permute.xlu0 %3852
    %v3855 = vadd.f32 %v3848, %v3853
    %v3856 = vadd.f32 %v3849, %v3853
    %v3857 = vmax.f32 %v3855, 0.0
    %v3858 = vmax.f32 %v3856, 0.0
    %v3861 = vcombine.low %v3857, %v3858
    %v3862 = vcombine.high %v3857, %v3858
    %v3866 = vunpack.c.l.s4 1935823168
    %v3867 = vunpack.c.0.s8 %v3866
    %v3868 = vlaneseq
    %v3869 = vshrl.u32 %v3868, 7
    %v3870 = vsub.s32 %v3867, %v3869
    %v3871 = vrot.slane %v3861, %v3870
    %v3873 = vunpack.c.l.s4 1935823168
    %v3874 = vunpack.c.0.s8 %v3873
    %v3875 = vlaneseq
    %v3876 = vshrl.u32 %v3875, 7
    %v3877 = vsub.s32 %v3874, %v3876
    %v3878 = vrot.slane %v3862, %v3877
    %v3879 = vpack.c.bf16 %v3878, %v3871
    %v3880 = vmul.f32 %v3758, %v3846
    %v3881 = vmul.f32 %v3760, %v3846
    %v3882 = vadd.f32 %v3880, %v3853
    %v3883 = vadd.f32 %v3881, %v3853
    %v3884 = vmax.f32 %v3882, 0.0
    %v3885 = vmax.f32 %v3883, 0.0
    %v3888 = vcombine.low %v3884, %v3885
    %v3889 = vcombine.high %v3884, %v3885
    %v3893 = vunpack.c.l.s4 1935823168
    %v3894 = vunpack.c.0.s8 %v3893
    %v3895 = vlaneseq
    %v3896 = vshrl.u32 %v3895, 7
    %v3897 = vsub.s32 %v3894, %v3896
    %v3898 = vrot.slane %v3888, %v3897
    %v3900 = vunpack.c.l.s4 1935823168
    %v3901 = vunpack.c.0.s8 %v3900
    %v3902 = vlaneseq
    %v3903 = vshrl.u32 %v3902, 7
    %v3904 = vsub.s32 %v3901, %v3903
    %v3905 = vrot.slane %v3889, %v3904
    %v3906 = vpack.c.bf16 %v3905, %v3898
    %v3907 = vmul.f32 %v3764, %v3846
    %v3908 = vmul.f32 %v3766, %v3846
    %v3909 = vadd.f32 %v3907, %v3853
    %v3910 = vadd.f32 %v3908, %v3853
    %v3911 = vmax.f32 %v3909, 0.0
    %v3912 = vmax.f32 %v3910, 0.0
    %v3915 = vcombine.low %v3911, %v3912
    %v3916 = vcombine.high %v3911, %v3912
    %v3920 = vunpack.c.l.s4 1935823168
    %v3921 = vunpack.c.0.s8 %v3920
    %v3922 = vlaneseq
    %v3923 = vshrl.u32 %v3922, 7
    %v3924 = vsub.s32 %v3921, %v3923
    %v3925 = vrot.slane %v3915, %v3924
    %v3927 = vunpack.c.l.s4 1935823168
    %v3928 = vunpack.c.0.s8 %v3927
    %v3929 = vlaneseq
    %v3930 = vshrl.u32 %v3929, 7
    %v3931 = vsub.s32 %v3928, %v3930
    %v3932 = vrot.slane %v3916, %v3931
    %v3933 = vpack.c.bf16 %v3932, %v3925
    %v3934 = vmul.f32 %v3768, %v3846
    %v3935 = vmul.f32 %v3770, %v3846
    %v3936 = vadd.f32 %v3934, %v3853
    %v3937 = vadd.f32 %v3935, %v3853
    %v3938 = vmax.f32 %v3936, 0.0
    %v3939 = vmax.f32 %v3937, 0.0
    %v3942 = vcombine.low %v3938, %v3939
    %v3943 = vcombine.high %v3938, %v3939
    %v3947 = vunpack.c.l.s4 1935823168
    %v3948 = vunpack.c.0.s8 %v3947
    %v3949 = vlaneseq
    %v3950 = vshrl.u32 %v3949, 7
    %v3951 = vsub.s32 %v3948, %v3950
    %v3952 = vrot.slane %v3942, %v3951
    %v3954 = vunpack.c.l.s4 1935823168
    %v3955 = vunpack.c.0.s8 %v3954
    %v3956 = vlaneseq
    %v3957 = vshrl.u32 %v3956, 7
    %v3958 = vsub.s32 %v3955, %v3957
    %v3959 = vrot.slane %v3943, %v3958
    %v3960 = vpack.c.bf16 %v3959, %v3952
    %v3961 = vld [vmem:[#allocation15] sm:$0xff]
    %v3962 = vld [vmem:[#allocation15 + $0x8] sm:$0xf]
    %v3963 = vld [vmem:[#allocation15 + $0xc] sm:$0xff]
    %v3964 = vld [vmem:[#allocation15 + $0x14] sm:$0xf]
    %v3965 = vld [vmem:[#allocation15 + $0x18] sm:$0xff]
    %v3966 = vld [vmem:[#allocation15 + $0x20] sm:$0xf]
    %v3967 = vld [vmem:[#allocation15 + $0x24] sm:$0xff]
    %v3968 = vld [vmem:[#allocation15 + $0x2c] sm:$0xf]
    %v3969 = vld [vmem:[#allocation15 + $0x30] sm:$0xff]
    %v3970 = vld [vmem:[#allocation15 + $0x38] sm:$0xf]
    %v3971 = vld [vmem:[#allocation15 + $0x3c] sm:$0xff]
    %v3972 = vld [vmem:[#allocation15 + $0x44] sm:$0xf]
    %v3973 = vld [vmem:[#allocation15 + $0x48] sm:$0xff]
    %v3974 = vld [vmem:[#allocation15 + $0x50] sm:$0xf]
    %v3975 = vld [vmem:[#allocation15 + $0x54] sm:$0xff]
    %v3976 = vld [vmem:[#allocation15 + $0x5c] sm:$0xf]
    %v3977 = vld [vmem:[#allocation15 + $0x60] sm:$0xff]
    %v3978 = vld [vmem:[#allocation15 + $0x68] sm:$0xf]
    %v3979 = vld [vmem:[#allocation15 + $0x6c] sm:$0xff]
    %v3980 = vld [vmem:[#allocation15 + $0x74] sm:$0xf]
    %v3981 = vld [vmem:[#allocation15 + $0x78] sm:$0xff]
    %v3982 = vld [vmem:[#allocation15 + $0x80] sm:$0xf]
    %v3983 = vld [vmem:[#allocation15 + $0x84] sm:$0xff]
    %v3984 = vld [vmem:[#allocation15 + $0x8c] sm:$0xf]
    %v3985 = vld [vmem:[#allocation15 + $0x90] sm:$0xff]
    %v3986 = vld [vmem:[#allocation15 + $0x98] sm:$0xf]
    %v3987 = vld [vmem:[#allocation15 + $0x9c] sm:$0xff]
    %v3988 = vld [vmem:[#allocation15 + $0xa4] sm:$0xf]
    %v3989 = vld [vmem:[#allocation15 + $0xa8] sm:$0xff]
    %v3990 = vld [vmem:[#allocation15 + $0xb0] sm:$0xf]
    %v3991 = vld [vmem:[#allocation15 + $0xb4] sm:$0xff]
    %v3992 = vld [vmem:[#allocation15 + $0xbc] sm:$0xf]
    %v3993 = vld [vmem:[#allocation15 + $0xc0] sm:$0xff]
    %v3994 = vld [vmem:[#allocation15 + $0xc8] sm:$0xf]
    %v3995 = vld [vmem:[#allocation15 + $0xcc] sm:$0xff]
    %v3996 = vld [vmem:[#allocation15 + $0xd4] sm:$0xf]
    %v3997 = vld [vmem:[#allocation15 + $0xd8] sm:$0xff]
    %v3998 = vld [vmem:[#allocation15 + $0xe0] sm:$0xf]
    %v3999 = vld [vmem:[#allocation15 + $0xe4] sm:$0xff]
    %v4000 = vld [vmem:[#allocation15 + $0xec] sm:$0xf]
    %v4001 = vld [vmem:[#allocation15 + $0xf0] sm:$0xff]
    %v4002 = vld [vmem:[#allocation15 + $0xf8] sm:$0xf]
    %v4003 = vld [vmem:[#allocation15 + $0xfc] sm:$0xff]
    %v4004 = vld [vmem:[#allocation15 + $0x104] sm:$0xf]
    %v4005 = vld [vmem:[#allocation15 + $0x108] sm:$0xff]
    %v4006 = vld [vmem:[#allocation15 + $0x110] sm:$0xf]
    %v4007 = vld [vmem:[#allocation15 + $0x114] sm:$0xff]
    %v4008 = vld [vmem:[#allocation15 + $0x11c] sm:$0xf]
    %v4009 = vld [vmem:[#allocation15 + $0x120] sm:$0xff]
    %v4010 = vld [vmem:[#allocation15 + $0x128] sm:$0xf]
    %v4011 = vld [vmem:[#allocation15 + $0x12c] sm:$0xff]
    %v4012 = vld [vmem:[#allocation15 + $0x134] sm:$0xf]
    %v4013 = vld [vmem:[#allocation15 + $0x138] sm:$0xff]
    %v4014 = vld [vmem:[#allocation15 + $0x140] sm:$0xf]
    %v4015 = vld [vmem:[#allocation15 + $0x144] sm:$0xff]
    %v4016 = vld [vmem:[#allocation15 + $0x14c] sm:$0xf]
    %v4017 = vld [vmem:[#allocation15 + $0x150] sm:$0xff]
    %v4018 = vld [vmem:[#allocation15 + $0x158] sm:$0xf]
    %v4019 = vld [vmem:[#allocation15 + $0x15c] sm:$0xff]
    %v4020 = vld [vmem:[#allocation15 + $0x164] sm:$0xf]
    %v4021 = vld [vmem:[#allocation15 + $0x168] sm:$0xff]
    %v4022 = vld [vmem:[#allocation15 + $0x170] sm:$0xf]
    %v4023 = vld [vmem:[#allocation15 + $0x174] sm:$0xff]
    %v4024 = vld [vmem:[#allocation15 + $0x17c] sm:$0xf]
    %v4025 = vld [vmem:[#allocation15 + $0x180] sm:$0xff]
    %v4026 = vld [vmem:[#allocation15 + $0x188] sm:$0xf]
    %v4027 = vld [vmem:[#allocation15 + $0x18c] sm:$0xff]
    %v4028 = vld [vmem:[#allocation15 + $0x194] sm:$0xf]
    %v4029 = vld [vmem:[#allocation15 + $0x198] sm:$0xff]
    %v4030 = vld [vmem:[#allocation15 + $0x1a0] sm:$0xf]
    %v4031 = vld [vmem:[#allocation15 + $0x1a4] sm:$0xff]
    %v4032 = vld [vmem:[#allocation15 + $0x1ac] sm:$0xf]
    %v4033 = vld [vmem:[#allocation15 + $0x1b0] sm:$0xff]
    %v4034 = vld [vmem:[#allocation15 + $0x1b8] sm:$0xf]
    %v4035 = vld [vmem:[#allocation15 + $0x1bc] sm:$0xff]
    %v4036 = vld [vmem:[#allocation15 + $0x1c4] sm:$0xf]
    %v4037 = vld [vmem:[#allocation15 + $0x1c8] sm:$0xff]
    %v4038 = vld [vmem:[#allocation15 + $0x1d0] sm:$0xf]
    %v4039 = vld [vmem:[#allocation15 + $0x1d4] sm:$0xff]
    %v4040 = vld [vmem:[#allocation15 + $0x1dc] sm:$0xf]
    %v4041 = vld [vmem:[#allocation15 + $0x1e0] sm:$0xff]
    %v4042 = vld [vmem:[#allocation15 + $0x1e8] sm:$0xf]
    %v4043 = vld [vmem:[#allocation15 + $0x1ec] sm:$0xff]
    %v4044 = vld [vmem:[#allocation15 + $0x1f4] sm:$0xf]
    %v4045 = vld [vmem:[#allocation15 + $0x1f8] sm:$0xff]
    %v4046 = vld [vmem:[#allocation15 + $0x200] sm:$0xf]
    %v4047 = vld [vmem:[#allocation15 + $0x204] sm:$0xff]
    %v4048 = vld [vmem:[#allocation15 + $0x20c] sm:$0xf]
    %v4049 = vld [vmem:[#allocation15 + $0x210] sm:$0xff]
    %v4050 = vld [vmem:[#allocation15 + $0x218] sm:$0xf]
    %v4051 = vld [vmem:[#allocation15 + $0x21c] sm:$0xff]
    %v4052 = vld [vmem:[#allocation15 + $0x224] sm:$0xf]
    %v4053 = vld [vmem:[#allocation15 + $0x228] sm:$0xff]
    %v4054 = vld [vmem:[#allocation15 + $0x230] sm:$0xf]
    %v4055 = vld [vmem:[#allocation15 + $0x234] sm:$0xff]
    %v4056 = vld [vmem:[#allocation15 + $0x23c] sm:$0xf]
    %v4057 = vld [vmem:[#allocation15 + $0x240] sm:$0xff]
    %v4058 = vld [vmem:[#allocation15 + $0x248] sm:$0xf]
    %v4059 = vld [vmem:[#allocation15 + $0x24c] sm:$0xff]
    %v4060 = vld [vmem:[#allocation15 + $0x254] sm:$0xf]
    %v4061 = vld [vmem:[#allocation15 + $0x258] sm:$0xff]
    %v4062 = vld [vmem:[#allocation15 + $0x260] sm:$0xf]
    %v4063 = vld [vmem:[#allocation15 + $0x264] sm:$0xff]
    %v4064 = vld [vmem:[#allocation15 + $0x26c] sm:$0xf]
    %v4065 = vld [vmem:[#allocation15 + $0x270] sm:$0xff]
    %v4066 = vld [vmem:[#allocation15 + $0x278] sm:$0xf]
    %v4067 = vld [vmem:[#allocation15 + $0x27c] sm:$0xff]
    %v4068 = vld [vmem:[#allocation15 + $0x284] sm:$0xf]
    %v4069 = vld [vmem:[#allocation15 + $0x288] sm:$0xff]
    %v4070 = vld [vmem:[#allocation15 + $0x290] sm:$0xf]
    %v4071 = vld [vmem:[#allocation15 + $0x294] sm:$0xff]
    %v4072 = vld [vmem:[#allocation15 + $0x29c] sm:$0xf]
    %v4073 = vld [vmem:[#allocation15 + $0x2a0] sm:$0xff]
    %v4074 = vld [vmem:[#allocation15 + $0x2a8] sm:$0xf]
    %v4075 = vld [vmem:[#allocation15 + $0x2ac] sm:$0xff]
    %v4076 = vld [vmem:[#allocation15 + $0x2b4] sm:$0xf]
    %v4077 = vld [vmem:[#allocation15 + $0x2b8] sm:$0xff]
    %v4078 = vld [vmem:[#allocation15 + $0x2c0] sm:$0xf]
    %v4079 = vld [vmem:[#allocation15 + $0x2c4] sm:$0xff]
    %v4080 = vld [vmem:[#allocation15 + $0x2cc] sm:$0xf]
    %v4081 = vld [vmem:[#allocation15 + $0x2d0] sm:$0xff]
    %v4082 = vld [vmem:[#allocation15 + $0x2d8] sm:$0xf]
    %v4083 = vld [vmem:[#allocation15 + $0x2dc] sm:$0xff]
    %v4084 = vld [vmem:[#allocation15 + $0x2e4] sm:$0xf]
    %v4085 = vld [vmem:[#allocation15 + $0x2e8] sm:$0xff]
    %v4086 = vld [vmem:[#allocation15 + $0x2f0] sm:$0xf]
    %v4087 = vld [vmem:[#allocation15 + $0x2f4] sm:$0xff]
    %v4088 = vld [vmem:[#allocation15 + $0x2fc] sm:$0xf]
    %v4217 = vunpack.c.l.b16 %v3961
    %v4218 = vunpack.c.h.b16 %v3961
    %v4219 = vunpack.c.l.b16 %v3962
    %v4220 = vunpack.c.l.b16 %v3963
    %v4221 = vunpack.c.h.b16 %v3963
    %v4222 = vunpack.c.l.b16 %v3964
    %v4223 = vunpack.c.l.b16 %v3965
    %v4224 = vunpack.c.h.b16 %v3965
    %v4225 = vunpack.c.l.b16 %v3966
    %v4226 = vunpack.c.l.b16 %v3967
    %v4227 = vunpack.c.h.b16 %v3967
    %v4228 = vunpack.c.l.b16 %v3968
    %v4229 = vunpack.c.l.b16 %v3969
    %v4230 = vunpack.c.h.b16 %v3969
    %v4231 = vunpack.c.l.b16 %v3970
    %v4232 = vunpack.c.l.b16 %v3971
    %v4233 = vunpack.c.h.b16 %v3971
    %v4234 = vunpack.c.l.b16 %v3972
    %v4235 = vunpack.c.l.b16 %v3973
    %v4236 = vunpack.c.h.b16 %v3973
    %v4237 = vunpack.c.l.b16 %v3974
    %v4238 = vunpack.c.l.b16 %v3975
    %v4239 = vunpack.c.h.b16 %v3975
    %v4240 = vunpack.c.l.b16 %v3976
    %v4241 = vunpack.c.l.b16 %v3977
    %v4242 = vunpack.c.h.b16 %v3977
    %v4243 = vunpack.c.l.b16 %v3978
    %v4244 = vunpack.c.l.b16 %v3979
    %v4245 = vunpack.c.h.b16 %v3979
    %v4246 = vunpack.c.l.b16 %v3980
    %v4247 = vunpack.c.l.b16 %v3981
    %v4248 = vunpack.c.h.b16 %v3981
    %v4249 = vunpack.c.l.b16 %v3982
    %v4250 = vunpack.c.l.b16 %v3983
    %v4251 = vunpack.c.h.b16 %v3983
    %v4252 = vunpack.c.l.b16 %v3984
    %v4253 = vunpack.c.l.b16 %v3985
    %v4254 = vunpack.c.h.b16 %v3985
    %v4255 = vunpack.c.l.b16 %v3986
    %v4256 = vunpack.c.l.b16 %v3987
    %v4257 = vunpack.c.h.b16 %v3987
    %v4258 = vunpack.c.l.b16 %v3988
    %v4259 = vunpack.c.l.b16 %v3989
    %v4260 = vunpack.c.h.b16 %v3989
    %v4261 = vunpack.c.l.b16 %v3990
    %v4262 = vunpack.c.l.b16 %v3991
    %v4263 = vunpack.c.h.b16 %v3991
    %v4264 = vunpack.c.l.b16 %v3992
    %v4265 = vunpack.c.l.b16 %v3993
    %v4266 = vunpack.c.h.b16 %v3993
    %v4267 = vunpack.c.l.b16 %v3994
    %v4268 = vunpack.c.l.b16 %v3995
    %v4269 = vunpack.c.h.b16 %v3995
    %v4270 = vunpack.c.l.b16 %v3996
    %v4271 = vunpack.c.l.b16 %v3997
    %v4272 = vunpack.c.h.b16 %v3997
    %v4273 = vunpack.c.l.b16 %v3998
    %v4274 = vunpack.c.l.b16 %v3999
    %v4275 = vunpack.c.h.b16 %v3999
    %v4276 = vunpack.c.l.b16 %v4000
    %v4277 = vunpack.c.l.b16 %v4001
    %v4278 = vunpack.c.h.b16 %v4001
    %v4279 = vunpack.c.l.b16 %v4002
    %v4280 = vunpack.c.l.b16 %v4003
    %v4281 = vunpack.c.h.b16 %v4003
    %v4282 = vunpack.c.l.b16 %v4004
    %v4283 = vunpack.c.l.b16 %v4005
    %v4284 = vunpack.c.h.b16 %v4005
    %v4285 = vunpack.c.l.b16 %v4006
    %v4286 = vunpack.c.l.b16 %v4007
    %v4287 = vunpack.c.h.b16 %v4007
    %v4288 = vunpack.c.l.b16 %v4008
    %v4289 = vunpack.c.l.b16 %v4009
    %v4290 = vunpack.c.h.b16 %v4009
    %v4291 = vunpack.c.l.b16 %v4010
    %v4292 = vunpack.c.l.b16 %v4011
    %v4293 = vunpack.c.h.b16 %v4011
    %v4294 = vunpack.c.l.b16 %v4012
    %v4295 = vunpack.c.l.b16 %v4013
    %v4296 = vunpack.c.h.b16 %v4013
    %v4297 = vunpack.c.l.b16 %v4014
    %v4298 = vunpack.c.l.b16 %v4015
    %v4299 = vunpack.c.h.b16 %v4015
    %v4300 = vunpack.c.l.b16 %v4016
    %v4301 = vunpack.c.l.b16 %v4017
    %v4302 = vunpack.c.h.b16 %v4017
    %v4303 = vunpack.c.l.b16 %v4018
    %v4304 = vunpack.c.l.b16 %v4019
    %v4305 = vunpack.c.h.b16 %v4019
    %v4306 = vunpack.c.l.b16 %v4020
    %v4307 = vunpack.c.l.b16 %v4021
    %v4308 = vunpack.c.h.b16 %v4021
    %v4309 = vunpack.c.l.b16 %v4022
    %v4310 = vunpack.c.l.b16 %v4023
    %v4311 = vunpack.c.h.b16 %v4023
    %v4312 = vunpack.c.l.b16 %v4024
    %v4313 = vunpack.c.l.b16 %v4025
    %v4314 = vunpack.c.h.b16 %v4025
    %v4315 = vunpack.c.l.b16 %v4026
    %v4316 = vunpack.c.l.b16 %v4027
    %v4317 = vunpack.c.h.b16 %v4027
    %v4318 = vunpack.c.l.b16 %v4028
    %v4319 = vunpack.c.l.b16 %v4029
    %v4320 = vunpack.c.h.b16 %v4029
    %v4321 = vunpack.c.l.b16 %v4030
    %v4322 = vunpack.c.l.b16 %v4031
    %v4323 = vunpack.c.h.b16 %v4031
    %v4324 = vunpack.c.l.b16 %v4032
    %v4325 = vunpack.c.l.b16 %v4033
    %v4326 = vunpack.c.h.b16 %v4033
    %v4327 = vunpack.c.l.b16 %v4034
    %v4328 = vunpack.c.l.b16 %v4035
    %v4329 = vunpack.c.h.b16 %v4035
    %v4330 = vunpack.c.l.b16 %v4036
    %v4331 = vunpack.c.l.b16 %v4037
    %v4332 = vunpack.c.h.b16 %v4037
    %v4333 = vunpack.c.l.b16 %v4038
    %v4334 = vunpack.c.l.b16 %v4039
    %v4335 = vunpack.c.h.b16 %v4039
    %v4336 = vunpack.c.l.b16 %v4040
    %v4337 = vunpack.c.l.b16 %v4041
    %v4338 = vunpack.c.h.b16 %v4041
    %v4339 = vunpack.c.l.b16 %v4042
    %v4340 = vunpack.c.l.b16 %v4043
    %v4341 = vunpack.c.h.b16 %v4043
    %v4342 = vunpack.c.l.b16 %v4044
    %v4343 = vunpack.c.l.b16 %v4045
    %v4344 = vunpack.c.h.b16 %v4045
    %v4345 = vunpack.c.l.b16 %v4046
    %v4346 = vunpack.c.l.b16 %v4047
    %v4347 = vunpack.c.h.b16 %v4047
    %v4348 = vunpack.c.l.b16 %v4048
    %v4349 = vunpack.c.l.b16 %v4049
    %v4350 = vunpack.c.h.b16 %v4049
    %v4351 = vunpack.c.l.b16 %v4050
    %v4352 = vunpack.c.l.b16 %v4051
    %v4353 = vunpack.c.h.b16 %v4051
    %v4354 = vunpack.c.l.b16 %v4052
    %v4355 = vunpack.c.l.b16 %v4053
    %v4356 = vunpack.c.h.b16 %v4053
    %v4357 = vunpack.c.l.b16 %v4054
    %v4358 = vunpack.c.l.b16 %v4055
    %v4359 = vunpack.c.h.b16 %v4055
    %v4360 = vunpack.c.l.b16 %v4056
    %v4361 = vunpack.c.l.b16 %v4057
    %v4362 = vunpack.c.h.b16 %v4057
    %v4363 = vunpack.c.l.b16 %v4058
    %v4364 = vunpack.c.l.b16 %v4059
    %v4365 = vunpack.c.h.b16 %v4059
    %v4366 = vunpack.c.l.b16 %v4060
    %v4367 = vunpack.c.l.b16 %v4061
    %v4368 = vunpack.c.h.b16 %v4061
    %v4369 = vunpack.c.l.b16 %v4062
    %v4370 = vunpack.c.l.b16 %v4063
    %v4371 = vunpack.c.h.b16 %v4063
    %v4372 = vunpack.c.l.b16 %v4064
    %v4373 = vunpack.c.l.b16 %v4065
    %v4374 = vunpack.c.h.b16 %v4065
    %v4375 = vunpack.c.l.b16 %v4066
    %v4376 = vunpack.c.l.b16 %v4067
    %v4377 = vunpack.c.h.b16 %v4067
    %v4378 = vunpack.c.l.b16 %v4068
    %v4379 = vunpack.c.l.b16 %v4069
    %v4380 = vunpack.c.h.b16 %v4069
    %v4381 = vunpack.c.l.b16 %v4070
    %v4382 = vunpack.c.l.b16 %v4071
    %v4383 = vunpack.c.h.b16 %v4071
    %v4384 = vunpack.c.l.b16 %v4072
    %v4385 = vunpack.c.l.b16 %v4073
    %v4386 = vunpack.c.h.b16 %v4073
    %v4387 = vunpack.c.l.b16 %v4074
    %v4388 = vunpack.c.l.b16 %v4075
    %v4389 = vunpack.c.h.b16 %v4075
    %v4390 = vunpack.c.l.b16 %v4076
    %v4391 = vunpack.c.l.b16 %v4077
    %v4392 = vunpack.c.h.b16 %v4077
    %v4393 = vunpack.c.l.b16 %v4078
    %v4394 = vunpack.c.l.b16 %v4079
    %v4395 = vunpack.c.h.b16 %v4079
    %v4396 = vunpack.c.l.b16 %v4080
    %v4397 = vunpack.c.l.b16 %v4081
    %v4398 = vunpack.c.h.b16 %v4081
    %v4399 = vunpack.c.l.b16 %v4082
    %v4400 = vunpack.c.l.b16 %v4083
    %v4401 = vunpack.c.h.b16 %v4083
    %v4402 = vunpack.c.l.b16 %v4084
    %v4403 = vunpack.c.l.b16 %v4085
    %v4404 = vunpack.c.h.b16 %v4085
    %v4405 = vunpack.c.l.b16 %v4086
    %v4406 = vunpack.c.l.b16 %v4087
    %v4407 = vunpack.c.h.b16 %v4087
    %v4408 = vunpack.c.l.b16 %v4088
    %v4409 = vpack.c.b16 %v4220, %v4217
    %v4410 = vpack.c.b16 %v4221, %v4218
    %v4411 = vpack.c.b16 %v4222, %v4219
    %v4412 = vpack.c.b16 %v4226, %v4223
    %v4413 = vpack.c.b16 %v4227, %v4224
    %v4414 = vpack.c.b16 %v4228, %v4225
    %v4415 = vpack.c.b16 %v4232, %v4229
    %v4416 = vpack.c.b16 %v4233, %v4230
    %v4417 = vpack.c.b16 %v4234, %v4231
    %v4418 = vpack.c.b16 %v4238, %v4235
    %v4419 = vpack.c.b16 %v4239, %v4236
    %v4420 = vpack.c.b16 %v4240, %v4237
    %v4421 = vpack.c.b16 %v4244, %v4241
    %v4422 = vpack.c.b16 %v4245, %v4242
    %v4423 = vpack.c.b16 %v4246, %v4243
    %v4424 = vpack.c.b16 %v4250, %v4247
    %v4425 = vpack.c.b16 %v4251, %v4248
    %v4426 = vpack.c.b16 %v4252, %v4249
    %v4427 = vpack.c.b16 %v4256, %v4253
    %v4428 = vpack.c.b16 %v4257, %v4254
    %v4429 = vpack.c.b16 %v4258, %v4255
    %v4430 = vpack.c.b16 %v4262, %v4259
    %v4431 = vpack.c.b16 %v4263, %v4260
    %v4432 = vpack.c.b16 %v4264, %v4261
    %v4433 = vpack.c.b16 %v4268, %v4265
    %v4434 = vpack.c.b16 %v4269, %v4266
    %v4435 = vpack.c.b16 %v4270, %v4267
    %v4436 = vpack.c.b16 %v4274, %v4271
    %v4437 = vpack.c.b16 %v4275, %v4272
    %v4438 = vpack.c.b16 %v4276, %v4273
    %v4439 = vpack.c.b16 %v4280, %v4277
    %v4440 = vpack.c.b16 %v4281, %v4278
    %v4441 = vpack.c.b16 %v4282, %v4279
    %v4442 = vpack.c.b16 %v4286, %v4283
    %v4443 = vpack.c.b16 %v4287, %v4284
    %v4444 = vpack.c.b16 %v4288, %v4285
    %v4445 = vpack.c.b16 %v4292, %v4289
    %v4446 = vpack.c.b16 %v4293, %v4290
    %v4447 = vpack.c.b16 %v4294, %v4291
    %v4448 = vpack.c.b16 %v4298, %v4295
    %v4449 = vpack.c.b16 %v4299, %v4296
    %v4450 = vpack.c.b16 %v4300, %v4297
    %v4451 = vpack.c.b16 %v4304, %v4301
    %v4452 = vpack.c.b16 %v4305, %v4302
    %v4453 = vpack.c.b16 %v4306, %v4303
    %v4454 = vpack.c.b16 %v4310, %v4307
    %v4455 = vpack.c.b16 %v4311, %v4308
    %v4456 = vpack.c.b16 %v4312, %v4309
    %v4457 = vpack.c.b16 %v4316, %v4313
    %v4458 = vpack.c.b16 %v4317, %v4314
    %v4459 = vpack.c.b16 %v4318, %v4315
    %v4460 = vpack.c.b16 %v4322, %v4319
    %v4461 = vpack.c.b16 %v4323, %v4320
    %v4462 = vpack.c.b16 %v4324, %v4321
    %v4463 = vpack.c.b16 %v4328, %v4325
    %v4464 = vpack.c.b16 %v4329, %v4326
    %v4465 = vpack.c.b16 %v4330, %v4327
    %v4466 = vpack.c.b16 %v4334, %v4331
    %v4467 = vpack.c.b16 %v4335, %v4332
    %v4468 = vpack.c.b16 %v4336, %v4333
    %v4469 = vpack.c.b16 %v4340, %v4337
    %v4470 = vpack.c.b16 %v4341, %v4338
    %v4471 = vpack.c.b16 %v4342, %v4339
    %v4472 = vpack.c.b16 %v4346, %v4343
    %v4473 = vpack.c.b16 %v4347, %v4344
    %v4474 = vpack.c.b16 %v4348, %v4345
    %v4475 = vpack.c.b16 %v4352, %v4349
    %v4476 = vpack.c.b16 %v4353, %v4350
    %v4477 = vpack.c.b16 %v4354, %v4351
    %v4478 = vpack.c.b16 %v4358, %v4355
    %v4479 = vpack.c.b16 %v4359, %v4356
    %v4480 = vpack.c.b16 %v4360, %v4357
    %v4481 = vpack.c.b16 %v4364, %v4361
    %v4482 = vpack.c.b16 %v4365, %v4362
    %v4483 = vpack.c.b16 %v4366, %v4363
    %v4484 = vpack.c.b16 %v4370, %v4367
    %v4485 = vpack.c.b16 %v4371, %v4368
    %v4486 = vpack.c.b16 %v4372, %v4369
    %v4487 = vpack.c.b16 %v4376, %v4373
    %v4488 = vpack.c.b16 %v4377, %v4374
    %v4489 = vpack.c.b16 %v4378, %v4375
    %v4490 = vpack.c.b16 %v4382, %v4379
    %v4491 = vpack.c.b16 %v4383, %v4380
    %v4492 = vpack.c.b16 %v4384, %v4381
    %v4493 = vpack.c.b16 %v4388, %v4385
    %v4494 = vpack.c.b16 %v4389, %v4386
    %v4495 = vpack.c.b16 %v4390, %v4387
    %v4496 = vpack.c.b16 %v4394, %v4391
    %v4497 = vpack.c.b16 %v4395, %v4392
    %v4498 = vpack.c.b16 %v4396, %v4393
    %v4499 = vpack.c.b16 %v4400, %v4397
    %v4500 = vpack.c.b16 %v4401, %v4398
    %v4501 = vpack.c.b16 %v4402, %v4399
    %v4502 = vpack.c.b16 %v4406, %v4403
    %v4503 = vpack.c.b16 %v4407, %v4404
    %v4504 = vpack.c.b16 %v4408, %v4405
    %4601 = vmatprep.subr.bf16.mxu0 %v4431
    %4602 = vmatpush1.bf16.msra.mxu0 %v4430
    %4603 = vmatprep.subr.bf16.mxu0 %v4428
    %4604 = vmatpush1.bf16.msra.mxu0 %v4427
    %4605 = vmatprep.subr.bf16.mxu0 %v4425
    %4606 = vmatpush1.bf16.msra.mxu0 %v4424
    %4607 = vmatprep.subr.bf16.mxu0 %v4422
    %4608 = vmatpush1.bf16.msra.mxu0 %v4421
    %4609 = vmatprep.subr.bf16.mxu0 %v4419
    %4610 = vmatpush1.bf16.msra.mxu0 %v4418
    %4611 = vmatprep.subr.bf16.mxu0 %v4416
    %4612 = vmatpush1.bf16.msra.mxu0 %v4415
    %4613 = vmatprep.subr.bf16.mxu0 %v4413
    %4614 = vmatpush1.bf16.msra.mxu0 %v4412
    %4615 = vmatprep.subr.bf16.mxu0 %v4410
    %4616 = vmatpush1.bf16.msra.mxu0 %v4409
    %4617 = vmatprep.subr.bf16.mxu0 %v4455
    %4618 = vmatpush2.bf16.msra.mxu0 %v4454
    %4619 = vmatprep.subr.bf16.mxu0 %v4452
    %4620 = vmatpush2.bf16.msra.mxu0 %v4451
    %4621 = vmatprep.subr.bf16.mxu0 %v4449
    %4622 = vmatpush2.bf16.msra.mxu0 %v4448
    %4623 = vmatprep.subr.bf16.mxu0 %v4446
    %4624 = vmatpush2.bf16.msra.mxu0 %v4445
    %4625 = vmatprep.subr.bf16.mxu0 %v4443
    %4626 = vmatpush2.bf16.msra.mxu0 %v4442
    %4627 = vmatprep.subr.bf16.mxu0 %v4440
    %4628 = vmatpush2.bf16.msra.mxu0 %v4439
    %4629 = vmatprep.subr.bf16.mxu0 %v4437
    %4630 = vmatpush2.bf16.msra.mxu0 %v4436
    %4631 = vmatprep.subr.bf16.mxu0 %v4434
    %4632 = vmatpush2.bf16.msra.mxu0 %v4433
    %4633 = vmatprep.mubr.bf16.mxu0 %v3906
    %4634 = vmatmul.mubr.bf16.gmra.mxu0 %v3879
    %v4635 = vpop.f32.mrf.mxu0
    %v4636 = vadd.f32 0.0, %v4635
    %v4637 = vpop.f32.mrf.mxu0
    %v4638 = vadd.f32 0.0, %v4637
    %v4639 = vpop.f32.mrf.mxu0
    %v4640 = vadd.f32 0.0, %v4639
    %v4641 = vpop.f32.mrf.mxu0
    %v4642 = vadd.f32 0.0, %v4641
    %4643 = vdwg.mxu0
    %4644 = vmatprep.subr.bf16.mxu0 %v4479
    %4645 = vmatpush1.bf16.msra.mxu0 %v4478
    %4646 = vmatprep.subr.bf16.mxu0 %v4476
    %4647 = vmatpush1.bf16.msra.mxu0 %v4475
    %4648 = vmatprep.subr.bf16.mxu0 %v4473
    %4649 = vmatpush1.bf16.msra.mxu0 %v4472
    %4650 = vmatprep.subr.bf16.mxu0 %v4470
    %4651 = vmatpush1.bf16.msra.mxu0 %v4469
    %4652 = vmatprep.subr.bf16.mxu0 %v4467
    %4653 = vmatpush1.bf16.msra.mxu0 %v4466
    %4654 = vmatprep.subr.bf16.mxu0 %v4464
    %4655 = vmatpush1.bf16.msra.mxu0 %v4463
    %4656 = vmatprep.subr.bf16.mxu0 %v4461
    %4657 = vmatpush1.bf16.msra.mxu0 %v4460
    %4658 = vmatprep.subr.bf16.mxu0 %v4458
    %4659 = vmatpush1.bf16.msra.mxu0 %v4457
    %4660 = vmatprep.subr.bf16.mxu0 %v4503
    %4661 = vmatpush2.bf16.msra.mxu0 %v4502
    %4662 = vmatprep.subr.bf16.mxu0 %v4500
    %4663 = vmatpush2.bf16.msra.mxu0 %v4499
    %4664 = vmatprep.subr.bf16.mxu0 %v4497
    %4665 = vmatpush2.bf16.msra.mxu0 %v4496
    %4666 = vmatprep.subr.bf16.mxu0 %v4494
    %4667 = vmatpush2.bf16.msra.mxu0 %v4493
    %4668 = vmatprep.subr.bf16.mxu0 %v4491
    %4669 = vmatpush2.bf16.msra.mxu0 %v4490
    %4670 = vmatprep.subr.bf16.mxu0 %v4488
    %4671 = vmatpush2.bf16.msra.mxu0 %v4487
    %4672 = vmatprep.subr.bf16.mxu0 %v4485
    %4673 = vmatpush2.bf16.msra.mxu0 %v4484
    %4674 = vmatprep.subr.bf16.mxu0 %v4482
    %4675 = vmatpush2.bf16.msra.mxu0 %v4481
    %4676 = vmatprep.mubr.bf16.mxu0 %v3960
    %4677 = vmatmul.mubr.bf16.gmra.mxu0 %v3933
    %v4678 = vpop.f32.mrf.mxu0
    %v4679 = vadd.f32 %v4636, %v4678
    %v4680 = vpop.f32.mrf.mxu0
    %v4681 = vadd.f32 %v4638, %v4680
    %v4682 = vpop.f32.mrf.mxu0
    %v4683 = vadd.f32 %v4640, %v4682
    %v4684 = vpop.f32.mrf.mxu0
    %v4685 = vadd.f32 %v4642, %v4684
    %4686 = vdwg.mxu0
    %4687 = vmatprep.subr.bf16.mxu0 0
    %4688 = vmatpush1.bf16.msra.mxu0 %v4432
    %4689 = vmatprep.subr.bf16.mxu0 0
    %4690 = vmatpush1.bf16.msra.mxu0 %v4429
    %4691 = vmatprep.subr.bf16.mxu0 0
    %4692 = vmatpush1.bf16.msra.mxu0 %v4426
    %4693 = vmatprep.subr.bf16.mxu0 0
    %4694 = vmatpush1.bf16.msra.mxu0 %v4423
    %4695 = vmatprep.subr.bf16.mxu0 0
    %4696 = vmatpush1.bf16.msra.mxu0 %v4420
    %4697 = vmatprep.subr.bf16.mxu0 0
    %4698 = vmatpush1.bf16.msra.mxu0 %v4417
    %4699 = vmatprep.subr.bf16.mxu0 0
    %4700 = vmatpush1.bf16.msra.mxu0 %v4414
    %4701 = vmatprep.subr.bf16.mxu0 0
    %4702 = vmatpush1.bf16.msra.mxu0 %v4411
    %4703 = vmatprep.subr.bf16.mxu0 0
    %4704 = vmatpush2.bf16.msra.mxu0 %v4456
    %4705 = vmatprep.subr.bf16.mxu0 0
    %4706 = vmatpush2.bf16.msra.mxu0 %v4453
    %4707 = vmatprep.subr.bf16.mxu0 0
    %4708 = vmatpush2.bf16.msra.mxu0 %v4450
    %4709 = vmatprep.subr.bf16.mxu0 0
    %4710 = vmatpush2.bf16.msra.mxu0 %v4447
    %4711 = vmatprep.subr.bf16.mxu0 0
    %4712 = vmatpush2.bf16.msra.mxu0 %v4444
    %4713 = vmatprep.subr.bf16.mxu0 0
    %4714 = vmatpush2.bf16.msra.mxu0 %v4441
    %4715 = vmatprep.subr.bf16.mxu0 0
    %4716 = vmatpush2.bf16.msra.mxu0 %v4438
    %4717 = vmatprep.subr.bf16.mxu0 0
    %4718 = vmatpush2.bf16.msra.mxu0 %v4435
    %4719 = vmatprep.mubr.bf16.mxu0 %v3906
    %4720 = vmatmul.mubr.bf16.gmra.mxu0 %v3879
    %v4721 = vpop.f32.mrf.mxu0
    %v4722 = vadd.f32 0.0, %v4721
    %v4723 = vpop.f32.mrf.mxu0
    %v4724 = vpop.f32.mrf.mxu0
    %v4725 = vadd.f32 0.0, %v4724
    %v4726 = vpop.f32.mrf.mxu0
    %4727 = vdwg.mxu0
    %4728 = vmatprep.subr.bf16.mxu0 0
    %4729 = vmatpush1.bf16.msra.mxu0 %v4480
    %4730 = vmatprep.subr.bf16.mxu0 0
    %4731 = vmatpush1.bf16.msra.mxu0 %v4477
    %4732 = vmatprep.subr.bf16.mxu0 0
    %4733 = vmatpush1.bf16.msra.mxu0 %v4474
    %4734 = vmatprep.subr.bf16.mxu0 0
    %4735 = vmatpush1.bf16.msra.mxu0 %v4471
    %4736 = vmatprep.subr.bf16.mxu0 0
    %4737 = vmatpush1.bf16.msra.mxu0 %v4468
    %4738 = vmatprep.subr.bf16.mxu0 0
    %4739 = vmatpush1.bf16.msra.mxu0 %v4465
    %4740 = vmatprep.subr.bf16.mxu0 0
    %4741 = vmatpush1.bf16.msra.mxu0 %v4462
    %4742 = vmatprep.subr.bf16.mxu0 0
    %4743 = vmatpush1.bf16.msra.mxu0 %v4459
    %4744 = vmatprep.subr.bf16.mxu0 0
    %4745 = vmatpush2.bf16.msra.mxu0 %v4504
    %4746 = vmatprep.subr.bf16.mxu0 0
    %4747 = vmatpush2.bf16.msra.mxu0 %v4501
    %4748 = vmatprep.subr.bf16.mxu0 0
    %4749 = vmatpush2.bf16.msra.mxu0 %v4498
    %4750 = vmatprep.subr.bf16.mxu0 0
    %4751 = vmatpush2.bf16.msra.mxu0 %v4495
    %4752 = vmatprep.subr.bf16.mxu0 0
    %4753 = vmatpush2.bf16.msra.mxu0 %v4492
    %4754 = vmatprep.subr.bf16.mxu0 0
    %4755 = vmatpush2.bf16.msra.mxu0 %v4489
    %4756 = vmatprep.subr.bf16.mxu0 0
    %4757 = vmatpush2.bf16.msra.mxu0 %v4486
    %4758 = vmatprep.subr.bf16.mxu0 0
    %4759 = vmatpush2.bf16.msra.mxu0 %v4483
    %4760 = vmatprep.mubr.bf16.mxu0 %v3960
    %4761 = vmatmul.mubr.bf16.gmra.mxu0 %v3933
    %v4762 = vpop.f32.mrf.mxu0
    %v4763 = vadd.f32 %v4722, %v4762
    %v4764 = vpop.f32.mrf.mxu0
    %v4765 = vpop.f32.mrf.mxu0
    %v4766 = vadd.f32 %v4725, %v4765
    %v4767 = vpop.f32.mrf.mxu0
    %4768 = vdwg.mxu0
    %vm4769 = vcmask 1040384
    %v4770 = vsel %vm4769, %v4679, 0.0
    %v4771 = vrot.slane %v4679, 1
    %vm4772 = vcmask 1041409
    %v4773 = vsel %vm4772, %v4771, %v4770
    %v4774 = vrot.slane %v4679, 2
    %vm4775 = vcmask 1042434
    %v4776 = vsel %vm4775, %v4774, %v4773
    %v4777 = vrot.slane %v4679, 3
    %vm4778 = vcmask 1043459
    %v4779 = vsel %vm4778, %v4777, %v4776
    %v4780 = vrot.slane %v4683, 4
    %vm4781 = vcmask 1044484
    %v4782 = vsel %vm4781, %v4780, %v4779
    %v4783 = vrot.slane %v4683, 5
    %vm4784 = vcmask 1045509
    %v4785 = vsel %vm4784, %v4783, %v4782
    %v4786 = vrot.slane %v4683, 6
    %vm4787 = vcmask 1046534
    %v4788 = vsel %vm4787, %v4786, %v4785
    %v4789 = vrot.slane %v4683, 7
    %vm4790 = vcmask 1047559
    %v4791 = vsel %vm4790, %v4789, %v4788
    %v4792 = vsel %vm4769, %v4681, 0.0
    %v4793 = vrot.slane %v4681, 1
    %v4794 = vsel %vm4772, %v4793, %v4792
    %v4795 = vrot.slane %v4681, 2
    %v4796 = vsel %vm4775, %v4795, %v4794
    %v4797 = vrot.slane %v4681, 3
    %v4798 = vsel %vm4778, %v4797, %v4796
    %v4799 = vrot.slane %v4685, 4
    %v4800 = vsel %vm4781, %v4799, %v4798
    %v4801 = vrot.slane %v4685, 5
    %v4802 = vsel %vm4784, %v4801, %v4800
    %v4803 = vrot.slane %v4685, 6
    %v4804 = vsel %vm4787, %v4803, %v4802
    %v4805 = vrot.slane %v4685, 7
    %v4806 = vsel %vm4790, %v4805, %v4804
    %v4807 = vsel %vm4769, %v4763, 0.0
    %v4808 = vrot.slane %v4763, 1
    %v4809 = vsel %vm4772, %v4808, %v4807
    %v4810 = vrot.slane %v4763, 2
    %v4811 = vsel %vm4775, %v4810, %v4809
    %v4812 = vrot.slane %v4763, 3
    %v4813 = vsel %vm4778, %v4812, %v4811
    %v4814 = vrot.slane %v4766, 4
    %v4815 = vsel %vm4781, %v4814, %v4813
    %v4816 = vrot.slane %v4766, 5
    %v4817 = vsel %vm4784, %v4816, %v4815
    %v4818 = vrot.slane %v4766, 6
    %v4819 = vsel %vm4787, %v4818, %v4817
    %v4820 = vrot.slane %v4766, 7
    %v4821 = vsel %vm4790, %v4820, %v4819
    %v4822 = vsel %vm4769, %v4771, 0.0
    %v4823 = vsel %vm4772, %v4774, %v4822
    %v4824 = vsel %vm4775, %v4777, %v4823
    %v4825 = vrot.slane %v4679, 4
    %v4826 = vsel %vm4778, %v4825, %v4824
    %v4827 = vsel %vm4781, %v4783, %v4826
    %v4828 = vsel %vm4784, %v4786, %v4827
    %v4829 = vsel %vm4787, %v4789, %v4828
    %v4830 = vsel %vm4790, %v4683, %v4829
    %v4831 = vsel %vm4769, %v4793, 0.0
    %v4832 = vsel %vm4772, %v4795, %v4831
    %v4833 = vsel %vm4775, %v4797, %v4832
    %v4834 = vrot.slane %v4681, 4
    %v4835 = vsel %vm4778, %v4834, %v4833
    %v4836 = vsel %vm4781, %v4801, %v4835
    %v4837 = vsel %vm4784, %v4803, %v4836
    %v4838 = vsel %vm4787, %v4805, %v4837
    %v4839 = vsel %vm4790, %v4685, %v4838
    %v4840 = vsel %vm4769, %v4808, 0.0
    %v4841 = vsel %vm4772, %v4810, %v4840
    %v4842 = vsel %vm4775, %v4812, %v4841
    %v4843 = vrot.slane %v4763, 4
    %v4844 = vsel %vm4778, %v4843, %v4842
    %v4845 = vsel %vm4781, %v4816, %v4844
    %v4846 = vsel %vm4784, %v4818, %v4845
    %v4847 = vsel %vm4787, %v4820, %v4846
    %v4848 = vsel %vm4790, %v4766, %v4847
    %v4849 = vpack.c.bf16 %v4791, %v4791
    %v4850 = vpack.c.bf16 %v4806, %v4806
    %v4851 = vpack.c.bf16 %v4821, %v4821
    %v4852 = vpack.c.bf16 %v4830, %v4830
    %v4853 = vpack.c.bf16 %v4839, %v4839
    %v4854 = vpack.c.bf16 %v4848, %v4848
    %v4861 = vunpack.c.l.b16 %v4849
    %v4862 = vunpack.c.l.b16 %v4850
    %v4863 = vunpack.c.l.b16 %v4851
    %v4864 = vunpack.c.l.b16 %v4852
    %v4865 = vunpack.c.l.b16 %v4853
    %v4866 = vunpack.c.l.b16 %v4854
    %v4867 = vpack.c.b16 %v4862, %v4861
    %v4868 = vpack.c.b16 %v4864, %v4863
    %v4869 = vpack.c.b16 %v4866, %v4865
    %4873 = vst [vmem:[#allocation4 + $0x4] sm:$0xff] %v4867
    %4874 = vst [vmem:[#allocation4 + $0xc] sm:$0xff] %v4868
    %4875 = vst [vmem:[#allocation4 + $0x14] sm:$0xff] %v4869
    %v4876 = vld [vmem:[#allocation4] sm:$0xff]
    %v4877 = vld [vmem:[#allocation4 + $0x8] sm:$0xff]
    %v4878 = vld [vmem:[#allocation4 + $0x10] sm:$0xff]
    %v4879 = vld [vmem:[#allocation4 + $0x18] sm:$0xf]
    %v4880 = vld [vmem:[#allocation4 + $0x4] sm:$0xff]
    %v4881 = vld [vmem:[#allocation4 + $0xc] sm:$0xff]
    %v4882 = vld [vmem:[#allocation4 + $0x14] sm:$0xff]
    %v4883 = vld [vmem:[#allocation4 + $0x4] sm:$0xff]
    %v4884 = vld [vmem:[#allocation4 + $0xc] sm:$0xff]
    %v4885 = vld [vmem:[#allocation4 + $0x14] sm:$0xff]
    %v4886 = vld [vmem:[#allocation4 + $0x1c] sm:$0xf]
    %v4891 = vunpack.c.l.b16 %v4876
    %v4892 = vunpack.c.h.b16 %v4876
    %v4893 = vunpack.c.l.b16 %v4877
    %v4894 = vunpack.c.h.b16 %v4877
    %v4895 = vunpack.c.l.b16 %v4878
    %v4896 = vunpack.c.h.b16 %v4878
    %v4897 = vunpack.c.l.b16 %v4879
    %v4898 = vpack.c.b16 %v4891, %v4891
    %v4899 = vpack.c.b16 %v4892, %v4892
    %v4900 = vpack.c.b16 %v4893, %v4893
    %v4901 = vpack.c.b16 %v4894, %v4894
    %v4902 = vpack.c.b16 %v4895, %v4895
    %v4903 = vpack.c.b16 %v4896, %v4896
    %v4904 = vpack.c.b16 %v4897, %v4897
    %4905 = vrot.lane.b32.xlu0 %v4898, 127
    %v4906 = vpop.permute.xlu0 %4905
    %4907 = vrot.lane.b32.xlu0 %v4899, 127
    %v4908 = vpop.permute.xlu0 %4907
    %4909 = vrot.lane.b32.xlu0 %v4900, 127
    %v4910 = vpop.permute.xlu0 %4909
    %4911 = vrot.lane.b32.xlu0 %v4901, 127
    %v4912 = vpop.permute.xlu0 %4911
    %4913 = vrot.lane.b32.xlu0 %v4902, 127
    %v4914 = vpop.permute.xlu0 %4913
    %4915 = vrot.lane.b32.xlu0 %v4903, 127
    %v4916 = vpop.permute.xlu0 %4915
    %4917 = vrot.lane.b32.xlu0 %v4904, 127
    %v4918 = vpop.permute.xlu0 %4917
    %v4919 = vsel %vm2142, %v4906, %v4908
    %v4920 = vsel %vm2142, %v4908, %v4910
    %v4921 = vsel %vm2142, %v4910, %v4912
    %v4922 = vsel %vm2142, %v4912, %v4914
    %v4923 = vsel %vm2142, %v4914, %v4916
    %v4924 = vsel %vm2142, %v4916, %v4918
    %4925 = vrot.lane.b32.xlu0 %v4898, 126
    %v4926 = vpop.permute.xlu0 %4925
    %4927 = vrot.lane.b32.xlu0 %v4899, 126
    %v4928 = vpop.permute.xlu0 %4927
    %4929 = vrot.lane.b32.xlu0 %v4900, 126
    %v4930 = vpop.permute.xlu0 %4929
    %4931 = vrot.lane.b32.xlu0 %v4901, 126
    %v4932 = vpop.permute.xlu0 %4931
    %4933 = vrot.lane.b32.xlu0 %v4902, 126
    %v4934 = vpop.permute.xlu0 %4933
    %4935 = vrot.lane.b32.xlu0 %v4903, 126
    %v4936 = vpop.permute.xlu0 %4935
    %4937 = vrot.lane.b32.xlu0 %v4904, 126
    %v4938 = vpop.permute.xlu0 %4937
    %v4939 = vsel %vm2159, %v4926, %v4928
    %v4940 = vsel %vm2159, %v4928, %v4930
    %v4941 = vsel %vm2159, %v4930, %v4932
    %v4942 = vsel %vm2159, %v4932, %v4934
    %v4943 = vsel %vm2159, %v4934, %v4936
    %v4944 = vsel %vm2159, %v4936, %v4938
    %4945 = vrot.lane.b32.xlu0 %v4898, 110
    %v4946 = vpop.permute.xlu0 %4945
    %4947 = vrot.lane.b32.xlu0 %v4899, 110
    %v4948 = vpop.permute.xlu0 %4947
    %4949 = vrot.lane.b32.xlu0 %v4900, 110
    %v4950 = vpop.permute.xlu0 %4949
    %4951 = vrot.lane.b32.xlu0 %v4901, 110
    %v4952 = vpop.permute.xlu0 %4951
    %4953 = vrot.lane.b32.xlu0 %v4902, 110
    %v4954 = vpop.permute.xlu0 %4953
    %4955 = vrot.lane.b32.xlu0 %v4903, 110
    %v4956 = vpop.permute.xlu0 %4955
    %4957 = vrot.lane.b32.xlu0 %v4904, 110
    %v4958 = vpop.permute.xlu0 %4957
    %vm4959 = vcmask 900096
    %v4960 = vsel %vm4959, %v4946, %v4948
    %v4961 = vsel %vm4959, %v4948, %v4950
    %v4962 = vsel %vm4959, %v4950, %v4952
    %v4963 = vsel %vm4959, %v4952, %v4954
    %v4964 = vsel %vm4959, %v4954, %v4956
    %v4965 = vsel %vm4959, %v4956, %v4958
    %v4969 = vunpack.c.l.b16 %v4880
    %v4970 = vunpack.c.h.b16 %v4880
    %v4971 = vunpack.c.l.b16 %v4881
    %v4972 = vunpack.c.h.b16 %v4881
    %v4973 = vunpack.c.l.b16 %v4882
    %v4974 = vunpack.c.h.b16 %v4882
    %v4975 = vpack.c.b16 %v4969, %v4969
    %v4976 = vpack.c.b16 %v4970, %v4970
    %v4977 = vpack.c.b16 %v4971, %v4971
    %v4978 = vpack.c.b16 %v4972, %v4972
    %v4979 = vpack.c.b16 %v4973, %v4973
    %v4980 = vpack.c.b16 %v4974, %v4974
    %4981 = vrot.lane.b32.xlu0 %v4975, 109
    %v4982 = vpop.permute.xlu0 %4981
    %4983 = vrot.lane.b32.xlu0 %v4976, 109
    %v4984 = vpop.permute.xlu0 %4983
    %4985 = vrot.lane.b32.xlu0 %v4977, 109
    %v4986 = vpop.permute.xlu0 %4985
    %4987 = vrot.lane.b32.xlu0 %v4978, 109
    %v4988 = vpop.permute.xlu0 %4987
    %4989 = vrot.lane.b32.xlu0 %v4979, 109
    %v4990 = vpop.permute.xlu0 %4989
    %4991 = vrot.lane.b32.xlu0 %v4980, 109
    %v4992 = vpop.permute.xlu0 %4991
    %vm4993 = vcmask 891904
    %v4994 = vsel %vm4993, %v4982, %v4984
    %v4995 = vsel %vm4993, %v4984, %v4986
    %v4996 = vsel %vm4993, %v4986, %v4988
    %v4997 = vsel %vm4993, %v4988, %v4990
    %v4998 = vsel %vm4993, %v4990, %v4992
    %v5003 = vunpack.c.l.b16 %v4883
    %v5004 = vunpack.c.h.b16 %v4883
    %v5005 = vunpack.c.l.b16 %v4884
    %v5006 = vunpack.c.h.b16 %v4884
    %v5007 = vunpack.c.l.b16 %v4885
    %v5008 = vunpack.c.h.b16 %v4885
    %v5009 = vunpack.c.l.b16 %v4886
    %v5010 = vpack.c.b16 %v5003, %v5003
    %v5011 = vpack.c.b16 %v5004, %v5004
    %v5012 = vpack.c.b16 %v5005, %v5005
    %v5013 = vpack.c.b16 %v5006, %v5006
    %v5014 = vpack.c.b16 %v5007, %v5007
    %v5015 = vpack.c.b16 %v5008, %v5008
    %v5016 = vpack.c.b16 %v5009, %v5009
    %5017 = vrot.lane.b32.xlu0 %v5010, 108
    %v5018 = vpop.permute.xlu0 %5017
    %5019 = vrot.lane.b32.xlu0 %v5011, 108
    %v5020 = vpop.permute.xlu0 %5019
    %5021 = vrot.lane.b32.xlu0 %v5012, 108
    %v5022 = vpop.permute.xlu0 %5021
    %5023 = vrot.lane.b32.xlu0 %v5013, 108
    %v5024 = vpop.permute.xlu0 %5023
    %5025 = vrot.lane.b32.xlu0 %v5014, 108
    %v5026 = vpop.permute.xlu0 %5025
    %5027 = vrot.lane.b32.xlu0 %v5015, 108
    %v5028 = vpop.permute.xlu0 %5027
    %5029 = vrot.lane.b32.xlu0 %v5016, 108
    %v5030 = vpop.permute.xlu0 %5029
    %v5031 = vsel %vm3579, %v5018, %v5020
    %v5032 = vsel %vm3579, %v5020, %v5022
    %v5033 = vsel %vm3579, %v5022, %v5024
    %v5034 = vsel %vm3579, %v5024, %v5026
    %v5035 = vsel %vm3579, %v5026, %v5028
    %v5036 = vsel %vm3579, %v5028, %v5030
    %5037 = vrot.lane.b32.xlu0 %v5010, 92
    %v5038 = vpop.permute.xlu0 %5037
    %5039 = vrot.lane.b32.xlu0 %v5011, 92
    %v5040 = vpop.permute.xlu0 %5039
    %5041 = vrot.lane.b32.xlu0 %v5012, 92
    %v5042 = vpop.permute.xlu0 %5041
    %5043 = vrot.lane.b32.xlu0 %v5013, 92
    %v5044 = vpop.permute.xlu0 %5043
    %5045 = vrot.lane.b32.xlu0 %v5014, 92
    %v5046 = vpop.permute.xlu0 %5045
    %5047 = vrot.lane.b32.xlu0 %v5015, 92
    %v5048 = vpop.permute.xlu0 %5047
    %5049 = vrot.lane.b32.xlu0 %v5016, 92
    %v5050 = vpop.permute.xlu0 %5049
    %vm5051 = vcmask 752640
    %v5052 = vsel %vm5051, %v5038, %v5040
    %v5053 = vsel %vm5051, %v5040, %v5042
    %v5054 = vsel %vm5051, %v5042, %v5044
    %v5055 = vsel %vm5051, %v5044, %v5046
    %v5056 = vsel %vm5051, %v5046, %v5048
    %v5057 = vsel %vm5051, %v5048, %v5050
    %5058 = vrot.lane.b32.xlu0 %v5010, 91
    %v5059 = vpop.permute.xlu0 %5058
    %5060 = vrot.lane.b32.xlu0 %v5011, 91
    %v5061 = vpop.permute.xlu0 %5060
    %5062 = vrot.lane.b32.xlu0 %v5012, 91
    %v5063 = vpop.permute.xlu0 %5062
    %5064 = vrot.lane.b32.xlu0 %v5013, 91
    %v5065 = vpop.permute.xlu0 %5064
    %5066 = vrot.lane.b32.xlu0 %v5014, 91
    %v5067 = vpop.permute.xlu0 %5066
    %5068 = vrot.lane.b32.xlu0 %v5015, 91
    %v5069 = vpop.permute.xlu0 %5068
    %5070 = vrot.lane.b32.xlu0 %v5016, 91
    %v5071 = vpop.permute.xlu0 %5070
    %vm5072 = vcmask 744448
    %v5073 = vsel %vm5072, %v5059, %v5061
    %v5074 = vsel %vm5072, %v5061, %v5063
    %v5075 = vsel %vm5072, %v5063, %v5065
    %v5076 = vsel %vm5072, %v5065, %v5067
    %v5077 = vsel %vm5072, %v5067, %v5069
    %v5078 = vsel %vm5072, %v5069, %v5071
    %5079 = vrot.lane.b32.xlu0 %v5010, 90
    %v5080 = vpop.permute.xlu0 %5079
    %5081 = vrot.lane.b32.xlu0 %v5011, 90
    %v5082 = vpop.permute.xlu0 %5081
    %5083 = vrot.lane.b32.xlu0 %v5012, 90
    %v5084 = vpop.permute.xlu0 %5083
    %5085 = vrot.lane.b32.xlu0 %v5013, 90
    %v5086 = vpop.permute.xlu0 %5085
    %5087 = vrot.lane.b32.xlu0 %v5014, 90
    %v5088 = vpop.permute.xlu0 %5087
    %5089 = vrot.lane.b32.xlu0 %v5015, 90
    %v5090 = vpop.permute.xlu0 %5089
    %5091 = vrot.lane.b32.xlu0 %v5016, 90
    %v5092 = vpop.permute.xlu0 %5091
    %vm5093 = vcmask 736256
    %v5094 = vsel %vm5093, %v5080, %v5082
    %v5095 = vsel %vm5093, %v5082, %v5084
    %v5096 = vsel %vm5093, %v5084, %v5086
    %v5097 = vsel %vm5093, %v5086, %v5088
    %v5098 = vsel %vm5093, %v5088, %v5090
    %v5099 = vsel %vm5093, %v5090, %v5092
    %vm5100 = vcmask 1043456
    %v5103 = vsel %vm5100, %v4898, %v4919
    %v5106 = vsel %vm5100, %v4899, %v4920
    %v5109 = vsel %vm5100, %v4900, %v4921
    %v5112 = vsel %vm5100, %v4901, %v4922
    %v5115 = vsel %vm5100, %v4902, %v4923
    %v5118 = vsel %vm5100, %v4903, %v4924
    %v5121 = vsel %vm5100, %v4904, %v4918
    %v5124 = vsel %vm5100, %v4939, %v4960
    %v5127 = vsel %vm5100, %v4940, %v4961
    %v5130 = vsel %vm5100, %v4941, %v4962
    %v5133 = vsel %vm5100, %v4942, %v4963
    %v5136 = vsel %vm5100, %v4943, %v4964
    %v5139 = vsel %vm5100, %v4944, %v4965
    %v5142 = vsel %vm5100, %v4938, %v4958
    %v5145 = vsel %vm5100, %v4982, %v5018
    %v5148 = vsel %vm5100, %v4994, %v5031
    %v5151 = vsel %vm5100, %v4995, %v5032
    %v5154 = vsel %vm5100, %v4996, %v5033
    %v5157 = vsel %vm5100, %v4997, %v5034
    %v5160 = vsel %vm5100, %v4998, %v5035
    %v5163 = vsel %vm5100, %v4992, %v5036
    %v5166 = vsel %vm5100, %v5038, %v5059
    %v5169 = vsel %vm5100, %v5052, %v5073
    %v5172 = vsel %vm5100, %v5053, %v5074
    %v5175 = vsel %vm5100, %v5054, %v5075
    %v5178 = vsel %vm5100, %v5055, %v5076
    %v5181 = vsel %vm5100, %v5056, %v5077
    %v5184 = vsel %vm5100, %v5057, %v5078
    %v5185 = vld [vmem:[#allocation16] sm:$0xf]
    %v5186 = vld [vmem:[#allocation16 + $0x4] sm:$0x3]
    %v5189 = vunpack.c.l.b16 %v5185
    %v5190 = vunpack.c.l.b16 %v5186
    %v5191 = vpack.c.b16 %v5190, %v5189
    %5220 = vrot.lane.b32.xlu0 %v5103, 19
    %v5221 = vpop.permute.xlu0 %5220
    %5222 = vrot.lane.b32.xlu0 %v5106, 19
    %v5223 = vpop.permute.xlu0 %5222
    %5224 = vrot.lane.b32.xlu0 %v5109, 19
    %v5225 = vpop.permute.xlu0 %5224
    %5226 = vrot.lane.b32.xlu0 %v5112, 19
    %v5227 = vpop.permute.xlu0 %5226
    %5228 = vrot.lane.b32.xlu0 %v5115, 19
    %v5229 = vpop.permute.xlu0 %5228
    %5230 = vrot.lane.b32.xlu0 %v5118, 19
    %v5231 = vpop.permute.xlu0 %5230
    %5232 = vrot.lane.b32.xlu0 %v5121, 19
    %v5233 = vpop.permute.xlu0 %5232
    %5234 = vrot.lane.b32.xlu0 %v5124, 19
    %v5235 = vpop.permute.xlu0 %5234
    %5236 = vrot.lane.b32.xlu0 %v5127, 19
    %v5237 = vpop.permute.xlu0 %5236
    %5238 = vrot.lane.b32.xlu0 %v5130, 19
    %v5239 = vpop.permute.xlu0 %5238
    %5240 = vrot.lane.b32.xlu0 %v5133, 19
    %v5241 = vpop.permute.xlu0 %5240
    %5242 = vrot.lane.b32.xlu0 %v5136, 19
    %v5243 = vpop.permute.xlu0 %5242
    %5244 = vrot.lane.b32.xlu0 %v5139, 19
    %v5245 = vpop.permute.xlu0 %5244
    %5246 = vrot.lane.b32.xlu0 %v5142, 19
    %v5247 = vpop.permute.xlu0 %5246
    %5248 = vrot.lane.b32.xlu0 %v5145, 19
    %v5249 = vpop.permute.xlu0 %5248
    %5250 = vrot.lane.b32.xlu0 %v5148, 19
    %v5251 = vpop.permute.xlu0 %5250
    %5252 = vrot.lane.b32.xlu0 %v5151, 19
    %v5253 = vpop.permute.xlu0 %5252
    %5254 = vrot.lane.b32.xlu0 %v5154, 19
    %v5255 = vpop.permute.xlu0 %5254
    %5256 = vrot.lane.b32.xlu0 %v5157, 19
    %v5257 = vpop.permute.xlu0 %5256
    %5258 = vrot.lane.b32.xlu0 %v5160, 19
    %v5259 = vpop.permute.xlu0 %5258
    %5260 = vrot.lane.b32.xlu0 %v5163, 19
    %v5261 = vpop.permute.xlu0 %5260
    %5262 = vrot.lane.b32.xlu0 %v5166, 19
    %v5263 = vpop.permute.xlu0 %5262
    %5264 = vrot.lane.b32.xlu0 %v5169, 19
    %v5265 = vpop.permute.xlu0 %5264
    %5266 = vrot.lane.b32.xlu0 %v5172, 19
    %v5267 = vpop.permute.xlu0 %5266
    %5268 = vrot.lane.b32.xlu0 %v5175, 19
    %v5269 = vpop.permute.xlu0 %5268
    %5270 = vrot.lane.b32.xlu0 %v5178, 19
    %v5271 = vpop.permute.xlu0 %5270
    %5272 = vrot.lane.b32.xlu0 %v5181, 19
    %v5273 = vpop.permute.xlu0 %5272
    %5274 = vrot.lane.b32.xlu0 %v5184, 19
    %v5275 = vpop.permute.xlu0 %5274
    %5276 = vrot.lane.b32.xlu0 %v5080, 19
    %v5277 = vpop.permute.xlu0 %5276
    %5278 = vrot.lane.b32.xlu0 %v5094, 19
    %v5279 = vpop.permute.xlu0 %5278
    %5280 = vrot.lane.b32.xlu0 %v5095, 19
    %v5281 = vpop.permute.xlu0 %5280
    %5282 = vrot.lane.b32.xlu0 %v5096, 19
    %v5283 = vpop.permute.xlu0 %5282
    %5284 = vrot.lane.b32.xlu0 %v5097, 19
    %v5285 = vpop.permute.xlu0 %5284
    %5286 = vrot.lane.b32.xlu0 %v5098, 19
    %v5287 = vpop.permute.xlu0 %5286
    %5288 = vrot.lane.b32.xlu0 %v5099, 19
    %v5289 = vpop.permute.xlu0 %5288
    %vm5290 = vcmask 154624
    %v5291 = vsel %vm5290, %v5221, %v5223
    %v5292 = vsel %vm5290, %v5223, %v5225
    %v5293 = vsel %vm5290, %v5225, %v5227
    %v5294 = vsel %vm5290, %v5227, %v5229
    %v5295 = vsel %vm5290, %v5229, %v5231
    %v5296 = vsel %vm5290, %v5231, %v5233
    %v5297 = vsel %vm5290, %v5235, %v5237
    %v5298 = vsel %vm5290, %v5237, %v5239
    %v5299 = vsel %vm5290, %v5239, %v5241
    %v5300 = vsel %vm5290, %v5241, %v5243
    %v5301 = vsel %vm5290, %v5243, %v5245
    %v5302 = vsel %vm5290, %v5245, %v5247
    %v5303 = vsel %vm5290, %v5249, %v5251
    %v5304 = vsel %vm5290, %v5251, %v5253
    %v5305 = vsel %vm5290, %v5253, %v5255
    %v5306 = vsel %vm5290, %v5255, %v5257
    %v5307 = vsel %vm5290, %v5257, %v5259
    %v5308 = vsel %vm5290, %v5259, %v5261
    %v5309 = vsel %vm5290, %v5263, %v5265
    %v5310 = vsel %vm5290, %v5265, %v5267
    %v5311 = vsel %vm5290, %v5267, %v5269
    %v5312 = vsel %vm5290, %v5269, %v5271
    %v5313 = vsel %vm5290, %v5271, %v5273
    %v5314 = vsel %vm5290, %v5273, %v5275
    %v5315 = vsel %vm5290, %v5277, %v5279
    %v5316 = vsel %vm5290, %v5279, %v5281
    %v5317 = vsel %vm5290, %v5281, %v5283
    %v5318 = vsel %vm5290, %v5283, %v5285
    %v5319 = vsel %vm5290, %v5285, %v5287
    %v5320 = vsel %vm5290, %v5287, %v5289
    %vm5345 = vcmask 588800
    %v5347 = vsel %vm5345, %v5191, 0
    %v5350 = vsel %vm5100, %v5315, 0
    %v5353 = vsel %vm5100, %v5316, 0
    %v5356 = vsel %vm5100, %v5317, 0
    %v5359 = vsel %vm5100, %v5318, 0
    %v5362 = vsel %vm5100, %v5319, 0
    %v5365 = vsel %vm5100, %v5320, 0
    %5367 = vmatprep.subr.bf16.mxu0 0
    %5368 = vmatpush1.bf16.msra.mxu0 0
    %5369 = vmatprep.subr.bf16.mxu0 0
    %5370 = vmatpush1.bf16.msra.mxu0 0
    %5371 = vmatprep.subr.bf16.mxu0 0
    %5372 = vmatpush1.bf16.msra.mxu0 0
    %5373 = vmatprep.subr.bf16.mxu0 %v5353
    %5374 = vmatpush1.bf16.msra.mxu0 %v5350
    %5375 = vmatprep.subr.bf16.mxu0 %v5310
    %5376 = vmatpush1.bf16.msra.mxu0 %v5309
    %5377 = vmatprep.subr.bf16.mxu0 %v5304
    %5378 = vmatpush1.bf16.msra.mxu0 %v5303
    %5379 = vmatprep.subr.bf16.mxu0 %v5298
    %5380 = vmatpush1.bf16.msra.mxu0 %v5297
    %5381 = vmatprep.subr.bf16.mxu0 %v5292
    %5382 = vmatpush1.bf16.msra.mxu0 %v5291
    %5383 = vmatprep.subr.bf16.mxu0 0
    %5384 = vmatpush2.bf16.msra.mxu0 0
    %5385 = vmatprep.subr.bf16.mxu0 0
    %5386 = vmatpush2.bf16.msra.mxu0 0
    %5387 = vmatprep.subr.bf16.mxu0 0
    %5388 = vmatpush2.bf16.msra.mxu0 0
    %5389 = vmatprep.subr.bf16.mxu0 0
    %5390 = vmatpush2.bf16.msra.mxu0 0
    %5391 = vmatprep.subr.bf16.mxu0 0
    %5392 = vmatpush2.bf16.msra.mxu0 0
    %5393 = vmatprep.subr.bf16.mxu0 0
    %5394 = vmatpush2.bf16.msra.mxu0 0
    %5395 = vmatprep.subr.bf16.mxu0 0
    %5396 = vmatpush2.bf16.msra.mxu0 0
    %5397 = vmatprep.subr.bf16.mxu0 0
    %5398 = vmatpush2.bf16.msra.mxu0 0
    %5399 = vmatprep.mubr.bf16.mxu0 0
    %5400 = vmatmul.mubr.bf16.gmra.mxu0 %v5347
    %v5401 = vpop.f32.mrf.mxu0
    %v5402 = vadd.f32 0.0, %v5401
    %v5403 = vpop.f32.mrf.mxu0
    %v5404 = vadd.f32 0.0, %v5403
    %v5405 = vpop.f32.mrf.mxu0
    %v5406 = vadd.f32 0.0, %v5405
    %v5407 = vpop.f32.mrf.mxu0
    %v5408 = vadd.f32 0.0, %v5407
    %5409 = vdwg.mxu0
    %5410 = vmatprep.subr.bf16.mxu0 0
    %5411 = vmatpush1.bf16.msra.mxu0 0
    %5412 = vmatprep.subr.bf16.mxu0 0
    %5413 = vmatpush1.bf16.msra.mxu0 0
    %5414 = vmatprep.subr.bf16.mxu0 0
    %5415 = vmatpush1.bf16.msra.mxu0 0
    %5416 = vmatprep.subr.bf16.mxu0 %v5359
    %5417 = vmatpush1.bf16.msra.mxu0 %v5356
    %5418 = vmatprep.subr.bf16.mxu0 %v5312
    %5419 = vmatpush1.bf16.msra.mxu0 %v5311
    %5420 = vmatprep.subr.bf16.mxu0 %v5306
    %5421 = vmatpush1.bf16.msra.mxu0 %v5305
    %5422 = vmatprep.subr.bf16.mxu0 %v5300
    %5423 = vmatpush1.bf16.msra.mxu0 %v5299
    %5424 = vmatprep.subr.bf16.mxu0 %v5294
    %5425 = vmatpush1.bf16.msra.mxu0 %v5293
    %5426 = vmatprep.subr.bf16.mxu0 0
    %5427 = vmatpush2.bf16.msra.mxu0 0
    %5428 = vmatprep.subr.bf16.mxu0 0
    %5429 = vmatpush2.bf16.msra.mxu0 0
    %5430 = vmatprep.subr.bf16.mxu0 0
    %5431 = vmatpush2.bf16.msra.mxu0 0
    %5432 = vmatprep.subr.bf16.mxu0 0
    %5433 = vmatpush2.bf16.msra.mxu0 0
    %5434 = vmatprep.subr.bf16.mxu0 0
    %5435 = vmatpush2.bf16.msra.mxu0 0
    %5436 = vmatprep.subr.bf16.mxu0 0
    %5437 = vmatpush2.bf16.msra.mxu0 0
    %5438 = vmatprep.subr.bf16.mxu0 0
    %5439 = vmatpush2.bf16.msra.mxu0 0
    %5440 = vmatprep.subr.bf16.mxu0 0
    %5441 = vmatpush2.bf16.msra.mxu0 0
    %5442 = vmatprep.mubr.bf16.mxu0 0
    %5443 = vmatmul.mubr.bf16.gmra.mxu0 %v5347
    %v5444 = vpop.f32.mrf.mxu0
    %v5445 = vadd.f32 0.0, %v5444
    %v5446 = vpop.f32.mrf.mxu0
    %v5447 = vadd.f32 0.0, %v5446
    %v5448 = vpop.f32.mrf.mxu0
    %v5449 = vadd.f32 0.0, %v5448
    %v5450 = vpop.f32.mrf.mxu0
    %v5451 = vadd.f32 0.0, %v5450
    %5452 = vdwg.mxu0
    %5453 = vmatprep.subr.bf16.mxu0 0
    %5454 = vmatpush1.bf16.msra.mxu0 0
    %5455 = vmatprep.subr.bf16.mxu0 0
    %5456 = vmatpush1.bf16.msra.mxu0 0
    %5457 = vmatprep.subr.bf16.mxu0 0
    %5458 = vmatpush1.bf16.msra.mxu0 0
    %5459 = vmatprep.subr.bf16.mxu0 %v5365
    %5460 = vmatpush1.bf16.msra.mxu0 %v5362
    %5461 = vmatprep.subr.bf16.mxu0 %v5314
    %5462 = vmatpush1.bf16.msra.mxu0 %v5313
    %5463 = vmatprep.subr.bf16.mxu0 %v5308
    %5464 = vmatpush1.bf16.msra.mxu0 %v5307
    %5465 = vmatprep.subr.bf16.mxu0 %v5302
    %5466 = vmatpush1.bf16.msra.mxu0 %v5301
    %5467 = vmatprep.subr.bf16.mxu0 %v5296
    %5468 = vmatpush1.bf16.msra.mxu0 %v5295
    %5469 = vmatprep.subr.bf16.mxu0 0
    %5470 = vmatpush2.bf16.msra.mxu0 0
    %5471 = vmatprep.subr.bf16.mxu0 0
    %5472 = vmatpush2.bf16.msra.mxu0 0
    %5473 = vmatprep.subr.bf16.mxu0 0
    %5474 = vmatpush2.bf16.msra.mxu0 0
    %5475 = vmatprep.subr.bf16.mxu0 0
    %5476 = vmatpush2.bf16.msra.mxu0 0
    %5477 = vmatprep.subr.bf16.mxu0 0
    %5478 = vmatpush2.bf16.msra.mxu0 0
    %5479 = vmatprep.subr.bf16.mxu0 0
    %5480 = vmatpush2.bf16.msra.mxu0 0
    %5481 = vmatprep.subr.bf16.mxu0 0
    %5482 = vmatpush2.bf16.msra.mxu0 0
    %5483 = vmatprep.subr.bf16.mxu0 0
    %5484 = vmatpush2.bf16.msra.mxu0 0
    %5485 = vmatprep.mubr.bf16.mxu0 0
    %5486 = vmatmul.mubr.bf16.gmra.mxu0 %v5347
    %v5487 = vpop.f32.mrf.mxu0
    %v5488 = vadd.f32 0.0, %v5487
    %v5489 = vpop.f32.mrf.mxu0
    %v5490 = vadd.f32 0.0, %v5489
    %v5491 = vpop.f32.mrf.mxu0
    %v5492 = vadd.f32 0.0, %v5491
    %v5493 = vpop.f32.mrf.mxu0
    %v5494 = vadd.f32 0.0, %v5493
    %5495 = vdwg.mxu0
    %v5496 = vld [vmem:[%s16] sm:$0x7]
    %5498 = vset.pattern.permute.xlu0 0
    %5499 = vperm.xlu0 %5498, %v5496
    %v5500 = vpop.permute.xlu0 %5499
    %v5502 = vadd.f32 %v5402, %v5500
    %v5503 = vadd.f32 %v5404, %v5500
    %v5504 = vadd.f32 %v5445, %v5500
    %v5505 = vadd.f32 %v5447, %v5500
    %v5506 = vadd.f32 %v5488, %v5500
    %v5507 = vadd.f32 %v5490, %v5500
    %v5508 = vsel %vm4769, %v5502, 0.0
    %v5509 = vrot.slane %v5505, 7
    %v5510 = vsel %vm4772, %v5509, %v5508
    %v5511 = vrot.slane %v5502, 7
    %v5512 = vsel %vm4775, %v5511, %v5510
    %v5513 = vrot.slane %v5505, 6
    %v5514 = vsel %vm4778, %v5513, %v5512
    %v5515 = vrot.slane %v5502, 6
    %v5516 = vsel %vm4781, %v5515, %v5514
    %v5517 = vrot.slane %v5505, 5
    %v5518 = vsel %vm4784, %v5517, %v5516
    %v5519 = vsel %vm4769, %v5503, 0.0
    %v5520 = vrot.slane %v5506, 7
    %v5521 = vsel %vm4772, %v5520, %v5519
    %v5522 = vrot.slane %v5503, 7
    %v5523 = vsel %vm4775, %v5522, %v5521
    %v5524 = vrot.slane %v5506, 6
    %v5525 = vsel %vm4778, %v5524, %v5523
    %v5526 = vrot.slane %v5503, 6
    %v5527 = vsel %vm4781, %v5526, %v5525
    %v5528 = vrot.slane %v5506, 5
    %v5529 = vsel %vm4784, %v5528, %v5527
    %v5530 = vsel %vm4769, %v5504, 0.0
    %v5531 = vrot.slane %v5507, 7
    %v5532 = vsel %vm4772, %v5531, %v5530
    %v5533 = vrot.slane %v5504, 7
    %v5534 = vsel %vm4775, %v5533, %v5532
    %v5535 = vrot.slane %v5507, 6
    %v5536 = vsel %vm4778, %v5535, %v5534
    %v5537 = vrot.slane %v5504, 6
    %v5538 = vsel %vm4781, %v5537, %v5536
    %v5539 = vrot.slane %v5507, 5
    %v5540 = vsel %vm4784, %v5539, %v5538
    %v5541 = vpack.c.bf16 %v5518, %v5518
    %v5542 = vpack.c.bf16 %v5529, %v5529
    %v5543 = vpack.c.bf16 %v5540, %v5540
    %v5544 = vrot.slane %v5500, 5
    %v5546 = vadd.f32 %v5402, %v5544
    %v5547 = vadd.f32 %v5404, %v5544
    %v5548 = vadd.f32 %v5445, %v5544
    %v5549 = vadd.f32 %v5447, %v5544
    %v5550 = vadd.f32 %v5488, %v5544
    %v5551 = vadd.f32 %v5490, %v5544
    %v5558 = vrot.slane %v5546, 3
    %v5559 = vrot.slane %v5547, 3
    %v5560 = vrot.slane %v5548, 3
    %v5561 = vrot.slane %v5549, 3
    %v5562 = vrot.slane %v5550, 3
    %v5563 = vrot.slane %v5551, 3
    %v5570 = vsel %vm4769, %v5558, 0.0
    %v5571 = vrot.slane %v5561, 7
    %v5572 = vsel %vm4772, %v5571, %v5570
    %v5573 = vrot.slane %v5558, 7
    %v5574 = vsel %vm4775, %v5573, %v5572
    %v5575 = vrot.slane %v5561, 6
    %v5576 = vsel %vm4778, %v5575, %v5574
    %v5577 = vrot.slane %v5558, 6
    %v5578 = vsel %vm4781, %v5577, %v5576
    %v5579 = vrot.slane %v5561, 5
    %v5580 = vsel %vm4784, %v5579, %v5578
    %v5581 = vsel %vm4769, %v5559, 0.0
    %v5582 = vrot.slane %v5562, 7
    %v5583 = vsel %vm4772, %v5582, %v5581
    %v5584 = vrot.slane %v5559, 7
    %v5585 = vsel %vm4775, %v5584, %v5583
    %v5586 = vrot.slane %v5562, 6
    %v5587 = vsel %vm4778, %v5586, %v5585
    %v5588 = vrot.slane %v5559, 6
    %v5589 = vsel %vm4781, %v5588, %v5587
    %v5590 = vrot.slane %v5562, 5
    %v5591 = vsel %vm4784, %v5590, %v5589
    %v5592 = vsel %vm4769, %v5560, 0.0
    %v5593 = vrot.slane %v5563, 7
    %v5594 = vsel %vm4772, %v5593, %v5592
    %v5595 = vrot.slane %v5560, 7
    %v5596 = vsel %vm4775, %v5595, %v5594
    %v5597 = vrot.slane %v5563, 6
    %v5598 = vsel %vm4778, %v5597, %v5596
    %v5599 = vrot.slane %v5560, 6
    %v5600 = vsel %vm4781, %v5599, %v5598
    %v5601 = vrot.slane %v5563, 5
    %v5602 = vsel %vm4784, %v5601, %v5600
    %v5603 = vpack.c.bf16 %v5580, %v5580
    %v5604 = vpack.c.bf16 %v5591, %v5591
    %v5605 = vpack.c.bf16 %v5602, %v5602
    %v5606 = vrot.slane %v5500, 2
    %v5608 = vadd.f32 %v5402, %v5606
    %v5609 = vadd.f32 %v5404, %v5606
    %v5610 = vadd.f32 %v5445, %v5606
    %v5611 = vadd.f32 %v5447, %v5606
    %v5612 = vadd.f32 %v5488, %v5606
    %v5613 = vadd.f32 %v5490, %v5606
    %v5614 = vadd.f32 %v5406, %v5606
    %v5615 = vadd.f32 %v5408, %v5606
    %v5616 = vadd.f32 %v5449, %v5606
    %v5617 = vadd.f32 %v5451, %v5606
    %v5618 = vadd.f32 %v5492, %v5606
    %v5619 = vadd.f32 %v5494, %v5606
    %vm5632 = vcmask 1041408
    %v5633 = vrot.slane %v5608, 6
    %v5634 = vrot.slane %v5614, 6
    %v5635 = vsel %vm5632, %v5633, %v5634
    %v5636 = vrot.slane %v5609, 6
    %v5637 = vrot.slane %v5615, 6
    %v5638 = vsel %vm5632, %v5636, %v5637
    %v5639 = vrot.slane %v5610, 6
    %v5640 = vrot.slane %v5616, 6
    %v5641 = vsel %vm5632, %v5639, %v5640
    %v5642 = vrot.slane %v5611, 6
    %v5643 = vrot.slane %v5617, 6
    %v5644 = vsel %vm5632, %v5642, %v5643
    %v5645 = vrot.slane %v5612, 6
    %v5646 = vrot.slane %v5618, 6
    %v5647 = vsel %vm5632, %v5645, %v5646
    %v5648 = vrot.slane %v5613, 6
    %v5649 = vrot.slane %v5619, 6
    %v5650 = vsel %vm5632, %v5648, %v5649
    %v5657 = vsel %vm4769, %v5635, 0.0
    %v5658 = vrot.slane %v5644, 7
    %v5659 = vsel %vm4772, %v5658, %v5657
    %v5660 = vrot.slane %v5635, 7
    %v5661 = vsel %vm4775, %v5660, %v5659
    %v5662 = vrot.slane %v5644, 6
    %v5663 = vsel %vm4778, %v5662, %v5661
    %v5664 = vrot.slane %v5635, 6
    %v5665 = vsel %vm4781, %v5664, %v5663
    %v5666 = vrot.slane %v5644, 5
    %v5667 = vsel %vm4784, %v5666, %v5665
    %v5668 = vsel %vm4769, %v5638, 0.0
    %v5669 = vrot.slane %v5647, 7
    %v5670 = vsel %vm4772, %v5669, %v5668
    %v5671 = vrot.slane %v5638, 7
    %v5672 = vsel %vm4775, %v5671, %v5670
    %v5673 = vrot.slane %v5647, 6
    %v5674 = vsel %vm4778, %v5673, %v5672
    %v5675 = vrot.slane %v5638, 6
    %v5676 = vsel %vm4781, %v5675, %v5674
    %v5677 = vrot.slane %v5647, 5
    %v5678 = vsel %vm4784, %v5677, %v5676
    %v5679 = vsel %vm4769, %v5641, 0.0
    %v5680 = vrot.slane %v5650, 7
    %v5681 = vsel %vm4772, %v5680, %v5679
    %v5682 = vrot.slane %v5641, 7
    %v5683 = vsel %vm4775, %v5682, %v5681
    %v5684 = vrot.slane %v5650, 6
    %v5685 = vsel %vm4778, %v5684, %v5683
    %v5686 = vrot.slane %v5641, 6
    %v5687 = vsel %vm4781, %v5686, %v5685
    %v5688 = vrot.slane %v5650, 5
    %v5689 = vsel %vm4784, %v5688, %v5687
    %v5690 = vpack.c.bf16 %v5667, %v5667
    %v5691 = vpack.c.bf16 %v5678, %v5678
    %v5692 = vpack.c.bf16 %v5689, %v5689
    %v5693 = vrot.slane %v5500, 7
    %v5695 = vadd.f32 %v5406, %v5693
    %v5696 = vadd.f32 %v5408, %v5693
    %v5697 = vadd.f32 %v5449, %v5693
    %v5698 = vadd.f32 %v5451, %v5693
    %v5699 = vadd.f32 %v5492, %v5693
    %v5700 = vadd.f32 %v5494, %v5693
    %v5707 = vrot.slane %v5695, 1
    %v5708 = vrot.slane %v5696, 1
    %v5709 = vrot.slane %v5697, 1
    %v5710 = vrot.slane %v5698, 1
    %v5711 = vrot.slane %v5699, 1
    %v5712 = vrot.slane %v5700, 1
    %v5719 = vsel %vm4769, %v5707, 0.0
    %v5720 = vrot.slane %v5710, 7
    %v5721 = vsel %vm4772, %v5720, %v5719
    %v5722 = vrot.slane %v5707, 7
    %v5723 = vsel %vm4775, %v5722, %v5721
    %v5724 = vrot.slane %v5710, 6
    %v5725 = vsel %vm4778, %v5724, %v5723
    %v5726 = vrot.slane %v5707, 6
    %v5727 = vsel %vm4781, %v5726, %v5725
    %v5728 = vrot.slane %v5710, 5
    %v5729 = vsel %vm4784, %v5728, %v5727
    %v5730 = vsel %vm4769, %v5708, 0.0
    %v5731 = vrot.slane %v5711, 7
    %v5732 = vsel %vm4772, %v5731, %v5730
    %v5733 = vrot.slane %v5708, 7
    %v5734 = vsel %vm4775, %v5733, %v5732
    %v5735 = vrot.slane %v5711, 6
    %v5736 = vsel %vm4778, %v5735, %v5734
    %v5737 = vrot.slane %v5708, 6
    %v5738 = vsel %vm4781, %v5737, %v5736
    %v5739 = vrot.slane %v5711, 5
    %v5740 = vsel %vm4784, %v5739, %v5738
    %v5741 = vsel %vm4769, %v5709, 0.0
    %v5742 = vrot.slane %v5712, 7
    %v5743 = vsel %vm4772, %v5742, %v5741
    %v5744 = vrot.slane %v5709, 7
    %v5745 = vsel %vm4775, %v5744, %v5743
    %v5746 = vrot.slane %v5712, 6
    %v5747 = vsel %vm4778, %v5746, %v5745
    %v5748 = vrot.slane %v5709, 6
    %v5749 = vsel %vm4781, %v5748, %v5747
    %v5750 = vrot.slane %v5712, 5
    %v5751 = vsel %vm4784, %v5750, %v5749
    %v5752 = vpack.c.bf16 %v5729, %v5729
    %v5753 = vpack.c.bf16 %v5740, %v5740
    %v5754 = vpack.c.bf16 %v5751, %v5751
    %v5755 = vld [vmem:[#allocation18] sm:$0xff]
    %v5756 = vld [vmem:[#allocation18 + $0x8] sm:$0xff]
    %v5757 = vld [vmem:[#allocation18 + $0x10] sm:$0xff]
    %v5758 = vld [vmem:[#allocation18 + $0x18] sm:$0xff]
    %v5759 = vld [vmem:[#allocation18 + $0x20] sm:$0xff]
    %v5760 = vld [vmem:[#allocation18 + $0x28] sm:$0xff]
    %v5761 = vld [vmem:[#allocation18 + $0x30] sm:$0xff]
    %v5762 = vld [vmem:[#allocation18 + $0x38] sm:$0xff]
    %v5763 = vld [vmem:[#allocation18 + $0x40] sm:$0xff]
    %v5764 = vld [vmem:[#allocation18 + $0x48] sm:$0xff]
    %v5765 = vld [vmem:[#allocation18 + $0x50] sm:$0xff]
    %v5766 = vld [vmem:[#allocation18 + $0x58] sm:$0xff]
    %v5767 = vld [vmem:[#allocation18 + $0x60] sm:$0xff]
    %v5768 = vld [vmem:[#allocation18 + $0x68] sm:$0xff]
    %v5769 = vld [vmem:[#allocation18 + $0x70] sm:$0xff]
    %v5770 = vld [vmem:[#allocation18 + $0x78] sm:$0xff]
    %v5771 = vld [vmem:[#allocation18 + $0x80] sm:$0xff]
    %v5772 = vld [vmem:[#allocation18 + $0x88] sm:$0xff]
    %v5773 = vld [vmem:[#allocation18 + $0x90] sm:$0xff]
    %v5774 = vld [vmem:[#allocation18 + $0x98] sm:$0xff]
    %v5775 = vld [vmem:[#allocation18 + $0xa0] sm:$0xff]
    %v5776 = vld [vmem:[#allocation18 + $0xa8] sm:$0xff]
    %v5777 = vld [vmem:[#allocation18 + $0xb0] sm:$0xff]
    %v5778 = vld [vmem:[#allocation18 + $0xb8] sm:$0xff]
    %v5779 = vld [vmem:[#allocation18 + $0xc0] sm:$0xff]
    %v5780 = vld [vmem:[#allocation18 + $0xc8] sm:$0xff]
    %v5781 = vld [vmem:[#allocation18 + $0xd0] sm:$0xff]
    %v5782 = vld [vmem:[#allocation18 + $0xd8] sm:$0xff]
    %v5783 = vld [vmem:[#allocation18 + $0xe0] sm:$0xff]
    %v5784 = vld [vmem:[#allocation18 + $0xe8] sm:$0xff]
    %v5785 = vld [vmem:[#allocation18 + $0xf0] sm:$0xff]
    %v5786 = vld [vmem:[#allocation18 + $0xf8] sm:$0xff]
    %v5787 = vld [vmem:[#allocation18 + $0x100] sm:$0xff]
    %v5788 = vld [vmem:[#allocation18 + $0x108] sm:$0xff]
    %v5789 = vld [vmem:[#allocation18 + $0x110] sm:$0xff]
    %v5790 = vld [vmem:[#allocation18 + $0x118] sm:$0xff]
    %v5791 = vld [vmem:[#allocation18 + $0x120] sm:$0xff]
    %v5792 = vld [vmem:[#allocation18 + $0x128] sm:$0xff]
    %v5793 = vld [vmem:[#allocation18 + $0x130] sm:$0xff]
    %v5794 = vld [vmem:[#allocation18 + $0x138] sm:$0xff]
    %v5795 = vld [vmem:[#allocation18 + $0x140] sm:$0xff]
    %v5796 = vld [vmem:[#allocation18 + $0x148] sm:$0xff]
    %v5797 = vld [vmem:[#allocation18 + $0x150] sm:$0xff]
    %v5798 = vld [vmem:[#allocation18 + $0x158] sm:$0xff]
    %v5799 = vld [vmem:[#allocation18 + $0x160] sm:$0xff]
    %v5800 = vld [vmem:[#allocation18 + $0x168] sm:$0xff]
    %v5801 = vld [vmem:[#allocation18 + $0x170] sm:$0xff]
    %v5802 = vld [vmem:[#allocation18 + $0x178] sm:$0xff]
    %v5803 = vld [vmem:[#allocation18 + $0x180] sm:$0xff]
    %v5804 = vld [vmem:[#allocation18 + $0x188] sm:$0xff]
    %v5805 = vld [vmem:[#allocation18 + $0x190] sm:$0xff]
    %v5806 = vld [vmem:[#allocation18 + $0x198] sm:$0xff]
    %v5807 = vld [vmem:[#allocation18 + $0x1a0] sm:$0xff]
    %v5808 = vld [vmem:[#allocation18 + $0x1a8] sm:$0xff]
    %v5809 = vld [vmem:[#allocation18 + $0x1b0] sm:$0xff]
    %v5810 = vld [vmem:[#allocation18 + $0x1b8] sm:$0xff]
    %v5811 = vld [vmem:[#allocation18 + $0x1c0] sm:$0xff]
    %v5812 = vld [vmem:[#allocation18 + $0x1c8] sm:$0xff]
    %v5813 = vld [vmem:[#allocation18 + $0x1d0] sm:$0xff]
    %v5814 = vld [vmem:[#allocation18 + $0x1d8] sm:$0xff]
    %v5815 = vld [vmem:[#allocation18 + $0x1e0] sm:$0xff]
    %v5816 = vld [vmem:[#allocation18 + $0x1e8] sm:$0xff]
    %v5817 = vld [vmem:[#allocation18 + $0x1f0] sm:$0xff]
    %v5818 = vld [vmem:[#allocation18 + $0x1f8] sm:$0xff]
    %v5819 = vld [vmem:[#allocation18 + $0x200] sm:$0xff]
    %v5820 = vld [vmem:[#allocation18 + $0x208] sm:$0xff]
    %v5821 = vld [vmem:[#allocation18 + $0x210] sm:$0xff]
    %v5822 = vld [vmem:[#allocation18 + $0x218] sm:$0xff]
    %v5823 = vld [vmem:[#allocation18 + $0x220] sm:$0xff]
    %v5824 = vld [vmem:[#allocation18 + $0x228] sm:$0xff]
    %v5825 = vld [vmem:[#allocation18 + $0x230] sm:$0xff]
    %v5826 = vld [vmem:[#allocation18 + $0x238] sm:$0xff]
    %v5827 = vld [vmem:[#allocation18 + $0x240] sm:$0xff]
    %v5828 = vld [vmem:[#allocation18 + $0x248] sm:$0xff]
    %v5829 = vld [vmem:[#allocation18 + $0x250] sm:$0xff]
    %v5830 = vld [vmem:[#allocation18 + $0x258] sm:$0xff]
    %v5831 = vld [vmem:[#allocation18 + $0x260] sm:$0xff]
    %v5832 = vld [vmem:[#allocation18 + $0x268] sm:$0xff]
    %v5833 = vld [vmem:[#allocation18 + $0x270] sm:$0xff]
    %v5834 = vld [vmem:[#allocation18 + $0x278] sm:$0xff]
    %v5835 = vld [vmem:[#allocation18 + $0x280] sm:$0xff]
    %v5836 = vld [vmem:[#allocation18 + $0x288] sm:$0xff]
    %v5837 = vld [vmem:[#allocation18 + $0x290] sm:$0xff]
    %v5838 = vld [vmem:[#allocation18 + $0x298] sm:$0xff]
    %v5839 = vld [vmem:[#allocation18 + $0x2a0] sm:$0xff]
    %v5840 = vld [vmem:[#allocation18 + $0x2a8] sm:$0xff]
    %v5841 = vld [vmem:[#allocation18 + $0x2b0] sm:$0xff]
    %v5842 = vld [vmem:[#allocation18 + $0x2b8] sm:$0xff]
    %v5843 = vld [vmem:[#allocation18 + $0x2c0] sm:$0xff]
    %v5844 = vld [vmem:[#allocation18 + $0x2c8] sm:$0xff]
    %v5845 = vld [vmem:[#allocation18 + $0x2d0] sm:$0xff]
    %v5846 = vld [vmem:[#allocation18 + $0x2d8] sm:$0xff]
    %v5847 = vld [vmem:[#allocation18 + $0x2e0] sm:$0xff]
    %v5848 = vld [vmem:[#allocation18 + $0x2e8] sm:$0xff]
    %v5849 = vld [vmem:[#allocation18 + $0x2f0] sm:$0xff]
    %v5850 = vld [vmem:[#allocation18 + $0x2f8] sm:$0xff]
    %v5851 = vld [vmem:[#allocation18 + $0x300] sm:$0xff]
    %v5852 = vld [vmem:[#allocation18 + $0x308] sm:$0xff]
    %v5853 = vld [vmem:[#allocation18 + $0x310] sm:$0xff]
    %v5854 = vld [vmem:[#allocation18 + $0x318] sm:$0xff]
    %v5855 = vld [vmem:[#allocation18 + $0x320] sm:$0xff]
    %v5856 = vld [vmem:[#allocation18 + $0x328] sm:$0xff]
    %v5857 = vld [vmem:[#allocation18 + $0x330] sm:$0xff]
    %v5858 = vld [vmem:[#allocation18 + $0x338] sm:$0xff]
    %v5859 = vld [vmem:[#allocation18 + $0x340] sm:$0xff]
    %v5860 = vld [vmem:[#allocation18 + $0x348] sm:$0xff]
    %v5861 = vld [vmem:[#allocation18 + $0x350] sm:$0xff]
    %v5862 = vld [vmem:[#allocation18 + $0x358] sm:$0xff]
    %v5863 = vld [vmem:[#allocation18 + $0x360] sm:$0xff]
    %v5864 = vld [vmem:[#allocation18 + $0x368] sm:$0xff]
    %v5865 = vld [vmem:[#allocation18 + $0x370] sm:$0xff]
    %v5866 = vld [vmem:[#allocation18 + $0x378] sm:$0xff]
    %v5867 = vld [vmem:[#allocation18 + $0x380] sm:$0xff]
    %v5868 = vld [vmem:[#allocation18 + $0x388] sm:$0xff]
    %v5869 = vld [vmem:[#allocation18 + $0x390] sm:$0xff]
    %v5870 = vld [vmem:[#allocation18 + $0x398] sm:$0xff]
    %v5871 = vld [vmem:[#allocation18 + $0x3a0] sm:$0xff]
    %v5872 = vld [vmem:[#allocation18 + $0x3a8] sm:$0xff]
    %v5873 = vld [vmem:[#allocation18 + $0x3b0] sm:$0xff]
    %v5874 = vld [vmem:[#allocation18 + $0x3b8] sm:$0xff]
    %v5875 = vld [vmem:[#allocation18 + $0x3c0] sm:$0xff]
    %v5876 = vld [vmem:[#allocation18 + $0x3c8] sm:$0xff]
    %v5877 = vld [vmem:[#allocation18 + $0x3d0] sm:$0xff]
    %v5878 = vld [vmem:[#allocation18 + $0x3d8] sm:$0xff]
    %v5879 = vld [vmem:[#allocation18 + $0x3e0] sm:$0xff]
    %v5880 = vld [vmem:[#allocation18 + $0x3e8] sm:$0xff]
    %v5881 = vld [vmem:[#allocation18 + $0x3f0] sm:$0xff]
    %v5882 = vld [vmem:[#allocation18 + $0x3f8] sm:$0xff]
    %v5883 = vld [vmem:[#allocation18 + $0x400] sm:$0xff]
    %v5884 = vld [vmem:[#allocation18 + $0x408] sm:$0xff]
    %v5885 = vld [vmem:[#allocation18 + $0x410] sm:$0xff]
    %v5886 = vld [vmem:[#allocation18 + $0x418] sm:$0xff]
    %v5887 = vld [vmem:[#allocation18 + $0x420] sm:$0xff]
    %v5888 = vld [vmem:[#allocation18 + $0x428] sm:$0xff]
    %v5889 = vld [vmem:[#allocation18 + $0x430] sm:$0xff]
    %v5890 = vld [vmem:[#allocation18 + $0x438] sm:$0xff]
    %v5891 = vld [vmem:[#allocation18 + $0x440] sm:$0xff]
    %v5892 = vld [vmem:[#allocation18 + $0x448] sm:$0xff]
    %v5893 = vld [vmem:[#allocation18 + $0x450] sm:$0xff]
    %v5894 = vld [vmem:[#allocation18 + $0x458] sm:$0xff]
    %v5895 = vld [vmem:[#allocation18 + $0x460] sm:$0xff]
    %v5896 = vld [vmem:[#allocation18 + $0x468] sm:$0xff]
    %v5897 = vld [vmem:[#allocation18 + $0x470] sm:$0xff]
    %v5898 = vld [vmem:[#allocation18 + $0x478] sm:$0xff]
    %v5899 = vld [vmem:[#allocation18 + $0x480] sm:$0xff]
    %v5900 = vld [vmem:[#allocation18 + $0x488] sm:$0xff]
    %v5901 = vld [vmem:[#allocation18 + $0x490] sm:$0xff]
    %v5902 = vld [vmem:[#allocation18 + $0x498] sm:$0xff]
    %v5903 = vld [vmem:[#allocation18 + $0x4a0] sm:$0xff]
    %v5904 = vld [vmem:[#allocation18 + $0x4a8] sm:$0xff]
    %v5905 = vld [vmem:[#allocation18 + $0x4b0] sm:$0xff]
    %v5906 = vld [vmem:[#allocation18 + $0x4b8] sm:$0xff]
    %v5907 = vld [vmem:[#allocation18 + $0x4c0] sm:$0xff]
    %v5908 = vld [vmem:[#allocation18 + $0x4c8] sm:$0xff]
    %v5909 = vld [vmem:[#allocation18 + $0x4d0] sm:$0xff]
    %v5910 = vld [vmem:[#allocation18 + $0x4d8] sm:$0xff]
    %v5911 = vld [vmem:[#allocation18 + $0x4e0] sm:$0xff]
    %v5912 = vld [vmem:[#allocation18 + $0x4e8] sm:$0xff]
    %v5913 = vld [vmem:[#allocation18 + $0x4f0] sm:$0xff]
    %v5914 = vld [vmem:[#allocation18 + $0x4f8] sm:$0xff]
    %v5915 = vld [vmem:[#allocation18 + $0x500] sm:$0xff]
    %v5916 = vld [vmem:[#allocation18 + $0x508] sm:$0xff]
    %v5917 = vld [vmem:[#allocation18 + $0x510] sm:$0xff]
    %v5918 = vld [vmem:[#allocation18 + $0x518] sm:$0xff]
    %v5919 = vld [vmem:[#allocation18 + $0x520] sm:$0xff]
    %v5920 = vld [vmem:[#allocation18 + $0x528] sm:$0xff]
    %v5921 = vld [vmem:[#allocation18 + $0x530] sm:$0xff]
    %v5922 = vld [vmem:[#allocation18 + $0x538] sm:$0xff]
    %v5923 = vld [vmem:[#allocation18 + $0x540] sm:$0xff]
    %v5924 = vld [vmem:[#allocation18 + $0x548] sm:$0xff]
    %v5925 = vld [vmem:[#allocation18 + $0x550] sm:$0xff]
    %v5926 = vld [vmem:[#allocation18 + $0x558] sm:$0xff]
    %v5927 = vld [vmem:[#allocation18 + $0x560] sm:$0xff]
    %v5928 = vld [vmem:[#allocation18 + $0x568] sm:$0xff]
    %v5929 = vld [vmem:[#allocation18 + $0x570] sm:$0xff]
    %v5930 = vld [vmem:[#allocation18 + $0x578] sm:$0xff]
    %v5931 = vld [vmem:[#allocation18 + $0x580] sm:$0xff]
    %v5932 = vld [vmem:[#allocation18 + $0x588] sm:$0xff]
    %v5933 = vld [vmem:[#allocation18 + $0x590] sm:$0xff]
    %v5934 = vld [vmem:[#allocation18 + $0x598] sm:$0xff]
    %v5935 = vld [vmem:[#allocation18 + $0x5a0] sm:$0xff]
    %v5936 = vld [vmem:[#allocation18 + $0x5a8] sm:$0xff]
    %v5937 = vld [vmem:[#allocation18 + $0x5b0] sm:$0xff]
    %v5938 = vld [vmem:[#allocation18 + $0x5b8] sm:$0xff]
    %v5939 = vld [vmem:[#allocation18 + $0x5c0] sm:$0xff]
    %v5940 = vld [vmem:[#allocation18 + $0x5c8] sm:$0xff]
    %v5941 = vld [vmem:[#allocation18 + $0x5d0] sm:$0xff]
    %v5942 = vld [vmem:[#allocation18 + $0x5d8] sm:$0xff]
    %v5943 = vld [vmem:[#allocation18 + $0x5e0] sm:$0xff]
    %v5944 = vld [vmem:[#allocation18 + $0x5e8] sm:$0xff]
    %v5945 = vld [vmem:[#allocation18 + $0x5f0] sm:$0xff]
    %v5946 = vld [vmem:[#allocation18 + $0x5f8] sm:$0xff]
    %v5947 = vld [vmem:[#allocation18 + $0x600] sm:$0xff]
    %v5948 = vld [vmem:[#allocation18 + $0x608] sm:$0xff]
    %v5949 = vld [vmem:[#allocation18 + $0x610] sm:$0xff]
    %v5950 = vld [vmem:[#allocation18 + $0x618] sm:$0xff]
    %v5951 = vld [vmem:[#allocation18 + $0x620] sm:$0xff]
    %v5952 = vld [vmem:[#allocation18 + $0x628] sm:$0xff]
    %v5953 = vld [vmem:[#allocation18 + $0x630] sm:$0xff]
    %v5954 = vld [vmem:[#allocation18 + $0x638] sm:$0xff]
    %v5955 = vld [vmem:[#allocation18 + $0x640] sm:$0xff]
    %v5956 = vld [vmem:[#allocation18 + $0x648] sm:$0xff]
    %v5957 = vld [vmem:[#allocation18 + $0x650] sm:$0xff]
    %v5958 = vld [vmem:[#allocation18 + $0x658] sm:$0xff]
    %v5959 = vld [vmem:[#allocation18 + $0x660] sm:$0xff]
    %v5960 = vld [vmem:[#allocation18 + $0x668] sm:$0xff]
    %v5961 = vld [vmem:[#allocation18 + $0x670] sm:$0xff]
    %v5962 = vld [vmem:[#allocation18 + $0x678] sm:$0xff]
    %v5963 = vld [vmem:[#allocation18 + $0x680] sm:$0xff]
    %v5964 = vld [vmem:[#allocation18 + $0x688] sm:$0xff]
    %v5965 = vld [vmem:[#allocation18 + $0x690] sm:$0xff]
    %v5966 = vld [vmem:[#allocation18 + $0x698] sm:$0xff]
    %v5967 = vld [vmem:[#allocation18 + $0x6a0] sm:$0xff]
    %v5968 = vld [vmem:[#allocation18 + $0x6a8] sm:$0xff]
    %v5969 = vld [vmem:[#allocation18 + $0x6b0] sm:$0xff]
    %v5970 = vld [vmem:[#allocation18 + $0x6b8] sm:$0xff]
    %v5971 = vld [vmem:[#allocation18 + $0x6c0] sm:$0xff]
    %v5972 = vld [vmem:[#allocation18 + $0x6c8] sm:$0xff]
    %v5973 = vld [vmem:[#allocation18 + $0x6d0] sm:$0xff]
    %v5974 = vld [vmem:[#allocation18 + $0x6d8] sm:$0xff]
    %v5975 = vld [vmem:[#allocation18 + $0x6e0] sm:$0xff]
    %v5976 = vld [vmem:[#allocation18 + $0x6e8] sm:$0xff]
    %v5977 = vld [vmem:[#allocation18 + $0x6f0] sm:$0xff]
    %v5978 = vld [vmem:[#allocation18 + $0x6f8] sm:$0xff]
    %v5979 = vld [vmem:[#allocation18 + $0x700] sm:$0xff]
    %v5980 = vld [vmem:[#allocation18 + $0x708] sm:$0xff]
    %v5981 = vld [vmem:[#allocation18 + $0x710] sm:$0xff]
    %v5982 = vld [vmem:[#allocation18 + $0x718] sm:$0xff]
    %v5983 = vld [vmem:[#allocation18 + $0x720] sm:$0xff]
    %v5984 = vld [vmem:[#allocation18 + $0x728] sm:$0xff]
    %v5985 = vld [vmem:[#allocation18 + $0x730] sm:$0xff]
    %v5986 = vld [vmem:[#allocation18 + $0x738] sm:$0xff]
    %v5987 = vld [vmem:[#allocation18 + $0x740] sm:$0xff]
    %v5988 = vld [vmem:[#allocation18 + $0x748] sm:$0xff]
    %v5989 = vld [vmem:[#allocation18 + $0x750] sm:$0xff]
    %v5990 = vld [vmem:[#allocation18 + $0x758] sm:$0xff]
    %v5991 = vld [vmem:[#allocation18 + $0x760] sm:$0xff]
    %v5992 = vld [vmem:[#allocation18 + $0x768] sm:$0xff]
    %v5993 = vld [vmem:[#allocation18 + $0x770] sm:$0xff]
    %v5994 = vld [vmem:[#allocation18 + $0x778] sm:$0xff]
    %v5995 = vld [vmem:[#allocation18 + $0x780] sm:$0xff]
    %v5996 = vld [vmem:[#allocation18 + $0x788] sm:$0xff]
    %v5997 = vld [vmem:[#allocation18 + $0x790] sm:$0xff]
    %v5998 = vld [vmem:[#allocation18 + $0x798] sm:$0xff]
    %v5999 = vld [vmem:[#allocation18 + $0x7a0] sm:$0xff]
    %v6000 = vld [vmem:[#allocation18 + $0x7a8] sm:$0xff]
    %v6001 = vld [vmem:[#allocation18 + $0x7b0] sm:$0xff]
    %v6002 = vld [vmem:[#allocation18 + $0x7b8] sm:$0xff]
    %v6003 = vld [vmem:[#allocation18 + $0x7c0] sm:$0xff]
    %v6004 = vld [vmem:[#allocation18 + $0x7c8] sm:$0xff]
    %v6005 = vld [vmem:[#allocation18 + $0x7d0] sm:$0xff]
    %v6006 = vld [vmem:[#allocation18 + $0x7d8] sm:$0xff]
    %v6007 = vld [vmem:[#allocation18 + $0x7e0] sm:$0xff]
    %v6008 = vld [vmem:[#allocation18 + $0x7e8] sm:$0xff]
    %v6009 = vld [vmem:[#allocation18 + $0x7f0] sm:$0xff]
    %v6010 = vld [vmem:[#allocation18 + $0x7f8] sm:$0xff]
    %v6011 = vld [vmem:[#allocation18 + $0x800] sm:$0xff]
    %v6012 = vld [vmem:[#allocation18 + $0x808] sm:$0xff]
    %v6013 = vld [vmem:[#allocation18 + $0x810] sm:$0xff]
    %v6014 = vld [vmem:[#allocation18 + $0x818] sm:$0xff]
    %v6015 = vld [vmem:[#allocation18 + $0x820] sm:$0xff]
    %v6016 = vld [vmem:[#allocation18 + $0x828] sm:$0xff]
    %v6017 = vld [vmem:[#allocation18 + $0x830] sm:$0xff]
    %v6018 = vld [vmem:[#allocation18 + $0x838] sm:$0xff]
    %v6019 = vld [vmem:[#allocation18 + $0x840] sm:$0xff]
    %v6020 = vld [vmem:[#allocation18 + $0x848] sm:$0xff]
    %v6021 = vld [vmem:[#allocation18 + $0x850] sm:$0xff]
    %v6022 = vld [vmem:[#allocation18 + $0x858] sm:$0xff]
    %v6023 = vld [vmem:[#allocation18 + $0x860] sm:$0xff]
    %v6024 = vld [vmem:[#allocation18 + $0x868] sm:$0xff]
    %v6025 = vld [vmem:[#allocation18 + $0x870] sm:$0xff]
    %v6026 = vld [vmem:[#allocation18 + $0x878] sm:$0xff]
    %v6027 = vld [vmem:[#allocation18 + $0x880] sm:$0xff]
    %v6028 = vld [vmem:[#allocation18 + $0x888] sm:$0xff]
    %v6029 = vld [vmem:[#allocation18 + $0x890] sm:$0xff]
    %v6030 = vld [vmem:[#allocation18 + $0x898] sm:$0xff]
    %v6031 = vld [vmem:[#allocation18 + $0x8a0] sm:$0xff]
    %v6032 = vld [vmem:[#allocation18 + $0x8a8] sm:$0xff]
    %v6033 = vld [vmem:[#allocation18 + $0x8b0] sm:$0xff]
    %v6034 = vld [vmem:[#allocation18 + $0x8b8] sm:$0xff]
    %v6035 = vld [vmem:[#allocation18 + $0x8c0] sm:$0xff]
    %v6036 = vld [vmem:[#allocation18 + $0x8c8] sm:$0xff]
    %v6037 = vld [vmem:[#allocation18 + $0x8d0] sm:$0xff]
    %v6038 = vld [vmem:[#allocation18 + $0x8d8] sm:$0xff]
    %v6039 = vld [vmem:[#allocation18 + $0x8e0] sm:$0xff]
    %v6040 = vld [vmem:[#allocation18 + $0x8e8] sm:$0xff]
    %v6041 = vld [vmem:[#allocation18 + $0x8f0] sm:$0xff]
    %v6042 = vld [vmem:[#allocation18 + $0x8f8] sm:$0xff]
    %v6043 = vld [vmem:[#allocation18 + $0x900] sm:$0xff]
    %v6044 = vld [vmem:[#allocation18 + $0x908] sm:$0xff]
    %v6045 = vld [vmem:[#allocation18 + $0x910] sm:$0xff]
    %v6046 = vld [vmem:[#allocation18 + $0x918] sm:$0xff]
    %v6047 = vld [vmem:[#allocation18 + $0x920] sm:$0xff]
    %v6048 = vld [vmem:[#allocation18 + $0x928] sm:$0xff]
    %v6049 = vld [vmem:[#allocation18 + $0x930] sm:$0xff]
    %v6050 = vld [vmem:[#allocation18 + $0x938] sm:$0xff]
    %v6051 = vld [vmem:[#allocation18 + $0x940] sm:$0xff]
    %v6052 = vld [vmem:[#allocation18 + $0x948] sm:$0xff]
    %v6053 = vld [vmem:[#allocation18 + $0x950] sm:$0xff]
    %v6054 = vld [vmem:[#allocation18 + $0x958] sm:$0xff]
    %v6055 = vld [vmem:[#allocation18 + $0x960] sm:$0xff]
    %v6056 = vld [vmem:[#allocation18 + $0x968] sm:$0xff]
    %v6057 = vld [vmem:[#allocation18 + $0x970] sm:$0xff]
    %v6058 = vld [vmem:[#allocation18 + $0x978] sm:$0xff]
    %v6059 = vld [vmem:[#allocation18 + $0x980] sm:$0xff]
    %v6060 = vld [vmem:[#allocation18 + $0x988] sm:$0xff]
    %v6061 = vld [vmem:[#allocation18 + $0x990] sm:$0xff]
    %v6062 = vld [vmem:[#allocation18 + $0x998] sm:$0xff]
    %v6063 = vld [vmem:[#allocation18 + $0x9a0] sm:$0xff]
    %v6064 = vld [vmem:[#allocation18 + $0x9a8] sm:$0xff]
    %v6065 = vld [vmem:[#allocation18 + $0x9b0] sm:$0xff]
    %v6066 = vld [vmem:[#allocation18 + $0x9b8] sm:$0xff]
    %v6067 = vld [vmem:[#allocation18 + $0x9c0] sm:$0xff]
    %v6068 = vld [vmem:[#allocation18 + $0x9c8] sm:$0xff]
    %v6069 = vld [vmem:[#allocation18 + $0x9d0] sm:$0xff]
    %v6070 = vld [vmem:[#allocation18 + $0x9d8] sm:$0xff]
    %v6071 = vld [vmem:[#allocation18 + $0x9e0] sm:$0xff]
    %v6072 = vld [vmem:[#allocation18 + $0x9e8] sm:$0xff]
    %v6073 = vld [vmem:[#allocation18 + $0x9f0] sm:$0xff]
    %v6074 = vld [vmem:[#allocation18 + $0x9f8] sm:$0xff]
    %v6075 = vld [vmem:[#allocation18 + $0xa00] sm:$0xff]
    %v6076 = vld [vmem:[#allocation18 + $0xa08] sm:$0xff]
    %v6077 = vld [vmem:[#allocation18 + $0xa10] sm:$0xff]
    %v6078 = vld [vmem:[#allocation18 + $0xa18] sm:$0xff]
    %v6079 = vld [vmem:[#allocation18 + $0xa20] sm:$0xff]
    %v6080 = vld [vmem:[#allocation18 + $0xa28] sm:$0xff]
    %v6081 = vld [vmem:[#allocation18 + $0xa30] sm:$0xff]
    %v6082 = vld [vmem:[#allocation18 + $0xa38] sm:$0xff]
    %v6083 = vld [vmem:[#allocation18 + $0xa40] sm:$0xff]
    %v6084 = vld [vmem:[#allocation18 + $0xa48] sm:$0xff]
    %v6085 = vld [vmem:[#allocation18 + $0xa50] sm:$0xff]
    %v6086 = vld [vmem:[#allocation18 + $0xa58] sm:$0xff]
    %v6087 = vld [vmem:[#allocation18 + $0xa60] sm:$0xff]
    %v6088 = vld [vmem:[#allocation18 + $0xa68] sm:$0xff]
    %v6089 = vld [vmem:[#allocation18 + $0xa70] sm:$0xff]
    %v6090 = vld [vmem:[#allocation18 + $0xa78] sm:$0xff]
    %v6091 = vld [vmem:[#allocation18 + $0xa80] sm:$0xff]
    %v6092 = vld [vmem:[#allocation18 + $0xa88] sm:$0xff]
    %v6093 = vld [vmem:[#allocation18 + $0xa90] sm:$0xff]
    %v6094 = vld [vmem:[#allocation18 + $0xa98] sm:$0xff]
    %v6095 = vld [vmem:[#allocation18 + $0xaa0] sm:$0xff]
    %v6096 = vld [vmem:[#allocation18 + $0xaa8] sm:$0xff]
    %v6097 = vld [vmem:[#allocation18 + $0xab0] sm:$0xff]
    %v6098 = vld [vmem:[#allocation18 + $0xab8] sm:$0xff]
    %v6099 = vld [vmem:[#allocation18 + $0xac0] sm:$0xff]
    %v6100 = vld [vmem:[#allocation18 + $0xac8] sm:$0xff]
    %v6101 = vld [vmem:[#allocation18 + $0xad0] sm:$0xff]
    %v6102 = vld [vmem:[#allocation18 + $0xad8] sm:$0xff]
    %v6103 = vld [vmem:[#allocation18 + $0xae0] sm:$0xff]
    %v6104 = vld [vmem:[#allocation18 + $0xae8] sm:$0xff]
    %v6105 = vld [vmem:[#allocation18 + $0xaf0] sm:$0xff]
    %v6106 = vld [vmem:[#allocation18 + $0xaf8] sm:$0xff]
    %v6107 = vld [vmem:[#allocation18 + $0xb00] sm:$0xff]
    %v6108 = vld [vmem:[#allocation18 + $0xb08] sm:$0xff]
    %v6109 = vld [vmem:[#allocation18 + $0xb10] sm:$0xff]
    %v6110 = vld [vmem:[#allocation18 + $0xb18] sm:$0xff]
    %v6111 = vld [vmem:[#allocation18 + $0xb20] sm:$0xff]
    %v6112 = vld [vmem:[#allocation18 + $0xb28] sm:$0xff]
    %v6113 = vld [vmem:[#allocation18 + $0xb30] sm:$0xff]
    %v6114 = vld [vmem:[#allocation18 + $0xb38] sm:$0xff]
    %v6115 = vld [vmem:[#allocation18 + $0xb40] sm:$0xff]
    %v6116 = vld [vmem:[#allocation18 + $0xb48] sm:$0xff]
    %v6117 = vld [vmem:[#allocation18 + $0xb50] sm:$0xff]
    %v6118 = vld [vmem:[#allocation18 + $0xb58] sm:$0xff]
    %v6119 = vld [vmem:[#allocation18 + $0xb60] sm:$0xff]
    %v6120 = vld [vmem:[#allocation18 + $0xb68] sm:$0xff]
    %v6121 = vld [vmem:[#allocation18 + $0xb70] sm:$0xff]
    %v6122 = vld [vmem:[#allocation18 + $0xb78] sm:$0xff]
    %v6123 = vld [vmem:[#allocation18 + $0xb80] sm:$0xff]
    %v6124 = vld [vmem:[#allocation18 + $0xb88] sm:$0xff]
    %v6125 = vld [vmem:[#allocation18 + $0xb90] sm:$0xff]
    %v6126 = vld [vmem:[#allocation18 + $0xb98] sm:$0xff]
    %v6127 = vld [vmem:[#allocation18 + $0xba0] sm:$0xff]
    %v6128 = vld [vmem:[#allocation18 + $0xba8] sm:$0xff]
    %v6129 = vld [vmem:[#allocation18 + $0xbb0] sm:$0xff]
    %v6130 = vld [vmem:[#allocation18 + $0xbb8] sm:$0xff]
    %v6131 = vld [vmem:[#allocation18 + $0xbc0] sm:$0xff]
    %v6132 = vld [vmem:[#allocation18 + $0xbc8] sm:$0xff]
    %v6133 = vld [vmem:[#allocation18 + $0xbd0] sm:$0xff]
    %v6134 = vld [vmem:[#allocation18 + $0xbd8] sm:$0xff]
    %v6135 = vld [vmem:[#allocation18 + $0xbe0] sm:$0xff]
    %v6136 = vld [vmem:[#allocation18 + $0xbe8] sm:$0xff]
    %v6137 = vld [vmem:[#allocation18 + $0xbf0] sm:$0xff]
    %v6138 = vld [vmem:[#allocation18 + $0xbf8] sm:$0xff]
    %v6139 = vld [vmem:[#allocation18 + $0xc00] sm:$0xff]
    %v6140 = vld [vmem:[#allocation18 + $0xc08] sm:$0xff]
    %v6141 = vld [vmem:[#allocation18 + $0xc10] sm:$0xff]
    %v6142 = vld [vmem:[#allocation18 + $0xc18] sm:$0xff]
    %v6143 = vld [vmem:[#allocation18 + $0xc20] sm:$0xff]
    %v6144 = vld [vmem:[#allocation18 + $0xc28] sm:$0xff]
    %v6145 = vld [vmem:[#allocation18 + $0xc30] sm:$0xff]
    %v6146 = vld [vmem:[#allocation18 + $0xc38] sm:$0xff]
    %v6147 = vld [vmem:[#allocation18 + $0xc40] sm:$0xff]
    %v6148 = vld [vmem:[#allocation18 + $0xc48] sm:$0xff]
    %v6149 = vld [vmem:[#allocation18 + $0xc50] sm:$0xff]
    %v6150 = vld [vmem:[#allocation18 + $0xc58] sm:$0xff]
    %v6151 = vld [vmem:[#allocation18 + $0xc60] sm:$0xff]
    %v6152 = vld [vmem:[#allocation18 + $0xc68] sm:$0xff]
    %v6153 = vld [vmem:[#allocation18 + $0xc70] sm:$0xff]
    %v6154 = vld [vmem:[#allocation18 + $0xc78] sm:$0xff]
    %v6155 = vld [vmem:[#allocation18 + $0xc80] sm:$0xff]
    %v6156 = vld [vmem:[#allocation18 + $0xc88] sm:$0xff]
    %v6157 = vld [vmem:[#allocation18 + $0xc90] sm:$0xff]
    %v6158 = vld [vmem:[#allocation18 + $0xc98] sm:$0xff]
    %v6159 = vld [vmem:[#allocation18 + $0xca0] sm:$0xff]
    %v6160 = vld [vmem:[#allocation18 + $0xca8] sm:$0xff]
    %v6161 = vld [vmem:[#allocation18 + $0xcb0] sm:$0xff]
    %v6162 = vld [vmem:[#allocation18 + $0xcb8] sm:$0xff]
    %v6163 = vld [vmem:[#allocation18 + $0xcc0] sm:$0xff]
    %v6164 = vld [vmem:[#allocation18 + $0xcc8] sm:$0xff]
    %v6165 = vld [vmem:[#allocation18 + $0xcd0] sm:$0xff]
    %v6166 = vld [vmem:[#allocation18 + $0xcd8] sm:$0xff]
    %v6167 = vld [vmem:[#allocation18 + $0xce0] sm:$0xff]
    %v6168 = vld [vmem:[#allocation18 + $0xce8] sm:$0xff]
    %v6169 = vld [vmem:[#allocation18 + $0xcf0] sm:$0xff]
    %v6170 = vld [vmem:[#allocation18 + $0xcf8] sm:$0xff]
    %v6171 = vld [vmem:[#allocation18 + $0xd00] sm:$0xff]
    %v6172 = vld [vmem:[#allocation18 + $0xd08] sm:$0xff]
    %v6173 = vld [vmem:[#allocation18 + $0xd10] sm:$0xff]
    %v6174 = vld [vmem:[#allocation18 + $0xd18] sm:$0xff]
    %v6175 = vld [vmem:[#allocation18 + $0xd20] sm:$0xff]
    %v6176 = vld [vmem:[#allocation18 + $0xd28] sm:$0xff]
    %v6177 = vld [vmem:[#allocation18 + $0xd30] sm:$0xff]
    %v6178 = vld [vmem:[#allocation18 + $0xd38] sm:$0xff]
    %v6179 = vld [vmem:[#allocation18 + $0xd40] sm:$0xff]
    %v6180 = vld [vmem:[#allocation18 + $0xd48] sm:$0xff]
    %v6181 = vld [vmem:[#allocation18 + $0xd50] sm:$0xff]
    %v6182 = vld [vmem:[#allocation18 + $0xd58] sm:$0xff]
    %v6183 = vld [vmem:[#allocation18 + $0xd60] sm:$0xff]
    %v6184 = vld [vmem:[#allocation18 + $0xd68] sm:$0xff]
    %v6185 = vld [vmem:[#allocation18 + $0xd70] sm:$0xff]
    %v6186 = vld [vmem:[#allocation18 + $0xd78] sm:$0xff]
    %v6187 = vld [vmem:[#allocation18 + $0xd80] sm:$0xff]
    %v6188 = vld [vmem:[#allocation18 + $0xd88] sm:$0xff]
    %v6189 = vld [vmem:[#allocation18 + $0xd90] sm:$0xff]
    %v6190 = vld [vmem:[#allocation18 + $0xd98] sm:$0xff]
    %v6191 = vld [vmem:[#allocation18 + $0xda0] sm:$0xff]
    %v6192 = vld [vmem:[#allocation18 + $0xda8] sm:$0xff]
    %v6193 = vld [vmem:[#allocation18 + $0xdb0] sm:$0xff]
    %v6194 = vld [vmem:[#allocation18 + $0xdb8] sm:$0xff]
    %v6195 = vld [vmem:[#allocation18 + $0xdc0] sm:$0xff]
    %v6196 = vld [vmem:[#allocation18 + $0xdc8] sm:$0xff]
    %v6197 = vld [vmem:[#allocation18 + $0xdd0] sm:$0xff]
    %v6198 = vld [vmem:[#allocation18 + $0xdd8] sm:$0xff]
    %v6199 = vld [vmem:[#allocation18 + $0xde0] sm:$0xff]
    %v6200 = vld [vmem:[#allocation18 + $0xde8] sm:$0xff]
    %v6201 = vld [vmem:[#allocation18 + $0xdf0] sm:$0xff]
    %v6202 = vld [vmem:[#allocation18 + $0xdf8] sm:$0xff]
    %v6203 = vld [vmem:[#allocation18 + $0xe00] sm:$0xff]
    %v6204 = vld [vmem:[#allocation18 + $0xe08] sm:$0xff]
    %v6205 = vld [vmem:[#allocation18 + $0xe10] sm:$0xff]
    %v6206 = vld [vmem:[#allocation18 + $0xe18] sm:$0xff]
    %v6207 = vld [vmem:[#allocation18 + $0xe20] sm:$0xff]
    %v6208 = vld [vmem:[#allocation18 + $0xe28] sm:$0xff]
    %v6209 = vld [vmem:[#allocation18 + $0xe30] sm:$0xff]
    %v6210 = vld [vmem:[#allocation18 + $0xe38] sm:$0xff]
    %v6211 = vld [vmem:[#allocation18 + $0xe40] sm:$0xff]
    %v6212 = vld [vmem:[#allocation18 + $0xe48] sm:$0xff]
    %v6213 = vld [vmem:[#allocation18 + $0xe50] sm:$0xff]
    %v6214 = vld [vmem:[#allocation18 + $0xe58] sm:$0xff]
    %v6215 = vld [vmem:[#allocation18 + $0xe60] sm:$0xff]
    %v6216 = vld [vmem:[#allocation18 + $0xe68] sm:$0xff]
    %v6217 = vld [vmem:[#allocation18 + $0xe70] sm:$0xff]
    %v6218 = vld [vmem:[#allocation18 + $0xe78] sm:$0xff]
    %v6219 = vld [vmem:[#allocation18 + $0xe80] sm:$0xff]
    %v6220 = vld [vmem:[#allocation18 + $0xe88] sm:$0xff]
    %v6221 = vld [vmem:[#allocation18 + $0xe90] sm:$0xff]
    %v6222 = vld [vmem:[#allocation18 + $0xe98] sm:$0xff]
    %v6223 = vld [vmem:[#allocation18 + $0xea0] sm:$0xff]
    %v6224 = vld [vmem:[#allocation18 + $0xea8] sm:$0xff]
    %v6225 = vld [vmem:[#allocation18 + $0xeb0] sm:$0xff]
    %v6226 = vld [vmem:[#allocation18 + $0xeb8] sm:$0xff]
    %v6227 = vld [vmem:[#allocation18 + $0xec0] sm:$0xff]
    %v6228 = vld [vmem:[#allocation18 + $0xec8] sm:$0xff]
    %v6229 = vld [vmem:[#allocation18 + $0xed0] sm:$0xff]
    %v6230 = vld [vmem:[#allocation18 + $0xed8] sm:$0xff]
    %v6231 = vld [vmem:[#allocation18 + $0xee0] sm:$0xff]
    %v6232 = vld [vmem:[#allocation18 + $0xee8] sm:$0xff]
    %v6233 = vld [vmem:[#allocation18 + $0xef0] sm:$0xff]
    %v6234 = vld [vmem:[#allocation18 + $0xef8] sm:$0xff]
    %v6235 = vld [vmem:[#allocation18 + $0xf00] sm:$0xff]
    %v6236 = vld [vmem:[#allocation18 + $0xf08] sm:$0xff]
    %v6237 = vld [vmem:[#allocation18 + $0xf10] sm:$0xff]
    %v6238 = vld [vmem:[#allocation18 + $0xf18] sm:$0xff]
    %v6239 = vld [vmem:[#allocation18 + $0xf20] sm:$0xff]
    %v6240 = vld [vmem:[#allocation18 + $0xf28] sm:$0xff]
    %v6241 = vld [vmem:[#allocation18 + $0xf30] sm:$0xff]
    %v6242 = vld [vmem:[#allocation18 + $0xf38] sm:$0xff]
    %v6243 = vld [vmem:[#allocation18 + $0xf40] sm:$0xff]
    %v6244 = vld [vmem:[#allocation18 + $0xf48] sm:$0xff]
    %v6245 = vld [vmem:[#allocation18 + $0xf50] sm:$0xff]
    %v6246 = vld [vmem:[#allocation18 + $0xf58] sm:$0xff]
    %v6247 = vld [vmem:[#allocation18 + $0xf60] sm:$0xff]
    %v6248 = vld [vmem:[#allocation18 + $0xf68] sm:$0xff]
    %v6249 = vld [vmem:[#allocation18 + $0xf70] sm:$0xff]
    %v6250 = vld [vmem:[#allocation18 + $0xf78] sm:$0xff]
    %v6251 = vld [vmem:[#allocation18 + $0xf80] sm:$0xff]
    %v6252 = vld [vmem:[#allocation18 + $0xf88] sm:$0xff]
    %v6253 = vld [vmem:[#allocation18 + $0xf90] sm:$0xff]
    %v6254 = vld [vmem:[#allocation18 + $0xf98] sm:$0xff]
    %v6255 = vld [vmem:[#allocation18 + $0xfa0] sm:$0xff]
    %v6256 = vld [vmem:[#allocation18 + $0xfa8] sm:$0xff]
    %v6257 = vld [vmem:[#allocation18 + $0xfb0] sm:$0xff]
    %v6258 = vld [vmem:[#allocation18 + $0xfb8] sm:$0xff]
    %v6259 = vld [vmem:[#allocation18 + $0xfc0] sm:$0xff]
    %v6260 = vld [vmem:[#allocation18 + $0xfc8] sm:$0xff]
    %v6261 = vld [vmem:[#allocation18 + $0xfd0] sm:$0xff]
    %v6262 = vld [vmem:[#allocation18 + $0xfd8] sm:$0xff]
    %v6263 = vld [vmem:[#allocation18 + $0xfe0] sm:$0xff]
    %v6264 = vld [vmem:[#allocation18 + $0xfe8] sm:$0xff]
    %v6265 = vld [vmem:[#allocation18 + $0xff0] sm:$0xff]
    %v6266 = vld [vmem:[#allocation18 + $0xff8] sm:$0xff]
    %v6267 = vld [vmem:[#allocation18 + $0x1000] sm:$0xff]
    %v6268 = vld [vmem:[#allocation18 + $0x1008] sm:$0xff]
    %v6269 = vld [vmem:[#allocation18 + $0x1010] sm:$0xff]
    %v6270 = vld [vmem:[#allocation18 + $0x1018] sm:$0xff]
    %v6271 = vld [vmem:[#allocation18 + $0x1020] sm:$0xff]
    %v6272 = vld [vmem:[#allocation18 + $0x1028] sm:$0xff]
    %v6273 = vld [vmem:[#allocation18 + $0x1030] sm:$0xff]
    %v6274 = vld [vmem:[#allocation18 + $0x1038] sm:$0xff]
    %v6275 = vld [vmem:[#allocation18 + $0x1040] sm:$0xff]
    %v6276 = vld [vmem:[#allocation18 + $0x1048] sm:$0xff]
    %v6277 = vld [vmem:[#allocation18 + $0x1050] sm:$0xff]
    %v6278 = vld [vmem:[#allocation18 + $0x1058] sm:$0xff]
    %v6279 = vld [vmem:[#allocation18 + $0x1060] sm:$0xff]
    %v6280 = vld [vmem:[#allocation18 + $0x1068] sm:$0xff]
    %v6281 = vld [vmem:[#allocation18 + $0x1070] sm:$0xff]
    %v6282 = vld [vmem:[#allocation18 + $0x1078] sm:$0xff]
    %v6283 = vld [vmem:[#allocation18 + $0x1080] sm:$0xff]
    %v6284 = vld [vmem:[#allocation18 + $0x1088] sm:$0xff]
    %v6285 = vld [vmem:[#allocation18 + $0x1090] sm:$0xff]
    %v6286 = vld [vmem:[#allocation18 + $0x1098] sm:$0xff]
    %v6287 = vld [vmem:[#allocation18 + $0x10a0] sm:$0xff]
    %v6288 = vld [vmem:[#allocation18 + $0x10a8] sm:$0xff]
    %v6289 = vld [vmem:[#allocation18 + $0x10b0] sm:$0xff]
    %v6290 = vld [vmem:[#allocation18 + $0x10b8] sm:$0xff]
    %v6291 = vld [vmem:[#allocation18 + $0x10c0] sm:$0xff]
    %v6292 = vld [vmem:[#allocation18 + $0x10c8] sm:$0xff]
    %v6293 = vld [vmem:[#allocation18 + $0x10d0] sm:$0xff]
    %v6294 = vld [vmem:[#allocation18 + $0x10d8] sm:$0xff]
    %v6295 = vld [vmem:[#allocation18 + $0x10e0] sm:$0xff]
    %v6296 = vld [vmem:[#allocation18 + $0x10e8] sm:$0xff]
    %v6297 = vld [vmem:[#allocation18 + $0x10f0] sm:$0xff]
    %v6298 = vld [vmem:[#allocation18 + $0x10f8] sm:$0xff]
    %v6299 = vld [vmem:[#allocation18 + $0x1100] sm:$0xff]
    %v6300 = vld [vmem:[#allocation18 + $0x1108] sm:$0xff]
    %v6301 = vld [vmem:[#allocation18 + $0x1110] sm:$0xff]
    %v6302 = vld [vmem:[#allocation18 + $0x1118] sm:$0xff]
    %v6303 = vld [vmem:[#allocation18 + $0x1120] sm:$0xff]
    %v6304 = vld [vmem:[#allocation18 + $0x1128] sm:$0xff]
    %v6305 = vld [vmem:[#allocation18 + $0x1130] sm:$0xff]
    %v6306 = vld [vmem:[#allocation18 + $0x1138] sm:$0xff]
    %v6307 = vld [vmem:[#allocation18 + $0x1140] sm:$0xff]
    %v6308 = vld [vmem:[#allocation18 + $0x1148] sm:$0xff]
    %v6309 = vld [vmem:[#allocation18 + $0x1150] sm:$0xff]
    %v6310 = vld [vmem:[#allocation18 + $0x1158] sm:$0xff]
    %v6311 = vld [vmem:[#allocation18 + $0x1160] sm:$0xff]
    %v6312 = vld [vmem:[#allocation18 + $0x1168] sm:$0xff]
    %v6313 = vld [vmem:[#allocation18 + $0x1170] sm:$0xff]
    %v6314 = vld [vmem:[#allocation18 + $0x1178] sm:$0xff]
    %v6315 = vld [vmem:[#allocation18 + $0x1180] sm:$0xff]
    %v6316 = vld [vmem:[#allocation18 + $0x1188] sm:$0xff]
    %v6317 = vld [vmem:[#allocation18 + $0x1190] sm:$0xff]
    %v6318 = vld [vmem:[#allocation18 + $0x1198] sm:$0xff]
    %v6319 = vld [vmem:[#allocation18 + $0x11a0] sm:$0xff]
    %v6320 = vld [vmem:[#allocation18 + $0x11a8] sm:$0xff]
    %v6321 = vld [vmem:[#allocation18 + $0x11b0] sm:$0xff]
    %v6322 = vld [vmem:[#allocation18 + $0x11b8] sm:$0xff]
    %v6323 = vld [vmem:[#allocation18 + $0x11c0] sm:$0xff]
    %v6324 = vld [vmem:[#allocation18 + $0x11c8] sm:$0xff]
    %v6325 = vld [vmem:[#allocation18 + $0x11d0] sm:$0xff]
    %v6326 = vld [vmem:[#allocation18 + $0x11d8] sm:$0xff]
    %v6327 = vld [vmem:[#allocation18 + $0x11e0] sm:$0xff]
    %v6328 = vld [vmem:[#allocation18 + $0x11e8] sm:$0xff]
    %v6329 = vld [vmem:[#allocation18 + $0x11f0] sm:$0xff]
    %v6330 = vld [vmem:[#allocation18 + $0x11f8] sm:$0xff]
    %v6331 = vld [vmem:[#allocation18 + $0x1200] sm:$0xff]
    %v6332 = vld [vmem:[#allocation18 + $0x1208] sm:$0xff]
    %v6333 = vld [vmem:[#allocation18 + $0x1210] sm:$0xff]
    %v6334 = vld [vmem:[#allocation18 + $0x1218] sm:$0xff]
    %v6335 = vld [vmem:[#allocation18 + $0x1220] sm:$0xff]
    %v6336 = vld [vmem:[#allocation18 + $0x1228] sm:$0xff]
    %v6337 = vld [vmem:[#allocation18 + $0x1230] sm:$0xff]
    %v6338 = vld [vmem:[#allocation18 + $0x1238] sm:$0xff]
    %v6339 = vld [vmem:[#allocation18 + $0x1240] sm:$0xff]
    %v6340 = vld [vmem:[#allocation18 + $0x1248] sm:$0xff]
    %v6341 = vld [vmem:[#allocation18 + $0x1250] sm:$0xff]
    %v6342 = vld [vmem:[#allocation18 + $0x1258] sm:$0xff]
    %v6343 = vld [vmem:[#allocation18 + $0x1260] sm:$0xff]
    %v6344 = vld [vmem:[#allocation18 + $0x1268] sm:$0xff]
    %v6345 = vld [vmem:[#allocation18 + $0x1270] sm:$0xff]
    %v6346 = vld [vmem:[#allocation18 + $0x1278] sm:$0xff]
    %v6347 = vld [vmem:[#allocation18 + $0x1280] sm:$0xff]
    %v6348 = vld [vmem:[#allocation18 + $0x1288] sm:$0xff]
    %v6349 = vld [vmem:[#allocation18 + $0x1290] sm:$0xff]
    %v6350 = vld [vmem:[#allocation18 + $0x1298] sm:$0xff]
    %v6351 = vld [vmem:[#allocation18 + $0x12a0] sm:$0xff]
    %v6352 = vld [vmem:[#allocation18 + $0x12a8] sm:$0xff]
    %v6353 = vld [vmem:[#allocation18 + $0x12b0] sm:$0xff]
    %v6354 = vld [vmem:[#allocation18 + $0x12b8] sm:$0xff]
    %v6355 = vld [vmem:[#allocation18 + $0x12c0] sm:$0xff]
    %v6356 = vld [vmem:[#allocation18 + $0x12c8] sm:$0xff]
    %v6357 = vld [vmem:[#allocation18 + $0x12d0] sm:$0xff]
    %v6358 = vld [vmem:[#allocation18 + $0x12d8] sm:$0xff]
    %v6359 = vld [vmem:[#allocation18 + $0x12e0] sm:$0xff]
    %v6360 = vld [vmem:[#allocation18 + $0x12e8] sm:$0xff]
    %v6361 = vld [vmem:[#allocation18 + $0x12f0] sm:$0xff]
    %v6362 = vld [vmem:[#allocation18 + $0x12f8] sm:$0xff]
    %v6363 = vld [vmem:[#allocation18 + $0x1300] sm:$0xff]
    %v6364 = vld [vmem:[#allocation18 + $0x1308] sm:$0xff]
    %v6365 = vld [vmem:[#allocation18 + $0x1310] sm:$0xff]
    %v6366 = vld [vmem:[#allocation18 + $0x1318] sm:$0xff]
    %v6367 = vld [vmem:[#allocation18 + $0x1320] sm:$0xff]
    %v6368 = vld [vmem:[#allocation18 + $0x1328] sm:$0xff]
    %v6369 = vld [vmem:[#allocation18 + $0x1330] sm:$0xff]
    %v6370 = vld [vmem:[#allocation18 + $0x1338] sm:$0xff]
    %v6371 = vld [vmem:[#allocation18 + $0x1340] sm:$0xff]
    %v6372 = vld [vmem:[#allocation18 + $0x1348] sm:$0xff]
    %v6373 = vld [vmem:[#allocation18 + $0x1350] sm:$0xff]
    %v6374 = vld [vmem:[#allocation18 + $0x1358] sm:$0xff]
    %v6375 = vld [vmem:[#allocation18 + $0x1360] sm:$0xff]
    %v6376 = vld [vmem:[#allocation18 + $0x1368] sm:$0xff]
    %v6377 = vld [vmem:[#allocation18 + $0x1370] sm:$0xff]
    %v6378 = vld [vmem:[#allocation18 + $0x1378] sm:$0xff]
    %v6379 = vld [vmem:[#allocation18 + $0x1380] sm:$0xff]
    %v6380 = vld [vmem:[#allocation18 + $0x1388] sm:$0xff]
    %v6381 = vld [vmem:[#allocation18 + $0x1390] sm:$0xff]
    %v6382 = vld [vmem:[#allocation18 + $0x1398] sm:$0xff]
    %v6383 = vld [vmem:[#allocation18 + $0x13a0] sm:$0xff]
    %v6384 = vld [vmem:[#allocation18 + $0x13a8] sm:$0xff]
    %v6385 = vld [vmem:[#allocation18 + $0x13b0] sm:$0xff]
    %v6386 = vld [vmem:[#allocation18 + $0x13b8] sm:$0xff]
    %v6387 = vld [vmem:[#allocation18 + $0x13c0] sm:$0xff]
    %v6388 = vld [vmem:[#allocation18 + $0x13c8] sm:$0xff]
    %v6389 = vld [vmem:[#allocation18 + $0x13d0] sm:$0xff]
    %v6390 = vld [vmem:[#allocation18 + $0x13d8] sm:$0xff]
    %v6391 = vld [vmem:[#allocation18 + $0x13e0] sm:$0xff]
    %v6392 = vld [vmem:[#allocation18 + $0x13e8] sm:$0xff]
    %v6393 = vld [vmem:[#allocation18 + $0x13f0] sm:$0xff]
    %v6394 = vld [vmem:[#allocation18 + $0x13f8] sm:$0xff]
    %v6395 = vld [vmem:[#allocation18 + $0x1400] sm:$0xff]
    %v6396 = vld [vmem:[#allocation18 + $0x1408] sm:$0xff]
    %v6397 = vld [vmem:[#allocation18 + $0x1410] sm:$0xff]
    %v6398 = vld [vmem:[#allocation18 + $0x1418] sm:$0xff]
    %v6399 = vld [vmem:[#allocation18 + $0x1420] sm:$0xff]
    %v6400 = vld [vmem:[#allocation18 + $0x1428] sm:$0xff]
    %v6401 = vld [vmem:[#allocation18 + $0x1430] sm:$0xff]
    %v6402 = vld [vmem:[#allocation18 + $0x1438] sm:$0xff]
    %v6403 = vld [vmem:[#allocation18 + $0x1440] sm:$0xff]
    %v6404 = vld [vmem:[#allocation18 + $0x1448] sm:$0xff]
    %v6405 = vld [vmem:[#allocation18 + $0x1450] sm:$0xff]
    %v6406 = vld [vmem:[#allocation18 + $0x1458] sm:$0xff]
    %v6407 = vld [vmem:[#allocation18 + $0x1460] sm:$0xff]
    %v6408 = vld [vmem:[#allocation18 + $0x1468] sm:$0xff]
    %v6409 = vld [vmem:[#allocation18 + $0x1470] sm:$0xff]
    %v6410 = vld [vmem:[#allocation18 + $0x1478] sm:$0xff]
    %v6411 = vld [vmem:[#allocation18 + $0x1480] sm:$0xff]
    %v6412 = vld [vmem:[#allocation18 + $0x1488] sm:$0xff]
    %v6413 = vld [vmem:[#allocation18 + $0x1490] sm:$0xff]
    %v6414 = vld [vmem:[#allocation18 + $0x1498] sm:$0xff]
    %v6415 = vld [vmem:[#allocation18 + $0x14a0] sm:$0xff]
    %v6416 = vld [vmem:[#allocation18 + $0x14a8] sm:$0xff]
    %v6417 = vld [vmem:[#allocation18 + $0x14b0] sm:$0xff]
    %v6418 = vld [vmem:[#allocation18 + $0x14b8] sm:$0xff]
    %v6419 = vld [vmem:[#allocation18 + $0x14c0] sm:$0xff]
    %v6420 = vld [vmem:[#allocation18 + $0x14c8] sm:$0xff]
    %v6421 = vld [vmem:[#allocation18 + $0x14d0] sm:$0xff]
    %v6422 = vld [vmem:[#allocation18 + $0x14d8] sm:$0xff]
    %v6423 = vld [vmem:[#allocation18 + $0x14e0] sm:$0xff]
    %v6424 = vld [vmem:[#allocation18 + $0x14e8] sm:$0xff]
    %v6425 = vld [vmem:[#allocation18 + $0x14f0] sm:$0xff]
    %v6426 = vld [vmem:[#allocation18 + $0x14f8] sm:$0xff]
    %v6427 = vld [vmem:[#allocation18 + $0x1500] sm:$0xff]
    %v6428 = vld [vmem:[#allocation18 + $0x1508] sm:$0xff]
    %v6429 = vld [vmem:[#allocation18 + $0x1510] sm:$0xff]
    %v6430 = vld [vmem:[#allocation18 + $0x1518] sm:$0xff]
    %v6431 = vld [vmem:[#allocation18 + $0x1520] sm:$0xff]
    %v6432 = vld [vmem:[#allocation18 + $0x1528] sm:$0xff]
    %v6433 = vld [vmem:[#allocation18 + $0x1530] sm:$0xff]
    %v6434 = vld [vmem:[#allocation18 + $0x1538] sm:$0xff]
    %v6435 = vld [vmem:[#allocation18 + $0x1540] sm:$0xff]
    %v6436 = vld [vmem:[#allocation18 + $0x1548] sm:$0xff]
    %v6437 = vld [vmem:[#allocation18 + $0x1550] sm:$0xff]
    %v6438 = vld [vmem:[#allocation18 + $0x1558] sm:$0xff]
    %v6439 = vld [vmem:[#allocation18 + $0x1560] sm:$0xff]
    %v6440 = vld [vmem:[#allocation18 + $0x1568] sm:$0xff]
    %v6441 = vld [vmem:[#allocation18 + $0x1570] sm:$0xff]
    %v6442 = vld [vmem:[#allocation18 + $0x1578] sm:$0xff]
    %v6443 = vld [vmem:[#allocation18 + $0x1580] sm:$0xff]
    %v6444 = vld [vmem:[#allocation18 + $0x1588] sm:$0xff]
    %v6445 = vld [vmem:[#allocation18 + $0x1590] sm:$0xff]
    %v6446 = vld [vmem:[#allocation18 + $0x1598] sm:$0xff]
    %v6447 = vld [vmem:[#allocation18 + $0x15a0] sm:$0xff]
    %v6448 = vld [vmem:[#allocation18 + $0x15a8] sm:$0xff]
    %v6449 = vld [vmem:[#allocation18 + $0x15b0] sm:$0xff]
    %v6450 = vld [vmem:[#allocation18 + $0x15b8] sm:$0xff]
    %v6451 = vld [vmem:[#allocation18 + $0x15c0] sm:$0xff]
    %v6452 = vld [vmem:[#allocation18 + $0x15c8] sm:$0xff]
    %v6453 = vld [vmem:[#allocation18 + $0x15d0] sm:$0xff]
    %v6454 = vld [vmem:[#allocation18 + $0x15d8] sm:$0xff]
    %v6455 = vld [vmem:[#allocation18 + $0x15e0] sm:$0xff]
    %v6456 = vld [vmem:[#allocation18 + $0x15e8] sm:$0xff]
    %v6457 = vld [vmem:[#allocation18 + $0x15f0] sm:$0xff]
    %v6458 = vld [vmem:[#allocation18 + $0x15f8] sm:$0xff]
    %v6459 = vld [vmem:[#allocation18 + $0x1600] sm:$0xff]
    %v6460 = vld [vmem:[#allocation18 + $0x1608] sm:$0xff]
    %v6461 = vld [vmem:[#allocation18 + $0x1610] sm:$0xff]
    %v6462 = vld [vmem:[#allocation18 + $0x1618] sm:$0xff]
    %v6463 = vld [vmem:[#allocation18 + $0x1620] sm:$0xff]
    %v6464 = vld [vmem:[#allocation18 + $0x1628] sm:$0xff]
    %v6465 = vld [vmem:[#allocation18 + $0x1630] sm:$0xff]
    %v6466 = vld [vmem:[#allocation18 + $0x1638] sm:$0xff]
    %v6467 = vld [vmem:[#allocation18 + $0x1640] sm:$0xff]
    %v6468 = vld [vmem:[#allocation18 + $0x1648] sm:$0xff]
    %v6469 = vld [vmem:[#allocation18 + $0x1650] sm:$0xff]
    %v6470 = vld [vmem:[#allocation18 + $0x1658] sm:$0xff]
    %v6471 = vld [vmem:[#allocation18 + $0x1660] sm:$0xff]
    %v6472 = vld [vmem:[#allocation18 + $0x1668] sm:$0xff]
    %v6473 = vld [vmem:[#allocation18 + $0x1670] sm:$0xff]
    %v6474 = vld [vmem:[#allocation18 + $0x1678] sm:$0xff]
    %v6475 = vld [vmem:[#allocation18 + $0x1680] sm:$0xff]
    %v6476 = vld [vmem:[#allocation18 + $0x1688] sm:$0xff]
    %v6477 = vld [vmem:[#allocation18 + $0x1690] sm:$0xff]
    %v6478 = vld [vmem:[#allocation18 + $0x1698] sm:$0xff]
    %v6479 = vld [vmem:[#allocation18 + $0x16a0] sm:$0xff]
    %v6480 = vld [vmem:[#allocation18 + $0x16a8] sm:$0xff]
    %v6481 = vld [vmem:[#allocation18 + $0x16b0] sm:$0xff]
    %v6482 = vld [vmem:[#allocation18 + $0x16b8] sm:$0xff]
    %v6483 = vld [vmem:[#allocation18 + $0x16c0] sm:$0xff]
    %v6484 = vld [vmem:[#allocation18 + $0x16c8] sm:$0xff]
    %v6485 = vld [vmem:[#allocation18 + $0x16d0] sm:$0xff]
    %v6486 = vld [vmem:[#allocation18 + $0x16d8] sm:$0xff]
    %v6487 = vld [vmem:[#allocation18 + $0x16e0] sm:$0xff]
    %v6488 = vld [vmem:[#allocation18 + $0x16e8] sm:$0xff]
    %v6489 = vld [vmem:[#allocation18 + $0x16f0] sm:$0xff]
    %v6490 = vld [vmem:[#allocation18 + $0x16f8] sm:$0xff]
    %v6491 = vld [vmem:[#allocation18 + $0x1700] sm:$0xff]
    %v6492 = vld [vmem:[#allocation18 + $0x1708] sm:$0xff]
    %v6493 = vld [vmem:[#allocation18 + $0x1710] sm:$0xff]
    %v6494 = vld [vmem:[#allocation18 + $0x1718] sm:$0xff]
    %v6495 = vld [vmem:[#allocation18 + $0x1720] sm:$0xff]
    %v6496 = vld [vmem:[#allocation18 + $0x1728] sm:$0xff]
    %v6497 = vld [vmem:[#allocation18 + $0x1730] sm:$0xff]
    %v6498 = vld [vmem:[#allocation18 + $0x1738] sm:$0xff]
    %v6499 = vld [vmem:[#allocation18 + $0x1740] sm:$0xff]
    %v6500 = vld [vmem:[#allocation18 + $0x1748] sm:$0xff]
    %v6501 = vld [vmem:[#allocation18 + $0x1750] sm:$0xff]
    %v6502 = vld [vmem:[#allocation18 + $0x1758] sm:$0xff]
    %v6503 = vld [vmem:[#allocation18 + $0x1760] sm:$0xff]
    %v6504 = vld [vmem:[#allocation18 + $0x1768] sm:$0xff]
    %v6505 = vld [vmem:[#allocation18 + $0x1770] sm:$0xff]
    %v6506 = vld [vmem:[#allocation18 + $0x1778] sm:$0xff]
    %v6507 = vld [vmem:[#allocation18 + $0x1780] sm:$0xff]
    %v6508 = vld [vmem:[#allocation18 + $0x1788] sm:$0xff]
    %v6509 = vld [vmem:[#allocation18 + $0x1790] sm:$0xff]
    %v6510 = vld [vmem:[#allocation18 + $0x1798] sm:$0xff]
    %v6511 = vld [vmem:[#allocation18 + $0x17a0] sm:$0xff]
    %v6512 = vld [vmem:[#allocation18 + $0x17a8] sm:$0xff]
    %v6513 = vld [vmem:[#allocation18 + $0x17b0] sm:$0xff]
    %v6514 = vld [vmem:[#allocation18 + $0x17b8] sm:$0xff]
    %v6515 = vld [vmem:[#allocation18 + $0x17c0] sm:$0xff]
    %v6516 = vld [vmem:[#allocation18 + $0x17c8] sm:$0xff]
    %v6517 = vld [vmem:[#allocation18 + $0x17d0] sm:$0xff]
    %v6518 = vld [vmem:[#allocation18 + $0x17d8] sm:$0xff]
    %v6519 = vld [vmem:[#allocation18 + $0x17e0] sm:$0xff]
    %v6520 = vld [vmem:[#allocation18 + $0x17e8] sm:$0xff]
    %v6521 = vld [vmem:[#allocation18 + $0x17f0] sm:$0xff]
    %v6522 = vld [vmem:[#allocation18 + $0x17f8] sm:$0xff]
    %v7291 = vunpack.c.l.b16 %v5755
    %v7292 = vunpack.c.h.b16 %v5755
    %v7293 = vunpack.c.l.b16 %v5756
    %v7294 = vunpack.c.h.b16 %v5756
    %v7295 = vunpack.c.l.b16 %v5757
    %v7296 = vunpack.c.h.b16 %v5757
    %v7297 = vunpack.c.l.b16 %v5758
    %v7298 = vunpack.c.h.b16 %v5758
    %v7299 = vunpack.c.l.b16 %v5759
    %v7300 = vunpack.c.h.b16 %v5759
    %v7301 = vunpack.c.l.b16 %v5760
    %v7302 = vunpack.c.h.b16 %v5760
    %v7303 = vunpack.c.l.b16 %v5761
    %v7304 = vunpack.c.h.b16 %v5761
    %v7305 = vunpack.c.l.b16 %v5762
    %v7306 = vunpack.c.h.b16 %v5762
    %v7307 = vunpack.c.l.b16 %v5763
    %v7308 = vunpack.c.h.b16 %v5763
    %v7309 = vunpack.c.l.b16 %v5764
    %v7310 = vunpack.c.h.b16 %v5764
    %v7311 = vunpack.c.l.b16 %v5765
    %v7312 = vunpack.c.h.b16 %v5765
    %v7313 = vunpack.c.l.b16 %v5766
    %v7314 = vunpack.c.h.b16 %v5766
    %v7315 = vunpack.c.l.b16 %v5767
    %v7316 = vunpack.c.h.b16 %v5767
    %v7317 = vunpack.c.l.b16 %v5768
    %v7318 = vunpack.c.h.b16 %v5768
    %v7319 = vunpack.c.l.b16 %v5769
    %v7320 = vunpack.c.h.b16 %v5769
    %v7321 = vunpack.c.l.b16 %v5770
    %v7322 = vunpack.c.h.b16 %v5770
    %v7323 = vunpack.c.l.b16 %v5771
    %v7324 = vunpack.c.h.b16 %v5771
    %v7325 = vunpack.c.l.b16 %v5772
    %v7326 = vunpack.c.h.b16 %v5772
    %v7327 = vunpack.c.l.b16 %v5773
    %v7328 = vunpack.c.h.b16 %v5773
    %v7329 = vunpack.c.l.b16 %v5774
    %v7330 = vunpack.c.h.b16 %v5774
    %v7331 = vunpack.c.l.b16 %v5775
    %v7332 = vunpack.c.h.b16 %v5775
    %v7333 = vunpack.c.l.b16 %v5776
    %v7334 = vunpack.c.h.b16 %v5776
    %v7335 = vunpack.c.l.b16 %v5777
    %v7336 = vunpack.c.h.b16 %v5777
    %v7337 = vunpack.c.l.b16 %v5778
    %v7338 = vunpack.c.h.b16 %v5778
    %v7339 = vunpack.c.l.b16 %v5779
    %v7340 = vunpack.c.h.b16 %v5779
    %v7341 = vunpack.c.l.b16 %v5780
    %v7342 = vunpack.c.h.b16 %v5780
    %v7343 = vunpack.c.l.b16 %v5781
    %v7344 = vunpack.c.h.b16 %v5781
    %v7345 = vunpack.c.l.b16 %v5782
    %v7346 = vunpack.c.h.b16 %v5782
    %v7347 = vunpack.c.l.b16 %v5783
    %v7348 = vunpack.c.h.b16 %v5783
    %v7349 = vunpack.c.l.b16 %v5784
    %v7350 = vunpack.c.h.b16 %v5784
    %v7351 = vunpack.c.l.b16 %v5785
    %v7352 = vunpack.c.h.b16 %v5785
    %v7353 = vunpack.c.l.b16 %v5786
    %v7354 = vunpack.c.h.b16 %v5786
    %v7355 = vunpack.c.l.b16 %v5787
    %v7356 = vunpack.c.h.b16 %v5787
    %v7357 = vunpack.c.l.b16 %v5788
    %v7358 = vunpack.c.h.b16 %v5788
    %v7359 = vunpack.c.l.b16 %v5789
    %v7360 = vunpack.c.h.b16 %v5789
    %v7361 = vunpack.c.l.b16 %v5790
    %v7362 = vunpack.c.h.b16 %v5790
    %v7363 = vunpack.c.l.b16 %v5791
    %v7364 = vunpack.c.h.b16 %v5791
    %v7365 = vunpack.c.l.b16 %v5792
    %v7366 = vunpack.c.h.b16 %v5792
    %v7367 = vunpack.c.l.b16 %v5793
    %v7368 = vunpack.c.h.b16 %v5793
    %v7369 = vunpack.c.l.b16 %v5794
    %v7370 = vunpack.c.h.b16 %v5794
    %v7371 = vunpack.c.l.b16 %v5795
    %v7372 = vunpack.c.h.b16 %v5795
    %v7373 = vunpack.c.l.b16 %v5796
    %v7374 = vunpack.c.h.b16 %v5796
    %v7375 = vunpack.c.l.b16 %v5797
    %v7376 = vunpack.c.h.b16 %v5797
    %v7377 = vunpack.c.l.b16 %v5798
    %v7378 = vunpack.c.h.b16 %v5798
    %v7379 = vunpack.c.l.b16 %v5799
    %v7380 = vunpack.c.h.b16 %v5799
    %v7381 = vunpack.c.l.b16 %v5800
    %v7382 = vunpack.c.h.b16 %v5800
    %v7383 = vunpack.c.l.b16 %v5801
    %v7384 = vunpack.c.h.b16 %v5801
    %v7385 = vunpack.c.l.b16 %v5802
    %v7386 = vunpack.c.h.b16 %v5802
    %v7387 = vunpack.c.l.b16 %v5803
    %v7388 = vunpack.c.h.b16 %v5803
    %v7389 = vunpack.c.l.b16 %v5804
    %v7390 = vunpack.c.h.b16 %v5804
    %v7391 = vunpack.c.l.b16 %v5805
    %v7392 = vunpack.c.h.b16 %v5805
    %v7393 = vunpack.c.l.b16 %v5806
    %v7394 = vunpack.c.h.b16 %v5806
    %v7395 = vunpack.c.l.b16 %v5807
    %v7396 = vunpack.c.h.b16 %v5807
    %v7397 = vunpack.c.l.b16 %v5808
    %v7398 = vunpack.c.h.b16 %v5808
    %v7399 = vunpack.c.l.b16 %v5809
    %v7400 = vunpack.c.h.b16 %v5809
    %v7401 = vunpack.c.l.b16 %v5810
    %v7402 = vunpack.c.h.b16 %v5810
    %v7403 = vunpack.c.l.b16 %v5811
    %v7404 = vunpack.c.h.b16 %v5811
    %v7405 = vunpack.c.l.b16 %v5812
    %v7406 = vunpack.c.h.b16 %v5812
    %v7407 = vunpack.c.l.b16 %v5813
    %v7408 = vunpack.c.h.b16 %v5813
    %v7409 = vunpack.c.l.b16 %v5814
    %v7410 = vunpack.c.h.b16 %v5814
    %v7411 = vunpack.c.l.b16 %v5815
    %v7412 = vunpack.c.h.b16 %v5815
    %v7413 = vunpack.c.l.b16 %v5816
    %v7414 = vunpack.c.h.b16 %v5816
    %v7415 = vunpack.c.l.b16 %v5817
    %v7416 = vunpack.c.h.b16 %v5817
    %v7417 = vunpack.c.l.b16 %v5818
    %v7418 = vunpack.c.h.b16 %v5818
    %v7419 = vunpack.c.l.b16 %v5819
    %v7420 = vunpack.c.h.b16 %v5819
    %v7421 = vunpack.c.l.b16 %v5820
    %v7422 = vunpack.c.h.b16 %v5820
    %v7423 = vunpack.c.l.b16 %v5821
    %v7424 = vunpack.c.h.b16 %v5821
    %v7425 = vunpack.c.l.b16 %v5822
    %v7426 = vunpack.c.h.b16 %v5822
    %v7427 = vunpack.c.l.b16 %v5823
    %v7428 = vunpack.c.h.b16 %v5823
    %v7429 = vunpack.c.l.b16 %v5824
    %v7430 = vunpack.c.h.b16 %v5824
    %v7431 = vunpack.c.l.b16 %v5825
    %v7432 = vunpack.c.h.b16 %v5825
    %v7433 = vunpack.c.l.b16 %v5826
    %v7434 = vunpack.c.h.b16 %v5826
    %v7435 = vunpack.c.l.b16 %v5827
    %v7436 = vunpack.c.h.b16 %v5827
    %v7437 = vunpack.c.l.b16 %v5828
    %v7438 = vunpack.c.h.b16 %v5828
    %v7439 = vunpack.c.l.b16 %v5829
    %v7440 = vunpack.c.h.b16 %v5829
    %v7441 = vunpack.c.l.b16 %v5830
    %v7442 = vunpack.c.h.b16 %v5830
    %v7443 = vunpack.c.l.b16 %v5831
    %v7444 = vunpack.c.h.b16 %v5831
    %v7445 = vunpack.c.l.b16 %v5832
    %v7446 = vunpack.c.h.b16 %v5832
    %v7447 = vunpack.c.l.b16 %v5833
    %v7448 = vunpack.c.h.b16 %v5833
    %v7449 = vunpack.c.l.b16 %v5834
    %v7450 = vunpack.c.h.b16 %v5834
    %v7451 = vunpack.c.l.b16 %v5835
    %v7452 = vunpack.c.h.b16 %v5835
    %v7453 = vunpack.c.l.b16 %v5836
    %v7454 = vunpack.c.h.b16 %v5836
    %v7455 = vunpack.c.l.b16 %v5837
    %v7456 = vunpack.c.h.b16 %v5837
    %v7457 = vunpack.c.l.b16 %v5838
    %v7458 = vunpack.c.h.b16 %v5838
    %v7459 = vunpack.c.l.b16 %v5839
    %v7460 = vunpack.c.h.b16 %v5839
    %v7461 = vunpack.c.l.b16 %v5840
    %v7462 = vunpack.c.h.b16 %v5840
    %v7463 = vunpack.c.l.b16 %v5841
    %v7464 = vunpack.c.h.b16 %v5841
    %v7465 = vunpack.c.l.b16 %v5842
    %v7466 = vunpack.c.h.b16 %v5842
    %v7467 = vunpack.c.l.b16 %v5843
    %v7468 = vunpack.c.h.b16 %v5843
    %v7469 = vunpack.c.l.b16 %v5844
    %v7470 = vunpack.c.h.b16 %v5844
    %v7471 = vunpack.c.l.b16 %v5845
    %v7472 = vunpack.c.h.b16 %v5845
    %v7473 = vunpack.c.l.b16 %v5846
    %v7474 = vunpack.c.h.b16 %v5846
    %v7475 = vunpack.c.l.b16 %v5847
    %v7476 = vunpack.c.h.b16 %v5847
    %v7477 = vunpack.c.l.b16 %v5848
    %v7478 = vunpack.c.h.b16 %v5848
    %v7479 = vunpack.c.l.b16 %v5849
    %v7480 = vunpack.c.h.b16 %v5849
    %v7481 = vunpack.c.l.b16 %v5850
    %v7482 = vunpack.c.h.b16 %v5850
    %v7483 = vunpack.c.l.b16 %v5851
    %v7484 = vunpack.c.h.b16 %v5851
    %v7485 = vunpack.c.l.b16 %v5852
    %v7486 = vunpack.c.h.b16 %v5852
    %v7487 = vunpack.c.l.b16 %v5853
    %v7488 = vunpack.c.h.b16 %v5853
    %v7489 = vunpack.c.l.b16 %v5854
    %v7490 = vunpack.c.h.b16 %v5854
    %v7491 = vunpack.c.l.b16 %v5855
    %v7492 = vunpack.c.h.b16 %v5855
    %v7493 = vunpack.c.l.b16 %v5856
    %v7494 = vunpack.c.h.b16 %v5856
    %v7495 = vunpack.c.l.b16 %v5857
    %v7496 = vunpack.c.h.b16 %v5857
    %v7497 = vunpack.c.l.b16 %v5858
    %v7498 = vunpack.c.h.b16 %v5858
    %v7499 = vunpack.c.l.b16 %v5859
    %v7500 = vunpack.c.h.b16 %v5859
    %v7501 = vunpack.c.l.b16 %v5860
    %v7502 = vunpack.c.h.b16 %v5860
    %v7503 = vunpack.c.l.b16 %v5861
    %v7504 = vunpack.c.h.b16 %v5861
    %v7505 = vunpack.c.l.b16 %v5862
    %v7506 = vunpack.c.h.b16 %v5862
    %v7507 = vunpack.c.l.b16 %v5863
    %v7508 = vunpack.c.h.b16 %v5863
    %v7509 = vunpack.c.l.b16 %v5864
    %v7510 = vunpack.c.h.b16 %v5864
    %v7511 = vunpack.c.l.b16 %v5865
    %v7512 = vunpack.c.h.b16 %v5865
    %v7513 = vunpack.c.l.b16 %v5866
    %v7514 = vunpack.c.h.b16 %v5866
    %v7515 = vunpack.c.l.b16 %v5867
    %v7516 = vunpack.c.h.b16 %v5867
    %v7517 = vunpack.c.l.b16 %v5868
    %v7518 = vunpack.c.h.b16 %v5868
    %v7519 = vunpack.c.l.b16 %v5869
    %v7520 = vunpack.c.h.b16 %v5869
    %v7521 = vunpack.c.l.b16 %v5870
    %v7522 = vunpack.c.h.b16 %v5870
    %v7523 = vunpack.c.l.b16 %v5871
    %v7524 = vunpack.c.h.b16 %v5871
    %v7525 = vunpack.c.l.b16 %v5872
    %v7526 = vunpack.c.h.b16 %v5872
    %v7527 = vunpack.c.l.b16 %v5873
    %v7528 = vunpack.c.h.b16 %v5873
    %v7529 = vunpack.c.l.b16 %v5874
    %v7530 = vunpack.c.h.b16 %v5874
    %v7531 = vunpack.c.l.b16 %v5875
    %v7532 = vunpack.c.h.b16 %v5875
    %v7533 = vunpack.c.l.b16 %v5876
    %v7534 = vunpack.c.h.b16 %v5876
    %v7535 = vunpack.c.l.b16 %v5877
    %v7536 = vunpack.c.h.b16 %v5877
    %v7537 = vunpack.c.l.b16 %v5878
    %v7538 = vunpack.c.h.b16 %v5878
    %v7539 = vunpack.c.l.b16 %v5879
    %v7540 = vunpack.c.h.b16 %v5879
    %v7541 = vunpack.c.l.b16 %v5880
    %v7542 = vunpack.c.h.b16 %v5880
    %v7543 = vunpack.c.l.b16 %v5881
    %v7544 = vunpack.c.h.b16 %v5881
    %v7545 = vunpack.c.l.b16 %v5882
    %v7546 = vunpack.c.h.b16 %v5882
    %v7547 = vunpack.c.l.b16 %v5883
    %v7548 = vunpack.c.h.b16 %v5883
    %v7549 = vunpack.c.l.b16 %v5884
    %v7550 = vunpack.c.h.b16 %v5884
    %v7551 = vunpack.c.l.b16 %v5885
    %v7552 = vunpack.c.h.b16 %v5885
    %v7553 = vunpack.c.l.b16 %v5886
    %v7554 = vunpack.c.h.b16 %v5886
    %v7555 = vunpack.c.l.b16 %v5887
    %v7556 = vunpack.c.h.b16 %v5887
    %v7557 = vunpack.c.l.b16 %v5888
    %v7558 = vunpack.c.h.b16 %v5888
    %v7559 = vunpack.c.l.b16 %v5889
    %v7560 = vunpack.c.h.b16 %v5889
    %v7561 = vunpack.c.l.b16 %v5890
    %v7562 = vunpack.c.h.b16 %v5890
    %v7563 = vunpack.c.l.b16 %v5891
    %v7564 = vunpack.c.h.b16 %v5891
    %v7565 = vunpack.c.l.b16 %v5892
    %v7566 = vunpack.c.h.b16 %v5892
    %v7567 = vunpack.c.l.b16 %v5893
    %v7568 = vunpack.c.h.b16 %v5893
    %v7569 = vunpack.c.l.b16 %v5894
    %v7570 = vunpack.c.h.b16 %v5894
    %v7571 = vunpack.c.l.b16 %v5895
    %v7572 = vunpack.c.h.b16 %v5895
    %v7573 = vunpack.c.l.b16 %v5896
    %v7574 = vunpack.c.h.b16 %v5896
    %v7575 = vunpack.c.l.b16 %v5897
    %v7576 = vunpack.c.h.b16 %v5897
    %v7577 = vunpack.c.l.b16 %v5898
    %v7578 = vunpack.c.h.b16 %v5898
    %v7579 = vunpack.c.l.b16 %v5899
    %v7580 = vunpack.c.h.b16 %v5899
    %v7581 = vunpack.c.l.b16 %v5900
    %v7582 = vunpack.c.h.b16 %v5900
    %v7583 = vunpack.c.l.b16 %v5901
    %v7584 = vunpack.c.h.b16 %v5901
    %v7585 = vunpack.c.l.b16 %v5902
    %v7586 = vunpack.c.h.b16 %v5902
    %v7587 = vunpack.c.l.b16 %v5903
    %v7588 = vunpack.c.h.b16 %v5903
    %v7589 = vunpack.c.l.b16 %v5904
    %v7590 = vunpack.c.h.b16 %v5904
    %v7591 = vunpack.c.l.b16 %v5905
    %v7592 = vunpack.c.h.b16 %v5905
    %v7593 = vunpack.c.l.b16 %v5906
    %v7594 = vunpack.c.h.b16 %v5906
    %v7595 = vunpack.c.l.b16 %v5907
    %v7596 = vunpack.c.h.b16 %v5907
    %v7597 = vunpack.c.l.b16 %v5908
    %v7598 = vunpack.c.h.b16 %v5908
    %v7599 = vunpack.c.l.b16 %v5909
    %v7600 = vunpack.c.h.b16 %v5909
    %v7601 = vunpack.c.l.b16 %v5910
    %v7602 = vunpack.c.h.b16 %v5910
    %v7603 = vunpack.c.l.b16 %v5911
    %v7604 = vunpack.c.h.b16 %v5911
    %v7605 = vunpack.c.l.b16 %v5912
    %v7606 = vunpack.c.h.b16 %v5912
    %v7607 = vunpack.c.l.b16 %v5913
    %v7608 = vunpack.c.h.b16 %v5913
    %v7609 = vunpack.c.l.b16 %v5914
    %v7610 = vunpack.c.h.b16 %v5914
    %v7611 = vunpack.c.l.b16 %v5915
    %v7612 = vunpack.c.h.b16 %v5915
    %v7613 = vunpack.c.l.b16 %v5916
    %v7614 = vunpack.c.h.b16 %v5916
    %v7615 = vunpack.c.l.b16 %v5917
    %v7616 = vunpack.c.h.b16 %v5917
    %v7617 = vunpack.c.l.b16 %v5918
    %v7618 = vunpack.c.h.b16 %v5918
    %v7619 = vunpack.c.l.b16 %v5919
    %v7620 = vunpack.c.h.b16 %v5919
    %v7621 = vunpack.c.l.b16 %v5920
    %v7622 = vunpack.c.h.b16 %v5920
    %v7623 = vunpack.c.l.b16 %v5921
    %v7624 = vunpack.c.h.b16 %v5921
    %v7625 = vunpack.c.l.b16 %v5922
    %v7626 = vunpack.c.h.b16 %v5922
    %v7627 = vunpack.c.l.b16 %v5923
    %v7628 = vunpack.c.h.b16 %v5923
    %v7629 = vunpack.c.l.b16 %v5924
    %v7630 = vunpack.c.h.b16 %v5924
    %v7631 = vunpack.c.l.b16 %v5925
    %v7632 = vunpack.c.h.b16 %v5925
    %v7633 = vunpack.c.l.b16 %v5926
    %v7634 = vunpack.c.h.b16 %v5926
    %v7635 = vunpack.c.l.b16 %v5927
    %v7636 = vunpack.c.h.b16 %v5927
    %v7637 = vunpack.c.l.b16 %v5928
    %v7638 = vunpack.c.h.b16 %v5928
    %v7639 = vunpack.c.l.b16 %v5929
    %v7640 = vunpack.c.h.b16 %v5929
    %v7641 = vunpack.c.l.b16 %v5930
    %v7642 = vunpack.c.h.b16 %v5930
    %v7643 = vunpack.c.l.b16 %v5931
    %v7644 = vunpack.c.h.b16 %v5931
    %v7645 = vunpack.c.l.b16 %v5932
    %v7646 = vunpack.c.h.b16 %v5932
    %v7647 = vunpack.c.l.b16 %v5933
    %v7648 = vunpack.c.h.b16 %v5933
    %v7649 = vunpack.c.l.b16 %v5934
    %v7650 = vunpack.c.h.b16 %v5934
    %v7651 = vunpack.c.l.b16 %v5935
    %v7652 = vunpack.c.h.b16 %v5935
    %v7653 = vunpack.c.l.b16 %v5936
    %v7654 = vunpack.c.h.b16 %v5936
    %v7655 = vunpack.c.l.b16 %v5937
    %v7656 = vunpack.c.h.b16 %v5937
    %v7657 = vunpack.c.l.b16 %v5938
    %v7658 = vunpack.c.h.b16 %v5938
    %v7659 = vunpack.c.l.b16 %v5939
    %v7660 = vunpack.c.h.b16 %v5939
    %v7661 = vunpack.c.l.b16 %v5940
    %v7662 = vunpack.c.h.b16 %v5940
    %v7663 = vunpack.c.l.b16 %v5941
    %v7664 = vunpack.c.h.b16 %v5941
    %v7665 = vunpack.c.l.b16 %v5942
    %v7666 = vunpack.c.h.b16 %v5942
    %v7667 = vunpack.c.l.b16 %v5943
    %v7668 = vunpack.c.h.b16 %v5943
    %v7669 = vunpack.c.l.b16 %v5944
    %v7670 = vunpack.c.h.b16 %v5944
    %v7671 = vunpack.c.l.b16 %v5945
    %v7672 = vunpack.c.h.b16 %v5945
    %v7673 = vunpack.c.l.b16 %v5946
    %v7674 = vunpack.c.h.b16 %v5946
    %v7675 = vunpack.c.l.b16 %v5947
    %v7676 = vunpack.c.h.b16 %v5947
    %v7677 = vunpack.c.l.b16 %v5948
    %v7678 = vunpack.c.h.b16 %v5948
    %v7679 = vunpack.c.l.b16 %v5949
    %v7680 = vunpack.c.h.b16 %v5949
    %v7681 = vunpack.c.l.b16 %v5950
    %v7682 = vunpack.c.h.b16 %v5950
    %v7683 = vunpack.c.l.b16 %v5951
    %v7684 = vunpack.c.h.b16 %v5951
    %v7685 = vunpack.c.l.b16 %v5952
    %v7686 = vunpack.c.h.b16 %v5952
    %v7687 = vunpack.c.l.b16 %v5953
    %v7688 = vunpack.c.h.b16 %v5953
    %v7689 = vunpack.c.l.b16 %v5954
    %v7690 = vunpack.c.h.b16 %v5954
    %v7691 = vunpack.c.l.b16 %v5955
    %v7692 = vunpack.c.h.b16 %v5955
    %v7693 = vunpack.c.l.b16 %v5956
    %v7694 = vunpack.c.h.b16 %v5956
    %v7695 = vunpack.c.l.b16 %v5957
    %v7696 = vunpack.c.h.b16 %v5957
    %v7697 = vunpack.c.l.b16 %v5958
    %v7698 = vunpack.c.h.b16 %v5958
    %v7699 = vunpack.c.l.b16 %v5959
    %v7700 = vunpack.c.h.b16 %v5959
    %v7701 = vunpack.c.l.b16 %v5960
    %v7702 = vunpack.c.h.b16 %v5960
    %v7703 = vunpack.c.l.b16 %v5961
    %v7704 = vunpack.c.h.b16 %v5961
    %v7705 = vunpack.c.l.b16 %v5962
    %v7706 = vunpack.c.h.b16 %v5962
    %v7707 = vunpack.c.l.b16 %v5963
    %v7708 = vunpack.c.h.b16 %v5963
    %v7709 = vunpack.c.l.b16 %v5964
    %v7710 = vunpack.c.h.b16 %v5964
    %v7711 = vunpack.c.l.b16 %v5965
    %v7712 = vunpack.c.h.b16 %v5965
    %v7713 = vunpack.c.l.b16 %v5966
    %v7714 = vunpack.c.h.b16 %v5966
    %v7715 = vunpack.c.l.b16 %v5967
    %v7716 = vunpack.c.h.b16 %v5967
    %v7717 = vunpack.c.l.b16 %v5968
    %v7718 = vunpack.c.h.b16 %v5968
    %v7719 = vunpack.c.l.b16 %v5969
    %v7720 = vunpack.c.h.b16 %v5969
    %v7721 = vunpack.c.l.b16 %v5970
    %v7722 = vunpack.c.h.b16 %v5970
    %v7723 = vunpack.c.l.b16 %v5971
    %v7724 = vunpack.c.h.b16 %v5971
    %v7725 = vunpack.c.l.b16 %v5972
    %v7726 = vunpack.c.h.b16 %v5972
    %v7727 = vunpack.c.l.b16 %v5973
    %v7728 = vunpack.c.h.b16 %v5973
    %v7729 = vunpack.c.l.b16 %v5974
    %v7730 = vunpack.c.h.b16 %v5974
    %v7731 = vunpack.c.l.b16 %v5975
    %v7732 = vunpack.c.h.b16 %v5975
    %v7733 = vunpack.c.l.b16 %v5976
    %v7734 = vunpack.c.h.b16 %v5976
    %v7735 = vunpack.c.l.b16 %v5977
    %v7736 = vunpack.c.h.b16 %v5977
    %v7737 = vunpack.c.l.b16 %v5978
    %v7738 = vunpack.c.h.b16 %v5978
    %v7739 = vunpack.c.l.b16 %v5979
    %v7740 = vunpack.c.h.b16 %v5979
    %v7741 = vunpack.c.l.b16 %v5980
    %v7742 = vunpack.c.h.b16 %v5980
    %v7743 = vunpack.c.l.b16 %v5981
    %v7744 = vunpack.c.h.b16 %v5981
    %v7745 = vunpack.c.l.b16 %v5982
    %v7746 = vunpack.c.h.b16 %v5982
    %v7747 = vunpack.c.l.b16 %v5983
    %v7748 = vunpack.c.h.b16 %v5983
    %v7749 = vunpack.c.l.b16 %v5984
    %v7750 = vunpack.c.h.b16 %v5984
    %v7751 = vunpack.c.l.b16 %v5985
    %v7752 = vunpack.c.h.b16 %v5985
    %v7753 = vunpack.c.l.b16 %v5986
    %v7754 = vunpack.c.h.b16 %v5986
    %v7755 = vunpack.c.l.b16 %v5987
    %v7756 = vunpack.c.h.b16 %v5987
    %v7757 = vunpack.c.l.b16 %v5988
    %v7758 = vunpack.c.h.b16 %v5988
    %v7759 = vunpack.c.l.b16 %v5989
    %v7760 = vunpack.c.h.b16 %v5989
    %v7761 = vunpack.c.l.b16 %v5990
    %v7762 = vunpack.c.h.b16 %v5990
    %v7763 = vunpack.c.l.b16 %v5991
    %v7764 = vunpack.c.h.b16 %v5991
    %v7765 = vunpack.c.l.b16 %v5992
    %v7766 = vunpack.c.h.b16 %v5992
    %v7767 = vunpack.c.l.b16 %v5993
    %v7768 = vunpack.c.h.b16 %v5993
    %v7769 = vunpack.c.l.b16 %v5994
    %v7770 = vunpack.c.h.b16 %v5994
    %v7771 = vunpack.c.l.b16 %v5995
    %v7772 = vunpack.c.h.b16 %v5995
    %v7773 = vunpack.c.l.b16 %v5996
    %v7774 = vunpack.c.h.b16 %v5996
    %v7775 = vunpack.c.l.b16 %v5997
    %v7776 = vunpack.c.h.b16 %v5997
    %v7777 = vunpack.c.l.b16 %v5998
    %v7778 = vunpack.c.h.b16 %v5998
    %v7779 = vunpack.c.l.b16 %v5999
    %v7780 = vunpack.c.h.b16 %v5999
    %v7781 = vunpack.c.l.b16 %v6000
    %v7782 = vunpack.c.h.b16 %v6000
    %v7783 = vunpack.c.l.b16 %v6001
    %v7784 = vunpack.c.h.b16 %v6001
    %v7785 = vunpack.c.l.b16 %v6002
    %v7786 = vunpack.c.h.b16 %v6002
    %v7787 = vunpack.c.l.b16 %v6003
    %v7788 = vunpack.c.h.b16 %v6003
    %v7789 = vunpack.c.l.b16 %v6004
    %v7790 = vunpack.c.h.b16 %v6004
    %v7791 = vunpack.c.l.b16 %v6005
    %v7792 = vunpack.c.h.b16 %v6005
    %v7793 = vunpack.c.l.b16 %v6006
    %v7794 = vunpack.c.h.b16 %v6006
    %v7795 = vunpack.c.l.b16 %v6007
    %v7796 = vunpack.c.h.b16 %v6007
    %v7797 = vunpack.c.l.b16 %v6008
    %v7798 = vunpack.c.h.b16 %v6008
    %v7799 = vunpack.c.l.b16 %v6009
    %v7800 = vunpack.c.h.b16 %v6009
    %v7801 = vunpack.c.l.b16 %v6010
    %v7802 = vunpack.c.h.b16 %v6010
    %v7803 = vunpack.c.l.b16 %v6011
    %v7804 = vunpack.c.h.b16 %v6011
    %v7805 = vunpack.c.l.b16 %v6012
    %v7806 = vunpack.c.h.b16 %v6012
    %v7807 = vunpack.c.l.b16 %v6013
    %v7808 = vunpack.c.h.b16 %v6013
    %v7809 = vunpack.c.l.b16 %v6014
    %v7810 = vunpack.c.h.b16 %v6014
    %v7811 = vunpack.c.l.b16 %v6015
    %v7812 = vunpack.c.h.b16 %v6015
    %v7813 = vunpack.c.l.b16 %v6016
    %v7814 = vunpack.c.h.b16 %v6016
    %v7815 = vunpack.c.l.b16 %v6017
    %v7816 = vunpack.c.h.b16 %v6017
    %v7817 = vunpack.c.l.b16 %v6018
    %v7818 = vunpack.c.h.b16 %v6018
    %v7819 = vunpack.c.l.b16 %v6019
    %v7820 = vunpack.c.h.b16 %v6019
    %v7821 = vunpack.c.l.b16 %v6020
    %v7822 = vunpack.c.h.b16 %v6020
    %v7823 = vunpack.c.l.b16 %v6021
    %v7824 = vunpack.c.h.b16 %v6021
    %v7825 = vunpack.c.l.b16 %v6022
    %v7826 = vunpack.c.h.b16 %v6022
    %v7827 = vunpack.c.l.b16 %v6023
    %v7828 = vunpack.c.h.b16 %v6023
    %v7829 = vunpack.c.l.b16 %v6024
    %v7830 = vunpack.c.h.b16 %v6024
    %v7831 = vunpack.c.l.b16 %v6025
    %v7832 = vunpack.c.h.b16 %v6025
    %v7833 = vunpack.c.l.b16 %v6026
    %v7834 = vunpack.c.h.b16 %v6026
    %v7835 = vunpack.c.l.b16 %v6027
    %v7836 = vunpack.c.h.b16 %v6027
    %v7837 = vunpack.c.l.b16 %v6028
    %v7838 = vunpack.c.h.b16 %v6028
    %v7839 = vunpack.c.l.b16 %v6029
    %v7840 = vunpack.c.h.b16 %v6029
    %v7841 = vunpack.c.l.b16 %v6030
    %v7842 = vunpack.c.h.b16 %v6030
    %v7843 = vunpack.c.l.b16 %v6031
    %v7844 = vunpack.c.h.b16 %v6031
    %v7845 = vunpack.c.l.b16 %v6032
    %v7846 = vunpack.c.h.b16 %v6032
    %v7847 = vunpack.c.l.b16 %v6033
    %v7848 = vunpack.c.h.b16 %v6033
    %v7849 = vunpack.c.l.b16 %v6034
    %v7850 = vunpack.c.h.b16 %v6034
    %v7851 = vunpack.c.l.b16 %v6035
    %v7852 = vunpack.c.h.b16 %v6035
    %v7853 = vunpack.c.l.b16 %v6036
    %v7854 = vunpack.c.h.b16 %v6036
    %v7855 = vunpack.c.l.b16 %v6037
    %v7856 = vunpack.c.h.b16 %v6037
    %v7857 = vunpack.c.l.b16 %v6038
    %v7858 = vunpack.c.h.b16 %v6038
    %v7859 = vunpack.c.l.b16 %v6039
    %v7860 = vunpack.c.h.b16 %v6039
    %v7861 = vunpack.c.l.b16 %v6040
    %v7862 = vunpack.c.h.b16 %v6040
    %v7863 = vunpack.c.l.b16 %v6041
    %v7864 = vunpack.c.h.b16 %v6041
    %v7865 = vunpack.c.l.b16 %v6042
    %v7866 = vunpack.c.h.b16 %v6042
    %v7867 = vunpack.c.l.b16 %v6043
    %v7868 = vunpack.c.h.b16 %v6043
    %v7869 = vunpack.c.l.b16 %v6044
    %v7870 = vunpack.c.h.b16 %v6044
    %v7871 = vunpack.c.l.b16 %v6045
    %v7872 = vunpack.c.h.b16 %v6045
    %v7873 = vunpack.c.l.b16 %v6046
    %v7874 = vunpack.c.h.b16 %v6046
    %v7875 = vunpack.c.l.b16 %v6047
    %v7876 = vunpack.c.h.b16 %v6047
    %v7877 = vunpack.c.l.b16 %v6048
    %v7878 = vunpack.c.h.b16 %v6048
    %v7879 = vunpack.c.l.b16 %v6049
    %v7880 = vunpack.c.h.b16 %v6049
    %v7881 = vunpack.c.l.b16 %v6050
    %v7882 = vunpack.c.h.b16 %v6050
    %v7883 = vunpack.c.l.b16 %v6051
    %v7884 = vunpack.c.h.b16 %v6051
    %v7885 = vunpack.c.l.b16 %v6052
    %v7886 = vunpack.c.h.b16 %v6052
    %v7887 = vunpack.c.l.b16 %v6053
    %v7888 = vunpack.c.h.b16 %v6053
    %v7889 = vunpack.c.l.b16 %v6054
    %v7890 = vunpack.c.h.b16 %v6054
    %v7891 = vunpack.c.l.b16 %v6055
    %v7892 = vunpack.c.h.b16 %v6055
    %v7893 = vunpack.c.l.b16 %v6056
    %v7894 = vunpack.c.h.b16 %v6056
    %v7895 = vunpack.c.l.b16 %v6057
    %v7896 = vunpack.c.h.b16 %v6057
    %v7897 = vunpack.c.l.b16 %v6058
    %v7898 = vunpack.c.h.b16 %v6058
    %v7899 = vunpack.c.l.b16 %v6059
    %v7900 = vunpack.c.h.b16 %v6059
    %v7901 = vunpack.c.l.b16 %v6060
    %v7902 = vunpack.c.h.b16 %v6060
    %v7903 = vunpack.c.l.b16 %v6061
    %v7904 = vunpack.c.h.b16 %v6061
    %v7905 = vunpack.c.l.b16 %v6062
    %v7906 = vunpack.c.h.b16 %v6062
    %v7907 = vunpack.c.l.b16 %v6063
    %v7908 = vunpack.c.h.b16 %v6063
    %v7909 = vunpack.c.l.b16 %v6064
    %v7910 = vunpack.c.h.b16 %v6064
    %v7911 = vunpack.c.l.b16 %v6065
    %v7912 = vunpack.c.h.b16 %v6065
    %v7913 = vunpack.c.l.b16 %v6066
    %v7914 = vunpack.c.h.b16 %v6066
    %v7915 = vunpack.c.l.b16 %v6067
    %v7916 = vunpack.c.h.b16 %v6067
    %v7917 = vunpack.c.l.b16 %v6068
    %v7918 = vunpack.c.h.b16 %v6068
    %v7919 = vunpack.c.l.b16 %v6069
    %v7920 = vunpack.c.h.b16 %v6069
    %v7921 = vunpack.c.l.b16 %v6070
    %v7922 = vunpack.c.h.b16 %v6070
    %v7923 = vunpack.c.l.b16 %v6071
    %v7924 = vunpack.c.h.b16 %v6071
    %v7925 = vunpack.c.l.b16 %v6072
    %v7926 = vunpack.c.h.b16 %v6072
    %v7927 = vunpack.c.l.b16 %v6073
    %v7928 = vunpack.c.h.b16 %v6073
    %v7929 = vunpack.c.l.b16 %v6074
    %v7930 = vunpack.c.h.b16 %v6074
    %v7931 = vunpack.c.l.b16 %v6075
    %v7932 = vunpack.c.h.b16 %v6075
    %v7933 = vunpack.c.l.b16 %v6076
    %v7934 = vunpack.c.h.b16 %v6076
    %v7935 = vunpack.c.l.b16 %v6077
    %v7936 = vunpack.c.h.b16 %v6077
    %v7937 = vunpack.c.l.b16 %v6078
    %v7938 = vunpack.c.h.b16 %v6078
    %v7939 = vunpack.c.l.b16 %v6079
    %v7940 = vunpack.c.h.b16 %v6079
    %v7941 = vunpack.c.l.b16 %v6080
    %v7942 = vunpack.c.h.b16 %v6080
    %v7943 = vunpack.c.l.b16 %v6081
    %v7944 = vunpack.c.h.b16 %v6081
    %v7945 = vunpack.c.l.b16 %v6082
    %v7946 = vunpack.c.h.b16 %v6082
    %v7947 = vunpack.c.l.b16 %v6083
    %v7948 = vunpack.c.h.b16 %v6083
    %v7949 = vunpack.c.l.b16 %v6084
    %v7950 = vunpack.c.h.b16 %v6084
    %v7951 = vunpack.c.l.b16 %v6085
    %v7952 = vunpack.c.h.b16 %v6085
    %v7953 = vunpack.c.l.b16 %v6086
    %v7954 = vunpack.c.h.b16 %v6086
    %v7955 = vunpack.c.l.b16 %v6087
    %v7956 = vunpack.c.h.b16 %v6087
    %v7957 = vunpack.c.l.b16 %v6088
    %v7958 = vunpack.c.h.b16 %v6088
    %v7959 = vunpack.c.l.b16 %v6089
    %v7960 = vunpack.c.h.b16 %v6089
    %v7961 = vunpack.c.l.b16 %v6090
    %v7962 = vunpack.c.h.b16 %v6090
    %v7963 = vunpack.c.l.b16 %v6091
    %v7964 = vunpack.c.h.b16 %v6091
    %v7965 = vunpack.c.l.b16 %v6092
    %v7966 = vunpack.c.h.b16 %v6092
    %v7967 = vunpack.c.l.b16 %v6093
    %v7968 = vunpack.c.h.b16 %v6093
    %v7969 = vunpack.c.l.b16 %v6094
    %v7970 = vunpack.c.h.b16 %v6094
    %v7971 = vunpack.c.l.b16 %v6095
    %v7972 = vunpack.c.h.b16 %v6095
    %v7973 = vunpack.c.l.b16 %v6096
    %v7974 = vunpack.c.h.b16 %v6096
    %v7975 = vunpack.c.l.b16 %v6097
    %v7976 = vunpack.c.h.b16 %v6097
    %v7977 = vunpack.c.l.b16 %v6098
    %v7978 = vunpack.c.h.b16 %v6098
    %v7979 = vunpack.c.l.b16 %v6099
    %v7980 = vunpack.c.h.b16 %v6099
    %v7981 = vunpack.c.l.b16 %v6100
    %v7982 = vunpack.c.h.b16 %v6100
    %v7983 = vunpack.c.l.b16 %v6101
    %v7984 = vunpack.c.h.b16 %v6101
    %v7985 = vunpack.c.l.b16 %v6102
    %v7986 = vunpack.c.h.b16 %v6102
    %v7987 = vunpack.c.l.b16 %v6103
    %v7988 = vunpack.c.h.b16 %v6103
    %v7989 = vunpack.c.l.b16 %v6104
    %v7990 = vunpack.c.h.b16 %v6104
    %v7991 = vunpack.c.l.b16 %v6105
    %v7992 = vunpack.c.h.b16 %v6105
    %v7993 = vunpack.c.l.b16 %v6106
    %v7994 = vunpack.c.h.b16 %v6106
    %v7995 = vunpack.c.l.b16 %v6107
    %v7996 = vunpack.c.h.b16 %v6107
    %v7997 = vunpack.c.l.b16 %v6108
    %v7998 = vunpack.c.h.b16 %v6108
    %v7999 = vunpack.c.l.b16 %v6109
    %v8000 = vunpack.c.h.b16 %v6109
    %v8001 = vunpack.c.l.b16 %v6110
    %v8002 = vunpack.c.h.b16 %v6110
    %v8003 = vunpack.c.l.b16 %v6111
    %v8004 = vunpack.c.h.b16 %v6111
    %v8005 = vunpack.c.l.b16 %v6112
    %v8006 = vunpack.c.h.b16 %v6112
    %v8007 = vunpack.c.l.b16 %v6113
    %v8008 = vunpack.c.h.b16 %v6113
    %v8009 = vunpack.c.l.b16 %v6114
    %v8010 = vunpack.c.h.b16 %v6114
    %v8011 = vunpack.c.l.b16 %v6115
    %v8012 = vunpack.c.h.b16 %v6115
    %v8013 = vunpack.c.l.b16 %v6116
    %v8014 = vunpack.c.h.b16 %v6116
    %v8015 = vunpack.c.l.b16 %v6117
    %v8016 = vunpack.c.h.b16 %v6117
    %v8017 = vunpack.c.l.b16 %v6118
    %v8018 = vunpack.c.h.b16 %v6118
    %v8019 = vunpack.c.l.b16 %v6119
    %v8020 = vunpack.c.h.b16 %v6119
    %v8021 = vunpack.c.l.b16 %v6120
    %v8022 = vunpack.c.h.b16 %v6120
    %v8023 = vunpack.c.l.b16 %v6121
    %v8024 = vunpack.c.h.b16 %v6121
    %v8025 = vunpack.c.l.b16 %v6122
    %v8026 = vunpack.c.h.b16 %v6122
    %v8027 = vunpack.c.l.b16 %v6123
    %v8028 = vunpack.c.h.b16 %v6123
    %v8029 = vunpack.c.l.b16 %v6124
    %v8030 = vunpack.c.h.b16 %v6124
    %v8031 = vunpack.c.l.b16 %v6125
    %v8032 = vunpack.c.h.b16 %v6125
    %v8033 = vunpack.c.l.b16 %v6126
    %v8034 = vunpack.c.h.b16 %v6126
    %v8035 = vunpack.c.l.b16 %v6127
    %v8036 = vunpack.c.h.b16 %v6127
    %v8037 = vunpack.c.l.b16 %v6128
    %v8038 = vunpack.c.h.b16 %v6128
    %v8039 = vunpack.c.l.b16 %v6129
    %v8040 = vunpack.c.h.b16 %v6129
    %v8041 = vunpack.c.l.b16 %v6130
    %v8042 = vunpack.c.h.b16 %v6130
    %v8043 = vunpack.c.l.b16 %v6131
    %v8044 = vunpack.c.h.b16 %v6131
    %v8045 = vunpack.c.l.b16 %v6132
    %v8046 = vunpack.c.h.b16 %v6132
    %v8047 = vunpack.c.l.b16 %v6133
    %v8048 = vunpack.c.h.b16 %v6133
    %v8049 = vunpack.c.l.b16 %v6134
    %v8050 = vunpack.c.h.b16 %v6134
    %v8051 = vunpack.c.l.b16 %v6135
    %v8052 = vunpack.c.h.b16 %v6135
    %v8053 = vunpack.c.l.b16 %v6136
    %v8054 = vunpack.c.h.b16 %v6136
    %v8055 = vunpack.c.l.b16 %v6137
    %v8056 = vunpack.c.h.b16 %v6137
    %v8057 = vunpack.c.l.b16 %v6138
    %v8058 = vunpack.c.h.b16 %v6138
    %v8059 = vunpack.c.l.b16 %v6139
    %v8060 = vunpack.c.h.b16 %v6139
    %v8061 = vunpack.c.l.b16 %v6140
    %v8062 = vunpack.c.h.b16 %v6140
    %v8063 = vunpack.c.l.b16 %v6141
    %v8064 = vunpack.c.h.b16 %v6141
    %v8065 = vunpack.c.l.b16 %v6142
    %v8066 = vunpack.c.h.b16 %v6142
    %v8067 = vunpack.c.l.b16 %v6143
    %v8068 = vunpack.c.h.b16 %v6143
    %v8069 = vunpack.c.l.b16 %v6144
    %v8070 = vunpack.c.h.b16 %v6144
    %v8071 = vunpack.c.l.b16 %v6145
    %v8072 = vunpack.c.h.b16 %v6145
    %v8073 = vunpack.c.l.b16 %v6146
    %v8074 = vunpack.c.h.b16 %v6146
    %v8075 = vunpack.c.l.b16 %v6147
    %v8076 = vunpack.c.h.b16 %v6147
    %v8077 = vunpack.c.l.b16 %v6148
    %v8078 = vunpack.c.h.b16 %v6148
    %v8079 = vunpack.c.l.b16 %v6149
    %v8080 = vunpack.c.h.b16 %v6149
    %v8081 = vunpack.c.l.b16 %v6150
    %v8082 = vunpack.c.h.b16 %v6150
    %v8083 = vunpack.c.l.b16 %v6151
    %v8084 = vunpack.c.h.b16 %v6151
    %v8085 = vunpack.c.l.b16 %v6152
    %v8086 = vunpack.c.h.b16 %v6152
    %v8087 = vunpack.c.l.b16 %v6153
    %v8088 = vunpack.c.h.b16 %v6153
    %v8089 = vunpack.c.l.b16 %v6154
    %v8090 = vunpack.c.h.b16 %v6154
    %v8091 = vunpack.c.l.b16 %v6155
    %v8092 = vunpack.c.h.b16 %v6155
    %v8093 = vunpack.c.l.b16 %v6156
    %v8094 = vunpack.c.h.b16 %v6156
    %v8095 = vunpack.c.l.b16 %v6157
    %v8096 = vunpack.c.h.b16 %v6157
    %v8097 = vunpack.c.l.b16 %v6158
    %v8098 = vunpack.c.h.b16 %v6158
    %v8099 = vunpack.c.l.b16 %v6159
    %v8100 = vunpack.c.h.b16 %v6159
    %v8101 = vunpack.c.l.b16 %v6160
    %v8102 = vunpack.c.h.b16 %v6160
    %v8103 = vunpack.c.l.b16 %v6161
    %v8104 = vunpack.c.h.b16 %v6161
    %v8105 = vunpack.c.l.b16 %v6162
    %v8106 = vunpack.c.h.b16 %v6162
    %v8107 = vunpack.c.l.b16 %v6163
    %v8108 = vunpack.c.h.b16 %v6163
    %v8109 = vunpack.c.l.b16 %v6164
    %v8110 = vunpack.c.h.b16 %v6164
    %v8111 = vunpack.c.l.b16 %v6165
    %v8112 = vunpack.c.h.b16 %v6165
    %v8113 = vunpack.c.l.b16 %v6166
    %v8114 = vunpack.c.h.b16 %v6166
    %v8115 = vunpack.c.l.b16 %v6167
    %v8116 = vunpack.c.h.b16 %v6167
    %v8117 = vunpack.c.l.b16 %v6168
    %v8118 = vunpack.c.h.b16 %v6168
    %v8119 = vunpack.c.l.b16 %v6169
    %v8120 = vunpack.c.h.b16 %v6169
    %v8121 = vunpack.c.l.b16 %v6170
    %v8122 = vunpack.c.h.b16 %v6170
    %v8123 = vunpack.c.l.b16 %v6171
    %v8124 = vunpack.c.h.b16 %v6171
    %v8125 = vunpack.c.l.b16 %v6172
    %v8126 = vunpack.c.h.b16 %v6172
    %v8127 = vunpack.c.l.b16 %v6173
    %v8128 = vunpack.c.h.b16 %v6173
    %v8129 = vunpack.c.l.b16 %v6174
    %v8130 = vunpack.c.h.b16 %v6174
    %v8131 = vunpack.c.l.b16 %v6175
    %v8132 = vunpack.c.h.b16 %v6175
    %v8133 = vunpack.c.l.b16 %v6176
    %v8134 = vunpack.c.h.b16 %v6176
    %v8135 = vunpack.c.l.b16 %v6177
    %v8136 = vunpack.c.h.b16 %v6177
    %v8137 = vunpack.c.l.b16 %v6178
    %v8138 = vunpack.c.h.b16 %v6178
    %v8139 = vunpack.c.l.b16 %v6179
    %v8140 = vunpack.c.h.b16 %v6179
    %v8141 = vunpack.c.l.b16 %v6180
    %v8142 = vunpack.c.h.b16 %v6180
    %v8143 = vunpack.c.l.b16 %v6181
    %v8144 = vunpack.c.h.b16 %v6181
    %v8145 = vunpack.c.l.b16 %v6182
    %v8146 = vunpack.c.h.b16 %v6182
    %v8147 = vunpack.c.l.b16 %v6183
    %v8148 = vunpack.c.h.b16 %v6183
    %v8149 = vunpack.c.l.b16 %v6184
    %v8150 = vunpack.c.h.b16 %v6184
    %v8151 = vunpack.c.l.b16 %v6185
    %v8152 = vunpack.c.h.b16 %v6185
    %v8153 = vunpack.c.l.b16 %v6186
    %v8154 = vunpack.c.h.b16 %v6186
    %v8155 = vunpack.c.l.b16 %v6187
    %v8156 = vunpack.c.h.b16 %v6187
    %v8157 = vunpack.c.l.b16 %v6188
    %v8158 = vunpack.c.h.b16 %v6188
    %v8159 = vunpack.c.l.b16 %v6189
    %v8160 = vunpack.c.h.b16 %v6189
    %v8161 = vunpack.c.l.b16 %v6190
    %v8162 = vunpack.c.h.b16 %v6190
    %v8163 = vunpack.c.l.b16 %v6191
    %v8164 = vunpack.c.h.b16 %v6191
    %v8165 = vunpack.c.l.b16 %v6192
    %v8166 = vunpack.c.h.b16 %v6192
    %v8167 = vunpack.c.l.b16 %v6193
    %v8168 = vunpack.c.h.b16 %v6193
    %v8169 = vunpack.c.l.b16 %v6194
    %v8170 = vunpack.c.h.b16 %v6194
    %v8171 = vunpack.c.l.b16 %v6195
    %v8172 = vunpack.c.h.b16 %v6195
    %v8173 = vunpack.c.l.b16 %v6196
    %v8174 = vunpack.c.h.b16 %v6196
    %v8175 = vunpack.c.l.b16 %v6197
    %v8176 = vunpack.c.h.b16 %v6197
    %v8177 = vunpack.c.l.b16 %v6198
    %v8178 = vunpack.c.h.b16 %v6198
    %v8179 = vunpack.c.l.b16 %v6199
    %v8180 = vunpack.c.h.b16 %v6199
    %v8181 = vunpack.c.l.b16 %v6200
    %v8182 = vunpack.c.h.b16 %v6200
    %v8183 = vunpack.c.l.b16 %v6201
    %v8184 = vunpack.c.h.b16 %v6201
    %v8185 = vunpack.c.l.b16 %v6202
    %v8186 = vunpack.c.h.b16 %v6202
    %v8187 = vunpack.c.l.b16 %v6203
    %v8188 = vunpack.c.h.b16 %v6203
    %v8189 = vunpack.c.l.b16 %v6204
    %v8190 = vunpack.c.h.b16 %v6204
    %v8191 = vunpack.c.l.b16 %v6205
    %v8192 = vunpack.c.h.b16 %v6205
    %v8193 = vunpack.c.l.b16 %v6206
    %v8194 = vunpack.c.h.b16 %v6206
    %v8195 = vunpack.c.l.b16 %v6207
    %v8196 = vunpack.c.h.b16 %v6207
    %v8197 = vunpack.c.l.b16 %v6208
    %v8198 = vunpack.c.h.b16 %v6208
    %v8199 = vunpack.c.l.b16 %v6209
    %v8200 = vunpack.c.h.b16 %v6209
    %v8201 = vunpack.c.l.b16 %v6210
    %v8202 = vunpack.c.h.b16 %v6210
    %v8203 = vunpack.c.l.b16 %v6211
    %v8204 = vunpack.c.h.b16 %v6211
    %v8205 = vunpack.c.l.b16 %v6212
    %v8206 = vunpack.c.h.b16 %v6212
    %v8207 = vunpack.c.l.b16 %v6213
    %v8208 = vunpack.c.h.b16 %v6213
    %v8209 = vunpack.c.l.b16 %v6214
    %v8210 = vunpack.c.h.b16 %v6214
    %v8211 = vunpack.c.l.b16 %v6215
    %v8212 = vunpack.c.h.b16 %v6215
    %v8213 = vunpack.c.l.b16 %v6216
    %v8214 = vunpack.c.h.b16 %v6216
    %v8215 = vunpack.c.l.b16 %v6217
    %v8216 = vunpack.c.h.b16 %v6217
    %v8217 = vunpack.c.l.b16 %v6218
    %v8218 = vunpack.c.h.b16 %v6218
    %v8219 = vunpack.c.l.b16 %v6219
    %v8220 = vunpack.c.h.b16 %v6219
    %v8221 = vunpack.c.l.b16 %v6220
    %v8222 = vunpack.c.h.b16 %v6220
    %v8223 = vunpack.c.l.b16 %v6221
    %v8224 = vunpack.c.h.b16 %v6221
    %v8225 = vunpack.c.l.b16 %v6222
    %v8226 = vunpack.c.h.b16 %v6222
    %v8227 = vunpack.c.l.b16 %v6223
    %v8228 = vunpack.c.h.b16 %v6223
    %v8229 = vunpack.c.l.b16 %v6224
    %v8230 = vunpack.c.h.b16 %v6224
    %v8231 = vunpack.c.l.b16 %v6225
    %v8232 = vunpack.c.h.b16 %v6225
    %v8233 = vunpack.c.l.b16 %v6226
    %v8234 = vunpack.c.h.b16 %v6226
    %v8235 = vunpack.c.l.b16 %v6227
    %v8236 = vunpack.c.h.b16 %v6227
    %v8237 = vunpack.c.l.b16 %v6228
    %v8238 = vunpack.c.h.b16 %v6228
    %v8239 = vunpack.c.l.b16 %v6229
    %v8240 = vunpack.c.h.b16 %v6229
    %v8241 = vunpack.c.l.b16 %v6230
    %v8242 = vunpack.c.h.b16 %v6230
    %v8243 = vunpack.c.l.b16 %v6231
    %v8244 = vunpack.c.h.b16 %v6231
    %v8245 = vunpack.c.l.b16 %v6232
    %v8246 = vunpack.c.h.b16 %v6232
    %v8247 = vunpack.c.l.b16 %v6233
    %v8248 = vunpack.c.h.b16 %v6233
    %v8249 = vunpack.c.l.b16 %v6234
    %v8250 = vunpack.c.h.b16 %v6234
    %v8251 = vunpack.c.l.b16 %v6235
    %v8252 = vunpack.c.h.b16 %v6235
    %v8253 = vunpack.c.l.b16 %v6236
    %v8254 = vunpack.c.h.b16 %v6236
    %v8255 = vunpack.c.l.b16 %v6237
    %v8256 = vunpack.c.h.b16 %v6237
    %v8257 = vunpack.c.l.b16 %v6238
    %v8258 = vunpack.c.h.b16 %v6238
    %v8259 = vunpack.c.l.b16 %v6239
    %v8260 = vunpack.c.h.b16 %v6239
    %v8261 = vunpack.c.l.b16 %v6240
    %v8262 = vunpack.c.h.b16 %v6240
    %v8263 = vunpack.c.l.b16 %v6241
    %v8264 = vunpack.c.h.b16 %v6241
    %v8265 = vunpack.c.l.b16 %v6242
    %v8266 = vunpack.c.h.b16 %v6242
    %v8267 = vunpack.c.l.b16 %v6243
    %v8268 = vunpack.c.h.b16 %v6243
    %v8269 = vunpack.c.l.b16 %v6244
    %v8270 = vunpack.c.h.b16 %v6244
    %v8271 = vunpack.c.l.b16 %v6245
    %v8272 = vunpack.c.h.b16 %v6245
    %v8273 = vunpack.c.l.b16 %v6246
    %v8274 = vunpack.c.h.b16 %v6246
    %v8275 = vunpack.c.l.b16 %v6247
    %v8276 = vunpack.c.h.b16 %v6247
    %v8277 = vunpack.c.l.b16 %v6248
    %v8278 = vunpack.c.h.b16 %v6248
    %v8279 = vunpack.c.l.b16 %v6249
    %v8280 = vunpack.c.h.b16 %v6249
    %v8281 = vunpack.c.l.b16 %v6250
    %v8282 = vunpack.c.h.b16 %v6250
    %v8283 = vunpack.c.l.b16 %v6251
    %v8284 = vunpack.c.h.b16 %v6251
    %v8285 = vunpack.c.l.b16 %v6252
    %v8286 = vunpack.c.h.b16 %v6252
    %v8287 = vunpack.c.l.b16 %v6253
    %v8288 = vunpack.c.h.b16 %v6253
    %v8289 = vunpack.c.l.b16 %v6254
    %v8290 = vunpack.c.h.b16 %v6254
    %v8291 = vunpack.c.l.b16 %v6255
    %v8292 = vunpack.c.h.b16 %v6255
    %v8293 = vunpack.c.l.b16 %v6256
    %v8294 = vunpack.c.h.b16 %v6256
    %v8295 = vunpack.c.l.b16 %v6257
    %v8296 = vunpack.c.h.b16 %v6257
    %v8297 = vunpack.c.l.b16 %v6258
    %v8298 = vunpack.c.h.b16 %v6258
    %v8299 = vunpack.c.l.b16 %v6259
    %v8300 = vunpack.c.h.b16 %v6259
    %v8301 = vunpack.c.l.b16 %v6260
    %v8302 = vunpack.c.h.b16 %v6260
    %v8303 = vunpack.c.l.b16 %v6261
    %v8304 = vunpack.c.h.b16 %v6261
    %v8305 = vunpack.c.l.b16 %v6262
    %v8306 = vunpack.c.h.b16 %v6262
    %v8307 = vunpack.c.l.b16 %v6263
    %v8308 = vunpack.c.h.b16 %v6263
    %v8309 = vunpack.c.l.b16 %v6264
    %v8310 = vunpack.c.h.b16 %v6264
    %v8311 = vunpack.c.l.b16 %v6265
    %v8312 = vunpack.c.h.b16 %v6265
    %v8313 = vunpack.c.l.b16 %v6266
    %v8314 = vunpack.c.h.b16 %v6266
    %v8315 = vunpack.c.l.b16 %v6267
    %v8316 = vunpack.c.h.b16 %v6267
    %v8317 = vunpack.c.l.b16 %v6268
    %v8318 = vunpack.c.h.b16 %v6268
    %v8319 = vunpack.c.l.b16 %v6269
    %v8320 = vunpack.c.h.b16 %v6269
    %v8321 = vunpack.c.l.b16 %v6270
    %v8322 = vunpack.c.h.b16 %v6270
    %v8323 = vunpack.c.l.b16 %v6271
    %v8324 = vunpack.c.h.b16 %v6271
    %v8325 = vunpack.c.l.b16 %v6272
    %v8326 = vunpack.c.h.b16 %v6272
    %v8327 = vunpack.c.l.b16 %v6273
    %v8328 = vunpack.c.h.b16 %v6273
    %v8329 = vunpack.c.l.b16 %v6274
    %v8330 = vunpack.c.h.b16 %v6274
    %v8331 = vunpack.c.l.b16 %v6275
    %v8332 = vunpack.c.h.b16 %v6275
    %v8333 = vunpack.c.l.b16 %v6276
    %v8334 = vunpack.c.h.b16 %v6276
    %v8335 = vunpack.c.l.b16 %v6277
    %v8336 = vunpack.c.h.b16 %v6277
    %v8337 = vunpack.c.l.b16 %v6278
    %v8338 = vunpack.c.h.b16 %v6278
    %v8339 = vunpack.c.l.b16 %v6279
    %v8340 = vunpack.c.h.b16 %v6279
    %v8341 = vunpack.c.l.b16 %v6280
    %v8342 = vunpack.c.h.b16 %v6280
    %v8343 = vunpack.c.l.b16 %v6281
    %v8344 = vunpack.c.h.b16 %v6281
    %v8345 = vunpack.c.l.b16 %v6282
    %v8346 = vunpack.c.h.b16 %v6282
    %v8347 = vunpack.c.l.b16 %v6283
    %v8348 = vunpack.c.h.b16 %v6283
    %v8349 = vunpack.c.l.b16 %v6284
    %v8350 = vunpack.c.h.b16 %v6284
    %v8351 = vunpack.c.l.b16 %v6285
    %v8352 = vunpack.c.h.b16 %v6285
    %v8353 = vunpack.c.l.b16 %v6286
    %v8354 = vunpack.c.h.b16 %v6286
    %v8355 = vunpack.c.l.b16 %v6287
    %v8356 = vunpack.c.h.b16 %v6287
    %v8357 = vunpack.c.l.b16 %v6288
    %v8358 = vunpack.c.h.b16 %v6288
    %v8359 = vunpack.c.l.b16 %v6289
    %v8360 = vunpack.c.h.b16 %v6289
    %v8361 = vunpack.c.l.b16 %v6290
    %v8362 = vunpack.c.h.b16 %v6290
    %v8363 = vunpack.c.l.b16 %v6291
    %v8364 = vunpack.c.h.b16 %v6291
    %v8365 = vunpack.c.l.b16 %v6292
    %v8366 = vunpack.c.h.b16 %v6292
    %v8367 = vunpack.c.l.b16 %v6293
    %v8368 = vunpack.c.h.b16 %v6293
    %v8369 = vunpack.c.l.b16 %v6294
    %v8370 = vunpack.c.h.b16 %v6294
    %v8371 = vunpack.c.l.b16 %v6295
    %v8372 = vunpack.c.h.b16 %v6295
    %v8373 = vunpack.c.l.b16 %v6296
    %v8374 = vunpack.c.h.b16 %v6296
    %v8375 = vunpack.c.l.b16 %v6297
    %v8376 = vunpack.c.h.b16 %v6297
    %v8377 = vunpack.c.l.b16 %v6298
    %v8378 = vunpack.c.h.b16 %v6298
    %v8379 = vunpack.c.l.b16 %v6299
    %v8380 = vunpack.c.h.b16 %v6299
    %v8381 = vunpack.c.l.b16 %v6300
    %v8382 = vunpack.c.h.b16 %v6300
    %v8383 = vunpack.c.l.b16 %v6301
    %v8384 = vunpack.c.h.b16 %v6301
    %v8385 = vunpack.c.l.b16 %v6302
    %v8386 = vunpack.c.h.b16 %v6302
    %v8387 = vunpack.c.l.b16 %v6303
    %v8388 = vunpack.c.h.b16 %v6303
    %v8389 = vunpack.c.l.b16 %v6304
    %v8390 = vunpack.c.h.b16 %v6304
    %v8391 = vunpack.c.l.b16 %v6305
    %v8392 = vunpack.c.h.b16 %v6305
    %v8393 = vunpack.c.l.b16 %v6306
    %v8394 = vunpack.c.h.b16 %v6306
    %v8395 = vunpack.c.l.b16 %v6307
    %v8396 = vunpack.c.h.b16 %v6307
    %v8397 = vunpack.c.l.b16 %v6308
    %v8398 = vunpack.c.h.b16 %v6308
    %v8399 = vunpack.c.l.b16 %v6309
    %v8400 = vunpack.c.h.b16 %v6309
    %v8401 = vunpack.c.l.b16 %v6310
    %v8402 = vunpack.c.h.b16 %v6310
    %v8403 = vunpack.c.l.b16 %v6311
    %v8404 = vunpack.c.h.b16 %v6311
    %v8405 = vunpack.c.l.b16 %v6312
    %v8406 = vunpack.c.h.b16 %v6312
    %v8407 = vunpack.c.l.b16 %v6313
    %v8408 = vunpack.c.h.b16 %v6313
    %v8409 = vunpack.c.l.b16 %v6314
    %v8410 = vunpack.c.h.b16 %v6314
    %v8411 = vunpack.c.l.b16 %v6315
    %v8412 = vunpack.c.h.b16 %v6315
    %v8413 = vunpack.c.l.b16 %v6316
    %v8414 = vunpack.c.h.b16 %v6316
    %v8415 = vunpack.c.l.b16 %v6317
    %v8416 = vunpack.c.h.b16 %v6317
    %v8417 = vunpack.c.l.b16 %v6318
    %v8418 = vunpack.c.h.b16 %v6318
    %v8419 = vunpack.c.l.b16 %v6319
    %v8420 = vunpack.c.h.b16 %v6319
    %v8421 = vunpack.c.l.b16 %v6320
    %v8422 = vunpack.c.h.b16 %v6320
    %v8423 = vunpack.c.l.b16 %v6321
    %v8424 = vunpack.c.h.b16 %v6321
    %v8425 = vunpack.c.l.b16 %v6322
    %v8426 = vunpack.c.h.b16 %v6322
    %v8427 = vunpack.c.l.b16 %v6323
    %v8428 = vunpack.c.h.b16 %v6323
    %v8429 = vunpack.c.l.b16 %v6324
    %v8430 = vunpack.c.h.b16 %v6324
    %v8431 = vunpack.c.l.b16 %v6325
    %v8432 = vunpack.c.h.b16 %v6325
    %v8433 = vunpack.c.l.b16 %v6326
    %v8434 = vunpack.c.h.b16 %v6326
    %v8435 = vunpack.c.l.b16 %v6327
    %v8436 = vunpack.c.h.b16 %v6327
    %v8437 = vunpack.c.l.b16 %v6328
    %v8438 = vunpack.c.h.b16 %v6328
    %v8439 = vunpack.c.l.b16 %v6329
    %v8440 = vunpack.c.h.b16 %v6329
    %v8441 = vunpack.c.l.b16 %v6330
    %v8442 = vunpack.c.h.b16 %v6330
    %v8443 = vunpack.c.l.b16 %v6331
    %v8444 = vunpack.c.h.b16 %v6331
    %v8445 = vunpack.c.l.b16 %v6332
    %v8446 = vunpack.c.h.b16 %v6332
    %v8447 = vunpack.c.l.b16 %v6333
    %v8448 = vunpack.c.h.b16 %v6333
    %v8449 = vunpack.c.l.b16 %v6334
    %v8450 = vunpack.c.h.b16 %v6334
    %v8451 = vunpack.c.l.b16 %v6335
    %v8452 = vunpack.c.h.b16 %v6335
    %v8453 = vunpack.c.l.b16 %v6336
    %v8454 = vunpack.c.h.b16 %v6336
    %v8455 = vunpack.c.l.b16 %v6337
    %v8456 = vunpack.c.h.b16 %v6337
    %v8457 = vunpack.c.l.b16 %v6338
    %v8458 = vunpack.c.h.b16 %v6338
    %v8459 = vunpack.c.l.b16 %v6339
    %v8460 = vunpack.c.h.b16 %v6339
    %v8461 = vunpack.c.l.b16 %v6340
    %v8462 = vunpack.c.h.b16 %v6340
    %v8463 = vunpack.c.l.b16 %v6341
    %v8464 = vunpack.c.h.b16 %v6341
    %v8465 = vunpack.c.l.b16 %v6342
    %v8466 = vunpack.c.h.b16 %v6342
    %v8467 = vunpack.c.l.b16 %v6343
    %v8468 = vunpack.c.h.b16 %v6343
    %v8469 = vunpack.c.l.b16 %v6344
    %v8470 = vunpack.c.h.b16 %v6344
    %v8471 = vunpack.c.l.b16 %v6345
    %v8472 = vunpack.c.h.b16 %v6345
    %v8473 = vunpack.c.l.b16 %v6346
    %v8474 = vunpack.c.h.b16 %v6346
    %v8475 = vunpack.c.l.b16 %v6347
    %v8476 = vunpack.c.h.b16 %v6347
    %v8477 = vunpack.c.l.b16 %v6348
    %v8478 = vunpack.c.h.b16 %v6348
    %v8479 = vunpack.c.l.b16 %v6349
    %v8480 = vunpack.c.h.b16 %v6349
    %v8481 = vunpack.c.l.b16 %v6350
    %v8482 = vunpack.c.h.b16 %v6350
    %v8483 = vunpack.c.l.b16 %v6351
    %v8484 = vunpack.c.h.b16 %v6351
    %v8485 = vunpack.c.l.b16 %v6352
    %v8486 = vunpack.c.h.b16 %v6352
    %v8487 = vunpack.c.l.b16 %v6353
    %v8488 = vunpack.c.h.b16 %v6353
    %v8489 = vunpack.c.l.b16 %v6354
    %v8490 = vunpack.c.h.b16 %v6354
    %v8491 = vunpack.c.l.b16 %v6355
    %v8492 = vunpack.c.h.b16 %v6355
    %v8493 = vunpack.c.l.b16 %v6356
    %v8494 = vunpack.c.h.b16 %v6356
    %v8495 = vunpack.c.l.b16 %v6357
    %v8496 = vunpack.c.h.b16 %v6357
    %v8497 = vunpack.c.l.b16 %v6358
    %v8498 = vunpack.c.h.b16 %v6358
    %v8499 = vunpack.c.l.b16 %v6359
    %v8500 = vunpack.c.h.b16 %v6359
    %v8501 = vunpack.c.l.b16 %v6360
    %v8502 = vunpack.c.h.b16 %v6360
    %v8503 = vunpack.c.l.b16 %v6361
    %v8504 = vunpack.c.h.b16 %v6361
    %v8505 = vunpack.c.l.b16 %v6362
    %v8506 = vunpack.c.h.b16 %v6362
    %v8507 = vunpack.c.l.b16 %v6363
    %v8508 = vunpack.c.h.b16 %v6363
    %v8509 = vunpack.c.l.b16 %v6364
    %v8510 = vunpack.c.h.b16 %v6364
    %v8511 = vunpack.c.l.b16 %v6365
    %v8512 = vunpack.c.h.b16 %v6365
    %v8513 = vunpack.c.l.b16 %v6366
    %v8514 = vunpack.c.h.b16 %v6366
    %v8515 = vunpack.c.l.b16 %v6367
    %v8516 = vunpack.c.h.b16 %v6367
    %v8517 = vunpack.c.l.b16 %v6368
    %v8518 = vunpack.c.h.b16 %v6368
    %v8519 = vunpack.c.l.b16 %v6369
    %v8520 = vunpack.c.h.b16 %v6369
    %v8521 = vunpack.c.l.b16 %v6370
    %v8522 = vunpack.c.h.b16 %v6370
    %v8523 = vunpack.c.l.b16 %v6371
    %v8524 = vunpack.c.h.b16 %v6371
    %v8525 = vunpack.c.l.b16 %v6372
    %v8526 = vunpack.c.h.b16 %v6372
    %v8527 = vunpack.c.l.b16 %v6373
    %v8528 = vunpack.c.h.b16 %v6373
    %v8529 = vunpack.c.l.b16 %v6374
    %v8530 = vunpack.c.h.b16 %v6374
    %v8531 = vunpack.c.l.b16 %v6375
    %v8532 = vunpack.c.h.b16 %v6375
    %v8533 = vunpack.c.l.b16 %v6376
    %v8534 = vunpack.c.h.b16 %v6376
    %v8535 = vunpack.c.l.b16 %v6377
    %v8536 = vunpack.c.h.b16 %v6377
    %v8537 = vunpack.c.l.b16 %v6378
    %v8538 = vunpack.c.h.b16 %v6378
    %v8539 = vunpack.c.l.b16 %v6379
    %v8540 = vunpack.c.h.b16 %v6379
    %v8541 = vunpack.c.l.b16 %v6380
    %v8542 = vunpack.c.h.b16 %v6380
    %v8543 = vunpack.c.l.b16 %v6381
    %v8544 = vunpack.c.h.b16 %v6381
    %v8545 = vunpack.c.l.b16 %v6382
    %v8546 = vunpack.c.h.b16 %v6382
    %v8547 = vunpack.c.l.b16 %v6383
    %v8548 = vunpack.c.h.b16 %v6383
    %v8549 = vunpack.c.l.b16 %v6384
    %v8550 = vunpack.c.h.b16 %v6384
    %v8551 = vunpack.c.l.b16 %v6385
    %v8552 = vunpack.c.h.b16 %v6385
    %v8553 = vunpack.c.l.b16 %v6386
    %v8554 = vunpack.c.h.b16 %v6386
    %v8555 = vunpack.c.l.b16 %v6387
    %v8556 = vunpack.c.h.b16 %v6387
    %v8557 = vunpack.c.l.b16 %v6388
    %v8558 = vunpack.c.h.b16 %v6388
    %v8559 = vunpack.c.l.b16 %v6389
    %v8560 = vunpack.c.h.b16 %v6389
    %v8561 = vunpack.c.l.b16 %v6390
    %v8562 = vunpack.c.h.b16 %v6390
    %v8563 = vunpack.c.l.b16 %v6391
    %v8564 = vunpack.c.h.b16 %v6391
    %v8565 = vunpack.c.l.b16 %v6392
    %v8566 = vunpack.c.h.b16 %v6392
    %v8567 = vunpack.c.l.b16 %v6393
    %v8568 = vunpack.c.h.b16 %v6393
    %v8569 = vunpack.c.l.b16 %v6394
    %v8570 = vunpack.c.h.b16 %v6394
    %v8571 = vunpack.c.l.b16 %v6395
    %v8572 = vunpack.c.h.b16 %v6395
    %v8573 = vunpack.c.l.b16 %v6396
    %v8574 = vunpack.c.h.b16 %v6396
    %v8575 = vunpack.c.l.b16 %v6397
    %v8576 = vunpack.c.h.b16 %v6397
    %v8577 = vunpack.c.l.b16 %v6398
    %v8578 = vunpack.c.h.b16 %v6398
    %v8579 = vunpack.c.l.b16 %v6399
    %v8580 = vunpack.c.h.b16 %v6399
    %v8581 = vunpack.c.l.b16 %v6400
    %v8582 = vunpack.c.h.b16 %v6400
    %v8583 = vunpack.c.l.b16 %v6401
    %v8584 = vunpack.c.h.b16 %v6401
    %v8585 = vunpack.c.l.b16 %v6402
    %v8586 = vunpack.c.h.b16 %v6402
    %v8587 = vunpack.c.l.b16 %v6403
    %v8588 = vunpack.c.h.b16 %v6403
    %v8589 = vunpack.c.l.b16 %v6404
    %v8590 = vunpack.c.h.b16 %v6404
    %v8591 = vunpack.c.l.b16 %v6405
    %v8592 = vunpack.c.h.b16 %v6405
    %v8593 = vunpack.c.l.b16 %v6406
    %v8594 = vunpack.c.h.b16 %v6406
    %v8595 = vunpack.c.l.b16 %v6407
    %v8596 = vunpack.c.h.b16 %v6407
    %v8597 = vunpack.c.l.b16 %v6408
    %v8598 = vunpack.c.h.b16 %v6408
    %v8599 = vunpack.c.l.b16 %v6409
    %v8600 = vunpack.c.h.b16 %v6409
    %v8601 = vunpack.c.l.b16 %v6410
    %v8602 = vunpack.c.h.b16 %v6410
    %v8603 = vunpack.c.l.b16 %v6411
    %v8604 = vunpack.c.h.b16 %v6411
    %v8605 = vunpack.c.l.b16 %v6412
    %v8606 = vunpack.c.h.b16 %v6412
    %v8607 = vunpack.c.l.b16 %v6413
    %v8608 = vunpack.c.h.b16 %v6413
    %v8609 = vunpack.c.l.b16 %v6414
    %v8610 = vunpack.c.h.b16 %v6414
    %v8611 = vunpack.c.l.b16 %v6415
    %v8612 = vunpack.c.h.b16 %v6415
    %v8613 = vunpack.c.l.b16 %v6416
    %v8614 = vunpack.c.h.b16 %v6416
    %v8615 = vunpack.c.l.b16 %v6417
    %v8616 = vunpack.c.h.b16 %v6417
    %v8617 = vunpack.c.l.b16 %v6418
    %v8618 = vunpack.c.h.b16 %v6418
    %v8619 = vunpack.c.l.b16 %v6419
    %v8620 = vunpack.c.h.b16 %v6419
    %v8621 = vunpack.c.l.b16 %v6420
    %v8622 = vunpack.c.h.b16 %v6420
    %v8623 = vunpack.c.l.b16 %v6421
    %v8624 = vunpack.c.h.b16 %v6421
    %v8625 = vunpack.c.l.b16 %v6422
    %v8626 = vunpack.c.h.b16 %v6422
    %v8627 = vunpack.c.l.b16 %v6423
    %v8628 = vunpack.c.h.b16 %v6423
    %v8629 = vunpack.c.l.b16 %v6424
    %v8630 = vunpack.c.h.b16 %v6424
    %v8631 = vunpack.c.l.b16 %v6425
    %v8632 = vunpack.c.h.b16 %v6425
    %v8633 = vunpack.c.l.b16 %v6426
    %v8634 = vunpack.c.h.b16 %v6426
    %v8635 = vunpack.c.l.b16 %v6427
    %v8636 = vunpack.c.h.b16 %v6427
    %v8637 = vunpack.c.l.b16 %v6428
    %v8638 = vunpack.c.h.b16 %v6428
    %v8639 = vunpack.c.l.b16 %v6429
    %v8640 = vunpack.c.h.b16 %v6429
    %v8641 = vunpack.c.l.b16 %v6430
    %v8642 = vunpack.c.h.b16 %v6430
    %v8643 = vunpack.c.l.b16 %v6431
    %v8644 = vunpack.c.h.b16 %v6431
    %v8645 = vunpack.c.l.b16 %v6432
    %v8646 = vunpack.c.h.b16 %v6432
    %v8647 = vunpack.c.l.b16 %v6433
    %v8648 = vunpack.c.h.b16 %v6433
    %v8649 = vunpack.c.l.b16 %v6434
    %v8650 = vunpack.c.h.b16 %v6434
    %v8651 = vunpack.c.l.b16 %v6435
    %v8652 = vunpack.c.h.b16 %v6435
    %v8653 = vunpack.c.l.b16 %v6436
    %v8654 = vunpack.c.h.b16 %v6436
    %v8655 = vunpack.c.l.b16 %v6437
    %v8656 = vunpack.c.h.b16 %v6437
    %v8657 = vunpack.c.l.b16 %v6438
    %v8658 = vunpack.c.h.b16 %v6438
    %v8659 = vunpack.c.l.b16 %v6439
    %v8660 = vunpack.c.h.b16 %v6439
    %v8661 = vunpack.c.l.b16 %v6440
    %v8662 = vunpack.c.h.b16 %v6440
    %v8663 = vunpack.c.l.b16 %v6441
    %v8664 = vunpack.c.h.b16 %v6441
    %v8665 = vunpack.c.l.b16 %v6442
    %v8666 = vunpack.c.h.b16 %v6442
    %v8667 = vunpack.c.l.b16 %v6443
    %v8668 = vunpack.c.h.b16 %v6443
    %v8669 = vunpack.c.l.b16 %v6444
    %v8670 = vunpack.c.h.b16 %v6444
    %v8671 = vunpack.c.l.b16 %v6445
    %v8672 = vunpack.c.h.b16 %v6445
    %v8673 = vunpack.c.l.b16 %v6446
    %v8674 = vunpack.c.h.b16 %v6446
    %v8675 = vunpack.c.l.b16 %v6447
    %v8676 = vunpack.c.h.b16 %v6447
    %v8677 = vunpack.c.l.b16 %v6448
    %v8678 = vunpack.c.h.b16 %v6448
    %v8679 = vunpack.c.l.b16 %v6449
    %v8680 = vunpack.c.h.b16 %v6449
    %v8681 = vunpack.c.l.b16 %v6450
    %v8682 = vunpack.c.h.b16 %v6450
    %v8683 = vunpack.c.l.b16 %v6451
    %v8684 = vunpack.c.h.b16 %v6451
    %v8685 = vunpack.c.l.b16 %v6452
    %v8686 = vunpack.c.h.b16 %v6452
    %v8687 = vunpack.c.l.b16 %v6453
    %v8688 = vunpack.c.h.b16 %v6453
    %v8689 = vunpack.c.l.b16 %v6454
    %v8690 = vunpack.c.h.b16 %v6454
    %v8691 = vunpack.c.l.b16 %v6455
    %v8692 = vunpack.c.h.b16 %v6455
    %v8693 = vunpack.c.l.b16 %v6456
    %v8694 = vunpack.c.h.b16 %v6456
    %v8695 = vunpack.c.l.b16 %v6457
    %v8696 = vunpack.c.h.b16 %v6457
    %v8697 = vunpack.c.l.b16 %v6458
    %v8698 = vunpack.c.h.b16 %v6458
    %v8699 = vunpack.c.l.b16 %v6459
    %v8700 = vunpack.c.h.b16 %v6459
    %v8701 = vunpack.c.l.b16 %v6460
    %v8702 = vunpack.c.h.b16 %v6460
    %v8703 = vunpack.c.l.b16 %v6461
    %v8704 = vunpack.c.h.b16 %v6461
    %v8705 = vunpack.c.l.b16 %v6462
    %v8706 = vunpack.c.h.b16 %v6462
    %v8707 = vunpack.c.l.b16 %v6463
    %v8708 = vunpack.c.h.b16 %v6463
    %v8709 = vunpack.c.l.b16 %v6464
    %v8710 = vunpack.c.h.b16 %v6464
    %v8711 = vunpack.c.l.b16 %v6465
    %v8712 = vunpack.c.h.b16 %v6465
    %v8713 = vunpack.c.l.b16 %v6466
    %v8714 = vunpack.c.h.b16 %v6466
    %v8715 = vunpack.c.l.b16 %v6467
    %v8716 = vunpack.c.h.b16 %v6467
    %v8717 = vunpack.c.l.b16 %v6468
    %v8718 = vunpack.c.h.b16 %v6468
    %v8719 = vunpack.c.l.b16 %v6469
    %v8720 = vunpack.c.h.b16 %v6469
    %v8721 = vunpack.c.l.b16 %v6470
    %v8722 = vunpack.c.h.b16 %v6470
    %v8723 = vunpack.c.l.b16 %v6471
    %v8724 = vunpack.c.h.b16 %v6471
    %v8725 = vunpack.c.l.b16 %v6472
    %v8726 = vunpack.c.h.b16 %v6472
    %v8727 = vunpack.c.l.b16 %v6473
    %v8728 = vunpack.c.h.b16 %v6473
    %v8729 = vunpack.c.l.b16 %v6474
    %v8730 = vunpack.c.h.b16 %v6474
    %v8731 = vunpack.c.l.b16 %v6475
    %v8732 = vunpack.c.h.b16 %v6475
    %v8733 = vunpack.c.l.b16 %v6476
    %v8734 = vunpack.c.h.b16 %v6476
    %v8735 = vunpack.c.l.b16 %v6477
    %v8736 = vunpack.c.h.b16 %v6477
    %v8737 = vunpack.c.l.b16 %v6478
    %v8738 = vunpack.c.h.b16 %v6478
    %v8739 = vunpack.c.l.b16 %v6479
    %v8740 = vunpack.c.h.b16 %v6479
    %v8741 = vunpack.c.l.b16 %v6480
    %v8742 = vunpack.c.h.b16 %v6480
    %v8743 = vunpack.c.l.b16 %v6481
    %v8744 = vunpack.c.h.b16 %v6481
    %v8745 = vunpack.c.l.b16 %v6482
    %v8746 = vunpack.c.h.b16 %v6482
    %v8747 = vunpack.c.l.b16 %v6483
    %v8748 = vunpack.c.h.b16 %v6483
    %v8749 = vunpack.c.l.b16 %v6484
    %v8750 = vunpack.c.h.b16 %v6484
    %v8751 = vunpack.c.l.b16 %v6485
    %v8752 = vunpack.c.h.b16 %v6485
    %v8753 = vunpack.c.l.b16 %v6486
    %v8754 = vunpack.c.h.b16 %v6486
    %v8755 = vunpack.c.l.b16 %v6487
    %v8756 = vunpack.c.h.b16 %v6487
    %v8757 = vunpack.c.l.b16 %v6488
    %v8758 = vunpack.c.h.b16 %v6488
    %v8759 = vunpack.c.l.b16 %v6489
    %v8760 = vunpack.c.h.b16 %v6489
    %v8761 = vunpack.c.l.b16 %v6490
    %v8762 = vunpack.c.h.b16 %v6490
    %v8763 = vunpack.c.l.b16 %v6491
    %v8764 = vunpack.c.h.b16 %v6491
    %v8765 = vunpack.c.l.b16 %v6492
    %v8766 = vunpack.c.h.b16 %v6492
    %v8767 = vunpack.c.l.b16 %v6493
    %v8768 = vunpack.c.h.b16 %v6493
    %v8769 = vunpack.c.l.b16 %v6494
    %v8770 = vunpack.c.h.b16 %v6494
    %v8771 = vunpack.c.l.b16 %v6495
    %v8772 = vunpack.c.h.b16 %v6495
    %v8773 = vunpack.c.l.b16 %v6496
    %v8774 = vunpack.c.h.b16 %v6496
    %v8775 = vunpack.c.l.b16 %v6497
    %v8776 = vunpack.c.h.b16 %v6497
    %v8777 = vunpack.c.l.b16 %v6498
    %v8778 = vunpack.c.h.b16 %v6498
    %v8779 = vunpack.c.l.b16 %v6499
    %v8780 = vunpack.c.h.b16 %v6499
    %v8781 = vunpack.c.l.b16 %v6500
    %v8782 = vunpack.c.h.b16 %v6500
    %v8783 = vunpack.c.l.b16 %v6501
    %v8784 = vunpack.c.h.b16 %v6501
    %v8785 = vunpack.c.l.b16 %v6502
    %v8786 = vunpack.c.h.b16 %v6502
    %v8787 = vunpack.c.l.b16 %v6503
    %v8788 = vunpack.c.h.b16 %v6503
    %v8789 = vunpack.c.l.b16 %v6504
    %v8790 = vunpack.c.h.b16 %v6504
    %v8791 = vunpack.c.l.b16 %v6505
    %v8792 = vunpack.c.h.b16 %v6505
    %v8793 = vunpack.c.l.b16 %v6506
    %v8794 = vunpack.c.h.b16 %v6506
    %v8795 = vunpack.c.l.b16 %v6507
    %v8796 = vunpack.c.h.b16 %v6507
    %v8797 = vunpack.c.l.b16 %v6508
    %v8798 = vunpack.c.h.b16 %v6508
    %v8799 = vunpack.c.l.b16 %v6509
    %v8800 = vunpack.c.h.b16 %v6509
    %v8801 = vunpack.c.l.b16 %v6510
    %v8802 = vunpack.c.h.b16 %v6510
    %v8803 = vunpack.c.l.b16 %v6511
    %v8804 = vunpack.c.h.b16 %v6511
    %v8805 = vunpack.c.l.b16 %v6512
    %v8806 = vunpack.c.h.b16 %v6512
    %v8807 = vunpack.c.l.b16 %v6513
    %v8808 = vunpack.c.h.b16 %v6513
    %v8809 = vunpack.c.l.b16 %v6514
    %v8810 = vunpack.c.h.b16 %v6514
    %v8811 = vunpack.c.l.b16 %v6515
    %v8812 = vunpack.c.h.b16 %v6515
    %v8813 = vunpack.c.l.b16 %v6516
    %v8814 = vunpack.c.h.b16 %v6516
    %v8815 = vunpack.c.l.b16 %v6517
    %v8816 = vunpack.c.h.b16 %v6517
    %v8817 = vunpack.c.l.b16 %v6518
    %v8818 = vunpack.c.h.b16 %v6518
    %v8819 = vunpack.c.l.b16 %v6519
    %v8820 = vunpack.c.h.b16 %v6519
    %v8821 = vunpack.c.l.b16 %v6520
    %v8822 = vunpack.c.h.b16 %v6520
    %v8823 = vunpack.c.l.b16 %v6521
    %v8824 = vunpack.c.h.b16 %v6521
    %v8825 = vunpack.c.l.b16 %v6522
    %v8826 = vunpack.c.h.b16 %v6522
    %v8827 = vpack.c.b16 %v7299, %v7291
    %v8828 = vpack.c.b16 %v7300, %v7292
    %v8829 = vpack.c.b16 %v7301, %v7293
    %v8830 = vpack.c.b16 %v7302, %v7294
    %v8831 = vpack.c.b16 %v7303, %v7295
    %v8832 = vpack.c.b16 %v7304, %v7296
    %v8833 = vpack.c.b16 %v7305, %v7297
    %v8834 = vpack.c.b16 %v7306, %v7298
    %v8835 = vpack.c.b16 %v7315, %v7307
    %v8836 = vpack.c.b16 %v7316, %v7308
    %v8837 = vpack.c.b16 %v7317, %v7309
    %v8838 = vpack.c.b16 %v7318, %v7310
    %v8839 = vpack.c.b16 %v7319, %v7311
    %v8840 = vpack.c.b16 %v7320, %v7312
    %v8841 = vpack.c.b16 %v7321, %v7313
    %v8842 = vpack.c.b16 %v7322, %v7314
    %v8843 = vpack.c.b16 %v7331, %v7323
    %v8844 = vpack.c.b16 %v7332, %v7324
    %v8845 = vpack.c.b16 %v7333, %v7325
    %v8846 = vpack.c.b16 %v7334, %v7326
    %v8847 = vpack.c.b16 %v7335, %v7327
    %v8848 = vpack.c.b16 %v7336, %v7328
    %v8849 = vpack.c.b16 %v7337, %v7329
    %v8850 = vpack.c.b16 %v7338, %v7330
    %v8851 = vpack.c.b16 %v7347, %v7339
    %v8852 = vpack.c.b16 %v7348, %v7340
    %v8853 = vpack.c.b16 %v7349, %v7341
    %v8854 = vpack.c.b16 %v7350, %v7342
    %v8855 = vpack.c.b16 %v7351, %v7343
    %v8856 = vpack.c.b16 %v7352, %v7344
    %v8857 = vpack.c.b16 %v7353, %v7345
    %v8858 = vpack.c.b16 %v7354, %v7346
    %v8859 = vpack.c.b16 %v7363, %v7355
    %v8860 = vpack.c.b16 %v7364, %v7356
    %v8861 = vpack.c.b16 %v7365, %v7357
    %v8862 = vpack.c.b16 %v7366, %v7358
    %v8863 = vpack.c.b16 %v7367, %v7359
    %v8864 = vpack.c.b16 %v7368, %v7360
    %v8865 = vpack.c.b16 %v7369, %v7361
    %v8866 = vpack.c.b16 %v7370, %v7362
    %v8867 = vpack.c.b16 %v7379, %v7371
    %v8868 = vpack.c.b16 %v7380, %v7372
    %v8869 = vpack.c.b16 %v7381, %v7373
    %v8870 = vpack.c.b16 %v7382, %v7374
    %v8871 = vpack.c.b16 %v7383, %v7375
    %v8872 = vpack.c.b16 %v7384, %v7376
    %v8873 = vpack.c.b16 %v7385, %v7377
    %v8874 = vpack.c.b16 %v7386, %v7378
    %v8875 = vpack.c.b16 %v7395, %v7387
    %v8876 = vpack.c.b16 %v7396, %v7388
    %v8877 = vpack.c.b16 %v7397, %v7389
    %v8878 = vpack.c.b16 %v7398, %v7390
    %v8879 = vpack.c.b16 %v7399, %v7391
    %v8880 = vpack.c.b16 %v7400, %v7392
    %v8881 = vpack.c.b16 %v7401, %v7393
    %v8882 = vpack.c.b16 %v7402, %v7394
    %v8883 = vpack.c.b16 %v7411, %v7403
    %v8884 = vpack.c.b16 %v7412, %v7404
    %v8885 = vpack.c.b16 %v7413, %v7405
    %v8886 = vpack.c.b16 %v7414, %v7406
    %v8887 = vpack.c.b16 %v7415, %v7407
    %v8888 = vpack.c.b16 %v7416, %v7408
    %v8889 = vpack.c.b16 %v7417, %v7409
    %v8890 = vpack.c.b16 %v7418, %v7410
    %v8891 = vpack.c.b16 %v7427, %v7419
    %v8892 = vpack.c.b16 %v7428, %v7420
    %v8893 = vpack.c.b16 %v7429, %v7421
    %v8894 = vpack.c.b16 %v7430, %v7422
    %v8895 = vpack.c.b16 %v7431, %v7423
    %v8896 = vpack.c.b16 %v7432, %v7424
    %v8897 = vpack.c.b16 %v7433, %v7425
    %v8898 = vpack.c.b16 %v7434, %v7426
    %v8899 = vpack.c.b16 %v7443, %v7435
    %v8900 = vpack.c.b16 %v7444, %v7436
    %v8901 = vpack.c.b16 %v7445, %v7437
    %v8902 = vpack.c.b16 %v7446, %v7438
    %v8903 = vpack.c.b16 %v7447, %v7439
    %v8904 = vpack.c.b16 %v7448, %v7440
    %v8905 = vpack.c.b16 %v7449, %v7441
    %v8906 = vpack.c.b16 %v7450, %v7442
    %v8907 = vpack.c.b16 %v7459, %v7451
    %v8908 = vpack.c.b16 %v7460, %v7452
    %v8909 = vpack.c.b16 %v7461, %v7453
    %v8910 = vpack.c.b16 %v7462, %v7454
    %v8911 = vpack.c.b16 %v7463, %v7455
    %v8912 = vpack.c.b16 %v7464, %v7456
    %v8913 = vpack.c.b16 %v7465, %v7457
    %v8914 = vpack.c.b16 %v7466, %v7458
    %v8915 = vpack.c.b16 %v7475, %v7467
    %v8916 = vpack.c.b16 %v7476, %v7468
    %v8917 = vpack.c.b16 %v7477, %v7469
    %v8918 = vpack.c.b16 %v7478, %v7470
    %v8919 = vpack.c.b16 %v7479, %v7471
    %v8920 = vpack.c.b16 %v7480, %v7472
    %v8921 = vpack.c.b16 %v7481, %v7473
    %v8922 = vpack.c.b16 %v7482, %v7474
    %v8923 = vpack.c.b16 %v7491, %v7483
    %v8924 = vpack.c.b16 %v7492, %v7484
    %v8925 = vpack.c.b16 %v7493, %v7485
    %v8926 = vpack.c.b16 %v7494, %v7486
    %v8927 = vpack.c.b16 %v7495, %v7487
    %v8928 = vpack.c.b16 %v7496, %v7488
    %v8929 = vpack.c.b16 %v7497, %v7489
    %v8930 = vpack.c.b16 %v7498, %v7490
    %v8931 = vpack.c.b16 %v7507, %v7499
    %v8932 = vpack.c.b16 %v7508, %v7500
    %v8933 = vpack.c.b16 %v7509, %v7501
    %v8934 = vpack.c.b16 %v7510, %v7502
    %v8935 = vpack.c.b16 %v7511, %v7503
    %v8936 = vpack.c.b16 %v7512, %v7504
    %v8937 = vpack.c.b16 %v7513, %v7505
    %v8938 = vpack.c.b16 %v7514, %v7506
    %v8939 = vpack.c.b16 %v7523, %v7515
    %v8940 = vpack.c.b16 %v7524, %v7516
    %v8941 = vpack.c.b16 %v7525, %v7517
    %v8942 = vpack.c.b16 %v7526, %v7518
    %v8943 = vpack.c.b16 %v7527, %v7519
    %v8944 = vpack.c.b16 %v7528, %v7520
    %v8945 = vpack.c.b16 %v7529, %v7521
    %v8946 = vpack.c.b16 %v7530, %v7522
    %v8947 = vpack.c.b16 %v7539, %v7531
    %v8948 = vpack.c.b16 %v7540, %v7532
    %v8949 = vpack.c.b16 %v7541, %v7533
    %v8950 = vpack.c.b16 %v7542, %v7534
    %v8951 = vpack.c.b16 %v7543, %v7535
    %v8952 = vpack.c.b16 %v7544, %v7536
    %v8953 = vpack.c.b16 %v7545, %v7537
    %v8954 = vpack.c.b16 %v7546, %v7538
    %v8955 = vpack.c.b16 %v7555, %v7547
    %v8956 = vpack.c.b16 %v7556, %v7548
    %v8957 = vpack.c.b16 %v7557, %v7549
    %v8958 = vpack.c.b16 %v7558, %v7550
    %v8959 = vpack.c.b16 %v7559, %v7551
    %v8960 = vpack.c.b16 %v7560, %v7552
    %v8961 = vpack.c.b16 %v7561, %v7553
    %v8962 = vpack.c.b16 %v7562, %v7554
    %v8963 = vpack.c.b16 %v7571, %v7563
    %v8964 = vpack.c.b16 %v7572, %v7564
    %v8965 = vpack.c.b16 %v7573, %v7565
    %v8966 = vpack.c.b16 %v7574, %v7566
    %v8967 = vpack.c.b16 %v7575, %v7567
    %v8968 = vpack.c.b16 %v7576, %v7568
    %v8969 = vpack.c.b16 %v7577, %v7569
    %v8970 = vpack.c.b16 %v7578, %v7570
    %v8971 = vpack.c.b16 %v7587, %v7579
    %v8972 = vpack.c.b16 %v7588, %v7580
    %v8973 = vpack.c.b16 %v7589, %v7581
    %v8974 = vpack.c.b16 %v7590, %v7582
    %v8975 = vpack.c.b16 %v7591, %v7583
    %v8976 = vpack.c.b16 %v7592, %v7584
    %v8977 = vpack.c.b16 %v7593, %v7585
    %v8978 = vpack.c.b16 %v7594, %v7586
    %v8979 = vpack.c.b16 %v7603, %v7595
    %v8980 = vpack.c.b16 %v7604, %v7596
    %v8981 = vpack.c.b16 %v7605, %v7597
    %v8982 = vpack.c.b16 %v7606, %v7598
    %v8983 = vpack.c.b16 %v7607, %v7599
    %v8984 = vpack.c.b16 %v7608, %v7600
    %v8985 = vpack.c.b16 %v7609, %v7601
    %v8986 = vpack.c.b16 %v7610, %v7602
    %v8987 = vpack.c.b16 %v7619, %v7611
    %v8988 = vpack.c.b16 %v7620, %v7612
    %v8989 = vpack.c.b16 %v7621, %v7613
    %v8990 = vpack.c.b16 %v7622, %v7614
    %v8991 = vpack.c.b16 %v7623, %v7615
    %v8992 = vpack.c.b16 %v7624, %v7616
    %v8993 = vpack.c.b16 %v7625, %v7617
    %v8994 = vpack.c.b16 %v7626, %v7618
    %v8995 = vpack.c.b16 %v7635, %v7627
    %v8996 = vpack.c.b16 %v7636, %v7628
    %v8997 = vpack.c.b16 %v7637, %v7629
    %v8998 = vpack.c.b16 %v7638, %v7630
    %v8999 = vpack.c.b16 %v7639, %v7631
    %v9000 = vpack.c.b16 %v7640, %v7632
    %v9001 = vpack.c.b16 %v7641, %v7633
    %v9002 = vpack.c.b16 %v7642, %v7634
    %v9003 = vpack.c.b16 %v7651, %v7643
    %v9004 = vpack.c.b16 %v7652, %v7644
    %v9005 = vpack.c.b16 %v7653, %v7645
    %v9006 = vpack.c.b16 %v7654, %v7646
    %v9007 = vpack.c.b16 %v7655, %v7647
    %v9008 = vpack.c.b16 %v7656, %v7648
    %v9009 = vpack.c.b16 %v7657, %v7649
    %v9010 = vpack.c.b16 %v7658, %v7650
    %v9011 = vpack.c.b16 %v7667, %v7659
    %v9012 = vpack.c.b16 %v7668, %v7660
    %v9013 = vpack.c.b16 %v7669, %v7661
    %v9014 = vpack.c.b16 %v7670, %v7662
    %v9015 = vpack.c.b16 %v7671, %v7663
    %v9016 = vpack.c.b16 %v7672, %v7664
    %v9017 = vpack.c.b16 %v7673, %v7665
    %v9018 = vpack.c.b16 %v7674, %v7666
    %v9019 = vpack.c.b16 %v7683, %v7675
    %v9020 = vpack.c.b16 %v7684, %v7676
    %v9021 = vpack.c.b16 %v7685, %v7677
    %v9022 = vpack.c.b16 %v7686, %v7678
    %v9023 = vpack.c.b16 %v7687, %v7679
    %v9024 = vpack.c.b16 %v7688, %v7680
    %v9025 = vpack.c.b16 %v7689, %v7681
    %v9026 = vpack.c.b16 %v7690, %v7682
    %v9027 = vpack.c.b16 %v7699, %v7691
    %v9028 = vpack.c.b16 %v7700, %v7692
    %v9029 = vpack.c.b16 %v7701, %v7693
    %v9030 = vpack.c.b16 %v7702, %v7694
    %v9031 = vpack.c.b16 %v7703, %v7695
    %v9032 = vpack.c.b16 %v7704, %v7696
    %v9033 = vpack.c.b16 %v7705, %v7697
    %v9034 = vpack.c.b16 %v7706, %v7698
    %v9035 = vpack.c.b16 %v7715, %v7707
    %v9036 = vpack.c.b16 %v7716, %v7708
    %v9037 = vpack.c.b16 %v7717, %v7709
    %v9038 = vpack.c.b16 %v7718, %v7710
    %v9039 = vpack.c.b16 %v7719, %v7711
    %v9040 = vpack.c.b16 %v7720, %v7712
    %v9041 = vpack.c.b16 %v7721, %v7713
    %v9042 = vpack.c.b16 %v7722, %v7714
    %v9043 = vpack.c.b16 %v7731, %v7723
    %v9044 = vpack.c.b16 %v7732, %v7724
    %v9045 = vpack.c.b16 %v7733, %v7725
    %v9046 = vpack.c.b16 %v7734, %v7726
    %v9047 = vpack.c.b16 %v7735, %v7727
    %v9048 = vpack.c.b16 %v7736, %v7728
    %v9049 = vpack.c.b16 %v7737, %v7729
    %v9050 = vpack.c.b16 %v7738, %v7730
    %v9051 = vpack.c.b16 %v7747, %v7739
    %v9052 = vpack.c.b16 %v7748, %v7740
    %v9053 = vpack.c.b16 %v7749, %v7741
    %v9054 = vpack.c.b16 %v7750, %v7742
    %v9055 = vpack.c.b16 %v7751, %v7743
    %v9056 = vpack.c.b16 %v7752, %v7744
    %v9057 = vpack.c.b16 %v7753, %v7745
    %v9058 = vpack.c.b16 %v7754, %v7746
    %v9059 = vpack.c.b16 %v7763, %v7755
    %v9060 = vpack.c.b16 %v7764, %v7756
    %v9061 = vpack.c.b16 %v7765, %v7757
    %v9062 = vpack.c.b16 %v7766, %v7758
    %v9063 = vpack.c.b16 %v7767, %v7759
    %v9064 = vpack.c.b16 %v7768, %v7760
    %v9065 = vpack.c.b16 %v7769, %v7761
    %v9066 = vpack.c.b16 %v7770, %v7762
    %v9067 = vpack.c.b16 %v7779, %v7771
    %v9068 = vpack.c.b16 %v7780, %v7772
    %v9069 = vpack.c.b16 %v7781, %v7773
    %v9070 = vpack.c.b16 %v7782, %v7774
    %v9071 = vpack.c.b16 %v7783, %v7775
    %v9072 = vpack.c.b16 %v7784, %v7776
    %v9073 = vpack.c.b16 %v7785, %v7777
    %v9074 = vpack.c.b16 %v7786, %v7778
    %v9075 = vpack.c.b16 %v7795, %v7787
    %v9076 = vpack.c.b16 %v7796, %v7788
    %v9077 = vpack.c.b16 %v7797, %v7789
    %v9078 = vpack.c.b16 %v7798, %v7790
    %v9079 = vpack.c.b16 %v7799, %v7791
    %v9080 = vpack.c.b16 %v7800, %v7792
    %v9081 = vpack.c.b16 %v7801, %v7793
    %v9082 = vpack.c.b16 %v7802, %v7794
    %v9083 = vpack.c.b16 %v7811, %v7803
    %v9084 = vpack.c.b16 %v7812, %v7804
    %v9085 = vpack.c.b16 %v7813, %v7805
    %v9086 = vpack.c.b16 %v7814, %v7806
    %v9087 = vpack.c.b16 %v7815, %v7807
    %v9088 = vpack.c.b16 %v7816, %v7808
    %v9089 = vpack.c.b16 %v7817, %v7809
    %v9090 = vpack.c.b16 %v7818, %v7810
    %v9091 = vpack.c.b16 %v7827, %v7819
    %v9092 = vpack.c.b16 %v7828, %v7820
    %v9093 = vpack.c.b16 %v7829, %v7821
    %v9094 = vpack.c.b16 %v7830, %v7822
    %v9095 = vpack.c.b16 %v7831, %v7823
    %v9096 = vpack.c.b16 %v7832, %v7824
    %v9097 = vpack.c.b16 %v7833, %v7825
    %v9098 = vpack.c.b16 %v7834, %v7826
    %v9099 = vpack.c.b16 %v7843, %v7835
    %v9100 = vpack.c.b16 %v7844, %v7836
    %v9101 = vpack.c.b16 %v7845, %v7837
    %v9102 = vpack.c.b16 %v7846, %v7838
    %v9103 = vpack.c.b16 %v7847, %v7839
    %v9104 = vpack.c.b16 %v7848, %v7840
    %v9105 = vpack.c.b16 %v7849, %v7841
    %v9106 = vpack.c.b16 %v7850, %v7842
    %v9107 = vpack.c.b16 %v7859, %v7851
    %v9108 = vpack.c.b16 %v7860, %v7852
    %v9109 = vpack.c.b16 %v7861, %v7853
    %v9110 = vpack.c.b16 %v7862, %v7854
    %v9111 = vpack.c.b16 %v7863, %v7855
    %v9112 = vpack.c.b16 %v7864, %v7856
    %v9113 = vpack.c.b16 %v7865, %v7857
    %v9114 = vpack.c.b16 %v7866, %v7858
    %v9115 = vpack.c.b16 %v7875, %v7867
    %v9116 = vpack.c.b16 %v7876, %v7868
    %v9117 = vpack.c.b16 %v7877, %v7869
    %v9118 = vpack.c.b16 %v7878, %v7870
    %v9119 = vpack.c.b16 %v7879, %v7871
    %v9120 = vpack.c.b16 %v7880, %v7872
    %v9121 = vpack.c.b16 %v7881, %v7873
    %v9122 = vpack.c.b16 %v7882, %v7874
    %v9123 = vpack.c.b16 %v7891, %v7883
    %v9124 = vpack.c.b16 %v7892, %v7884
    %v9125 = vpack.c.b16 %v7893, %v7885
    %v9126 = vpack.c.b16 %v7894, %v7886
    %v9127 = vpack.c.b16 %v7895, %v7887
    %v9128 = vpack.c.b16 %v7896, %v7888
    %v9129 = vpack.c.b16 %v7897, %v7889
    %v9130 = vpack.c.b16 %v7898, %v7890
    %v9131 = vpack.c.b16 %v7907, %v7899
    %v9132 = vpack.c.b16 %v7908, %v7900
    %v9133 = vpack.c.b16 %v7909, %v7901
    %v9134 = vpack.c.b16 %v7910, %v7902
    %v9135 = vpack.c.b16 %v7911, %v7903
    %v9136 = vpack.c.b16 %v7912, %v7904
    %v9137 = vpack.c.b16 %v7913, %v7905
    %v9138 = vpack.c.b16 %v7914, %v7906
    %v9139 = vpack.c.b16 %v7923, %v7915
    %v9140 = vpack.c.b16 %v7924, %v7916
    %v9141 = vpack.c.b16 %v7925, %v7917
    %v9142 = vpack.c.b16 %v7926, %v7918
    %v9143 = vpack.c.b16 %v7927, %v7919
    %v9144 = vpack.c.b16 %v7928, %v7920
    %v9145 = vpack.c.b16 %v7929, %v7921
    %v9146 = vpack.c.b16 %v7930, %v7922
    %v9147 = vpack.c.b16 %v7939, %v7931
    %v9148 = vpack.c.b16 %v7940, %v7932
    %v9149 = vpack.c.b16 %v7941, %v7933
    %v9150 = vpack.c.b16 %v7942, %v7934
    %v9151 = vpack.c.b16 %v7943, %v7935
    %v9152 = vpack.c.b16 %v7944, %v7936
    %v9153 = vpack.c.b16 %v7945, %v7937
    %v9154 = vpack.c.b16 %v7946, %v7938
    %v9155 = vpack.c.b16 %v7955, %v7947
    %v9156 = vpack.c.b16 %v7956, %v7948
    %v9157 = vpack.c.b16 %v7957, %v7949
    %v9158 = vpack.c.b16 %v7958, %v7950
    %v9159 = vpack.c.b16 %v7959, %v7951
    %v9160 = vpack.c.b16 %v7960, %v7952
    %v9161 = vpack.c.b16 %v7961, %v7953
    %v9162 = vpack.c.b16 %v7962, %v7954
    %v9163 = vpack.c.b16 %v7971, %v7963
    %v9164 = vpack.c.b16 %v7972, %v7964
    %v9165 = vpack.c.b16 %v7973, %v7965
    %v9166 = vpack.c.b16 %v7974, %v7966
    %v9167 = vpack.c.b16 %v7975, %v7967
    %v9168 = vpack.c.b16 %v7976, %v7968
    %v9169 = vpack.c.b16 %v7977, %v7969
    %v9170 = vpack.c.b16 %v7978, %v7970
    %v9171 = vpack.c.b16 %v7987, %v7979
    %v9172 = vpack.c.b16 %v7988, %v7980
    %v9173 = vpack.c.b16 %v7989, %v7981
    %v9174 = vpack.c.b16 %v7990, %v7982
    %v9175 = vpack.c.b16 %v7991, %v7983
    %v9176 = vpack.c.b16 %v7992, %v7984
    %v9177 = vpack.c.b16 %v7993, %v7985
    %v9178 = vpack.c.b16 %v7994, %v7986
    %v9179 = vpack.c.b16 %v8003, %v7995
    %v9180 = vpack.c.b16 %v8004, %v7996
    %v9181 = vpack.c.b16 %v8005, %v7997
    %v9182 = vpack.c.b16 %v8006, %v7998
    %v9183 = vpack.c.b16 %v8007, %v7999
    %v9184 = vpack.c.b16 %v8008, %v8000
    %v9185 = vpack.c.b16 %v8009, %v8001
    %v9186 = vpack.c.b16 %v8010, %v8002
    %v9187 = vpack.c.b16 %v8019, %v8011
    %v9188 = vpack.c.b16 %v8020, %v8012
    %v9189 = vpack.c.b16 %v8021, %v8013
    %v9190 = vpack.c.b16 %v8022, %v8014
    %v9191 = vpack.c.b16 %v8023, %v8015
    %v9192 = vpack.c.b16 %v8024, %v8016
    %v9193 = vpack.c.b16 %v8025, %v8017
    %v9194 = vpack.c.b16 %v8026, %v8018
    %v9195 = vpack.c.b16 %v8035, %v8027
    %v9196 = vpack.c.b16 %v8036, %v8028
    %v9197 = vpack.c.b16 %v8037, %v8029
    %v9198 = vpack.c.b16 %v8038, %v8030
    %v9199 = vpack.c.b16 %v8039, %v8031
    %v9200 = vpack.c.b16 %v8040, %v8032
    %v9201 = vpack.c.b16 %v8041, %v8033
    %v9202 = vpack.c.b16 %v8042, %v8034
    %v9203 = vpack.c.b16 %v8051, %v8043
    %v9204 = vpack.c.b16 %v8052, %v8044
    %v9205 = vpack.c.b16 %v8053, %v8045
    %v9206 = vpack.c.b16 %v8054, %v8046
    %v9207 = vpack.c.b16 %v8055, %v8047
    %v9208 = vpack.c.b16 %v8056, %v8048
    %v9209 = vpack.c.b16 %v8057, %v8049
    %v9210 = vpack.c.b16 %v8058, %v8050
    %v9211 = vpack.c.b16 %v8067, %v8059
    %v9212 = vpack.c.b16 %v8068, %v8060
    %v9213 = vpack.c.b16 %v8069, %v8061
    %v9214 = vpack.c.b16 %v8070, %v8062
    %v9215 = vpack.c.b16 %v8071, %v8063
    %v9216 = vpack.c.b16 %v8072, %v8064
    %v9217 = vpack.c.b16 %v8073, %v8065
    %v9218 = vpack.c.b16 %v8074, %v8066
    %v9219 = vpack.c.b16 %v8083, %v8075
    %v9220 = vpack.c.b16 %v8084, %v8076
    %v9221 = vpack.c.b16 %v8085, %v8077
    %v9222 = vpack.c.b16 %v8086, %v8078
    %v9223 = vpack.c.b16 %v8087, %v8079
    %v9224 = vpack.c.b16 %v8088, %v8080
    %v9225 = vpack.c.b16 %v8089, %v8081
    %v9226 = vpack.c.b16 %v8090, %v8082
    %v9227 = vpack.c.b16 %v8099, %v8091
    %v9228 = vpack.c.b16 %v8100, %v8092
    %v9229 = vpack.c.b16 %v8101, %v8093
    %v9230 = vpack.c.b16 %v8102, %v8094
    %v9231 = vpack.c.b16 %v8103, %v8095
    %v9232 = vpack.c.b16 %v8104, %v8096
    %v9233 = vpack.c.b16 %v8105, %v8097
    %v9234 = vpack.c.b16 %v8106, %v8098
    %v9235 = vpack.c.b16 %v8115, %v8107
    %v9236 = vpack.c.b16 %v8116, %v8108
    %v9237 = vpack.c.b16 %v8117, %v8109
    %v9238 = vpack.c.b16 %v8118, %v8110
    %v9239 = vpack.c.b16 %v8119, %v8111
    %v9240 = vpack.c.b16 %v8120, %v8112
    %v9241 = vpack.c.b16 %v8121, %v8113
    %v9242 = vpack.c.b16 %v8122, %v8114
    %v9243 = vpack.c.b16 %v8131, %v8123
    %v9244 = vpack.c.b16 %v8132, %v8124
    %v9245 = vpack.c.b16 %v8133, %v8125
    %v9246 = vpack.c.b16 %v8134, %v8126
    %v9247 = vpack.c.b16 %v8135, %v8127
    %v9248 = vpack.c.b16 %v8136, %v8128
    %v9249 = vpack.c.b16 %v8137, %v8129
    %v9250 = vpack.c.b16 %v8138, %v8130
    %v9251 = vpack.c.b16 %v8147, %v8139
    %v9252 = vpack.c.b16 %v8148, %v8140
    %v9253 = vpack.c.b16 %v8149, %v8141
    %v9254 = vpack.c.b16 %v8150, %v8142
    %v9255 = vpack.c.b16 %v8151, %v8143
    %v9256 = vpack.c.b16 %v8152, %v8144
    %v9257 = vpack.c.b16 %v8153, %v8145
    %v9258 = vpack.c.b16 %v8154, %v8146
    %v9259 = vpack.c.b16 %v8163, %v8155
    %v9260 = vpack.c.b16 %v8164, %v8156
    %v9261 = vpack.c.b16 %v8165, %v8157
    %v9262 = vpack.c.b16 %v8166, %v8158
    %v9263 = vpack.c.b16 %v8167, %v8159
    %v9264 = vpack.c.b16 %v8168, %v8160
    %v9265 = vpack.c.b16 %v8169, %v8161
    %v9266 = vpack.c.b16 %v8170, %v8162
    %v9267 = vpack.c.b16 %v8179, %v8171
    %v9268 = vpack.c.b16 %v8180, %v8172
    %v9269 = vpack.c.b16 %v8181, %v8173
    %v9270 = vpack.c.b16 %v8182, %v8174
    %v9271 = vpack.c.b16 %v8183, %v8175
    %v9272 = vpack.c.b16 %v8184, %v8176
    %v9273 = vpack.c.b16 %v8185, %v8177
    %v9274 = vpack.c.b16 %v8186, %v8178
    %v9275 = vpack.c.b16 %v8195, %v8187
    %v9276 = vpack.c.b16 %v8196, %v8188
    %v9277 = vpack.c.b16 %v8197, %v8189
    %v9278 = vpack.c.b16 %v8198, %v8190
    %v9279 = vpack.c.b16 %v8199, %v8191
    %v9280 = vpack.c.b16 %v8200, %v8192
    %v9281 = vpack.c.b16 %v8201, %v8193
    %v9282 = vpack.c.b16 %v8202, %v8194
    %v9283 = vpack.c.b16 %v8211, %v8203
    %v9284 = vpack.c.b16 %v8212, %v8204
    %v9285 = vpack.c.b16 %v8213, %v8205
    %v9286 = vpack.c.b16 %v8214, %v8206
    %v9287 = vpack.c.b16 %v8215, %v8207
    %v9288 = vpack.c.b16 %v8216, %v8208
    %v9289 = vpack.c.b16 %v8217, %v8209
    %v9290 = vpack.c.b16 %v8218, %v8210
    %v9291 = vpack.c.b16 %v8227, %v8219
    %v9292 = vpack.c.b16 %v8228, %v8220
    %v9293 = vpack.c.b16 %v8229, %v8221
    %v9294 = vpack.c.b16 %v8230, %v8222
    %v9295 = vpack.c.b16 %v8231, %v8223
    %v9296 = vpack.c.b16 %v8232, %v8224
    %v9297 = vpack.c.b16 %v8233, %v8225
    %v9298 = vpack.c.b16 %v8234, %v8226
    %v9299 = vpack.c.b16 %v8243, %v8235
    %v9300 = vpack.c.b16 %v8244, %v8236
    %v9301 = vpack.c.b16 %v8245, %v8237
    %v9302 = vpack.c.b16 %v8246, %v8238
    %v9303 = vpack.c.b16 %v8247, %v8239
    %v9304 = vpack.c.b16 %v8248, %v8240
    %v9305 = vpack.c.b16 %v8249, %v8241
    %v9306 = vpack.c.b16 %v8250, %v8242
    %v9307 = vpack.c.b16 %v8259, %v8251
    %v9308 = vpack.c.b16 %v8260, %v8252
    %v9309 = vpack.c.b16 %v8261, %v8253
    %v9310 = vpack.c.b16 %v8262, %v8254
    %v9311 = vpack.c.b16 %v8263, %v8255
    %v9312 = vpack.c.b16 %v8264, %v8256
    %v9313 = vpack.c.b16 %v8265, %v8257
    %v9314 = vpack.c.b16 %v8266, %v8258
    %v9315 = vpack.c.b16 %v8275, %v8267
    %v9316 = vpack.c.b16 %v8276, %v8268
    %v9317 = vpack.c.b16 %v8277, %v8269
    %v9318 = vpack.c.b16 %v8278, %v8270
    %v9319 = vpack.c.b16 %v8279, %v8271
    %v9320 = vpack.c.b16 %v8280, %v8272
    %v9321 = vpack.c.b16 %v8281, %v8273
    %v9322 = vpack.c.b16 %v8282, %v8274
    %v9323 = vpack.c.b16 %v8291, %v8283
    %v9324 = vpack.c.b16 %v8292, %v8284
    %v9325 = vpack.c.b16 %v8293, %v8285
    %v9326 = vpack.c.b16 %v8294, %v8286
    %v9327 = vpack.c.b16 %v8295, %v8287
    %v9328 = vpack.c.b16 %v8296, %v8288
    %v9329 = vpack.c.b16 %v8297, %v8289
    %v9330 = vpack.c.b16 %v8298, %v8290
    %v9331 = vpack.c.b16 %v8307, %v8299
    %v9332 = vpack.c.b16 %v8308, %v8300
    %v9333 = vpack.c.b16 %v8309, %v8301
    %v9334 = vpack.c.b16 %v8310, %v8302
    %v9335 = vpack.c.b16 %v8311, %v8303
    %v9336 = vpack.c.b16 %v8312, %v8304
    %v9337 = vpack.c.b16 %v8313, %v8305
    %v9338 = vpack.c.b16 %v8314, %v8306
    %v9339 = vpack.c.b16 %v8323, %v8315
    %v9340 = vpack.c.b16 %v8324, %v8316
    %v9341 = vpack.c.b16 %v8325, %v8317
    %v9342 = vpack.c.b16 %v8326, %v8318
    %v9343 = vpack.c.b16 %v8327, %v8319
    %v9344 = vpack.c.b16 %v8328, %v8320
    %v9345 = vpack.c.b16 %v8329, %v8321
    %v9346 = vpack.c.b16 %v8330, %v8322
    %v9347 = vpack.c.b16 %v8339, %v8331
    %v9348 = vpack.c.b16 %v8340, %v8332
    %v9349 = vpack.c.b16 %v8341, %v8333
    %v9350 = vpack.c.b16 %v8342, %v8334
    %v9351 = vpack.c.b16 %v8343, %v8335
    %v9352 = vpack.c.b16 %v8344, %v8336
    %v9353 = vpack.c.b16 %v8345, %v8337
    %v9354 = vpack.c.b16 %v8346, %v8338
    %v9355 = vpack.c.b16 %v8355, %v8347
    %v9356 = vpack.c.b16 %v8356, %v8348
    %v9357 = vpack.c.b16 %v8357, %v8349
    %v9358 = vpack.c.b16 %v8358, %v8350
    %v9359 = vpack.c.b16 %v8359, %v8351
    %v9360 = vpack.c.b16 %v8360, %v8352
    %v9361 = vpack.c.b16 %v8361, %v8353
    %v9362 = vpack.c.b16 %v8362, %v8354
    %v9363 = vpack.c.b16 %v8371, %v8363
    %v9364 = vpack.c.b16 %v8372, %v8364
    %v9365 = vpack.c.b16 %v8373, %v8365
    %v9366 = vpack.c.b16 %v8374, %v8366
    %v9367 = vpack.c.b16 %v8375, %v8367
    %v9368 = vpack.c.b16 %v8376, %v8368
    %v9369 = vpack.c.b16 %v8377, %v8369
    %v9370 = vpack.c.b16 %v8378, %v8370
    %v9371 = vpack.c.b16 %v8387, %v8379
    %v9372 = vpack.c.b16 %v8388, %v8380
    %v9373 = vpack.c.b16 %v8389, %v8381
    %v9374 = vpack.c.b16 %v8390, %v8382
    %v9375 = vpack.c.b16 %v8391, %v8383
    %v9376 = vpack.c.b16 %v8392, %v8384
    %v9377 = vpack.c.b16 %v8393, %v8385
    %v9378 = vpack.c.b16 %v8394, %v8386
    %v9379 = vpack.c.b16 %v8403, %v8395
    %v9380 = vpack.c.b16 %v8404, %v8396
    %v9381 = vpack.c.b16 %v8405, %v8397
    %v9382 = vpack.c.b16 %v8406, %v8398
    %v9383 = vpack.c.b16 %v8407, %v8399
    %v9384 = vpack.c.b16 %v8408, %v8400
    %v9385 = vpack.c.b16 %v8409, %v8401
    %v9386 = vpack.c.b16 %v8410, %v8402
    %v9387 = vpack.c.b16 %v8419, %v8411
    %v9388 = vpack.c.b16 %v8420, %v8412
    %v9389 = vpack.c.b16 %v8421, %v8413
    %v9390 = vpack.c.b16 %v8422, %v8414
    %v9391 = vpack.c.b16 %v8423, %v8415
    %v9392 = vpack.c.b16 %v8424, %v8416
    %v9393 = vpack.c.b16 %v8425, %v8417
    %v9394 = vpack.c.b16 %v8426, %v8418
    %v9395 = vpack.c.b16 %v8435, %v8427
    %v9396 = vpack.c.b16 %v8436, %v8428
    %v9397 = vpack.c.b16 %v8437, %v8429
    %v9398 = vpack.c.b16 %v8438, %v8430
    %v9399 = vpack.c.b16 %v8439, %v8431
    %v9400 = vpack.c.b16 %v8440, %v8432
    %v9401 = vpack.c.b16 %v8441, %v8433
    %v9402 = vpack.c.b16 %v8442, %v8434
    %v9403 = vpack.c.b16 %v8451, %v8443
    %v9404 = vpack.c.b16 %v8452, %v8444
    %v9405 = vpack.c.b16 %v8453, %v8445
    %v9406 = vpack.c.b16 %v8454, %v8446
    %v9407 = vpack.c.b16 %v8455, %v8447
    %v9408 = vpack.c.b16 %v8456, %v8448
    %v9409 = vpack.c.b16 %v8457, %v8449
    %v9410 = vpack.c.b16 %v8458, %v8450
    %v9411 = vpack.c.b16 %v8467, %v8459
    %v9412 = vpack.c.b16 %v8468, %v8460
    %v9413 = vpack.c.b16 %v8469, %v8461
    %v9414 = vpack.c.b16 %v8470, %v8462
    %v9415 = vpack.c.b16 %v8471, %v8463
    %v9416 = vpack.c.b16 %v8472, %v8464
    %v9417 = vpack.c.b16 %v8473, %v8465
    %v9418 = vpack.c.b16 %v8474, %v8466
    %v9419 = vpack.c.b16 %v8483, %v8475
    %v9420 = vpack.c.b16 %v8484, %v8476
    %v9421 = vpack.c.b16 %v8485, %v8477
    %v9422 = vpack.c.b16 %v8486, %v8478
    %v9423 = vpack.c.b16 %v8487, %v8479
    %v9424 = vpack.c.b16 %v8488, %v8480
    %v9425 = vpack.c.b16 %v8489, %v8481
    %v9426 = vpack.c.b16 %v8490, %v8482
    %v9427 = vpack.c.b16 %v8499, %v8491
    %v9428 = vpack.c.b16 %v8500, %v8492
    %v9429 = vpack.c.b16 %v8501, %v8493
    %v9430 = vpack.c.b16 %v8502, %v8494
    %v9431 = vpack.c.b16 %v8503, %v8495
    %v9432 = vpack.c.b16 %v8504, %v8496
    %v9433 = vpack.c.b16 %v8505, %v8497
    %v9434 = vpack.c.b16 %v8506, %v8498
    %v9435 = vpack.c.b16 %v8515, %v8507
    %v9436 = vpack.c.b16 %v8516, %v8508
    %v9437 = vpack.c.b16 %v8517, %v8509
    %v9438 = vpack.c.b16 %v8518, %v8510
    %v9439 = vpack.c.b16 %v8519, %v8511
    %v9440 = vpack.c.b16 %v8520, %v8512
    %v9441 = vpack.c.b16 %v8521, %v8513
    %v9442 = vpack.c.b16 %v8522, %v8514
    %v9443 = vpack.c.b16 %v8531, %v8523
    %v9444 = vpack.c.b16 %v8532, %v8524
    %v9445 = vpack.c.b16 %v8533, %v8525
    %v9446 = vpack.c.b16 %v8534, %v8526
    %v9447 = vpack.c.b16 %v8535, %v8527
    %v9448 = vpack.c.b16 %v8536, %v8528
    %v9449 = vpack.c.b16 %v8537, %v8529
    %v9450 = vpack.c.b16 %v8538, %v8530
    %v9451 = vpack.c.b16 %v8547, %v8539
    %v9452 = vpack.c.b16 %v8548, %v8540
    %v9453 = vpack.c.b16 %v8549, %v8541
    %v9454 = vpack.c.b16 %v8550, %v8542
    %v9455 = vpack.c.b16 %v8551, %v8543
    %v9456 = vpack.c.b16 %v8552, %v8544
    %v9457 = vpack.c.b16 %v8553, %v8545
    %v9458 = vpack.c.b16 %v8554, %v8546
    %v9459 = vpack.c.b16 %v8563, %v8555
    %v9460 = vpack.c.b16 %v8564, %v8556
    %v9461 = vpack.c.b16 %v8565, %v8557
    %v9462 = vpack.c.b16 %v8566, %v8558
    %v9463 = vpack.c.b16 %v8567, %v8559
    %v9464 = vpack.c.b16 %v8568, %v8560
    %v9465 = vpack.c.b16 %v8569, %v8561
    %v9466 = vpack.c.b16 %v8570, %v8562
    %v9467 = vpack.c.b16 %v8579, %v8571
    %v9468 = vpack.c.b16 %v8580, %v8572
    %v9469 = vpack.c.b16 %v8581, %v8573
    %v9470 = vpack.c.b16 %v8582, %v8574
    %v9471 = vpack.c.b16 %v8583, %v8575
    %v9472 = vpack.c.b16 %v8584, %v8576
    %v9473 = vpack.c.b16 %v8585, %v8577
    %v9474 = vpack.c.b16 %v8586, %v8578
    %v9475 = vpack.c.b16 %v8595, %v8587
    %v9476 = vpack.c.b16 %v8596, %v8588
    %v9477 = vpack.c.b16 %v8597, %v8589
    %v9478 = vpack.c.b16 %v8598, %v8590
    %v9479 = vpack.c.b16 %v8599, %v8591
    %v9480 = vpack.c.b16 %v8600, %v8592
    %v9481 = vpack.c.b16 %v8601, %v8593
    %v9482 = vpack.c.b16 %v8602, %v8594
    %v9483 = vpack.c.b16 %v8611, %v8603
    %v9484 = vpack.c.b16 %v8612, %v8604
    %v9485 = vpack.c.b16 %v8613, %v8605
    %v9486 = vpack.c.b16 %v8614, %v8606
    %v9487 = vpack.c.b16 %v8615, %v8607
    %v9488 = vpack.c.b16 %v8616, %v8608
    %v9489 = vpack.c.b16 %v8617, %v8609
    %v9490 = vpack.c.b16 %v8618, %v8610
    %v9491 = vpack.c.b16 %v8627, %v8619
    %v9492 = vpack.c.b16 %v8628, %v8620
    %v9493 = vpack.c.b16 %v8629, %v8621
    %v9494 = vpack.c.b16 %v8630, %v8622
    %v9495 = vpack.c.b16 %v8631, %v8623
    %v9496 = vpack.c.b16 %v8632, %v8624
    %v9497 = vpack.c.b16 %v8633, %v8625
    %v9498 = vpack.c.b16 %v8634, %v8626
    %v9499 = vpack.c.b16 %v8643, %v8635
    %v9500 = vpack.c.b16 %v8644, %v8636
    %v9501 = vpack.c.b16 %v8645, %v8637
    %v9502 = vpack.c.b16 %v8646, %v8638
    %v9503 = vpack.c.b16 %v8647, %v8639
    %v9504 = vpack.c.b16 %v8648, %v8640
    %v9505 = vpack.c.b16 %v8649, %v8641
    %v9506 = vpack.c.b16 %v8650, %v8642
    %v9507 = vpack.c.b16 %v8659, %v8651
    %v9508 = vpack.c.b16 %v8660, %v8652
    %v9509 = vpack.c.b16 %v8661, %v8653
    %v9510 = vpack.c.b16 %v8662, %v8654
    %v9511 = vpack.c.b16 %v8663, %v8655
    %v9512 = vpack.c.b16 %v8664, %v8656
    %v9513 = vpack.c.b16 %v8665, %v8657
    %v9514 = vpack.c.b16 %v8666, %v8658
    %v9515 = vpack.c.b16 %v8675, %v8667
    %v9516 = vpack.c.b16 %v8676, %v8668
    %v9517 = vpack.c.b16 %v8677, %v8669
    %v9518 = vpack.c.b16 %v8678, %v8670
    %v9519 = vpack.c.b16 %v8679, %v8671
    %v9520 = vpack.c.b16 %v8680, %v8672
    %v9521 = vpack.c.b16 %v8681, %v8673
    %v9522 = vpack.c.b16 %v8682, %v8674
    %v9523 = vpack.c.b16 %v8691, %v8683
    %v9524 = vpack.c.b16 %v8692, %v8684
    %v9525 = vpack.c.b16 %v8693, %v8685
    %v9526 = vpack.c.b16 %v8694, %v8686
    %v9527 = vpack.c.b16 %v8695, %v8687
    %v9528 = vpack.c.b16 %v8696, %v8688
    %v9529 = vpack.c.b16 %v8697, %v8689
    %v9530 = vpack.c.b16 %v8698, %v8690
    %v9531 = vpack.c.b16 %v8707, %v8699
    %v9532 = vpack.c.b16 %v8708, %v8700
    %v9533 = vpack.c.b16 %v8709, %v8701
    %v9534 = vpack.c.b16 %v8710, %v8702
    %v9535 = vpack.c.b16 %v8711, %v8703
    %v9536 = vpack.c.b16 %v8712, %v8704
    %v9537 = vpack.c.b16 %v8713, %v8705
    %v9538 = vpack.c.b16 %v8714, %v8706
    %v9539 = vpack.c.b16 %v8723, %v8715
    %v9540 = vpack.c.b16 %v8724, %v8716
    %v9541 = vpack.c.b16 %v8725, %v8717
    %v9542 = vpack.c.b16 %v8726, %v8718
    %v9543 = vpack.c.b16 %v8727, %v8719
    %v9544 = vpack.c.b16 %v8728, %v8720
    %v9545 = vpack.c.b16 %v8729, %v8721
    %v9546 = vpack.c.b16 %v8730, %v8722
    %v9547 = vpack.c.b16 %v8739, %v8731
    %v9548 = vpack.c.b16 %v8740, %v8732
    %v9549 = vpack.c.b16 %v8741, %v8733
    %v9550 = vpack.c.b16 %v8742, %v8734
    %v9551 = vpack.c.b16 %v8743, %v8735
    %v9552 = vpack.c.b16 %v8744, %v8736
    %v9553 = vpack.c.b16 %v8745, %v8737
    %v9554 = vpack.c.b16 %v8746, %v8738
    %v9555 = vpack.c.b16 %v8755, %v8747
    %v9556 = vpack.c.b16 %v8756, %v8748
    %v9557 = vpack.c.b16 %v8757, %v8749
    %v9558 = vpack.c.b16 %v8758, %v8750
    %v9559 = vpack.c.b16 %v8759, %v8751
    %v9560 = vpack.c.b16 %v8760, %v8752
    %v9561 = vpack.c.b16 %v8761, %v8753
    %v9562 = vpack.c.b16 %v8762, %v8754
    %v9563 = vpack.c.b16 %v8771, %v8763
    %v9564 = vpack.c.b16 %v8772, %v8764
    %v9565 = vpack.c.b16 %v8773, %v8765
    %v9566 = vpack.c.b16 %v8774, %v8766
    %v9567 = vpack.c.b16 %v8775, %v8767
    %v9568 = vpack.c.b16 %v8776, %v8768
    %v9569 = vpack.c.b16 %v8777, %v8769
    %v9570 = vpack.c.b16 %v8778, %v8770
    %v9571 = vpack.c.b16 %v8787, %v8779
    %v9572 = vpack.c.b16 %v8788, %v8780
    %v9573 = vpack.c.b16 %v8789, %v8781
    %v9574 = vpack.c.b16 %v8790, %v8782
    %v9575 = vpack.c.b16 %v8791, %v8783
    %v9576 = vpack.c.b16 %v8792, %v8784
    %v9577 = vpack.c.b16 %v8793, %v8785
    %v9578 = vpack.c.b16 %v8794, %v8786
    %v9579 = vpack.c.b16 %v8803, %v8795
    %v9580 = vpack.c.b16 %v8804, %v8796
    %v9581 = vpack.c.b16 %v8805, %v8797
    %v9582 = vpack.c.b16 %v8806, %v8798
    %v9583 = vpack.c.b16 %v8807, %v8799
    %v9584 = vpack.c.b16 %v8808, %v8800
    %v9585 = vpack.c.b16 %v8809, %v8801
    %v9586 = vpack.c.b16 %v8810, %v8802
    %v9587 = vpack.c.b16 %v8819, %v8811
    %v9588 = vpack.c.b16 %v8820, %v8812
    %v9589 = vpack.c.b16 %v8821, %v8813
    %v9590 = vpack.c.b16 %v8822, %v8814
    %v9591 = vpack.c.b16 %v8823, %v8815
    %v9592 = vpack.c.b16 %v8824, %v8816
    %v9593 = vpack.c.b16 %v8825, %v8817
    %v9594 = vpack.c.b16 %v8826, %v8818
    %10363 = vmatprep.subr.bf16.mxu0 %v8884
    %10364 = vmatpush1.bf16.msra.mxu0 %v8883
    %10365 = vmatprep.subr.bf16.mxu0 %v8876
    %10366 = vmatpush1.bf16.msra.mxu0 %v8875
    %10367 = vmatprep.subr.bf16.mxu0 %v8868
    %10368 = vmatpush1.bf16.msra.mxu0 %v8867
    %10369 = vmatprep.subr.bf16.mxu0 %v8860
    %10370 = vmatpush1.bf16.msra.mxu0 %v8859
    %10371 = vmatprep.subr.bf16.mxu0 %v8852
    %10372 = vmatpush1.bf16.msra.mxu0 %v8851
    %10373 = vmatprep.subr.bf16.mxu0 %v8844
    %10374 = vmatpush1.bf16.msra.mxu0 %v8843
    %10375 = vmatprep.subr.bf16.mxu0 %v8836
    %10376 = vmatpush1.bf16.msra.mxu0 %v8835
    %10377 = vmatprep.subr.bf16.mxu0 %v8828
    %10378 = vmatpush1.bf16.msra.mxu0 %v8827
    %10379 = vmatprep.subr.bf16.mxu0 %v8948
    %10380 = vmatpush2.bf16.msra.mxu0 %v8947
    %10381 = vmatprep.subr.bf16.mxu0 %v8940
    %10382 = vmatpush2.bf16.msra.mxu0 %v8939
    %10383 = vmatprep.subr.bf16.mxu0 %v8932
    %10384 = vmatpush2.bf16.msra.mxu0 %v8931
    %10385 = vmatprep.subr.bf16.mxu0 %v8924
    %10386 = vmatpush2.bf16.msra.mxu0 %v8923
    %10387 = vmatprep.subr.bf16.mxu0 %v8916
    %10388 = vmatpush2.bf16.msra.mxu0 %v8915
    %10389 = vmatprep.subr.bf16.mxu0 %v8908
    %10390 = vmatpush2.bf16.msra.mxu0 %v8907
    %10391 = vmatprep.subr.bf16.mxu0 %v8900
    %10392 = vmatpush2.bf16.msra.mxu0 %v8899
    %10393 = vmatprep.subr.bf16.mxu0 %v8892
    %10394 = vmatpush2.bf16.msra.mxu0 %v8891
    %10395 = vmatprep.mubr.bf16.mxu0 %v5542
    %10396 = vmatmul.mubr.bf16.gmra.mxu0 %v5541
    %v10397 = vpop.f32.mrf.mxu0
    %v10398 = vadd.f32 0.0, %v10397
    %v10399 = vpop.f32.mrf.mxu0
    %v10400 = vadd.f32 0.0, %v10399
    %v10401 = vpop.f32.mrf.mxu0
    %v10402 = vpop.f32.mrf.mxu0
    %10403 = vdwg.mxu0
    %10404 = vmatprep.subr.bf16.mxu0 %v9012
    %10405 = vmatpush1.bf16.msra.mxu0 %v9011
    %10406 = vmatprep.subr.bf16.mxu0 %v9004
    %10407 = vmatpush1.bf16.msra.mxu0 %v9003
    %10408 = vmatprep.subr.bf16.mxu0 %v8996
    %10409 = vmatpush1.bf16.msra.mxu0 %v8995
    %10410 = vmatprep.subr.bf16.mxu0 %v8988
    %10411 = vmatpush1.bf16.msra.mxu0 %v8987
    %10412 = vmatprep.subr.bf16.mxu0 %v8980
    %10413 = vmatpush1.bf16.msra.mxu0 %v8979
    %10414 = vmatprep.subr.bf16.mxu0 %v8972
    %10415 = vmatpush1.bf16.msra.mxu0 %v8971
    %10416 = vmatprep.subr.bf16.mxu0 %v8964
    %10417 = vmatpush1.bf16.msra.mxu0 %v8963
    %10418 = vmatprep.subr.bf16.mxu0 %v8956
    %10419 = vmatpush1.bf16.msra.mxu0 %v8955
    %10420 = vmatprep.subr.bf16.mxu0 %v9076
    %10421 = vmatpush2.bf16.msra.mxu0 %v9075
    %10422 = vmatprep.subr.bf16.mxu0 %v9068
    %10423 = vmatpush2.bf16.msra.mxu0 %v9067
    %10424 = vmatprep.subr.bf16.mxu0 %v9060
    %10425 = vmatpush2.bf16.msra.mxu0 %v9059
    %10426 = vmatprep.subr.bf16.mxu0 %v9052
    %10427 = vmatpush2.bf16.msra.mxu0 %v9051
    %10428 = vmatprep.subr.bf16.mxu0 %v9044
    %10429 = vmatpush2.bf16.msra.mxu0 %v9043
    %10430 = vmatprep.subr.bf16.mxu0 %v9036
    %10431 = vmatpush2.bf16.msra.mxu0 %v9035
    %10432 = vmatprep.subr.bf16.mxu0 %v9028
    %10433 = vmatpush2.bf16.msra.mxu0 %v9027
    %10434 = vmatprep.subr.bf16.mxu0 %v9020
    %10435 = vmatpush2.bf16.msra.mxu0 %v9019
    %10436 = vmatprep.mubr.bf16.mxu0 %v5603
    %10437 = vmatmul.mubr.bf16.gmra.mxu0 %v5543
    %v10438 = vpop.f32.mrf.mxu0
    %v10439 = vadd.f32 %v10398, %v10438
    %v10440 = vpop.f32.mrf.mxu0
    %v10441 = vadd.f32 %v10400, %v10440
    %v10442 = vpop.f32.mrf.mxu0
    %v10443 = vpop.f32.mrf.mxu0
    %10444 = vdwg.mxu0
    %10445 = vmatprep.subr.bf16.mxu0 %v9140
    %10446 = vmatpush1.bf16.msra.mxu0 %v9139
    %10447 = vmatprep.subr.bf16.mxu0 %v9132
    %10448 = vmatpush1.bf16.msra.mxu0 %v9131
    %10449 = vmatprep.subr.bf16.mxu0 %v9124
    %10450 = vmatpush1.bf16.msra.mxu0 %v9123
    %10451 = vmatprep.subr.bf16.mxu0 %v9116
    %10452 = vmatpush1.bf16.msra.mxu0 %v9115
    %10453 = vmatprep.subr.bf16.mxu0 %v9108
    %10454 = vmatpush1.bf16.msra.mxu0 %v9107
    %10455 = vmatprep.subr.bf16.mxu0 %v9100
    %10456 = vmatpush1.bf16.msra.mxu0 %v9099
    %10457 = vmatprep.subr.bf16.mxu0 %v9092
    %10458 = vmatpush1.bf16.msra.mxu0 %v9091
    %10459 = vmatprep.subr.bf16.mxu0 %v9084
    %10460 = vmatpush1.bf16.msra.mxu0 %v9083
    %10461 = vmatprep.subr.bf16.mxu0 %v9204
    %10462 = vmatpush2.bf16.msra.mxu0 %v9203
    %10463 = vmatprep.subr.bf16.mxu0 %v9196
    %10464 = vmatpush2.bf16.msra.mxu0 %v9195
    %10465 = vmatprep.subr.bf16.mxu0 %v9188
    %10466 = vmatpush2.bf16.msra.mxu0 %v9187
    %10467 = vmatprep.subr.bf16.mxu0 %v9180
    %10468 = vmatpush2.bf16.msra.mxu0 %v9179
    %10469 = vmatprep.subr.bf16.mxu0 %v9172
    %10470 = vmatpush2.bf16.msra.mxu0 %v9171
    %10471 = vmatprep.subr.bf16.mxu0 %v9164
    %10472 = vmatpush2.bf16.msra.mxu0 %v9163
    %10473 = vmatprep.subr.bf16.mxu0 %v9156
    %10474 = vmatpush2.bf16.msra.mxu0 %v9155
    %10475 = vmatprep.subr.bf16.mxu0 %v9148
    %10476 = vmatpush2.bf16.msra.mxu0 %v9147
    %10477 = vmatprep.mubr.bf16.mxu0 %v5605
    %10478 = vmatmul.mubr.bf16.gmra.mxu0 %v5604
    %v10479 = vpop.f32.mrf.mxu0
    %v10480 = vadd.f32 %v10439, %v10479
    %v10481 = vpop.f32.mrf.mxu0
    %v10482 = vadd.f32 %v10441, %v10481
    %v10483 = vpop.f32.mrf.mxu0
    %v10484 = vpop.f32.mrf.mxu0
    %10485 = vdwg.mxu0
    %10486 = vmatprep.subr.bf16.mxu0 %v9268
    %10487 = vmatpush1.bf16.msra.mxu0 %v9267
    %10488 = vmatprep.subr.bf16.mxu0 %v9260
    %10489 = vmatpush1.bf16.msra.mxu0 %v9259
    %10490 = vmatprep.subr.bf16.mxu0 %v9252
    %10491 = vmatpush1.bf16.msra.mxu0 %v9251
    %10492 = vmatprep.subr.bf16.mxu0 %v9244
    %10493 = vmatpush1.bf16.msra.mxu0 %v9243
    %10494 = vmatprep.subr.bf16.mxu0 %v9236
    %10495 = vmatpush1.bf16.msra.mxu0 %v9235
    %10496 = vmatprep.subr.bf16.mxu0 %v9228
    %10497 = vmatpush1.bf16.msra.mxu0 %v9227
    %10498 = vmatprep.subr.bf16.mxu0 %v9220
    %10499 = vmatpush1.bf16.msra.mxu0 %v9219
    %10500 = vmatprep.subr.bf16.mxu0 %v9212
    %10501 = vmatpush1.bf16.msra.mxu0 %v9211
    %10502 = vmatprep.subr.bf16.mxu0 %v9332
    %10503 = vmatpush2.bf16.msra.mxu0 %v9331
    %10504 = vmatprep.subr.bf16.mxu0 %v9324
    %10505 = vmatpush2.bf16.msra.mxu0 %v9323
    %10506 = vmatprep.subr.bf16.mxu0 %v9316
    %10507 = vmatpush2.bf16.msra.mxu0 %v9315
    %10508 = vmatprep.subr.bf16.mxu0 %v9308
    %10509 = vmatpush2.bf16.msra.mxu0 %v9307
    %10510 = vmatprep.subr.bf16.mxu0 %v9300
    %10511 = vmatpush2.bf16.msra.mxu0 %v9299
    %10512 = vmatprep.subr.bf16.mxu0 %v9292
    %10513 = vmatpush2.bf16.msra.mxu0 %v9291
    %10514 = vmatprep.subr.bf16.mxu0 %v9284
    %10515 = vmatpush2.bf16.msra.mxu0 %v9283
    %10516 = vmatprep.subr.bf16.mxu0 %v9276
    %10517 = vmatpush2.bf16.msra.mxu0 %v9275
    %10518 = vmatprep.mubr.bf16.mxu0 %v5691
    %10519 = vmatmul.mubr.bf16.gmra.mxu0 %v5690
    %v10520 = vpop.f32.mrf.mxu0
    %v10521 = vadd.f32 %v10480, %v10520
    %v10522 = vpop.f32.mrf.mxu0
    %v10523 = vadd.f32 %v10482, %v10522
    %v10524 = vpop.f32.mrf.mxu0
    %v10525 = vpop.f32.mrf.mxu0
    %10526 = vdwg.mxu0
    %10527 = vmatprep.subr.bf16.mxu0 %v9396
    %10528 = vmatpush1.bf16.msra.mxu0 %v9395
    %10529 = vmatprep.subr.bf16.mxu0 %v9388
    %10530 = vmatpush1.bf16.msra.mxu0 %v9387
    %10531 = vmatprep.subr.bf16.mxu0 %v9380
    %10532 = vmatpush1.bf16.msra.mxu0 %v9379
    %10533 = vmatprep.subr.bf16.mxu0 %v9372
    %10534 = vmatpush1.bf16.msra.mxu0 %v9371
    %10535 = vmatprep.subr.bf16.mxu0 %v9364
    %10536 = vmatpush1.bf16.msra.mxu0 %v9363
    %10537 = vmatprep.subr.bf16.mxu0 %v9356
    %10538 = vmatpush1.bf16.msra.mxu0 %v9355
    %10539 = vmatprep.subr.bf16.mxu0 %v9348
    %10540 = vmatpush1.bf16.msra.mxu0 %v9347
    %10541 = vmatprep.subr.bf16.mxu0 %v9340
    %10542 = vmatpush1.bf16.msra.mxu0 %v9339
    %10543 = vmatprep.subr.bf16.mxu0 %v9460
    %10544 = vmatpush2.bf16.msra.mxu0 %v9459
    %10545 = vmatprep.subr.bf16.mxu0 %v9452
    %10546 = vmatpush2.bf16.msra.mxu0 %v9451
    %10547 = vmatprep.subr.bf16.mxu0 %v9444
    %10548 = vmatpush2.bf16.msra.mxu0 %v9443
    %10549 = vmatprep.subr.bf16.mxu0 %v9436
    %10550 = vmatpush2.bf16.msra.mxu0 %v9435
    %10551 = vmatprep.subr.bf16.mxu0 %v9428
    %10552 = vmatpush2.bf16.msra.mxu0 %v9427
    %10553 = vmatprep.subr.bf16.mxu0 %v9420
    %10554 = vmatpush2.bf16.msra.mxu0 %v9419
    %10555 = vmatprep.subr.bf16.mxu0 %v9412
    %10556 = vmatpush2.bf16.msra.mxu0 %v9411
    %10557 = vmatprep.subr.bf16.mxu0 %v9404
    %10558 = vmatpush2.bf16.msra.mxu0 %v9403
    %10559 = vmatprep.mubr.bf16.mxu0 %v5752
    %10560 = vmatmul.mubr.bf16.gmra.mxu0 %v5692
    %v10561 = vpop.f32.mrf.mxu0
    %v10562 = vadd.f32 %v10521, %v10561
    %v10563 = vpop.f32.mrf.mxu0
    %v10564 = vadd.f32 %v10523, %v10563
    %v10565 = vpop.f32.mrf.mxu0
    %v10566 = vpop.f32.mrf.mxu0
    %10567 = vdwg.mxu0
    %10568 = vmatprep.subr.bf16.mxu0 %v9524
    %10569 = vmatpush1.bf16.msra.mxu0 %v9523
    %10570 = vmatprep.subr.bf16.mxu0 %v9516
    %10571 = vmatpush1.bf16.msra.mxu0 %v9515
    %10572 = vmatprep.subr.bf16.mxu0 %v9508
    %10573 = vmatpush1.bf16.msra.mxu0 %v9507
    %10574 = vmatprep.subr.bf16.mxu0 %v9500
    %10575 = vmatpush1.bf16.msra.mxu0 %v9499
    %10576 = vmatprep.subr.bf16.mxu0 %v9492
    %10577 = vmatpush1.bf16.msra.mxu0 %v9491
    %10578 = vmatprep.subr.bf16.mxu0 %v9484
    %10579 = vmatpush1.bf16.msra.mxu0 %v9483
    %10580 = vmatprep.subr.bf16.mxu0 %v9476
    %10581 = vmatpush1.bf16.msra.mxu0 %v9475
    %10582 = vmatprep.subr.bf16.mxu0 %v9468
    %10583 = vmatpush1.bf16.msra.mxu0 %v9467
    %10584 = vmatprep.subr.bf16.mxu0 %v9588
    %10585 = vmatpush2.bf16.msra.mxu0 %v9587
    %10586 = vmatprep.subr.bf16.mxu0 %v9580
    %10587 = vmatpush2.bf16.msra.mxu0 %v9579
    %10588 = vmatprep.subr.bf16.mxu0 %v9572
    %10589 = vmatpush2.bf16.msra.mxu0 %v9571
    %10590 = vmatprep.subr.bf16.mxu0 %v9564
    %10591 = vmatpush2.bf16.msra.mxu0 %v9563
    %10592 = vmatprep.subr.bf16.mxu0 %v9556
    %10593 = vmatpush2.bf16.msra.mxu0 %v9555
    %10594 = vmatprep.subr.bf16.mxu0 %v9548
    %10595 = vmatpush2.bf16.msra.mxu0 %v9547
    %10596 = vmatprep.subr.bf16.mxu0 %v9540
    %10597 = vmatpush2.bf16.msra.mxu0 %v9539
    %10598 = vmatprep.subr.bf16.mxu0 %v9532
    %10599 = vmatpush2.bf16.msra.mxu0 %v9531
    %10600 = vmatprep.mubr.bf16.mxu0 %v5754
    %10601 = vmatmul.mubr.bf16.gmra.mxu0 %v5753
    %v10602 = vpop.f32.mrf.mxu0
    %v10603 = vadd.f32 %v10562, %v10602
    %v10604 = vpop.f32.mrf.mxu0
    %v10605 = vadd.f32 %v10564, %v10604
    %v10606 = vpop.f32.mrf.mxu0
    %v10607 = vpop.f32.mrf.mxu0
    %10608 = vdwg.mxu0
    %10609 = vmatprep.subr.bf16.mxu0 %v8886
    %10610 = vmatpush1.bf16.msra.mxu0 %v8885
    %10611 = vmatprep.subr.bf16.mxu0 %v8878
    %10612 = vmatpush1.bf16.msra.mxu0 %v8877
    %10613 = vmatprep.subr.bf16.mxu0 %v8870
    %10614 = vmatpush1.bf16.msra.mxu0 %v8869
    %10615 = vmatprep.subr.bf16.mxu0 %v8862
    %10616 = vmatpush1.bf16.msra.mxu0 %v8861
    %10617 = vmatprep.subr.bf16.mxu0 %v8854
    %10618 = vmatpush1.bf16.msra.mxu0 %v8853
    %10619 = vmatprep.subr.bf16.mxu0 %v8846
    %10620 = vmatpush1.bf16.msra.mxu0 %v8845
    %10621 = vmatprep.subr.bf16.mxu0 %v8838
    %10622 = vmatpush1.bf16.msra.mxu0 %v8837
    %10623 = vmatprep.subr.bf16.mxu0 %v8830
    %10624 = vmatpush1.bf16.msra.mxu0 %v8829
    %10625 = vmatprep.subr.bf16.mxu0 %v8950
    %10626 = vmatpush2.bf16.msra.mxu0 %v8949
    %10627 = vmatprep.subr.bf16.mxu0 %v8942
    %10628 = vmatpush2.bf16.msra.mxu0 %v8941
    %10629 = vmatprep.subr.bf16.mxu0 %v8934
    %10630 = vmatpush2.bf16.msra.mxu0 %v8933
    %10631 = vmatprep.subr.bf16.mxu0 %v8926
    %10632 = vmatpush2.bf16.msra.mxu0 %v8925
    %10633 = vmatprep.subr.bf16.mxu0 %v8918
    %10634 = vmatpush2.bf16.msra.mxu0 %v8917
    %10635 = vmatprep.subr.bf16.mxu0 %v8910
    %10636 = vmatpush2.bf16.msra.mxu0 %v8909
    %10637 = vmatprep.subr.bf16.mxu0 %v8902
    %10638 = vmatpush2.bf16.msra.mxu0 %v8901
    %10639 = vmatprep.subr.bf16.mxu0 %v8894
    %10640 = vmatpush2.bf16.msra.mxu0 %v8893
    %10641 = vmatprep.mubr.bf16.mxu0 %v5542
    %10642 = vmatmul.mubr.bf16.gmra.mxu0 %v5541
    %v10643 = vpop.f32.mrf.mxu0
    %v10644 = vadd.f32 0.0, %v10643
    %v10645 = vpop.f32.mrf.mxu0
    %v10646 = vadd.f32 0.0, %v10645
    %v10647 = vpop.f32.mrf.mxu0
    %v10648 = vpop.f32.mrf.mxu0
    %10649 = vdwg.mxu0
    %10650 = vmatprep.subr.bf16.mxu0 %v9014
    %10651 = vmatpush1.bf16.msra.mxu0 %v9013
    %10652 = vmatprep.subr.bf16.mxu0 %v9006
    %10653 = vmatpush1.bf16.msra.mxu0 %v9005
    %10654 = vmatprep.subr.bf16.mxu0 %v8998
    %10655 = vmatpush1.bf16.msra.mxu0 %v8997
    %10656 = vmatprep.subr.bf16.mxu0 %v8990
    %10657 = vmatpush1.bf16.msra.mxu0 %v8989
    %10658 = vmatprep.subr.bf16.mxu0 %v8982
    %10659 = vmatpush1.bf16.msra.mxu0 %v8981
    %10660 = vmatprep.subr.bf16.mxu0 %v8974
    %10661 = vmatpush1.bf16.msra.mxu0 %v8973
    %10662 = vmatprep.subr.bf16.mxu0 %v8966
    %10663 = vmatpush1.bf16.msra.mxu0 %v8965
    %10664 = vmatprep.subr.bf16.mxu0 %v8958
    %10665 = vmatpush1.bf16.msra.mxu0 %v8957
    %10666 = vmatprep.subr.bf16.mxu0 %v9078
    %10667 = vmatpush2.bf16.msra.mxu0 %v9077
    %10668 = vmatprep.subr.bf16.mxu0 %v9070
    %10669 = vmatpush2.bf16.msra.mxu0 %v9069
    %10670 = vmatprep.subr.bf16.mxu0 %v9062
    %10671 = vmatpush2.bf16.msra.mxu0 %v9061
    %10672 = vmatprep.subr.bf16.mxu0 %v9054
    %10673 = vmatpush2.bf16.msra.mxu0 %v9053
    %10674 = vmatprep.subr.bf16.mxu0 %v9046
    %10675 = vmatpush2.bf16.msra.mxu0 %v9045
    %10676 = vmatprep.subr.bf16.mxu0 %v9038
    %10677 = vmatpush2.bf16.msra.mxu0 %v9037
    %10678 = vmatprep.subr.bf16.mxu0 %v9030
    %10679 = vmatpush2.bf16.msra.mxu0 %v9029
    %10680 = vmatprep.subr.bf16.mxu0 %v9022
    %10681 = vmatpush2.bf16.msra.mxu0 %v9021
    %10682 = vmatprep.mubr.bf16.mxu0 %v5603
    %10683 = vmatmul.mubr.bf16.gmra.mxu0 %v5543
    %v10684 = vpop.f32.mrf.mxu0
    %v10685 = vadd.f32 %v10644, %v10684
    %v10686 = vpop.f32.mrf.mxu0
    %v10687 = vadd.f32 %v10646, %v10686
    %v10688 = vpop.f32.mrf.mxu0
    %v10689 = vpop.f32.mrf.mxu0
    %10690 = vdwg.mxu0
    %10691 = vmatprep.subr.bf16.mxu0 %v9142
    %10692 = vmatpush1.bf16.msra.mxu0 %v9141
    %10693 = vmatprep.subr.bf16.mxu0 %v9134
    %10694 = vmatpush1.bf16.msra.mxu0 %v9133
    %10695 = vmatprep.subr.bf16.mxu0 %v9126
    %10696 = vmatpush1.bf16.msra.mxu0 %v9125
    %10697 = vmatprep.subr.bf16.mxu0 %v9118
    %10698 = vmatpush1.bf16.msra.mxu0 %v9117
    %10699 = vmatprep.subr.bf16.mxu0 %v9110
    %10700 = vmatpush1.bf16.msra.mxu0 %v9109
    %10701 = vmatprep.subr.bf16.mxu0 %v9102
    %10702 = vmatpush1.bf16.msra.mxu0 %v9101
    %10703 = vmatprep.subr.bf16.mxu0 %v9094
    %10704 = vmatpush1.bf16.msra.mxu0 %v9093
    %10705 = vmatprep.subr.bf16.mxu0 %v9086
    %10706 = vmatpush1.bf16.msra.mxu0 %v9085
    %10707 = vmatprep.subr.bf16.mxu0 %v9206
    %10708 = vmatpush2.bf16.msra.mxu0 %v9205
    %10709 = vmatprep.subr.bf16.mxu0 %v9198
    %10710 = vmatpush2.bf16.msra.mxu0 %v9197
    %10711 = vmatprep.subr.bf16.mxu0 %v9190
    %10712 = vmatpush2.bf16.msra.mxu0 %v9189
    %10713 = vmatprep.subr.bf16.mxu0 %v9182
    %10714 = vmatpush2.bf16.msra.mxu0 %v9181
    %10715 = vmatprep.subr.bf16.mxu0 %v9174
    %10716 = vmatpush2.bf16.msra.mxu0 %v9173
    %10717 = vmatprep.subr.bf16.mxu0 %v9166
    %10718 = vmatpush2.bf16.msra.mxu0 %v9165
    %10719 = vmatprep.subr.bf16.mxu0 %v9158
    %10720 = vmatpush2.bf16.msra.mxu0 %v9157
    %10721 = vmatprep.subr.bf16.mxu0 %v9150
    %10722 = vmatpush2.bf16.msra.mxu0 %v9149
    %10723 = vmatprep.mubr.bf16.mxu0 %v5605
    %10724 = vmatmul.mubr.bf16.gmra.mxu0 %v5604
    %v10725 = vpop.f32.mrf.mxu0
    %v10726 = vadd.f32 %v10685, %v10725
    %v10727 = vpop.f32.mrf.mxu0
    %v10728 = vadd.f32 %v10687, %v10727
    %v10729 = vpop.f32.mrf.mxu0
    %v10730 = vpop.f32.mrf.mxu0
    %10731 = vdwg.mxu0
    %10732 = vmatprep.subr.bf16.mxu0 %v9270
    %10733 = vmatpush1.bf16.msra.mxu0 %v9269
    %10734 = vmatprep.subr.bf16.mxu0 %v9262
    %10735 = vmatpush1.bf16.msra.mxu0 %v9261
    %10736 = vmatprep.subr.bf16.mxu0 %v9254
    %10737 = vmatpush1.bf16.msra.mxu0 %v9253
    %10738 = vmatprep.subr.bf16.mxu0 %v9246
    %10739 = vmatpush1.bf16.msra.mxu0 %v9245
    %10740 = vmatprep.subr.bf16.mxu0 %v9238
    %10741 = vmatpush1.bf16.msra.mxu0 %v9237
    %10742 = vmatprep.subr.bf16.mxu0 %v9230
    %10743 = vmatpush1.bf16.msra.mxu0 %v9229
    %10744 = vmatprep.subr.bf16.mxu0 %v9222
    %10745 = vmatpush1.bf16.msra.mxu0 %v9221
    %10746 = vmatprep.subr.bf16.mxu0 %v9214
    %10747 = vmatpush1.bf16.msra.mxu0 %v9213
    %10748 = vmatprep.subr.bf16.mxu0 %v9334
    %10749 = vmatpush2.bf16.msra.mxu0 %v9333
    %10750 = vmatprep.subr.bf16.mxu0 %v9326
    %10751 = vmatpush2.bf16.msra.mxu0 %v9325
    %10752 = vmatprep.subr.bf16.mxu0 %v9318
    %10753 = vmatpush2.bf16.msra.mxu0 %v9317
    %10754 = vmatprep.subr.bf16.mxu0 %v9310
    %10755 = vmatpush2.bf16.msra.mxu0 %v9309
    %10756 = vmatprep.subr.bf16.mxu0 %v9302
    %10757 = vmatpush2.bf16.msra.mxu0 %v9301
    %10758 = vmatprep.subr.bf16.mxu0 %v9294
    %10759 = vmatpush2.bf16.msra.mxu0 %v9293
    %10760 = vmatprep.subr.bf16.mxu0 %v9286
    %10761 = vmatpush2.bf16.msra.mxu0 %v9285
    %10762 = vmatprep.subr.bf16.mxu0 %v9278
    %10763 = vmatpush2.bf16.msra.mxu0 %v9277
    %10764 = vmatprep.mubr.bf16.mxu0 %v5691
    %10765 = vmatmul.mubr.bf16.gmra.mxu0 %v5690
    %v10766 = vpop.f32.mrf.mxu0
    %v10767 = vadd.f32 %v10726, %v10766
    %v10768 = vpop.f32.mrf.mxu0
    %v10769 = vadd.f32 %v10728, %v10768
    %v10770 = vpop.f32.mrf.mxu0
    %v10771 = vpop.f32.mrf.mxu0
    %10772 = vdwg.mxu0
    %10773 = vmatprep.subr.bf16.mxu0 %v9398
    %10774 = vmatpush1.bf16.msra.mxu0 %v9397
    %10775 = vmatprep.subr.bf16.mxu0 %v9390
    %10776 = vmatpush1.bf16.msra.mxu0 %v9389
    %10777 = vmatprep.subr.bf16.mxu0 %v9382
    %10778 = vmatpush1.bf16.msra.mxu0 %v9381
    %10779 = vmatprep.subr.bf16.mxu0 %v9374
    %10780 = vmatpush1.bf16.msra.mxu0 %v9373
    %10781 = vmatprep.subr.bf16.mxu0 %v9366
    %10782 = vmatpush1.bf16.msra.mxu0 %v9365
    %10783 = vmatprep.subr.bf16.mxu0 %v9358
    %10784 = vmatpush1.bf16.msra.mxu0 %v9357
    %10785 = vmatprep.subr.bf16.mxu0 %v9350
    %10786 = vmatpush1.bf16.msra.mxu0 %v9349
    %10787 = vmatprep.subr.bf16.mxu0 %v9342
    %10788 = vmatpush1.bf16.msra.mxu0 %v9341
    %10789 = vmatprep.subr.bf16.mxu0 %v9462
    %10790 = vmatpush2.bf16.msra.mxu0 %v9461
    %10791 = vmatprep.subr.bf16.mxu0 %v9454
    %10792 = vmatpush2.bf16.msra.mxu0 %v9453
    %10793 = vmatprep.subr.bf16.mxu0 %v9446
    %10794 = vmatpush2.bf16.msra.mxu0 %v9445
    %10795 = vmatprep.subr.bf16.mxu0 %v9438
    %10796 = vmatpush2.bf16.msra.mxu0 %v9437
    %10797 = vmatprep.subr.bf16.mxu0 %v9430
    %10798 = vmatpush2.bf16.msra.mxu0 %v9429
    %10799 = vmatprep.subr.bf16.mxu0 %v9422
    %10800 = vmatpush2.bf16.msra.mxu0 %v9421
    %10801 = vmatprep.subr.bf16.mxu0 %v9414
    %10802 = vmatpush2.bf16.msra.mxu0 %v9413
    %10803 = vmatprep.subr.bf16.mxu0 %v9406
    %10804 = vmatpush2.bf16.msra.mxu0 %v9405
    %10805 = vmatprep.mubr.bf16.mxu0 %v5752
    %10806 = vmatmul.mubr.bf16.gmra.mxu0 %v5692
    %v10807 = vpop.f32.mrf.mxu0
    %v10808 = vadd.f32 %v10767, %v10807
    %v10809 = vpop.f32.mrf.mxu0
    %v10810 = vadd.f32 %v10769, %v10809
    %v10811 = vpop.f32.mrf.mxu0
    %v10812 = vpop.f32.mrf.mxu0
    %10813 = vdwg.mxu0
    %10814 = vmatprep.subr.bf16.mxu0 %v9526
    %10815 = vmatpush1.bf16.msra.mxu0 %v9525
    %10816 = vmatprep.subr.bf16.mxu0 %v9518
    %10817 = vmatpush1.bf16.msra.mxu0 %v9517
    %10818 = vmatprep.subr.bf16.mxu0 %v9510
    %10819 = vmatpush1.bf16.msra.mxu0 %v9509
    %10820 = vmatprep.subr.bf16.mxu0 %v9502
    %10821 = vmatpush1.bf16.msra.mxu0 %v9501
    %10822 = vmatprep.subr.bf16.mxu0 %v9494
    %10823 = vmatpush1.bf16.msra.mxu0 %v9493
    %10824 = vmatprep.subr.bf16.mxu0 %v9486
    %10825 = vmatpush1.bf16.msra.mxu0 %v9485
    %10826 = vmatprep.subr.bf16.mxu0 %v9478
    %10827 = vmatpush1.bf16.msra.mxu0 %v9477
    %10828 = vmatprep.subr.bf16.mxu0 %v9470
    %10829 = vmatpush1.bf16.msra.mxu0 %v9469
    %10830 = vmatprep.subr.bf16.mxu0 %v9590
    %10831 = vmatpush2.bf16.msra.mxu0 %v9589
    %10832 = vmatprep.subr.bf16.mxu0 %v9582
    %10833 = vmatpush2.bf16.msra.mxu0 %v9581
    %10834 = vmatprep.subr.bf16.mxu0 %v9574
    %10835 = vmatpush2.bf16.msra.mxu0 %v9573
    %10836 = vmatprep.subr.bf16.mxu0 %v9566
    %10837 = vmatpush2.bf16.msra.mxu0 %v9565
    %10838 = vmatprep.subr.bf16.mxu0 %v9558
    %10839 = vmatpush2.bf16.msra.mxu0 %v9557
    %10840 = vmatprep.subr.bf16.mxu0 %v9550
    %10841 = vmatpush2.bf16.msra.mxu0 %v9549
    %10842 = vmatprep.subr.bf16.mxu0 %v9542
    %10843 = vmatpush2.bf16.msra.mxu0 %v9541
    %10844 = vmatprep.subr.bf16.mxu0 %v9534
    %10845 = vmatpush2.bf16.msra.mxu0 %v9533
    %10846 = vmatprep.mubr.bf16.mxu0 %v5754
    %10847 = vmatmul.mubr.bf16.gmra.mxu0 %v5753
    %v10848 = vpop.f32.mrf.mxu0
    %v10849 = vadd.f32 %v10808, %v10848
    %v10850 = vpop.f32.mrf.mxu0
    %v10851 = vadd.f32 %v10810, %v10850
    %v10852 = vpop.f32.mrf.mxu0
    %v10853 = vpop.f32.mrf.mxu0
    %10854 = vdwg.mxu0
    %10855 = vmatprep.subr.bf16.mxu0 %v8888
    %10856 = vmatpush1.bf16.msra.mxu0 %v8887
    %10857 = vmatprep.subr.bf16.mxu0 %v8880
    %10858 = vmatpush1.bf16.msra.mxu0 %v8879
    %10859 = vmatprep.subr.bf16.mxu0 %v8872
    %10860 = vmatpush1.bf16.msra.mxu0 %v8871
    %10861 = vmatprep.subr.bf16.mxu0 %v8864
    %10862 = vmatpush1.bf16.msra.mxu0 %v8863
    %10863 = vmatprep.subr.bf16.mxu0 %v8856
    %10864 = vmatpush1.bf16.msra.mxu0 %v8855
    %10865 = vmatprep.subr.bf16.mxu0 %v8848
    %10866 = vmatpush1.bf16.msra.mxu0 %v8847
    %10867 = vmatprep.subr.bf16.mxu0 %v8840
    %10868 = vmatpush1.bf16.msra.mxu0 %v8839
    %10869 = vmatprep.subr.bf16.mxu0 %v8832
    %10870 = vmatpush1.bf16.msra.mxu0 %v8831
    %10871 = vmatprep.subr.bf16.mxu0 %v8952
    %10872 = vmatpush2.bf16.msra.mxu0 %v8951
    %10873 = vmatprep.subr.bf16.mxu0 %v8944
    %10874 = vmatpush2.bf16.msra.mxu0 %v8943
    %10875 = vmatprep.subr.bf16.mxu0 %v8936
    %10876 = vmatpush2.bf16.msra.mxu0 %v8935
    %10877 = vmatprep.subr.bf16.mxu0 %v8928
    %10878 = vmatpush2.bf16.msra.mxu0 %v8927
    %10879 = vmatprep.subr.bf16.mxu0 %v8920
    %10880 = vmatpush2.bf16.msra.mxu0 %v8919
    %10881 = vmatprep.subr.bf16.mxu0 %v8912
    %10882 = vmatpush2.bf16.msra.mxu0 %v8911
    %10883 = vmatprep.subr.bf16.mxu0 %v8904
    %10884 = vmatpush2.bf16.msra.mxu0 %v8903
    %10885 = vmatprep.subr.bf16.mxu0 %v8896
    %10886 = vmatpush2.bf16.msra.mxu0 %v8895
    %10887 = vmatprep.mubr.bf16.mxu0 %v5542
    %10888 = vmatmul.mubr.bf16.gmra.mxu0 %v5541
    %v10889 = vpop.f32.mrf.mxu0
    %v10890 = vadd.f32 0.0, %v10889
    %v10891 = vpop.f32.mrf.mxu0
    %v10892 = vadd.f32 0.0, %v10891
    %v10893 = vpop.f32.mrf.mxu0
    %v10894 = vpop.f32.mrf.mxu0
    %10895 = vdwg.mxu0
    %10896 = vmatprep.subr.bf16.mxu0 %v9016
    %10897 = vmatpush1.bf16.msra.mxu0 %v9015
    %10898 = vmatprep.subr.bf16.mxu0 %v9008
    %10899 = vmatpush1.bf16.msra.mxu0 %v9007
    %10900 = vmatprep.subr.bf16.mxu0 %v9000
    %10901 = vmatpush1.bf16.msra.mxu0 %v8999
    %10902 = vmatprep.subr.bf16.mxu0 %v8992
    %10903 = vmatpush1.bf16.msra.mxu0 %v8991
    %10904 = vmatprep.subr.bf16.mxu0 %v8984
    %10905 = vmatpush1.bf16.msra.mxu0 %v8983
    %10906 = vmatprep.subr.bf16.mxu0 %v8976
    %10907 = vmatpush1.bf16.msra.mxu0 %v8975
    %10908 = vmatprep.subr.bf16.mxu0 %v8968
    %10909 = vmatpush1.bf16.msra.mxu0 %v8967
    %10910 = vmatprep.subr.bf16.mxu0 %v8960
    %10911 = vmatpush1.bf16.msra.mxu0 %v8959
    %10912 = vmatprep.subr.bf16.mxu0 %v9080
    %10913 = vmatpush2.bf16.msra.mxu0 %v9079
    %10914 = vmatprep.subr.bf16.mxu0 %v9072
    %10915 = vmatpush2.bf16.msra.mxu0 %v9071
    %10916 = vmatprep.subr.bf16.mxu0 %v9064
    %10917 = vmatpush2.bf16.msra.mxu0 %v9063
    %10918 = vmatprep.subr.bf16.mxu0 %v9056
    %10919 = vmatpush2.bf16.msra.mxu0 %v9055
    %10920 = vmatprep.subr.bf16.mxu0 %v9048
    %10921 = vmatpush2.bf16.msra.mxu0 %v9047
    %10922 = vmatprep.subr.bf16.mxu0 %v9040
    %10923 = vmatpush2.bf16.msra.mxu0 %v9039
    %10924 = vmatprep.subr.bf16.mxu0 %v9032
    %10925 = vmatpush2.bf16.msra.mxu0 %v9031
    %10926 = vmatprep.subr.bf16.mxu0 %v9024
    %10927 = vmatpush2.bf16.msra.mxu0 %v9023
    %10928 = vmatprep.mubr.bf16.mxu0 %v5603
    %10929 = vmatmul.mubr.bf16.gmra.mxu0 %v5543
    %v10930 = vpop.f32.mrf.mxu0
    %v10931 = vadd.f32 %v10890, %v10930
    %v10932 = vpop.f32.mrf.mxu0
    %v10933 = vadd.f32 %v10892, %v10932
    %v10934 = vpop.f32.mrf.mxu0
    %v10935 = vpop.f32.mrf.mxu0
    %10936 = vdwg.mxu0
    %10937 = vmatprep.subr.bf16.mxu0 %v9144
    %10938 = vmatpush1.bf16.msra.mxu0 %v9143
    %10939 = vmatprep.subr.bf16.mxu0 %v9136
    %10940 = vmatpush1.bf16.msra.mxu0 %v9135
    %10941 = vmatprep.subr.bf16.mxu0 %v9128
    %10942 = vmatpush1.bf16.msra.mxu0 %v9127
    %10943 = vmatprep.subr.bf16.mxu0 %v9120
    %10944 = vmatpush1.bf16.msra.mxu0 %v9119
    %10945 = vmatprep.subr.bf16.mxu0 %v9112
    %10946 = vmatpush1.bf16.msra.mxu0 %v9111
    %10947 = vmatprep.subr.bf16.mxu0 %v9104
    %10948 = vmatpush1.bf16.msra.mxu0 %v9103
    %10949 = vmatprep.subr.bf16.mxu0 %v9096
    %10950 = vmatpush1.bf16.msra.mxu0 %v9095
    %10951 = vmatprep.subr.bf16.mxu0 %v9088
    %10952 = vmatpush1.bf16.msra.mxu0 %v9087
    %10953 = vmatprep.subr.bf16.mxu0 %v9208
    %10954 = vmatpush2.bf16.msra.mxu0 %v9207
    %10955 = vmatprep.subr.bf16.mxu0 %v9200
    %10956 = vmatpush2.bf16.msra.mxu0 %v9199
    %10957 = vmatprep.subr.bf16.mxu0 %v9192
    %10958 = vmatpush2.bf16.msra.mxu0 %v9191
    %10959 = vmatprep.subr.bf16.mxu0 %v9184
    %10960 = vmatpush2.bf16.msra.mxu0 %v9183
    %10961 = vmatprep.subr.bf16.mxu0 %v9176
    %10962 = vmatpush2.bf16.msra.mxu0 %v9175
    %10963 = vmatprep.subr.bf16.mxu0 %v9168
    %10964 = vmatpush2.bf16.msra.mxu0 %v9167
    %10965 = vmatprep.subr.bf16.mxu0 %v9160
    %10966 = vmatpush2.bf16.msra.mxu0 %v9159
    %10967 = vmatprep.subr.bf16.mxu0 %v9152
    %10968 = vmatpush2.bf16.msra.mxu0 %v9151
    %10969 = vmatprep.mubr.bf16.mxu0 %v5605
    %10970 = vmatmul.mubr.bf16.gmra.mxu0 %v5604
    %v10971 = vpop.f32.mrf.mxu0
    %v10972 = vadd.f32 %v10931, %v10971
    %v10973 = vpop.f32.mrf.mxu0
    %v10974 = vadd.f32 %v10933, %v10973
    %v10975 = vpop.f32.mrf.mxu0
    %v10976 = vpop.f32.mrf.mxu0
    %10977 = vdwg.mxu0
    %10978 = vmatprep.subr.bf16.mxu0 %v9272
    %10979 = vmatpush1.bf16.msra.mxu0 %v9271
    %10980 = vmatprep.subr.bf16.mxu0 %v9264
    %10981 = vmatpush1.bf16.msra.mxu0 %v9263
    %10982 = vmatprep.subr.bf16.mxu0 %v9256
    %10983 = vmatpush1.bf16.msra.mxu0 %v9255
    %10984 = vmatprep.subr.bf16.mxu0 %v9248
    %10985 = vmatpush1.bf16.msra.mxu0 %v9247
    %10986 = vmatprep.subr.bf16.mxu0 %v9240
    %10987 = vmatpush1.bf16.msra.mxu0 %v9239
    %10988 = vmatprep.subr.bf16.mxu0 %v9232
    %10989 = vmatpush1.bf16.msra.mxu0 %v9231
    %10990 = vmatprep.subr.bf16.mxu0 %v9224
    %10991 = vmatpush1.bf16.msra.mxu0 %v9223
    %10992 = vmatprep.subr.bf16.mxu0 %v9216
    %10993 = vmatpush1.bf16.msra.mxu0 %v9215
    %10994 = vmatprep.subr.bf16.mxu0 %v9336
    %10995 = vmatpush2.bf16.msra.mxu0 %v9335
    %10996 = vmatprep.subr.bf16.mxu0 %v9328
    %10997 = vmatpush2.bf16.msra.mxu0 %v9327
    %10998 = vmatprep.subr.bf16.mxu0 %v9320
    %10999 = vmatpush2.bf16.msra.mxu0 %v9319
    %11000 = vmatprep.subr.bf16.mxu0 %v9312
    %11001 = vmatpush2.bf16.msra.mxu0 %v9311
    %11002 = vmatprep.subr.bf16.mxu0 %v9304
    %11003 = vmatpush2.bf16.msra.mxu0 %v9303
    %11004 = vmatprep.subr.bf16.mxu0 %v9296
    %11005 = vmatpush2.bf16.msra.mxu0 %v9295
    %11006 = vmatprep.subr.bf16.mxu0 %v9288
    %11007 = vmatpush2.bf16.msra.mxu0 %v9287
    %11008 = vmatprep.subr.bf16.mxu0 %v9280
    %11009 = vmatpush2.bf16.msra.mxu0 %v9279
    %11010 = vmatprep.mubr.bf16.mxu0 %v5691
    %11011 = vmatmul.mubr.bf16.gmra.mxu0 %v5690
    %v11012 = vpop.f32.mrf.mxu0
    %v11013 = vadd.f32 %v10972, %v11012
    %v11014 = vpop.f32.mrf.mxu0
    %v11015 = vadd.f32 %v10974, %v11014
    %v11016 = vpop.f32.mrf.mxu0
    %v11017 = vpop.f32.mrf.mxu0
    %11018 = vdwg.mxu0
    %11019 = vmatprep.subr.bf16.mxu0 %v9400
    %11020 = vmatpush1.bf16.msra.mxu0 %v9399
    %11021 = vmatprep.subr.bf16.mxu0 %v9392
    %11022 = vmatpush1.bf16.msra.mxu0 %v9391
    %11023 = vmatprep.subr.bf16.mxu0 %v9384
    %11024 = vmatpush1.bf16.msra.mxu0 %v9383
    %11025 = vmatprep.subr.bf16.mxu0 %v9376
    %11026 = vmatpush1.bf16.msra.mxu0 %v9375
    %11027 = vmatprep.subr.bf16.mxu0 %v9368
    %11028 = vmatpush1.bf16.msra.mxu0 %v9367
    %11029 = vmatprep.subr.bf16.mxu0 %v9360
    %11030 = vmatpush1.bf16.msra.mxu0 %v9359
    %11031 = vmatprep.subr.bf16.mxu0 %v9352
    %11032 = vmatpush1.bf16.msra.mxu0 %v9351
    %11033 = vmatprep.subr.bf16.mxu0 %v9344
    %11034 = vmatpush1.bf16.msra.mxu0 %v9343
    %11035 = vmatprep.subr.bf16.mxu0 %v9464
    %11036 = vmatpush2.bf16.msra.mxu0 %v9463
    %11037 = vmatprep.subr.bf16.mxu0 %v9456
    %11038 = vmatpush2.bf16.msra.mxu0 %v9455
    %11039 = vmatprep.subr.bf16.mxu0 %v9448
    %11040 = vmatpush2.bf16.msra.mxu0 %v9447
    %11041 = vmatprep.subr.bf16.mxu0 %v9440
    %11042 = vmatpush2.bf16.msra.mxu0 %v9439
    %11043 = vmatprep.subr.bf16.mxu0 %v9432
    %11044 = vmatpush2.bf16.msra.mxu0 %v9431
    %11045 = vmatprep.subr.bf16.mxu0 %v9424
    %11046 = vmatpush2.bf16.msra.mxu0 %v9423
    %11047 = vmatprep.subr.bf16.mxu0 %v9416
    %11048 = vmatpush2.bf16.msra.mxu0 %v9415
    %11049 = vmatprep.subr.bf16.mxu0 %v9408
    %11050 = vmatpush2.bf16.msra.mxu0 %v9407
    %11051 = vmatprep.mubr.bf16.mxu0 %v5752
    %11052 = vmatmul.mubr.bf16.gmra.mxu0 %v5692
    %v11053 = vpop.f32.mrf.mxu0
    %v11054 = vadd.f32 %v11013, %v11053
    %v11055 = vpop.f32.mrf.mxu0
    %v11056 = vadd.f32 %v11015, %v11055
    %v11057 = vpop.f32.mrf.mxu0
    %v11058 = vpop.f32.mrf.mxu0
    %11059 = vdwg.mxu0
    %11060 = vmatprep.subr.bf16.mxu0 %v9528
    %11061 = vmatpush1.bf16.msra.mxu0 %v9527
    %11062 = vmatprep.subr.bf16.mxu0 %v9520
    %11063 = vmatpush1.bf16.msra.mxu0 %v9519
    %11064 = vmatprep.subr.bf16.mxu0 %v9512
    %11065 = vmatpush1.bf16.msra.mxu0 %v9511
    %11066 = vmatprep.subr.bf16.mxu0 %v9504
    %11067 = vmatpush1.bf16.msra.mxu0 %v9503
    %11068 = vmatprep.subr.bf16.mxu0 %v9496
    %11069 = vmatpush1.bf16.msra.mxu0 %v9495
    %11070 = vmatprep.subr.bf16.mxu0 %v9488
    %11071 = vmatpush1.bf16.msra.mxu0 %v9487
    %11072 = vmatprep.subr.bf16.mxu0 %v9480
    %11073 = vmatpush1.bf16.msra.mxu0 %v9479
    %11074 = vmatprep.subr.bf16.mxu0 %v9472
    %11075 = vmatpush1.bf16.msra.mxu0 %v9471
    %11076 = vmatprep.subr.bf16.mxu0 %v9592
    %11077 = vmatpush2.bf16.msra.mxu0 %v9591
    %11078 = vmatprep.subr.bf16.mxu0 %v9584
    %11079 = vmatpush2.bf16.msra.mxu0 %v9583
    %11080 = vmatprep.subr.bf16.mxu0 %v9576
    %11081 = vmatpush2.bf16.msra.mxu0 %v9575
    %11082 = vmatprep.subr.bf16.mxu0 %v9568
    %11083 = vmatpush2.bf16.msra.mxu0 %v9567
    %11084 = vmatprep.subr.bf16.mxu0 %v9560
    %11085 = vmatpush2.bf16.msra.mxu0 %v9559
    %11086 = vmatprep.subr.bf16.mxu0 %v9552
    %11087 = vmatpush2.bf16.msra.mxu0 %v9551
    %11088 = vmatprep.subr.bf16.mxu0 %v9544
    %11089 = vmatpush2.bf16.msra.mxu0 %v9543
    %11090 = vmatprep.subr.bf16.mxu0 %v9536
    %11091 = vmatpush2.bf16.msra.mxu0 %v9535
    %11092 = vmatprep.mubr.bf16.mxu0 %v5754
    %11093 = vmatmul.mubr.bf16.gmra.mxu0 %v5753
    %v11094 = vpop.f32.mrf.mxu0
    %v11095 = vadd.f32 %v11054, %v11094
    %v11096 = vpop.f32.mrf.mxu0
    %v11097 = vadd.f32 %v11056, %v11096
    %v11098 = vpop.f32.mrf.mxu0
    %v11099 = vpop.f32.mrf.mxu0
    %11100 = vdwg.mxu0
    %11101 = vmatprep.subr.bf16.mxu0 %v8890
    %11102 = vmatpush1.bf16.msra.mxu0 %v8889
    %11103 = vmatprep.subr.bf16.mxu0 %v8882
    %11104 = vmatpush1.bf16.msra.mxu0 %v8881
    %11105 = vmatprep.subr.bf16.mxu0 %v8874
    %11106 = vmatpush1.bf16.msra.mxu0 %v8873
    %11107 = vmatprep.subr.bf16.mxu0 %v8866
    %11108 = vmatpush1.bf16.msra.mxu0 %v8865
    %11109 = vmatprep.subr.bf16.mxu0 %v8858
    %11110 = vmatpush1.bf16.msra.mxu0 %v8857
    %11111 = vmatprep.subr.bf16.mxu0 %v8850
    %11112 = vmatpush1.bf16.msra.mxu0 %v8849
    %11113 = vmatprep.subr.bf16.mxu0 %v8842
    %11114 = vmatpush1.bf16.msra.mxu0 %v8841
    %11115 = vmatprep.subr.bf16.mxu0 %v8834
    %11116 = vmatpush1.bf16.msra.mxu0 %v8833
    %11117 = vmatprep.subr.bf16.mxu0 %v8954
    %11118 = vmatpush2.bf16.msra.mxu0 %v8953
    %11119 = vmatprep.subr.bf16.mxu0 %v8946
    %11120 = vmatpush2.bf16.msra.mxu0 %v8945
    %11121 = vmatprep.subr.bf16.mxu0 %v8938
    %11122 = vmatpush2.bf16.msra.mxu0 %v8937
    %11123 = vmatprep.subr.bf16.mxu0 %v8930
    %11124 = vmatpush2.bf16.msra.mxu0 %v8929
    %11125 = vmatprep.subr.bf16.mxu0 %v8922
    %11126 = vmatpush2.bf16.msra.mxu0 %v8921
    %11127 = vmatprep.subr.bf16.mxu0 %v8914
    %11128 = vmatpush2.bf16.msra.mxu0 %v8913
    %11129 = vmatprep.subr.bf16.mxu0 %v8906
    %11130 = vmatpush2.bf16.msra.mxu0 %v8905
    %11131 = vmatprep.subr.bf16.mxu0 %v8898
    %11132 = vmatpush2.bf16.msra.mxu0 %v8897
    %11133 = vmatprep.mubr.bf16.mxu0 %v5542
    %11134 = vmatmul.mubr.bf16.gmra.mxu0 %v5541
    %v11135 = vpop.f32.mrf.mxu0
    %v11136 = vadd.f32 0.0, %v11135
    %v11137 = vpop.f32.mrf.mxu0
    %v11138 = vadd.f32 0.0, %v11137
    %v11139 = vpop.f32.mrf.mxu0
    %v11140 = vpop.f32.mrf.mxu0
    %11141 = vdwg.mxu0
    %11142 = vmatprep.subr.bf16.mxu0 %v9018
    %11143 = vmatpush1.bf16.msra.mxu0 %v9017
    %11144 = vmatprep.subr.bf16.mxu0 %v9010
    %11145 = vmatpush1.bf16.msra.mxu0 %v9009
    %11146 = vmatprep.subr.bf16.mxu0 %v9002
    %11147 = vmatpush1.bf16.msra.mxu0 %v9001
    %11148 = vmatprep.subr.bf16.mxu0 %v8994
    %11149 = vmatpush1.bf16.msra.mxu0 %v8993
    %11150 = vmatprep.subr.bf16.mxu0 %v8986
    %11151 = vmatpush1.bf16.msra.mxu0 %v8985
    %11152 = vmatprep.subr.bf16.mxu0 %v8978
    %11153 = vmatpush1.bf16.msra.mxu0 %v8977
    %11154 = vmatprep.subr.bf16.mxu0 %v8970
    %11155 = vmatpush1.bf16.msra.mxu0 %v8969
    %11156 = vmatprep.subr.bf16.mxu0 %v8962
    %11157 = vmatpush1.bf16.msra.mxu0 %v8961
    %11158 = vmatprep.subr.bf16.mxu0 %v9082
    %11159 = vmatpush2.bf16.msra.mxu0 %v9081
    %11160 = vmatprep.subr.bf16.mxu0 %v9074
    %11161 = vmatpush2.bf16.msra.mxu0 %v9073
    %11162 = vmatprep.subr.bf16.mxu0 %v9066
    %11163 = vmatpush2.bf16.msra.mxu0 %v9065
    %11164 = vmatprep.subr.bf16.mxu0 %v9058
    %11165 = vmatpush2.bf16.msra.mxu0 %v9057
    %11166 = vmatprep.subr.bf16.mxu0 %v9050
    %11167 = vmatpush2.bf16.msra.mxu0 %v9049
    %11168 = vmatprep.subr.bf16.mxu0 %v9042
    %11169 = vmatpush2.bf16.msra.mxu0 %v9041
    %11170 = vmatprep.subr.bf16.mxu0 %v9034
    %11171 = vmatpush2.bf16.msra.mxu0 %v9033
    %11172 = vmatprep.subr.bf16.mxu0 %v9026
    %11173 = vmatpush2.bf16.msra.mxu0 %v9025
    %11174 = vmatprep.mubr.bf16.mxu0 %v5603
    %11175 = vmatmul.mubr.bf16.gmra.mxu0 %v5543
    %v11176 = vpop.f32.mrf.mxu0
    %v11177 = vadd.f32 %v11136, %v11176
    %v11178 = vpop.f32.mrf.mxu0
    %v11179 = vadd.f32 %v11138, %v11178
    %v11180 = vpop.f32.mrf.mxu0
    %v11181 = vpop.f32.mrf.mxu0
    %11182 = vdwg.mxu0
    %11183 = vmatprep.subr.bf16.mxu0 %v9146
    %11184 = vmatpush1.bf16.msra.mxu0 %v9145
    %11185 = vmatprep.subr.bf16.mxu0 %v9138
    %11186 = vmatpush1.bf16.msra.mxu0 %v9137
    %11187 = vmatprep.subr.bf16.mxu0 %v9130
    %11188 = vmatpush1.bf16.msra.mxu0 %v9129
    %11189 = vmatprep.subr.bf16.mxu0 %v9122
    %11190 = vmatpush1.bf16.msra.mxu0 %v9121
    %11191 = vmatprep.subr.bf16.mxu0 %v9114
    %11192 = vmatpush1.bf16.msra.mxu0 %v9113
    %11193 = vmatprep.subr.bf16.mxu0 %v9106
    %11194 = vmatpush1.bf16.msra.mxu0 %v9105
    %11195 = vmatprep.subr.bf16.mxu0 %v9098
    %11196 = vmatpush1.bf16.msra.mxu0 %v9097
    %11197 = vmatprep.subr.bf16.mxu0 %v9090
    %11198 = vmatpush1.bf16.msra.mxu0 %v9089
    %11199 = vmatprep.subr.bf16.mxu0 %v9210
    %11200 = vmatpush2.bf16.msra.mxu0 %v9209
    %11201 = vmatprep.subr.bf16.mxu0 %v9202
    %11202 = vmatpush2.bf16.msra.mxu0 %v9201
    %11203 = vmatprep.subr.bf16.mxu0 %v9194
    %11204 = vmatpush2.bf16.msra.mxu0 %v9193
    %11205 = vmatprep.subr.bf16.mxu0 %v9186
    %11206 = vmatpush2.bf16.msra.mxu0 %v9185
    %11207 = vmatprep.subr.bf16.mxu0 %v9178
    %11208 = vmatpush2.bf16.msra.mxu0 %v9177
    %11209 = vmatprep.subr.bf16.mxu0 %v9170
    %11210 = vmatpush2.bf16.msra.mxu0 %v9169
    %11211 = vmatprep.subr.bf16.mxu0 %v9162
    %11212 = vmatpush2.bf16.msra.mxu0 %v9161
    %11213 = vmatprep.subr.bf16.mxu0 %v9154
    %11214 = vmatpush2.bf16.msra.mxu0 %v9153
    %11215 = vmatprep.mubr.bf16.mxu0 %v5605
    %11216 = vmatmul.mubr.bf16.gmra.mxu0 %v5604
    %v11217 = vpop.f32.mrf.mxu0
    %v11218 = vadd.f32 %v11177, %v11217
    %v11219 = vpop.f32.mrf.mxu0
    %v11220 = vadd.f32 %v11179, %v11219
    %v11221 = vpop.f32.mrf.mxu0
    %v11222 = vpop.f32.mrf.mxu0
    %11223 = vdwg.mxu0
    %11224 = vmatprep.subr.bf16.mxu0 %v9274
    %11225 = vmatpush1.bf16.msra.mxu0 %v9273
    %11226 = vmatprep.subr.bf16.mxu0 %v9266
    %11227 = vmatpush1.bf16.msra.mxu0 %v9265
    %11228 = vmatprep.subr.bf16.mxu0 %v9258
    %11229 = vmatpush1.bf16.msra.mxu0 %v9257
    %11230 = vmatprep.subr.bf16.mxu0 %v9250
    %11231 = vmatpush1.bf16.msra.mxu0 %v9249
    %11232 = vmatprep.subr.bf16.mxu0 %v9242
    %11233 = vmatpush1.bf16.msra.mxu0 %v9241
    %11234 = vmatprep.subr.bf16.mxu0 %v9234
    %11235 = vmatpush1.bf16.msra.mxu0 %v9233
    %11236 = vmatprep.subr.bf16.mxu0 %v9226
    %11237 = vmatpush1.bf16.msra.mxu0 %v9225
    %11238 = vmatprep.subr.bf16.mxu0 %v9218
    %11239 = vmatpush1.bf16.msra.mxu0 %v9217
    %11240 = vmatprep.subr.bf16.mxu0 %v9338
    %11241 = vmatpush2.bf16.msra.mxu0 %v9337
    %11242 = vmatprep.subr.bf16.mxu0 %v9330
    %11243 = vmatpush2.bf16.msra.mxu0 %v9329
    %11244 = vmatprep.subr.bf16.mxu0 %v9322
    %11245 = vmatpush2.bf16.msra.mxu0 %v9321
    %11246 = vmatprep.subr.bf16.mxu0 %v9314
    %11247 = vmatpush2.bf16.msra.mxu0 %v9313
    %11248 = vmatprep.subr.bf16.mxu0 %v9306
    %11249 = vmatpush2.bf16.msra.mxu0 %v9305
    %11250 = vmatprep.subr.bf16.mxu0 %v9298
    %11251 = vmatpush2.bf16.msra.mxu0 %v9297
    %11252 = vmatprep.subr.bf16.mxu0 %v9290
    %11253 = vmatpush2.bf16.msra.mxu0 %v9289
    %11254 = vmatprep.subr.bf16.mxu0 %v9282
    %11255 = vmatpush2.bf16.msra.mxu0 %v9281
    %11256 = vmatprep.mubr.bf16.mxu0 %v5691
    %11257 = vmatmul.mubr.bf16.gmra.mxu0 %v5690
    %v11258 = vpop.f32.mrf.mxu0
    %v11259 = vadd.f32 %v11218, %v11258
    %v11260 = vpop.f32.mrf.mxu0
    %v11261 = vadd.f32 %v11220, %v11260
    %v11262 = vpop.f32.mrf.mxu0
    %v11263 = vpop.f32.mrf.mxu0
    %11264 = vdwg.mxu0
    %11265 = vmatprep.subr.bf16.mxu0 %v9402
    %11266 = vmatpush1.bf16.msra.mxu0 %v9401
    %11267 = vmatprep.subr.bf16.mxu0 %v9394
    %11268 = vmatpush1.bf16.msra.mxu0 %v9393
    %11269 = vmatprep.subr.bf16.mxu0 %v9386
    %11270 = vmatpush1.bf16.msra.mxu0 %v9385
    %11271 = vmatprep.subr.bf16.mxu0 %v9378
    %11272 = vmatpush1.bf16.msra.mxu0 %v9377
    %11273 = vmatprep.subr.bf16.mxu0 %v9370
    %11274 = vmatpush1.bf16.msra.mxu0 %v9369
    %11275 = vmatprep.subr.bf16.mxu0 %v9362
    %11276 = vmatpush1.bf16.msra.mxu0 %v9361
    %11277 = vmatprep.subr.bf16.mxu0 %v9354
    %11278 = vmatpush1.bf16.msra.mxu0 %v9353
    %11279 = vmatprep.subr.bf16.mxu0 %v9346
    %11280 = vmatpush1.bf16.msra.mxu0 %v9345
    %11281 = vmatprep.subr.bf16.mxu0 %v9466
    %11282 = vmatpush2.bf16.msra.mxu0 %v9465
    %11283 = vmatprep.subr.bf16.mxu0 %v9458
    %11284 = vmatpush2.bf16.msra.mxu0 %v9457
    %11285 = vmatprep.subr.bf16.mxu0 %v9450
    %11286 = vmatpush2.bf16.msra.mxu0 %v9449
    %11287 = vmatprep.subr.bf16.mxu0 %v9442
    %11288 = vmatpush2.bf16.msra.mxu0 %v9441
    %11289 = vmatprep.subr.bf16.mxu0 %v9434
    %11290 = vmatpush2.bf16.msra.mxu0 %v9433
    %11291 = vmatprep.subr.bf16.mxu0 %v9426
    %11292 = vmatpush2.bf16.msra.mxu0 %v9425
    %11293 = vmatprep.subr.bf16.mxu0 %v9418
    %11294 = vmatpush2.bf16.msra.mxu0 %v9417
    %11295 = vmatprep.subr.bf16.mxu0 %v9410
    %11296 = vmatpush2.bf16.msra.mxu0 %v9409
    %11297 = vmatprep.mubr.bf16.mxu0 %v5752
    %11298 = vmatmul.mubr.bf16.gmra.mxu0 %v5692
    %v11299 = vpop.f32.mrf.mxu0
    %v11300 = vadd.f32 %v11259, %v11299
    %v11301 = vpop.f32.mrf.mxu0
    %v11302 = vadd.f32 %v11261, %v11301
    %v11303 = vpop.f32.mrf.mxu0
    %v11304 = vpop.f32.mrf.mxu0
    %11305 = vdwg.mxu0
    %11306 = vmatprep.subr.bf16.mxu0 %v9530
    %11307 = vmatpush1.bf16.msra.mxu0 %v9529
    %11308 = vmatprep.subr.bf16.mxu0 %v9522
    %11309 = vmatpush1.bf16.msra.mxu0 %v9521
    %11310 = vmatprep.subr.bf16.mxu0 %v9514
    %11311 = vmatpush1.bf16.msra.mxu0 %v9513
    %11312 = vmatprep.subr.bf16.mxu0 %v9506
    %11313 = vmatpush1.bf16.msra.mxu0 %v9505
    %11314 = vmatprep.subr.bf16.mxu0 %v9498
    %11315 = vmatpush1.bf16.msra.mxu0 %v9497
    %11316 = vmatprep.subr.bf16.mxu0 %v9490
    %11317 = vmatpush1.bf16.msra.mxu0 %v9489
    %11318 = vmatprep.subr.bf16.mxu0 %v9482
    %11319 = vmatpush1.bf16.msra.mxu0 %v9481
    %11320 = vmatprep.subr.bf16.mxu0 %v9474
    %11321 = vmatpush1.bf16.msra.mxu0 %v9473
    %11322 = vmatprep.subr.bf16.mxu0 %v9594
    %11323 = vmatpush2.bf16.msra.mxu0 %v9593
    %11324 = vmatprep.subr.bf16.mxu0 %v9586
    %11325 = vmatpush2.bf16.msra.mxu0 %v9585
    %11326 = vmatprep.subr.bf16.mxu0 %v9578
    %11327 = vmatpush2.bf16.msra.mxu0 %v9577
    %11328 = vmatprep.subr.bf16.mxu0 %v9570
    %11329 = vmatpush2.bf16.msra.mxu0 %v9569
    %11330 = vmatprep.subr.bf16.mxu0 %v9562
    %11331 = vmatpush2.bf16.msra.mxu0 %v9561
    %11332 = vmatprep.subr.bf16.mxu0 %v9554
    %11333 = vmatpush2.bf16.msra.mxu0 %v9553
    %11334 = vmatprep.subr.bf16.mxu0 %v9546
    %11335 = vmatpush2.bf16.msra.mxu0 %v9545
    %11336 = vmatprep.subr.bf16.mxu0 %v9538
    %11337 = vmatpush2.bf16.msra.mxu0 %v9537
    %11338 = vmatprep.mubr.bf16.mxu0 %v5754
    %11339 = vmatmul.mubr.bf16.gmra.mxu0 %v5753
    %v11340 = vpop.f32.mrf.mxu0
    %v11341 = vadd.f32 %v11300, %v11340
    %v11342 = vpop.f32.mrf.mxu0
    %v11343 = vadd.f32 %v11302, %v11342
    %v11344 = vpop.f32.mrf.mxu0
    %v11345 = vpop.f32.mrf.mxu0
    %11346 = vdwg.mxu0
    %v11355 = vcombine.low %v10603, %v10605
    %v11356 = vcombine.high %v10603, %v10605
    %v11357 = vcombine.low %v10849, %v10851
    %v11358 = vcombine.high %v10849, %v10851
    %v11359 = vcombine.low %v11095, %v11097
    %v11360 = vcombine.high %v11095, %v11097
    %v11361 = vcombine.low %v11341, %v11343
    %v11362 = vcombine.high %v11341, %v11343
    %v11364 = vunpack.c.l.s4 1966171168
    %v11365 = vunpack.c.0.s8 %v11364
    %v11366 = vlaneseq
    %v11367 = vshrl.u32 %v11366, 7
    %v11368 = vsub.s32 %v11365, %v11367
    %v11369 = vrot.slane %v11355, %v11368
    %v11371 = vunpack.c.l.s4 1966171168
    %v11372 = vunpack.c.0.s8 %v11371
    %v11373 = vlaneseq
    %v11374 = vshrl.u32 %v11373, 7
    %v11375 = vsub.s32 %v11372, %v11374
    %v11376 = vrot.slane %v11356, %v11375
    %v11378 = vunpack.c.l.s4 1966171168
    %v11379 = vunpack.c.0.s8 %v11378
    %v11380 = vlaneseq
    %v11381 = vshrl.u32 %v11380, 7
    %v11382 = vsub.s32 %v11379, %v11381
    %v11383 = vrot.slane %v11357, %v11382
    %v11385 = vunpack.c.l.s4 1966171168
    %v11386 = vunpack.c.0.s8 %v11385
    %v11387 = vlaneseq
    %v11388 = vshrl.u32 %v11387, 7
    %v11389 = vsub.s32 %v11386, %v11388
    %v11390 = vrot.slane %v11358, %v11389
    %v11392 = vunpack.c.l.s4 1966171168
    %v11393 = vunpack.c.0.s8 %v11392
    %v11394 = vlaneseq
    %v11395 = vshrl.u32 %v11394, 7
    %v11396 = vsub.s32 %v11393, %v11395
    %v11397 = vrot.slane %v11359, %v11396
    %v11399 = vunpack.c.l.s4 1966171168
    %v11400 = vunpack.c.0.s8 %v11399
    %v11401 = vlaneseq
    %v11402 = vshrl.u32 %v11401, 7
    %v11403 = vsub.s32 %v11400, %v11402
    %v11404 = vrot.slane %v11360, %v11403
    %v11406 = vunpack.c.l.s4 1966171168
    %v11407 = vunpack.c.0.s8 %v11406
    %v11408 = vlaneseq
    %v11409 = vshrl.u32 %v11408, 7
    %v11410 = vsub.s32 %v11407, %v11409
    %v11411 = vrot.slane %v11361, %v11410
    %v11413 = vunpack.c.l.s4 1966171168
    %v11414 = vunpack.c.0.s8 %v11413
    %v11415 = vlaneseq
    %v11416 = vshrl.u32 %v11415, 7
    %v11417 = vsub.s32 %v11414, %v11416
    %v11418 = vrot.slane %v11362, %v11417
    %v11419 = vcombine.low %v11369, %v11383
    %v11420 = vcombine.high %v11369, %v11383
    %v11421 = vcombine.low %v11376, %v11390
    %v11422 = vcombine.high %v11376, %v11390
    %v11423 = vcombine.low %v11397, %v11411
    %v11424 = vcombine.high %v11397, %v11411
    %v11425 = vcombine.low %v11404, %v11418
    %v11426 = vcombine.high %v11404, %v11418
    %v11428 = vunpack.c.l.s4 1966171168
    %v11429 = vunpack.c.0.s8 %v11428
    %v11430 = vlaneseq
    %v11431 = vshrl.u32 %v11430, 7
    %v11432 = vsub.s32 %v11429, %v11431
    %v11433 = vrot.slane %v11419, %v11432
    %v11435 = vunpack.c.l.s4 1966171168
    %v11436 = vunpack.c.0.s8 %v11435
    %v11437 = vlaneseq
    %v11438 = vshrl.u32 %v11437, 7
    %v11439 = vsub.s32 %v11436, %v11438
    %v11440 = vrot.slane %v11421, %v11439
    %v11442 = vunpack.c.l.s4 1966171168
    %v11443 = vunpack.c.0.s8 %v11442
    %v11444 = vlaneseq
    %v11445 = vshrl.u32 %v11444, 7
    %v11446 = vsub.s32 %v11443, %v11445
    %v11447 = vrot.slane %v11420, %v11446
    %v11449 = vunpack.c.l.s4 1966171168
    %v11450 = vunpack.c.0.s8 %v11449
    %v11451 = vlaneseq
    %v11452 = vshrl.u32 %v11451, 7
    %v11453 = vsub.s32 %v11450, %v11452
    %v11454 = vrot.slane %v11422, %v11453
    %v11456 = vunpack.c.l.s4 1966171168
    %v11457 = vunpack.c.0.s8 %v11456
    %v11458 = vlaneseq
    %v11459 = vshrl.u32 %v11458, 7
    %v11460 = vsub.s32 %v11457, %v11459
    %v11461 = vrot.slane %v11423, %v11460
    %v11463 = vunpack.c.l.s4 1966171168
    %v11464 = vunpack.c.0.s8 %v11463
    %v11465 = vlaneseq
    %v11466 = vshrl.u32 %v11465, 7
    %v11467 = vsub.s32 %v11464, %v11466
    %v11468 = vrot.slane %v11425, %v11467
    %v11470 = vunpack.c.l.s4 1966171168
    %v11471 = vunpack.c.0.s8 %v11470
    %v11472 = vlaneseq
    %v11473 = vshrl.u32 %v11472, 7
    %v11474 = vsub.s32 %v11471, %v11473
    %v11475 = vrot.slane %v11424, %v11474
    %v11477 = vunpack.c.l.s4 1966171168
    %v11478 = vunpack.c.0.s8 %v11477
    %v11479 = vlaneseq
    %v11480 = vshrl.u32 %v11479, 7
    %v11481 = vsub.s32 %v11478, %v11480
    %v11482 = vrot.slane %v11426, %v11481
    %v11483 = vcombine.low %v11433, %v11461
    %v11484 = vcombine.high %v11433, %v11461
    %v11485 = vcombine.low %v11440, %v11468
    %v11486 = vcombine.low %v11447, %v11475
    %v11487 = vcombine.high %v11447, %v11475
    %v11488 = vcombine.low %v11454, %v11482
    %v11495 = vxor.u32 %v11483, 2147483648
    %v11496 = vxor.u32 %v11486, 2147483648
    %v11497 = vxor.u32 %v11484, 2147483648
    %v11498 = vxor.u32 %v11487, 2147483648
    %v11499 = vxor.u32 %v11485, 2147483648
    %v11500 = vxor.u32 %v11488, 2147483648
    %v11501 = vmul.f32 %v11495, 1.442695
    %v11502 = vpow.pop %v11501
    %v11503 = vmul.f32 %v11496, 1.442695
    %v11504 = vpow.pop %v11503
    %v11505 = vmul.f32 %v11497, 1.442695
    %v11506 = vpow.pop %v11505
    %v11507 = vmul.f32 %v11498, 1.442695
    %v11508 = vpow.pop %v11507
    %v11509 = vmul.f32 %v11499, 1.442695
    %v11510 = vpow.pop %v11509
    %v11511 = vmul.f32 %v11500, 1.442695
    %v11512 = vpow.pop %v11511
    %v11513 = vadd.f32 %v11502, 1.0
    %v11514 = vadd.f32 %v11504, 1.0
    %v11515 = vadd.f32 %v11506, 1.0
    %v11516 = vadd.f32 %v11508, 1.0
    %v11517 = vadd.f32 %v11510, 1.0
    %v11518 = vadd.f32 %v11512, 1.0
    %v11519 = vrcp.pop %v11513
    %v11520 = vmul.f32 1.0, %v11519
    %v11521 = vrcp.pop %v11514
    %v11522 = vmul.f32 1.0, %v11521
    %v11523 = vrcp.pop %v11515
    %v11524 = vmul.f32 1.0, %v11523
    %v11525 = vrcp.pop %v11516
    %v11526 = vmul.f32 1.0, %v11525
    %v11527 = vrcp.pop %v11517
    %v11528 = vmul.f32 1.0, %v11527
    %v11529 = vrcp.pop %v11518
    %v11530 = vmul.f32 1.0, %v11529
    %v11537 = vcombine.low %v11520, %v11528
    %v11538 = vcombine.high %v11520, %v11528
    %v11539 = vcombine.high %v11524, %v11524
    %v11541 = vunpack.c.l.s4 1935823168
    %v11542 = vunpack.c.0.s8 %v11541
    %v11543 = vlaneseq
    %v11544 = vshrl.u32 %v11543, 7
    %v11545 = vsub.s32 %v11542, %v11544
    %v11546 = vrot.slane %v11537, %v11545
    %v11548 = vunpack.c.l.s4 1935823168
    %v11549 = vunpack.c.0.s8 %v11548
    %v11550 = vlaneseq
    %v11551 = vshrl.u32 %v11550, 7
    %v11552 = vsub.s32 %v11549, %v11551
    %v11553 = vrot.slane %v11524, %v11552
    %v11555 = vunpack.c.l.s4 1935823168
    %v11556 = vunpack.c.0.s8 %v11555
    %v11557 = vlaneseq
    %v11558 = vshrl.u32 %v11557, 7
    %v11559 = vsub.s32 %v11556, %v11558
    %v11560 = vrot.slane %v11538, %v11559
    %v11562 = vunpack.c.l.s4 1935823168
    %v11563 = vunpack.c.0.s8 %v11562
    %v11564 = vlaneseq
    %v11565 = vshrl.u32 %v11564, 7
    %v11566 = vsub.s32 %v11563, %v11565
    %v11567 = vrot.slane %v11539, %v11566
    %v11568 = vcombine.low %v11546, %v11553
    %v11569 = vcombine.high %v11546, %v11553
    %v11570 = vcombine.low %v11560, %v11567
    %v11571 = vcombine.high %v11560, %v11567
    %v11573 = vunpack.c.l.s4 1935823168
    %v11574 = vunpack.c.0.s8 %v11573
    %v11575 = vlaneseq
    %v11576 = vshrl.u32 %v11575, 7
    %v11577 = vsub.s32 %v11574, %v11576
    %v11578 = vrot.slane %v11568, %v11577
    %v11580 = vunpack.c.l.s4 1935823168
    %v11581 = vunpack.c.0.s8 %v11580
    %v11582 = vlaneseq
    %v11583 = vshrl.u32 %v11582, 7
    %v11584 = vsub.s32 %v11581, %v11583
    %v11585 = vrot.slane %v11569, %v11584
    %v11587 = vunpack.c.l.s4 1935823168
    %v11588 = vunpack.c.0.s8 %v11587
    %v11589 = vlaneseq
    %v11590 = vshrl.u32 %v11589, 7
    %v11591 = vsub.s32 %v11588, %v11590
    %v11592 = vrot.slane %v11570, %v11591
    %v11594 = vunpack.c.l.s4 1935823168
    %v11595 = vunpack.c.0.s8 %v11594
    %v11596 = vlaneseq
    %v11597 = vshrl.u32 %v11596, 7
    %v11598 = vsub.s32 %v11595, %v11597
    %v11599 = vrot.slane %v11571, %v11598
    %v11600 = vcombine.low %v11522, %v11530
    %v11601 = vcombine.high %v11522, %v11530
    %v11602 = vcombine.high %v11526, %v11526
    %v11604 = vunpack.c.l.s4 1935823168
    %v11605 = vunpack.c.0.s8 %v11604
    %v11606 = vlaneseq
    %v11607 = vshrl.u32 %v11606, 7
    %v11608 = vsub.s32 %v11605, %v11607
    %v11609 = vrot.slane %v11600, %v11608
    %v11611 = vunpack.c.l.s4 1935823168
    %v11612 = vunpack.c.0.s8 %v11611
    %v11613 = vlaneseq
    %v11614 = vshrl.u32 %v11613, 7
    %v11615 = vsub.s32 %v11612, %v11614
    %v11616 = vrot.slane %v11526, %v11615
    %v11618 = vunpack.c.l.s4 1935823168
    %v11619 = vunpack.c.0.s8 %v11618
    %v11620 = vlaneseq
    %v11621 = vshrl.u32 %v11620, 7
    %v11622 = vsub.s32 %v11619, %v11621
    %v11623 = vrot.slane %v11601, %v11622
    %v11625 = vunpack.c.l.s4 1935823168
    %v11626 = vunpack.c.0.s8 %v11625
    %v11627 = vlaneseq
    %v11628 = vshrl.u32 %v11627, 7
    %v11629 = vsub.s32 %v11626, %v11628
    %v11630 = vrot.slane %v11602, %v11629
    %v11631 = vcombine.low %v11609, %v11616
    %v11632 = vcombine.high %v11609, %v11616
    %v11633 = vcombine.low %v11623, %v11630
    %v11634 = vcombine.high %v11623, %v11630
    %v11636 = vunpack.c.l.s4 1935823168
    %v11637 = vunpack.c.0.s8 %v11636
    %v11638 = vlaneseq
    %v11639 = vshrl.u32 %v11638, 7
    %v11640 = vsub.s32 %v11637, %v11639
    %v11641 = vrot.slane %v11631, %v11640
    %v11643 = vunpack.c.l.s4 1935823168
    %v11644 = vunpack.c.0.s8 %v11643
    %v11645 = vlaneseq
    %v11646 = vshrl.u32 %v11645, 7
    %v11647 = vsub.s32 %v11644, %v11646
    %v11648 = vrot.slane %v11632, %v11647
    %v11650 = vunpack.c.l.s4 1935823168
    %v11651 = vunpack.c.0.s8 %v11650
    %v11652 = vlaneseq
    %v11653 = vshrl.u32 %v11652, 7
    %v11654 = vsub.s32 %v11651, %v11653
    %v11655 = vrot.slane %v11633, %v11654
    %v11657 = vunpack.c.l.s4 1935823168
    %v11658 = vunpack.c.0.s8 %v11657
    %v11659 = vlaneseq
    %v11660 = vshrl.u32 %v11659, 7
    %v11661 = vsub.s32 %v11658, %v11660
    %v11662 = vrot.slane %v11634, %v11661
    %11671 = vst [vmem:[%s18] sm:$0x77] %v11578
    %11672 = vst [vmem:[%s18 + $0x8] sm:$0x77] %v11585
    %11673 = vst [vmem:[%s18 + $0x10] sm:$0x77] %v11592
    %11674 = vst [vmem:[%s18 + $0x18] sm:$0x77] %v11599
    %11675 = vst [vmem:[%s18 + $0x20] sm:$0x77] %v11641
    %11676 = vst [vmem:[%s18 + $0x28] sm:$0x77] %v11648
    %11677 = vst [vmem:[%s18 + $0x30] sm:$0x77] %v11655
    %11678 = vst [vmem:[%s18 + $0x38] sm:$0x77] %v11662
    // Predicated region
    $region110: #{dec_cnn_add_oscn_forward.1} parent=1 // pred_check
      _
    $region111: #{dec_cnn_add_oscn_forward.1} parent=1 // pred_check_branch
      %11680 = sbr.rel (0) target = $region113
    $region112: #{dec_cnn_add_oscn_forward.1} parent=1 // pred_region
      _
    $region113: #{dec_cnn_add_oscn_forward.1} parent=1 // pred_fallthru
      _
    // Predicated region
    $region114: #{dec_cnn_add_oscn_forward.1} parent=1 // pred_check
      _
    $region115: #{dec_cnn_add_oscn_forward.1} parent=1 // pred_check_branch
      %11682 = sbr.rel (0) target = $region117
    $region116: #{dec_cnn_add_oscn_forward.1} parent=1 // pred_region
      _
    $region117: #{dec_cnn_add_oscn_forward.1} parent=1 // pred_fallthru
      _
    %11683 = vsyncpa [#allocation6], 1
    %11684 = vsyncpa [#allocation8], 1
    %11685 = vsyncpa [#allocation11], 1
    %11686 = vsyncpa [#allocation14], 1
    %11687 = vsyncpa [#allocation17], 1

</llo_original>
